<compile_context>
chip_gen: v7x
topology: tpu7x:2x2x1
jax: 0.10.0
libtpu: 0.0.40
codegen_flags: <defaults>
</compile_context>

<pallas_src>
import functools

import jax
import jax.numpy as jnp
from jax import lax
from jax.experimental import pallas as pl
from jax.experimental.pallas import tpu as pltpu

BN_EPS = 1e-3


# ----------------------------------------------------------------------------
# The fused InceptionE kernel (one batch element per grid step).
#
# Spatial layout: the padded image (Hp=H+2, Wp=W+2) is flattened row-major to
# `npp` rows (rounded up to a multiple of 8) and stored with `sl` zero slack
# rows on each side, so a conv tap (dh, dw) is simply the window starting at
# row  sl + dh*Wp + dw .  Border rows of intermediates are zeroed with `mask`
# so they act as the convs' zero padding; border rows of the output are junk
# and are cropped by the wrapper.
# ----------------------------------------------------------------------------
def _inception_e_kernel(
        x_ref, mask_ref,
        w_b3_ref, w_bs_ref, w_s2_ref,
        w_stem_ref, w_b3t_ref, w_bs2t_ref,
        b_b3_ref, b_bs_ref, b_s2_ref, b_fin_ref,
        o_ref,
        b3_buf, bs_buf, bs2_buf,
        *, wp, sl, npp):
    f32 = jnp.float32
    bf16 = jnp.bfloat16
    mask = mask_ref[...]                                   # (npp, 1) f32

    def xwin(t):                                           # x window at flat offset t
        return x_ref[0, sl + t:sl + t + npp, :]

    def win(buf, t):                                       # intermediate window
        return buf[sl + t:sl + t + npp, :]

    def store_padded(buf, val):                            # zero slack + write data
        c = buf.shape[1]
        zeros = jnp.zeros((sl, c), buf.dtype)
        buf[0:sl, :] = zeros
        buf[sl + npp:sl + npp + sl, :] = zeros
        buf[sl:sl + npp, :] = (val * mask).astype(buf.dtype)

    x_bf = xwin(0).astype(bf16)

    # ---- stage 1: 1x1 convs from x -> intermediates b3 (c384) and bs (c448)
    b3 = jnp.maximum(jnp.dot(x_bf, w_b3_ref[...], preferred_element_type=f32)
                     + b_b3_ref[...], 0.0)
    store_padded(b3_buf, b3)
    bs = jnp.maximum(jnp.dot(x_bf, w_bs_ref[...], preferred_element_type=f32)
                     + b_bs_ref[...], 0.0)
    store_padded(bs_buf, bs)

    # ---- stage 2: 3x3 conv (c448 -> c384), taps accumulated on the MXU
    acc2 = None
    for kh in range(3):
        for kw in range(3):
            t = (kh - 1) * wp + (kw - 1)
            d = jnp.dot(win(bs_buf, t).astype(bf16), w_s2_ref[kh * 3 + kw],
                        preferred_element_type=f32)
            acc2 = d if acc2 is None else acc2 + d
    bs2 = jnp.maximum(acc2 + b_s2_ref[...], 0.0)
    store_padded(bs2_buf, bs2)

    # ---- stage 3: everything that lands in the concatenated output slab.
    # All weights below are embedded into the full (K, Ctot) output space, so
    # every matmul just accumulates into one lane-dense accumulator.
    acc = jnp.dot(x_bf, w_stem_ref[0], preferred_element_type=f32)   # branch1x1

    # avg-pool 3x3, stride 1, pad 1, count_include_pad (VPU adds), then 1x1 conv
    pooled = xwin(-wp - 1)
    for t in (-wp, -wp + 1, -1, 0, 1, wp - 1, wp, wp + 1):
        pooled = pooled + xwin(t)
    acc = acc + jnp.dot((pooled * (1.0 / 9.0)).astype(bf16), w_stem_ref[1],
                        preferred_element_type=f32)                   # branch_pool

    taps = (-1, 0, 1, -wp, 0, wp)       # (1,3)-conv taps then (3,1)-conv taps
    for ki, t in enumerate(taps):       # branch3x3_2a / 2b  (input b3)
        acc = acc + jnp.dot(win(b3_buf, t).astype(bf16), w_b3t_ref[ki],
                            preferred_element_type=f32)
    for ki, t in enumerate(taps):       # branch3x3stack_3a / 3b  (input bs2)
        acc = acc + jnp.dot(win(bs2_buf, t).astype(bf16), w_bs2t_ref[ki],
                            preferred_element_type=f32)

    # one dense, full-lane-width store of the whole concatenated block output
    o_ref[0] = jnp.maximum(acc + b_fin_ref[...], 0.0).astype(o_ref.dtype)


# ----------------------------------------------------------------------------
# Parameter construction (deterministic, synthetic) — same layout as before.
# ----------------------------------------------------------------------------
def _make_basic_conv(key, cin, cout, kh, kw):
    """Returns (w_hwio, folded_scale, folded_bias) for Conv2d(bias=False)+BN."""
    k1, k2, k3, k4, k5 = jax.random.split(key, 5)
    w_oihw = 0.1 * jax.random.normal(k1, (cout, cin, kh, kw), jnp.float32)
    w_hwio = jnp.transpose(w_oihw, (2, 3, 1, 0))
    gamma = 1.0 + 0.1 * jax.random.normal(k2, (cout,), jnp.float32)
    beta = 0.05 * jax.random.normal(k3, (cout,), jnp.float32)
    run_mean = 0.05 * jax.random.normal(k4, (cout,), jnp.float32)
    run_var = jnp.abs(jax.random.normal(k5, (cout,), jnp.float32)) + 0.5
    scale = gamma / jnp.sqrt(run_var + BN_EPS)
    bias = beta - run_mean * scale
    return w_hwio, scale, bias


def init_inception_e_params(key, input_channels, k):
    scale = 2.0 ** (-k)
    c320 = int(scale * 320)
    c384 = int(scale * 384)
    c448 = int(scale * 448)
    c192 = int(scale * 192)
    keys = jax.random.split(key, 9)
    return {
        "b1x1":      _make_basic_conv(keys[0], input_channels, c320, 1, 1),
        "b3x3_1":    _make_basic_conv(keys[1], input_channels, c384, 1, 1),
        "b3x3_2a":   _make_basic_conv(keys[2], c384, c384, 1, 3),
        "b3x3_2b":   _make_basic_conv(keys[3], c384, c384, 3, 1),
        "b3x3s_1":   _make_basic_conv(keys[4], input_channels, c448, 1, 1),
        "b3x3s_2":   _make_basic_conv(keys[5], c448, c384, 3, 3),
        "b3x3s_3a":  _make_basic_conv(keys[6], c384, c384, 1, 3),
        "b3x3s_3b":  _make_basic_conv(keys[7], c384, c384, 3, 1),
        "bpool_1x1": _make_basic_conv(keys[8], input_channels, c192, 1, 1),
    }


# ----------------------------------------------------------------------------
# Host-side packing: fold BN scale into weights, embed final-stage weights into
# the concatenated output channel space, cast matmul weights to bf16.
# ----------------------------------------------------------------------------
def _pack_params(params):
    w1, s1, bias1 = params["b1x1"]           # (1,1,Cin,c320)
    w31, s31, bias31 = params["b3x3_1"]      # (1,1,Cin,c384)
    w2a, s2a, bias2a = params["b3x3_2a"]     # (1,3,c384,c384)
    w2b, s2b, bias2b = params["b3x3_2b"]     # (3,1,c384,c384)
    ws1, ss1, biass1 = params["b3x3s_1"]     # (1,1,Cin,c448)
    ws2, ss2, biass2 = params["b3x3s_2"]     # (3,3,c448,c384)
    w3a, s3a, bias3a = params["b3x3s_3a"]    # (1,3,c384,c384)
    w3b, s3b, bias3b = params["b3x3s_3b"]    # (3,1,c384,c384)
    wpl, spl, biaspl = params["bpool_1x1"]   # (1,1,Cin,c192)

    c320 = w1.shape[3]
    c384 = w31.shape[3]
    c448 = ws1.shape[3]
    c192 = wpl.shape[3]
    ctot = c320 + 4 * c384 + c192
    off_1x1 = 0
    off_2a = c320
    off_2b = c320 + c384
    off_3a = c320 + 2 * c384
    off_3b = c320 + 3 * c384
    off_pool = c320 + 4 * c384

    def emb(w2d, off):   # (K, c) -> (K, ctot) embedded at channel offset `off`
        z = jnp.zeros((w2d.shape[0], ctot), jnp.float32)
        return z.at[:, off:off + w2d.shape[1]].set(w2d)

    bf16 = jnp.bfloat16
    # intermediate-producing layers (native output widths)
    w_b3 = (w31[0, 0] * s31).astype(bf16)                      # (Cin, c384)
    w_bs = (ws1[0, 0] * ss1).astype(bf16)                      # (Cin, c448)
    w_s2 = (ws2 * ss2).reshape(9, c448, c384).astype(bf16)     # (9, c448, c384)

    # final-stage weights embedded into the concatenated output space
    w_stem = jnp.stack([emb(w1[0, 0] * s1, off_1x1),
                        emb(wpl[0, 0] * spl, off_pool)]).astype(bf16)   # (2,Cin,ctot)
    w_b3t = jnp.stack([emb(w2a[0, 0] * s2a, off_2a),
                       emb(w2a[0, 1] * s2a, off_2a),
                       emb(w2a[0, 2] * s2a, off_2a),
                       emb(w2b[0, 0] * s2b, off_2b),
                       emb(w2b[1, 0] * s2b, off_2b),
                       emb(w2b[2, 0] * s2b, off_2b)]).astype(bf16)      # (6,c384,ctot)
    w_bs2t = jnp.stack([emb(w3a[0, 0] * s3a, off_3a),
                        emb(w3a[0, 1] * s3a, off_3a),
                        emb(w3a[0, 2] * s3a, off_3a),
                        emb(w3b[0, 0] * s3b, off_3b),
                        emb(w3b[1, 0] * s3b, off_3b),
                        emb(w3b[2, 0] * s3b, off_3b)]).astype(bf16)     # (6,c384,ctot)

    b_b3 = bias31.reshape(1, c384).astype(jnp.float32)
    b_bs = biass1.reshape(1, c448).astype(jnp.float32)
    b_s2 = biass2.reshape(1, c384).astype(jnp.float32)
    b_fin = jnp.zeros((1, ctot), jnp.float32)
    b_fin = b_fin.at[0, off_1x1:off_1x1 + c320].set(bias1)
    b_fin = b_fin.at[0, off_2a:off_2a + c384].set(bias2a)
    b_fin = b_fin.at[0, off_2b:off_2b + c384].set(bias2b)
    b_fin = b_fin.at[0, off_3a:off_3a + c384].set(bias3a)
    b_fin = b_fin.at[0, off_3b:off_3b + c384].set(bias3b)
    b_fin = b_fin.at[0, off_pool:off_pool + c192].set(biaspl)

    return dict(w_b3=w_b3, w_bs=w_bs, w_s2=w_s2, w_stem=w_stem,
                w_b3t=w_b3t, w_bs2t=w_bs2t,
                b_b3=b_b3, b_bs=b_bs, b_s2=b_s2, b_fin=b_fin,
                c384=c384, c448=c448, ctot=ctot)


# ----------------------------------------------------------------------------
# InceptionE forward (PyTorch NCHW in / NCHW out; compute in fused NHWC-flat).
# ----------------------------------------------------------------------------
def inception_e_forward(x_nchw, params):
    x = jnp.transpose(x_nchw, (0, 2, 3, 1)).astype(jnp.float32)   # NHWC
    N, H, W, cin = x.shape
    Hp, Wp = H + 2, W + 2
    NP = Hp * Wp
    NPP = ((NP + 7) // 8) * 8                 # data-region rows (mult of 8)
    SL = ((Wp + 1 + 7) // 8) * 8              # slack rows >= max |tap offset|
    NT = SL + NPP + SL

    pk = _pack_params(params)
    ctot, c384, c448 = pk["ctot"], pk["c384"], pk["c448"]

    # flattened, zero-padded image with slack rows on both ends
    xpf = jnp.pad(x, ((0, 0), (1, 1), (1, 1), (0, 0))).reshape(N, NP, cin)
    x_sl = jnp.pad(xpf, ((0, 0), (SL, NT - SL - NP), (0, 0)))

    # 1 at interior pixels of the padded grid, 0 at padding / round-up rows
    rows = jnp.arange(NPP)
    r, c = rows // Wp, rows % Wp
    mask = ((rows < NP) & (r >= 1) & (r <= H) & (c >= 1) & (c <= W))
    mask = mask.astype(jnp.float32).reshape(NPP, 1)

    kern = functools.partial(_inception_e_kernel, wp=Wp, sl=SL, npp=NPP)

    out_flat = pl.pallas_call(
        kern,
        out_shape=jax.ShapeDtypeStruct((N, NPP, ctot), jnp.float32),
        grid_spec=pltpu.PrefetchScalarGridSpec(
            num_scalar_prefetch=0,
            grid=(N,),
            in_specs=[
                pl.BlockSpec((1, NT, cin), lambda n: (n, 0, 0)),
                pl.BlockSpec((NPP, 1), lambda n: (0, 0)),
                pl.BlockSpec(pk["w_b3"].shape, lambda n: (0, 0)),
                pl.BlockSpec(pk["w_bs"].shape, lambda n: (0, 0)),
                pl.BlockSpec(pk["w_s2"].shape, lambda n: (0, 0, 0)),
                pl.BlockSpec(pk["w_stem"].shape, lambda n: (0, 0, 0)),
                pl.BlockSpec(pk["w_b3t"].shape, lambda n: (0, 0, 0)),
                pl.BlockSpec(pk["w_bs2t"].shape, lambda n: (0, 0, 0)),
                pl.BlockSpec(pk["b_b3"].shape, lambda n: (0, 0)),
                pl.BlockSpec(pk["b_bs"].shape, lambda n: (0, 0)),
                pl.BlockSpec(pk["b_s2"].shape, lambda n: (0, 0)),
                pl.BlockSpec(pk["b_fin"].shape, lambda n: (0, 0)),
            ],
            out_specs=pl.BlockSpec((1, NPP, ctot), lambda n: (n, 0, 0)),
            scratch_shapes=[
                pltpu.VMEM((NT, c384), jnp.float32),   # b3  (padded-flat)
                pltpu.VMEM((NT, c448), jnp.float32),   # bs
                pltpu.VMEM((NT, c384), jnp.float32),   # bs2
            ],
        ),
        compiler_params=pltpu.CompilerParams(
            dimension_semantics=("parallel",),          # 2 TCs on v7x
            vmem_limit_bytes=32 * 1024 * 1024,
        ),
    )(x_sl, mask, pk["w_b3"], pk["w_bs"], pk["w_s2"], pk["w_stem"],
      pk["w_b3t"], pk["w_bs2t"], pk["b_b3"], pk["b_bs"], pk["b_s2"], pk["b_fin"])

    # crop the padded border / round-up rows and go back to NCHW
    out = out_flat[:, :NP, :].reshape(N, Hp, Wp, ctot)[:, 1:H + 1, 1:W + 1, :]
    return jnp.transpose(out, (0, 3, 1, 2))


# ----------------------------------------------------------------------------
# Pure-JAX reference (correctness check only)
# ----------------------------------------------------------------------------
def _ref_conv_bn_relu(x_nhwc, w_hwio, scale, bias, ph, pw):
    y = lax.conv_general_dilated(
        x_nhwc, w_hwio, window_strides=(1, 1),
        padding=((ph, ph), (pw, pw)),
        dimension_numbers=("NHWC", "HWIO", "NHWC"))
    y = y * scale[None, None, None, :] + bias[None, None, None, :]
    return jnp.maximum(y, 0.0)


def _ref_forward(x_nchw, params):
    x = jnp.transpose(x_nchw, (0, 2, 3, 1)).astype(jnp.float32)

    def run(name, xin, ph, pw):
        w, s, b = params[name]
        return _ref_conv_bn_relu(xin, w, s, b, ph, pw)

    branch1x1 = run("b1x1", x, 0, 0)
    b3 = run("b3x3_1", x, 0, 0)
    branch3x3 = jnp.concatenate([run("b3x3_2a", b3, 0, 1),
                                 run("b3x3_2b", b3, 1, 0)], axis=-1)
    bs = run("b3x3s_1", x, 0, 0)
    bs = run("b3x3s_2", bs, 1, 1)
    branch3x3stack = jnp.concatenate([run("b3x3s_3a", bs, 0, 1),
                                      run("b3x3s_3b", bs, 1, 0)], axis=-1)
    xp = jnp.pad(x, ((0, 0), (1, 1), (1, 1), (0, 0)))
    pooled = lax.reduce_window(xp, 0.0, lax.add, (1, 3, 3, 1), (1, 1, 1, 1),
                               "VALID") / 9.0
    branchpool = run("bpool_1x1", pooled, 0, 0)
    out = jnp.concatenate([branch1x1, branch3x3, branch3x3stack, branchpool],
                          axis=-1)
    return jnp.transpose(out, (0, 3, 1, 2))


# ----------------------------------------------------------------------------
if __name__ == "__main__":
    # batch=2, Cin=4, 16x16 spatial, k=4 -> widths 20/24/28/12, total 128 out ch.
    N, CIN, H, W, K = 2, 4, 16, 16, 4

    key = jax.random.PRNGKey(0)
    kx, kp = jax.random.split(key)
    x = jax.random.normal(kx, (N, CIN, H, W), jnp.float32)   # NCHW like PyTorch
    params = init_inception_e_params(kp, CIN, K)

    fwd = jax.jit(inception_e_forward)
    out = jax.block_until_ready(fwd(x, params))

    ref = jax.block_until_ready(_ref_forward(x, params))
    assert out.shape == ref.shape == (N, 128, H, W), out.shape
    max_err = float(jnp.max(jnp.abs(out - ref)))
    # bf16 MXU operands with f32 accumulation -> small relative error vs f32 ref
    assert jnp.allclose(out, ref, rtol=3e-2, atol=3e-2), max_err

    print("KERNEL_OK")
</pallas_src>

<mosaic_0001>
module attributes {stable_mosaic.version = 11 : i64} {
  func.func @_inception_e_kernel(%arg0: i32, %arg1: memref<1x376x4xf32, #tpu.memory_space<vmem>>, %arg2: memref<328x1xf32, #tpu.memory_space<vmem>>, %arg3: memref<4x24xbf16, #tpu.memory_space<vmem>>, %arg4: memref<4x28xbf16, #tpu.memory_space<vmem>>, %arg5: memref<9x28x24xbf16, #tpu.memory_space<vmem>>, %arg6: memref<2x4x128xbf16, #tpu.memory_space<vmem>>, %arg7: memref<6x24x128xbf16, #tpu.memory_space<vmem>>, %arg8: memref<6x24x128xbf16, #tpu.memory_space<vmem>>, %arg9: memref<1x24xf32, #tpu.memory_space<vmem>>, %arg10: memref<1x28xf32, #tpu.memory_space<vmem>>, %arg11: memref<1x24xf32, #tpu.memory_space<vmem>>, %arg12: memref<1x128xf32, #tpu.memory_space<vmem>>, %arg13: memref<1x328x128xf32, #tpu.memory_space<vmem>>, %arg14: memref<376x24xf32, #tpu.memory_space<vmem>>, %arg15: memref<376x28xf32, #tpu.memory_space<vmem>>, %arg16: memref<376x24xf32, #tpu.memory_space<vmem>>) attributes {dimension_semantics = [#tpu.dimension_semantics<parallel>], iteration_bounds = array<i64: 2>, scalar_prefetch = 0 : i64, scratch_operands = 3 : i64, tpu.core_type = #tpu.core_type<tc>, window_params = [{transform_indices = @transform_0, window_bounds = array<i64: 1, 376, 4>}, {pipeline_mode = #tpu.pipeline_mode<synchronous>, transform_indices = @transform_1, window_bounds = array<i64: 328, 1>}, {pipeline_mode = #tpu.pipeline_mode<synchronous>, transform_indices = @transform_2, window_bounds = array<i64: 4, 24>}, {pipeline_mode = #tpu.pipeline_mode<synchronous>, transform_indices = @transform_3, window_bounds = array<i64: 4, 28>}, {pipeline_mode = #tpu.pipeline_mode<synchronous>, transform_indices = @transform_4, window_bounds = array<i64: 9, 28, 24>}, {pipeline_mode = #tpu.pipeline_mode<synchronous>, transform_indices = @transform_5, window_bounds = array<i64: 2, 4, 128>}, {pipeline_mode = #tpu.pipeline_mode<synchronous>, transform_indices = @transform_6, window_bounds = array<i64: 6, 24, 128>}, {pipeline_mode = #tpu.pipeline_mode<synchronous>, transform_indices = @transform_7, window_bounds = array<i64: 6, 24, 128>}, {pipeline_mode = #tpu.pipeline_mode<synchronous>, transform_indices = @transform_8, window_bounds = array<i64: 1, 24>}, {pipeline_mode = #tpu.pipeline_mode<synchronous>, transform_indices = @transform_9, window_bounds = array<i64: 1, 28>}, {pipeline_mode = #tpu.pipeline_mode<synchronous>, transform_indices = @transform_10, window_bounds = array<i64: 1, 24>}, {pipeline_mode = #tpu.pipeline_mode<synchronous>, transform_indices = @transform_11, window_bounds = array<i64: 1, 128>}, {transform_indices = @transform_12, window_bounds = array<i64: 1, 328, 128>}]} {
    %c0 = arith.constant 0 : index
    %c0_0 = arith.constant 0 : index
    %0 = vector.load %arg2[%c0, %c0_0] : memref<328x1xf32, #tpu.memory_space<vmem>>, vector<328x1xf32>
    %c0_1 = arith.constant 0 : index
    %c24 = arith.constant 24 : index
    %c0_2 = arith.constant 0 : index
    %1 = vector.load %arg1[%c0_1, %c24, %c0_2] : memref<1x376x4xf32, #tpu.memory_space<vmem>>, vector<1x328x4xf32>
    %2 = vector.shape_cast %1 : vector<1x328x4xf32> to vector<328x4xf32>
    %3 = arith.truncf %2 : vector<328x4xf32> to vector<328x4xbf16>
    %c0_3 = arith.constant 0 : index
    %c0_4 = arith.constant 0 : index
    %4 = vector.load %arg3[%c0_3, %c0_4] : memref<4x24xbf16, #tpu.memory_space<vmem>>, vector<4x24xbf16>
    %cst = arith.constant dense<0.000000e+00> : vector<328x24xf32>
    %5 = tpu.matmul %3, %4, %cst {dimension_numbers = #tpu.dot_dimension_numbers<[1], [0], [0], [1], [0, 0, 1, 1], [], []>} : vector<328x4xbf16>, vector<4x24xbf16>, vector<328x24xf32> -> vector<328x24xf32>
    %c0_5 = arith.constant 0 : index
    %c0_6 = arith.constant 0 : index
    %6 = vector.load %arg9[%c0_5, %c0_6] : memref<1x24xf32, #tpu.memory_space<vmem>>, vector<1x24xf32>
    %7 = vector.broadcast %6 : vector<1x24xf32> to vector<328x24xf32>
    %8 = arith.addf %5, %7 : vector<328x24xf32>
    %cst_7 = arith.constant 0.000000e+00 : f32
    %9 = vector.broadcast %cst_7 : f32 to vector<328x24xf32>
    %10 = arith.maximumf %8, %9 : vector<328x24xf32>
    %cst_8 = arith.constant 0.000000e+00 : f32
    %11 = vector.broadcast %cst_8 : f32 to vector<24x24xf32>
    %c0_9 = arith.constant 0 : index
    %c0_10 = arith.constant 0 : index
    %12 = vector.load %arg14[%c0_9, %c0_10] : memref<376x24xf32, #tpu.memory_space<vmem>>, vector<24x24xf32>
    tpu.vector_store %arg14[%c0_9, %c0_10], %11 {strides = array<i32>} : memref<376x24xf32, #tpu.memory_space<vmem>>, vector<24x24xf32>,
    %c352 = arith.constant 352 : index
    %c0_11 = arith.constant 0 : index
    %13 = vector.load %arg14[%c352, %c0_11] : memref<376x24xf32, #tpu.memory_space<vmem>>, vector<24x24xf32>
    tpu.vector_store %arg14[%c352, %c0_11], %11 {strides = array<i32>} : memref<376x24xf32, #tpu.memory_space<vmem>>, vector<24x24xf32>,
    %14 = vector.broadcast %0 : vector<328x1xf32> to vector<328x24xf32>
    %15 = arith.mulf %10, %14 : vector<328x24xf32>
    %c24_12 = arith.constant 24 : index
    %c0_13 = arith.constant 0 : index
    %16 = vector.load %arg14[%c24_12, %c0_13] : memref<376x24xf32, #tpu.memory_space<vmem>>, vector<328x24xf32>
    tpu.vector_store %arg14[%c24_12, %c0_13], %15 {strides = array<i32>} : memref<376x24xf32, #tpu.memory_space<vmem>>, vector<328x24xf32>,
    %c0_14 = arith.constant 0 : index
    %c0_15 = arith.constant 0 : index
    %17 = vector.load %arg4[%c0_14, %c0_15] : memref<4x28xbf16, #tpu.memory_space<vmem>>, vector<4x28xbf16>
    %cst_16 = arith.constant dense<0.000000e+00> : vector<328x28xf32>
    %18 = tpu.matmul %3, %17, %cst_16 {dimension_numbers = #tpu.dot_dimension_numbers<[1], [0], [0], [1], [0, 0, 1, 1], [], []>} : vector<328x4xbf16>, vector<4x28xbf16>, vector<328x28xf32> -> vector<328x28xf32>
    %c0_17 = arith.constant 0 : index
    %c0_18 = arith.constant 0 : index
    %19 = vector.load %arg10[%c0_17, %c0_18] : memref<1x28xf32, #tpu.memory_space<vmem>>, vector<1x28xf32>
    %20 = vector.broadcast %19 : vector<1x28xf32> to vector<328x28xf32>
    %21 = arith.addf %18, %20 : vector<328x28xf32>
    %cst_19 = arith.constant 0.000000e+00 : f32
    %22 = vector.broadcast %cst_19 : f32 to vector<328x28xf32>
    %23 = arith.maximumf %21, %22 : vector<328x28xf32>
    %cst_20 = arith.constant 0.000000e+00 : f32
    %24 = vector.broadcast %cst_20 : f32 to vector<24x28xf32>
    %c0_21 = arith.constant 0 : index
    %c0_22 = arith.constant 0 : index
    %25 = vector.load %arg15[%c0_21, %c0_22] : memref<376x28xf32, #tpu.memory_space<vmem>>, vector<24x28xf32>
    tpu.vector_store %arg15[%c0_21, %c0_22], %24 {strides = array<i32>} : memref<376x28xf32, #tpu.memory_space<vmem>>, vector<24x28xf32>,
    %c352_23 = arith.constant 352 : index
    %c0_24 = arith.constant 0 : index
    %26 = vector.load %arg15[%c352_23, %c0_24] : memref<376x28xf32, #tpu.memory_space<vmem>>, vector<24x28xf32>
    tpu.vector_store %arg15[%c352_23, %c0_24], %24 {strides = array<i32>} : memref<376x28xf32, #tpu.memory_space<vmem>>, vector<24x28xf32>,
    %27 = vector.broadcast %0 : vector<328x1xf32> to vector<328x28xf32>
    %28 = arith.mulf %23, %27 : vector<328x28xf32>
    %c24_25 = arith.constant 24 : index
    %c0_26 = arith.constant 0 : index
    %29 = vector.load %arg15[%c24_25, %c0_26] : memref<376x28xf32, #tpu.memory_space<vmem>>, vector<328x28xf32>
    tpu.vector_store %arg15[%c24_25, %c0_26], %28 {strides = array<i32>} : memref<376x28xf32, #tpu.memory_space<vmem>>, vector<328x28xf32>,
    %c5 = arith.constant 5 : index
    %c0_27 = arith.constant 0 : index
    %30 = vector.load %arg15[%c5, %c0_27] : memref<376x28xf32, #tpu.memory_space<vmem>>, vector<328x28xf32>
    %31 = arith.truncf %30 : vector<328x28xf32> to vector<328x28xbf16>
    %c0_28 = arith.constant 0 : index
    %c0_29 = arith.constant 0 : index
    %c0_30 = arith.constant 0 : index
    %32 = vector.load %arg5[%c0_28, %c0_29, %c0_30] : memref<9x28x24xbf16, #tpu.memory_space<vmem>>, vector<1x28x24xbf16>
    %33 = vector.shape_cast %32 : vector<1x28x24xbf16> to vector<28x24xbf16>
    %cst_31 = arith.constant dense<0.000000e+00> : vector<328x24xf32>
    %34 = tpu.matmul %31, %33, %cst_31 {dimension_numbers = #tpu.dot_dimension_numbers<[1], [0], [0], [1], [0, 0, 1, 1], [], []>} : vector<328x28xbf16>, vector<28x24xbf16>, vector<328x24xf32> -> vector<328x24xf32>
    %c6 = arith.constant 6 : index
    %c0_32 = arith.constant 0 : index
    %35 = vector.load %arg15[%c6, %c0_32] : memref<376x28xf32, #tpu.memory_space<vmem>>, vector<328x28xf32>
    %36 = arith.truncf %35 : vector<328x28xf32> to vector<328x28xbf16>
    %c1 = arith.constant 1 : index
    %c0_33 = arith.constant 0 : index
    %c0_34 = arith.constant 0 : index
    %37 = vector.load %arg5[%c1, %c0_33, %c0_34] : memref<9x28x24xbf16, #tpu.memory_space<vmem>>, vector<1x28x24xbf16>
    %38 = vector.shape_cast %37 : vector<1x28x24xbf16> to vector<28x24xbf16>
    %cst_35 = arith.constant dense<0.000000e+00> : vector<328x24xf32>
    %39 = tpu.matmul %36, %38, %cst_35 {dimension_numbers = #tpu.dot_dimension_numbers<[1], [0], [0], [1], [0, 0, 1, 1], [], []>} : vector<328x28xbf16>, vector<28x24xbf16>, vector<328x24xf32> -> vector<328x24xf32>
    %40 = arith.addf %34, %39 : vector<328x24xf32>
    %c7 = arith.constant 7 : index
    %c0_36 = arith.constant 0 : index
    %41 = vector.load %arg15[%c7, %c0_36] : memref<376x28xf32, #tpu.memory_space<vmem>>, vector<328x28xf32>
    %42 = arith.truncf %41 : vector<328x28xf32> to vector<328x28xbf16>
    %c2 = arith.constant 2 : index
    %c0_37 = arith.constant 0 : index
    %c0_38 = arith.constant 0 : index
    %43 = vector.load %arg5[%c2, %c0_37, %c0_38] : memref<9x28x24xbf16, #tpu.memory_space<vmem>>, vector<1x28x24xbf16>
    %44 = vector.shape_cast %43 : vector<1x28x24xbf16> to vector<28x24xbf16>
    %cst_39 = arith.constant dense<0.000000e+00> : vector<328x24xf32>
    %45 = tpu.matmul %42, %44, %cst_39 {dimension_numbers = #tpu.dot_dimension_numbers<[1], [0], [0], [1], [0, 0, 1, 1], [], []>} : vector<328x28xbf16>, vector<28x24xbf16>, vector<328x24xf32> -> vector<328x24xf32>
    %46 = arith.addf %40, %45 : vector<328x24xf32>
    %c23 = arith.constant 23 : index
    %c0_40 = arith.constant 0 : index
    %47 = vector.load %arg15[%c23, %c0_40] : memref<376x28xf32, #tpu.memory_space<vmem>>, vector<328x28xf32>
    %48 = arith.truncf %47 : vector<328x28xf32> to vector<328x28xbf16>
    %c3 = arith.constant 3 : index
    %c0_41 = arith.constant 0 : index
    %c0_42 = arith.constant 0 : index
    %49 = vector.load %arg5[%c3, %c0_41, %c0_42] : memref<9x28x24xbf16, #tpu.memory_space<vmem>>, vector<1x28x24xbf16>
    %50 = vector.shape_cast %49 : vector<1x28x24xbf16> to vector<28x24xbf16>
    %cst_43 = arith.constant dense<0.000000e+00> : vector<328x24xf32>
    %51 = tpu.matmul %48, %50, %cst_43 {dimension_numbers = #tpu.dot_dimension_numbers<[1], [0], [0], [1], [0, 0, 1, 1], [], []>} : vector<328x28xbf16>, vector<28x24xbf16>, vector<328x24xf32> -> vector<328x24xf32>
    %52 = arith.addf %46, %51 : vector<328x24xf32>
    %c24_44 = arith.constant 24 : index
    %c0_45 = arith.constant 0 : index
    %53 = vector.load %arg15[%c24_44, %c0_45] : memref<376x28xf32, #tpu.memory_space<vmem>>, vector<328x28xf32>
    %54 = arith.truncf %53 : vector<328x28xf32> to vector<328x28xbf16>
    %c4 = arith.constant 4 : index
    %c0_46 = arith.constant 0 : index
    %c0_47 = arith.constant 0 : index
    %55 = vector.load %arg5[%c4, %c0_46, %c0_47] : memref<9x28x24xbf16, #tpu.memory_space<vmem>>, vector<1x28x24xbf16>
    %56 = vector.shape_cast %55 : vector<1x28x24xbf16> to vector<28x24xbf16>
    %cst_48 = arith.constant dense<0.000000e+00> : vector<328x24xf32>
    %57 = tpu.matmul %54, %56, %cst_48 {dimension_numbers = #tpu.dot_dimension_numbers<[1], [0], [0], [1], [0, 0, 1, 1], [], []>} : vector<328x28xbf16>, vector<28x24xbf16>, vector<328x24xf32> -> vector<328x24xf32>
    %58 = arith.addf %52, %57 : vector<328x24xf32>
    %c25 = arith.constant 25 : index
    %c0_49 = arith.constant 0 : index
    %59 = vector.load %arg15[%c25, %c0_49] : memref<376x28xf32, #tpu.memory_space<vmem>>, vector<328x28xf32>
    %60 = arith.truncf %59 : vector<328x28xf32> to vector<328x28xbf16>
    %c5_50 = arith.constant 5 : index
    %c0_51 = arith.constant 0 : index
    %c0_52 = arith.constant 0 : index
    %61 = vector.load %arg5[%c5_50, %c0_51, %c0_52] : memref<9x28x24xbf16, #tpu.memory_space<vmem>>, vector<1x28x24xbf16>
    %62 = vector.shape_cast %61 : vector<1x28x24xbf16> to vector<28x24xbf16>
    %cst_53 = arith.constant dense<0.000000e+00> : vector<328x24xf32>
    %63 = tpu.matmul %60, %62, %cst_53 {dimension_numbers = #tpu.dot_dimension_numbers<[1], [0], [0], [1], [0, 0, 1, 1], [], []>} : vector<328x28xbf16>, vector<28x24xbf16>, vector<328x24xf32> -> vector<328x24xf32>
    %64 = arith.addf %58, %63 : vector<328x24xf32>
    %c41 = arith.constant 41 : index
    %c0_54 = arith.constant 0 : index
    %65 = vector.load %arg15[%c41, %c0_54] : memref<376x28xf32, #tpu.memory_space<vmem>>, vector<328x28xf32>
    %66 = arith.truncf %65 : vector<328x28xf32> to vector<328x28xbf16>
    %c6_55 = arith.constant 6 : index
    %c0_56 = arith.constant 0 : index
    %c0_57 = arith.constant 0 : index
    %67 = vector.load %arg5[%c6_55, %c0_56, %c0_57] : memref<9x28x24xbf16, #tpu.memory_space<vmem>>, vector<1x28x24xbf16>
    %68 = vector.shape_cast %67 : vector<1x28x24xbf16> to vector<28x24xbf16>
    %cst_58 = arith.constant dense<0.000000e+00> : vector<328x24xf32>
    %69 = tpu.matmul %66, %68, %cst_58 {dimension_numbers = #tpu.dot_dimension_numbers<[1], [0], [0], [1], [0, 0, 1, 1], [], []>} : vector<328x28xbf16>, vector<28x24xbf16>, vector<328x24xf32> -> vector<328x24xf32>
    %70 = arith.addf %64, %69 : vector<328x24xf32>
    %c42 = arith.constant 42 : index
    %c0_59 = arith.constant 0 : index
    %71 = vector.load %arg15[%c42, %c0_59] : memref<376x28xf32, #tpu.memory_space<vmem>>, vector<328x28xf32>
    %72 = arith.truncf %71 : vector<328x28xf32> to vector<328x28xbf16>
    %c7_60 = arith.constant 7 : index
    %c0_61 = arith.constant 0 : index
    %c0_62 = arith.constant 0 : index
    %73 = vector.load %arg5[%c7_60, %c0_61, %c0_62] : memref<9x28x24xbf16, #tpu.memory_space<vmem>>, vector<1x28x24xbf16>
    %74 = vector.shape_cast %73 : vector<1x28x24xbf16> to vector<28x24xbf16>
    %cst_63 = arith.constant dense<0.000000e+00> : vector<328x24xf32>
    %75 = tpu.matmul %72, %74, %cst_63 {dimension_numbers = #tpu.dot_dimension_numbers<[1], [0], [0], [1], [0, 0, 1, 1], [], []>} : vector<328x28xbf16>, vector<28x24xbf16>, vector<328x24xf32> -> vector<328x24xf32>
    %76 = arith.addf %70, %75 : vector<328x24xf32>
    %c43 = arith.constant 43 : index
    %c0_64 = arith.constant 0 : index
    %77 = vector.load %arg15[%c43, %c0_64] : memref<376x28xf32, #tpu.memory_space<vmem>>, vector<328x28xf32>
    %78 = arith.truncf %77 : vector<328x28xf32> to vector<328x28xbf16>
    %c8 = arith.constant 8 : index
    %c0_65 = arith.constant 0 : index
    %c0_66 = arith.constant 0 : index
    %79 = vector.load %arg5[%c8, %c0_65, %c0_66] : memref<9x28x24xbf16, #tpu.memory_space<vmem>>, vector<1x28x24xbf16>
    %80 = vector.shape_cast %79 : vector<1x28x24xbf16> to vector<28x24xbf16>
    %cst_67 = arith.constant dense<0.000000e+00> : vector<328x24xf32>
    %81 = tpu.matmul %78, %80, %cst_67 {dimension_numbers = #tpu.dot_dimension_numbers<[1], [0], [0], [1], [0, 0, 1, 1], [], []>} : vector<328x28xbf16>, vector<28x24xbf16>, vector<328x24xf32> -> vector<328x24xf32>
    %82 = arith.addf %76, %81 : vector<328x24xf32>
    %c0_68 = arith.constant 0 : index
    %c0_69 = arith.constant 0 : index
    %83 = vector.load %arg11[%c0_68, %c0_69] : memref<1x24xf32, #tpu.memory_space<vmem>>, vector<1x24xf32>
    %84 = vector.broadcast %83 : vector<1x24xf32> to vector<328x24xf32>
    %85 = arith.addf %82, %84 : vector<328x24xf32>
    %cst_70 = arith.constant 0.000000e+00 : f32
    %86 = vector.broadcast %cst_70 : f32 to vector<328x24xf32>
    %87 = arith.maximumf %85, %86 : vector<328x24xf32>
    %cst_71 = arith.constant 0.000000e+00 : f32
    %88 = vector.broadcast %cst_71 : f32 to vector<24x24xf32>
    %c0_72 = arith.constant 0 : index
    %c0_73 = arith.constant 0 : index
    %89 = vector.load %arg16[%c0_72, %c0_73] : memref<376x24xf32, #tpu.memory_space<vmem>>, vector<24x24xf32>
    tpu.vector_store %arg16[%c0_72, %c0_73], %88 {strides = array<i32>} : memref<376x24xf32, #tpu.memory_space<vmem>>, vector<24x24xf32>,
    %c352_74 = arith.constant 352 : index
    %c0_75 = arith.constant 0 : index
    %90 = vector.load %arg16[%c352_74, %c0_75] : memref<376x24xf32, #tpu.memory_space<vmem>>, vector<24x24xf32>
    tpu.vector_store %arg16[%c352_74, %c0_75], %88 {strides = array<i32>} : memref<376x24xf32, #tpu.memory_space<vmem>>, vector<24x24xf32>,
    %91 = vector.broadcast %0 : vector<328x1xf32> to vector<328x24xf32>
    %92 = arith.mulf %87, %91 : vector<328x24xf32>
    %c24_76 = arith.constant 24 : index
    %c0_77 = arith.constant 0 : index
    %93 = vector.load %arg16[%c24_76, %c0_77] : memref<376x24xf32, #tpu.memory_space<vmem>>, vector<328x24xf32>
    tpu.vector_store %arg16[%c24_76, %c0_77], %92 {strides = array<i32>} : memref<376x24xf32, #tpu.memory_space<vmem>>, vector<328x24xf32>,
    %c0_78 = arith.constant 0 : index
    %c0_79 = arith.constant 0 : index
    %c0_80 = arith.constant 0 : index
    %94 = vector.load %arg6[%c0_78, %c0_79, %c0_80] : memref<2x4x128xbf16, #tpu.memory_space<vmem>>, vector<1x4x128xbf16>
    %95 = vector.shape_cast %94 : vector<1x4x128xbf16> to vector<4x128xbf16>
    %cst_81 = arith.constant dense<0.000000e+00> : vector<328x128xf32>
    %96 = tpu.matmul %3, %95, %cst_81 {dimension_numbers = #tpu.dot_dimension_numbers<[1], [0], [0], [1], [0, 0, 1, 1], [], []>} : vector<328x4xbf16>, vector<4x128xbf16>, vector<328x128xf32> -> vector<328x128xf32>
    %c0_82 = arith.constant 0 : index
    %c5_83 = arith.constant 5 : index
    %c0_84 = arith.constant 0 : index
    %97 = vector.load %arg1[%c0_82, %c5_83, %c0_84] : memref<1x376x4xf32, #tpu.memory_space<vmem>>, vector<1x328x4xf32>
    %98 = vector.shape_cast %97 : vector<1x328x4xf32> to vector<328x4xf32>
    %c0_85 = arith.constant 0 : index
    %c6_86 = arith.constant 6 : index
    %c0_87 = arith.constant 0 : index
    %99 = vector.load %arg1[%c0_85, %c6_86, %c0_87] : memref<1x376x4xf32, #tpu.memory_space<vmem>>, vector<1x328x4xf32>
    %100 = vector.shape_cast %99 : vector<1x328x4xf32> to vector<328x4xf32>
    %101 = arith.addf %98, %100 : vector<328x4xf32>
    %c0_88 = arith.constant 0 : index
    %c7_89 = arith.constant 7 : index
    %c0_90 = arith.constant 0 : index
    %102 = vector.load %arg1[%c0_88, %c7_89, %c0_90] : memref<1x376x4xf32, #tpu.memory_space<vmem>>, vector<1x328x4xf32>
    %103 = vector.shape_cast %102 : vector<1x328x4xf32> to vector<328x4xf32>
    %104 = arith.addf %101, %103 : vector<328x4xf32>
    %c0_91 = arith.constant 0 : index
    %c23_92 = arith.constant 23 : index
    %c0_93 = arith.constant 0 : index
    %105 = vector.load %arg1[%c0_91, %c23_92, %c0_93] : memref<1x376x4xf32, #tpu.memory_space<vmem>>, vector<1x328x4xf32>
    %106 = vector.shape_cast %105 : vector<1x328x4xf32> to vector<328x4xf32>
    %107 = arith.addf %104, %106 : vector<328x4xf32>
    %c0_94 = arith.constant 0 : index
    %c24_95 = arith.constant 24 : index
    %c0_96 = arith.constant 0 : index
    %108 = vector.load %arg1[%c0_94, %c24_95, %c0_96] : memref<1x376x4xf32, #tpu.memory_space<vmem>>, vector<1x328x4xf32>
    %109 = vector.shape_cast %108 : vector<1x328x4xf32> to vector<328x4xf32>
    %110 = arith.addf %107, %109 : vector<328x4xf32>
    %c0_97 = arith.constant 0 : index
    %c25_98 = arith.constant 25 : index
    %c0_99 = arith.constant 0 : index
    %111 = vector.load %arg1[%c0_97, %c25_98, %c0_99] : memref<1x376x4xf32, #tpu.memory_space<vmem>>, vector<1x328x4xf32>
    %112 = vector.shape_cast %111 : vector<1x328x4xf32> to vector<328x4xf32>
    %113 = arith.addf %110, %112 : vector<328x4xf32>
    %c0_100 = arith.constant 0 : index
    %c41_101 = arith.constant 41 : index
    %c0_102 = arith.constant 0 : index
    %114 = vector.load %arg1[%c0_100, %c41_101, %c0_102] : memref<1x376x4xf32, #tpu.memory_space<vmem>>, vector<1x328x4xf32>
    %115 = vector.shape_cast %114 : vector<1x328x4xf32> to vector<328x4xf32>
    %116 = arith.addf %113, %115 : vector<328x4xf32>
    %c0_103 = arith.constant 0 : index
    %c42_104 = arith.constant 42 : index
    %c0_105 = arith.constant 0 : index
    %117 = vector.load %arg1[%c0_103, %c42_104, %c0_105] : memref<1x376x4xf32, #tpu.memory_space<vmem>>, vector<1x328x4xf32>
    %118 = vector.shape_cast %117 : vector<1x328x4xf32> to vector<328x4xf32>
    %119 = arith.addf %116, %118 : vector<328x4xf32>
    %c0_106 = arith.constant 0 : index
    %c43_107 = arith.constant 43 : index
    %c0_108 = arith.constant 0 : index
    %120 = vector.load %arg1[%c0_106, %c43_107, %c0_108] : memref<1x376x4xf32, #tpu.memory_space<vmem>>, vector<1x328x4xf32>
    %121 = vector.shape_cast %120 : vector<1x328x4xf32> to vector<328x4xf32>
    %122 = arith.addf %119, %121 : vector<328x4xf32>
    %cst_109 = arith.constant 0.111111112 : f32
    %123 = vector.broadcast %cst_109 : f32 to vector<328x4xf32>
    %124 = arith.mulf %122, %123 : vector<328x4xf32>
    %125 = arith.truncf %124 : vector<328x4xf32> to vector<328x4xbf16>
    %c1_110 = arith.constant 1 : index
    %c0_111 = arith.constant 0 : index
    %c0_112 = arith.constant 0 : index
    %126 = vector.load %arg6[%c1_110, %c0_111, %c0_112] : memref<2x4x128xbf16, #tpu.memory_space<vmem>>, vector<1x4x128xbf16>
    %127 = vector.shape_cast %126 : vector<1x4x128xbf16> to vector<4x128xbf16>
    %cst_113 = arith.constant dense<0.000000e+00> : vector<328x128xf32>
    %128 = tpu.matmul %125, %127, %cst_113 {dimension_numbers = #tpu.dot_dimension_numbers<[1], [0], [0], [1], [0, 0, 1, 1], [], []>} : vector<328x4xbf16>, vector<4x128xbf16>, vector<328x128xf32> -> vector<328x128xf32>
    %129 = arith.addf %96, %128 : vector<328x128xf32>
    %c23_114 = arith.constant 23 : index
    %c0_115 = arith.constant 0 : index
    %130 = vector.load %arg14[%c23_114, %c0_115] : memref<376x24xf32, #tpu.memory_space<vmem>>, vector<328x24xf32>
    %131 = arith.truncf %130 : vector<328x24xf32> to vector<328x24xbf16>
    %c0_116 = arith.constant 0 : index
    %c0_117 = arith.constant 0 : index
    %c0_118 = arith.constant 0 : index
    %132 = vector.load %arg7[%c0_116, %c0_117, %c0_118] : memref<6x24x128xbf16, #tpu.memory_space<vmem>>, vector<1x24x128xbf16>
    %133 = vector.shape_cast %132 : vector<1x24x128xbf16> to vector<24x128xbf16>
    %cst_119 = arith.constant dense<0.000000e+00> : vector<328x128xf32>
    %134 = tpu.matmul %131, %133, %cst_119 {dimension_numbers = #tpu.dot_dimension_numbers<[1], [0], [0], [1], [0, 0, 1, 1], [], []>} : vector<328x24xbf16>, vector<24x128xbf16>, vector<328x128xf32> -> vector<328x128xf32>
    %135 = arith.addf %129, %134 : vector<328x128xf32>
    %c24_120 = arith.constant 24 : index
    %c0_121 = arith.constant 0 : index
    %136 = vector.load %arg14[%c24_120, %c0_121] : memref<376x24xf32, #tpu.memory_space<vmem>>, vector<328x24xf32>
    %137 = arith.truncf %136 : vector<328x24xf32> to vector<328x24xbf16>
    %c1_122 = arith.constant 1 : index
    %c0_123 = arith.constant 0 : index
    %c0_124 = arith.constant 0 : index
    %138 = vector.load %arg7[%c1_122, %c0_123, %c0_124] : memref<6x24x128xbf16, #tpu.memory_space<vmem>>, vector<1x24x128xbf16>
    %139 = vector.shape_cast %138 : vector<1x24x128xbf16> to vector<24x128xbf16>
    %cst_125 = arith.constant dense<0.000000e+00> : vector<328x128xf32>
    %140 = tpu.matmul %137, %139, %cst_125 {dimension_numbers = #tpu.dot_dimension_numbers<[1], [0], [0], [1], [0, 0, 1, 1], [], []>} : vector<328x24xbf16>, vector<24x128xbf16>, vector<328x128xf32> -> vector<328x128xf32>
    %141 = arith.addf %135, %140 : vector<328x128xf32>
    %c25_126 = arith.constant 25 : index
    %c0_127 = arith.constant 0 : index
    %142 = vector.load %arg14[%c25_126, %c0_127] : memref<376x24xf32, #tpu.memory_space<vmem>>, vector<328x24xf32>
    %143 = arith.truncf %142 : vector<328x24xf32> to vector<328x24xbf16>
    %c2_128 = arith.constant 2 : index
    %c0_129 = arith.constant 0 : index
    %c0_130 = arith.constant 0 : index
    %144 = vector.load %arg7[%c2_128, %c0_129, %c0_130] : memref<6x24x128xbf16, #tpu.memory_space<vmem>>, vector<1x24x128xbf16>
    %145 = vector.shape_cast %144 : vector<1x24x128xbf16> to vector<24x128xbf16>
    %cst_131 = arith.constant dense<0.000000e+00> : vector<328x128xf32>
    %146 = tpu.matmul %143, %145, %cst_131 {dimension_numbers = #tpu.dot_dimension_numbers<[1], [0], [0], [1], [0, 0, 1, 1], [], []>} : vector<328x24xbf16>, vector<24x128xbf16>, vector<328x128xf32> -> vector<328x128xf32>
    %147 = arith.addf %141, %146 : vector<328x128xf32>
    %c6_132 = arith.constant 6 : index
    %c0_133 = arith.constant 0 : index
    %148 = vector.load %arg14[%c6_132, %c0_133] : memref<376x24xf32, #tpu.memory_space<vmem>>, vector<328x24xf32>
    %149 = arith.truncf %148 : vector<328x24xf32> to vector<328x24xbf16>
    %c3_134 = arith.constant 3 : index
    %c0_135 = arith.constant 0 : index
    %c0_136 = arith.constant 0 : index
    %150 = vector.load %arg7[%c3_134, %c0_135, %c0_136] : memref<6x24x128xbf16, #tpu.memory_space<vmem>>, vector<1x24x128xbf16>
    %151 = vector.shape_cast %150 : vector<1x24x128xbf16> to vector<24x128xbf16>
    %cst_137 = arith.constant dense<0.000000e+00> : vector<328x128xf32>
    %152 = tpu.matmul %149, %151, %cst_137 {dimension_numbers = #tpu.dot_dimension_numbers<[1], [0], [0], [1], [0, 0, 1, 1], [], []>} : vector<328x24xbf16>, vector<24x128xbf16>, vector<328x128xf32> -> vector<328x128xf32>
    %153 = arith.addf %147, %152 : vector<328x128xf32>
    %c24_138 = arith.constant 24 : index
    %c0_139 = arith.constant 0 : index
    %154 = vector.load %arg14[%c24_138, %c0_139] : memref<376x24xf32, #tpu.memory_space<vmem>>, vector<328x24xf32>
    %155 = arith.truncf %154 : vector<328x24xf32> to vector<328x24xbf16>
    %c4_140 = arith.constant 4 : index
    %c0_141 = arith.constant 0 : index
    %c0_142 = arith.constant 0 : index
    %156 = vector.load %arg7[%c4_140, %c0_141, %c0_142] : memref<6x24x128xbf16, #tpu.memory_space<vmem>>, vector<1x24x128xbf16>
    %157 = vector.shape_cast %156 : vector<1x24x128xbf16> to vector<24x128xbf16>
    %cst_143 = arith.constant dense<0.000000e+00> : vector<328x128xf32>
    %158 = tpu.matmul %155, %157, %cst_143 {dimension_numbers = #tpu.dot_dimension_numbers<[1], [0], [0], [1], [0, 0, 1, 1], [], []>} : vector<328x24xbf16>, vector<24x128xbf16>, vector<328x128xf32> -> vector<328x128xf32>
    %159 = arith.addf %153, %158 : vector<328x128xf32>
    %c42_144 = arith.constant 42 : index
    %c0_145 = arith.constant 0 : index
    %160 = vector.load %arg14[%c42_144, %c0_145] : memref<376x24xf32, #tpu.memory_space<vmem>>, vector<328x24xf32>
    %161 = arith.truncf %160 : vector<328x24xf32> to vector<328x24xbf16>
    %c5_146 = arith.constant 5 : index
    %c0_147 = arith.constant 0 : index
    %c0_148 = arith.constant 0 : index
    %162 = vector.load %arg7[%c5_146, %c0_147, %c0_148] : memref<6x24x128xbf16, #tpu.memory_space<vmem>>, vector<1x24x128xbf16>
    %163 = vector.shape_cast %162 : vector<1x24x128xbf16> to vector<24x128xbf16>
    %cst_149 = arith.constant dense<0.000000e+00> : vector<328x128xf32>
    %164 = tpu.matmul %161, %163, %cst_149 {dimension_numbers = #tpu.dot_dimension_numbers<[1], [0], [0], [1], [0, 0, 1, 1], [], []>} : vector<328x24xbf16>, vector<24x128xbf16>, vector<328x128xf32> -> vector<328x128xf32>
    %165 = arith.addf %159, %164 : vector<328x128xf32>
    %c23_150 = arith.constant 23 : index
    %c0_151 = arith.constant 0 : index
    %166 = vector.load %arg16[%c23_150, %c0_151] : memref<376x24xf32, #tpu.memory_space<vmem>>, vector<328x24xf32>
    %167 = arith.truncf %166 : vector<328x24xf32> to vector<328x24xbf16>
    %c0_152 = arith.constant 0 : index
    %c0_153 = arith.constant 0 : index
    %c0_154 = arith.constant 0 : index
    %168 = vector.load %arg8[%c0_152, %c0_153, %c0_154] : memref<6x24x128xbf16, #tpu.memory_space<vmem>>, vector<1x24x128xbf16>
    %169 = vector.shape_cast %168 : vector<1x24x128xbf16> to vector<24x128xbf16>
    %cst_155 = arith.constant dense<0.000000e+00> : vector<328x128xf32>
    %170 = tpu.matmul %167, %169, %cst_155 {dimension_numbers = #tpu.dot_dimension_numbers<[1], [0], [0], [1], [0, 0, 1, 1], [], []>} : vector<328x24xbf16>, vector<24x128xbf16>, vector<328x128xf32> -> vector<328x128xf32>
    %171 = arith.addf %165, %170 : vector<328x128xf32>
    %c24_156 = arith.constant 24 : index
    %c0_157 = arith.constant 0 : index
    %172 = vector.load %arg16[%c24_156, %c0_157] : memref<376x24xf32, #tpu.memory_space<vmem>>, vector<328x24xf32>
    %173 = arith.truncf %172 : vector<328x24xf32> to vector<328x24xbf16>
    %c1_158 = arith.constant 1 : index
    %c0_159 = arith.constant 0 : index
    %c0_160 = arith.constant 0 : index
    %174 = vector.load %arg8[%c1_158, %c0_159, %c0_160] : memref<6x24x128xbf16, #tpu.memory_space<vmem>>, vector<1x24x128xbf16>
    %175 = vector.shape_cast %174 : vector<1x24x128xbf16> to vector<24x128xbf16>
    %cst_161 = arith.constant dense<0.000000e+00> : vector<328x128xf32>
    %176 = tpu.matmul %173, %175, %cst_161 {dimension_numbers = #tpu.dot_dimension_numbers<[1], [0], [0], [1], [0, 0, 1, 1], [], []>} : vector<328x24xbf16>, vector<24x128xbf16>, vector<328x128xf32> -> vector<328x128xf32>
    %177 = arith.addf %171, %176 : vector<328x128xf32>
    %c25_162 = arith.constant 25 : index
    %c0_163 = arith.constant 0 : index
    %178 = vector.load %arg16[%c25_162, %c0_163] : memref<376x24xf32, #tpu.memory_space<vmem>>, vector<328x24xf32>
    %179 = arith.truncf %178 : vector<328x24xf32> to vector<328x24xbf16>
    %c2_164 = arith.constant 2 : index
    %c0_165 = arith.constant 0 : index
    %c0_166 = arith.constant 0 : index
    %180 = vector.load %arg8[%c2_164, %c0_165, %c0_166] : memref<6x24x128xbf16, #tpu.memory_space<vmem>>, vector<1x24x128xbf16>
    %181 = vector.shape_cast %180 : vector<1x24x128xbf16> to vector<24x128xbf16>
    %cst_167 = arith.constant dense<0.000000e+00> : vector<328x128xf32>
    %182 = tpu.matmul %179, %181, %cst_167 {dimension_numbers = #tpu.dot_dimension_numbers<[1], [0], [0], [1], [0, 0, 1, 1], [], []>} : vector<328x24xbf16>, vector<24x128xbf16>, vector<328x128xf32> -> vector<328x128xf32>
    %183 = arith.addf %177, %182 : vector<328x128xf32>
    %c6_168 = arith.constant 6 : index
    %c0_169 = arith.constant 0 : index
    %184 = vector.load %arg16[%c6_168, %c0_169] : memref<376x24xf32, #tpu.memory_space<vmem>>, vector<328x24xf32>
    %185 = arith.truncf %184 : vector<328x24xf32> to vector<328x24xbf16>
    %c3_170 = arith.constant 3 : index
    %c0_171 = arith.constant 0 : index
    %c0_172 = arith.constant 0 : index
    %186 = vector.load %arg8[%c3_170, %c0_171, %c0_172] : memref<6x24x128xbf16, #tpu.memory_space<vmem>>, vector<1x24x128xbf16>
    %187 = vector.shape_cast %186 : vector<1x24x128xbf16> to vector<24x128xbf16>
    %cst_173 = arith.constant dense<0.000000e+00> : vector<328x128xf32>
    %188 = tpu.matmul %185, %187, %cst_173 {dimension_numbers = #tpu.dot_dimension_numbers<[1], [0], [0], [1], [0, 0, 1, 1], [], []>} : vector<328x24xbf16>, vector<24x128xbf16>, vector<328x128xf32> -> vector<328x128xf32>
    %189 = arith.addf %183, %188 : vector<328x128xf32>
    %c24_174 = arith.constant 24 : index
    %c0_175 = arith.constant 0 : index
    %190 = vector.load %arg16[%c24_174, %c0_175] : memref<376x24xf32, #tpu.memory_space<vmem>>, vector<328x24xf32>
    %191 = arith.truncf %190 : vector<328x24xf32> to vector<328x24xbf16>
    %c4_176 = arith.constant 4 : index
    %c0_177 = arith.constant 0 : index
    %c0_178 = arith.constant 0 : index
    %192 = vector.load %arg8[%c4_176, %c0_177, %c0_178] : memref<6x24x128xbf16, #tpu.memory_space<vmem>>, vector<1x24x128xbf16>
    %193 = vector.shape_cast %192 : vector<1x24x128xbf16> to vector<24x128xbf16>
    %cst_179 = arith.constant dense<0.000000e+00> : vector<328x128xf32>
    %194 = tpu.matmul %191, %193, %cst_179 {dimension_numbers = #tpu.dot_dimension_numbers<[1], [0], [0], [1], [0, 0, 1, 1], [], []>} : vector<328x24xbf16>, vector<24x128xbf16>, vector<328x128xf32> -> vector<328x128xf32>
    %195 = arith.addf %189, %194 : vector<328x128xf32>
    %c42_180 = arith.constant 42 : index
    %c0_181 = arith.constant 0 : index
    %196 = vector.load %arg16[%c42_180, %c0_181] : memref<376x24xf32, #tpu.memory_space<vmem>>, vector<328x24xf32>
    %197 = arith.truncf %196 : vector<328x24xf32> to vector<328x24xbf16>
    %c5_182 = arith.constant 5 : index
    %c0_183 = arith.constant 0 : index
    %c0_184 = arith.constant 0 : index
    %198 = vector.load %arg8[%c5_182, %c0_183, %c0_184] : memref<6x24x128xbf16, #tpu.memory_space<vmem>>, vector<1x24x128xbf16>
    %199 = vector.shape_cast %198 : vector<1x24x128xbf16> to vector<24x128xbf16>
    %cst_185 = arith.constant dense<0.000000e+00> : vector<328x128xf32>
    %200 = tpu.matmul %197, %199, %cst_185 {dimension_numbers = #tpu.dot_dimension_numbers<[1], [0], [0], [1], [0, 0, 1, 1], [], []>} : vector<328x24xbf16>, vector<24x128xbf16>, vector<328x128xf32> -> vector<328x128xf32>
    %201 = arith.addf %195, %200 : vector<328x128xf32>
    %c0_186 = arith.constant 0 : index
    %c0_187 = arith.constant 0 : index
    %202 = vector.load %arg12[%c0_186, %c0_187] : memref<1x128xf32, #tpu.memory_space<vmem>>, vector<1x128xf32>
    %203 = vector.broadcast %202 : vector<1x128xf32> to vector<328x128xf32>
    %204 = arith.addf %201, %203 : vector<328x128xf32>
    %cst_188 = arith.constant 0.000000e+00 : f32
    %205 = vector.broadcast %cst_188 : f32 to vector<328x128xf32>
    %206 = arith.maximumf %204, %205 : vector<328x128xf32>
    %c0_189 = arith.constant 0 : index
    %c0_190 = arith.constant 0 : index
    %c0_191 = arith.constant 0 : index
    %207 = vector.load %arg13[%c0_189, %c0_190, %c0_191] : memref<1x328x128xf32, #tpu.memory_space<vmem>>, vector<1x328x128xf32>
    %208 = vector.shape_cast %207 : vector<1x328x128xf32> to vector<328x128xf32>
    %209 = vector.shape_cast %206 : vector<328x128xf32> to vector<1x328x128xf32>
    tpu.vector_store %arg13[%c0_189, %c0_190, %c0_191], %209 {strides = array<i32>} : memref<1x328x128xf32, #tpu.memory_space<vmem>>, vector<1x328x128xf32>,
    return
  }
  func.func @transform_0(%arg0: i32) -> (i32, i32, i32) {
    %c0_i32 = arith.constant 0 : i32
    %c0_i32_0 = arith.constant 0 : i32
    %c0_i32_1 = arith.constant 0 : i32
    return %arg0, %c0_i32, %c0_i32_0 : i32, i32, i32
  }
  func.func @transform_1(%arg0: i32) -> (i32, i32) {
    %c0_i32 = arith.constant 0 : i32
    %c0_i32_0 = arith.constant 0 : i32
    %c0_i32_1 = arith.constant 0 : i32
    return %c0_i32, %c0_i32_0 : i32, i32
  }
  func.func @transform_2(%arg0: i32) -> (i32, i32) {
    %c0_i32 = arith.constant 0 : i32
    %c0_i32_0 = arith.constant 0 : i32
    %c0_i32_1 = arith.constant 0 : i32
    return %c0_i32, %c0_i32_0 : i32, i32
  }
  func.func @transform_3(%arg0: i32) -> (i32, i32) {
    %c0_i32 = arith.constant 0 : i32
    %c0_i32_0 = arith.constant 0 : i32
    %c0_i32_1 = arith.constant 0 : i32
    return %c0_i32, %c0_i32_0 : i32, i32
  }
  func.func @transform_4(%arg0: i32) -> (i32, i32, i32) {
    %c0_i32 = arith.constant 0 : i32
    %c0_i32_0 = arith.constant 0 : i32
    %c0_i32_1 = arith.constant 0 : i32
    %c0_i32_2 = arith.constant 0 : i32
    return %c0_i32, %c0_i32_0, %c0_i32_1 : i32, i32, i32
  }
  func.func @transform_5(%arg0: i32) -> (i32, i32, i32) {
    %c0_i32 = arith.constant 0 : i32
    %c0_i32_0 = arith.constant 0 : i32
    %c0_i32_1 = arith.constant 0 : i32
    %c0_i32_2 = arith.constant 0 : i32
    return %c0_i32, %c0_i32_0, %c0_i32_1 : i32, i32, i32
  }
  func.func @transform_6(%arg0: i32) -> (i32, i32, i32) {
    %c0_i32 = arith.constant 0 : i32
    %c0_i32_0 = arith.constant 0 : i32
    %c0_i32_1 = arith.constant 0 : i32
    %c0_i32_2 = arith.constant 0 : i32
    return %c0_i32, %c0_i32_0, %c0_i32_1 : i32, i32, i32
  }
  func.func @transform_7(%arg0: i32) -> (i32, i32, i32) {
    %c0_i32 = arith.constant 0 : i32
    %c0_i32_0 = arith.constant 0 : i32
    %c0_i32_1 = arith.constant 0 : i32
    %c0_i32_2 = arith.constant 0 : i32
    return %c0_i32, %c0_i32_0, %c0_i32_1 : i32, i32, i32
  }
  func.func @transform_8(%arg0: i32) -> (i32, i32) {
    %c0_i32 = arith.constant 0 : i32
    %c0_i32_0 = arith.constant 0 : i32
    %c0_i32_1 = arith.constant 0 : i32
    return %c0_i32, %c0_i32_0 : i32, i32
  }
  func.func @transform_9(%arg0: i32) -> (i32, i32) {
    %c0_i32 = arith.constant 0 : i32
    %c0_i32_0 = arith.constant 0 : i32
    %c0_i32_1 = arith.constant 0 : i32
    return %c0_i32, %c0_i32_0 : i32, i32
  }
  func.func @transform_10(%arg0: i32) -> (i32, i32) {
    %c0_i32 = arith.constant 0 : i32
    %c0_i32_0 = arith.constant 0 : i32
    %c0_i32_1 = arith.constant 0 : i32
    return %c0_i32, %c0_i32_0 : i32, i32
  }
  func.func @transform_11(%arg0: i32) -> (i32, i32) {
    %c0_i32 = arith.constant 0 : i32
    %c0_i32_0 = arith.constant 0 : i32
    %c0_i32_1 = arith.constant 0 : i32
    return %c0_i32, %c0_i32_0 : i32, i32
  }
  func.func @transform_12(%arg0: i32) -> (i32, i32, i32) {
    %c0_i32 = arith.constant 0 : i32
    %c0_i32_0 = arith.constant 0 : i32
    %c0_i32_1 = arith.constant 0 : i32
    return %arg0, %c0_i32, %c0_i32_0 : i32, i32, i32
  }
}

</mosaic_0001>

<llo_original>
// kernel: inception_e_forward.1
$region0: #{inception_e_forward.1}
  #allocation0 [shape = 'u32[]', space=smem, size = 0x4, offset = 0x4, fixed_abs, tag = 'smem constant byte address 0x4 - core index']
  #allocation1 [shape = 'u32[144,128]{1,0:T(1,128)}', space=vmem, size = 0x12000, scoped, tag = 'internal scratch']
  #allocation2 [shape = 'f32[376,24]{1,0:T(8,128)}', space=vmem, size = 0x2f000, scoped, tag = 'scratch operand']
  #allocation3 [shape = 'f32[376,28]{1,0:T(8,128)}', space=vmem, size = 0x2f000, scoped, tag = 'scratch operand']
  #allocation4 [shape = 'f32[376,24]{1,0:T(8,128)}', space=vmem, size = 0x2f000, scoped, tag = 'scratch operand']
  %s0 = inlined_call_operand.vmem [shape: f32[2,376,4], index: 0, kind: input, shape index: {}]
  %s1 = inlined_call_operand.vmem [shape: f32[328,1], index: 1, kind: input, shape index: {}]
  %s2 = inlined_call_operand.vmem [shape: bf16[4,24], index: 2, kind: input, shape index: {}]
  %s3 = inlined_call_operand.vmem [shape: bf16[4,28], index: 3, kind: input, shape index: {}]
  %s4 = inlined_call_operand.vmem [shape: bf16[9,28,24], index: 4, kind: input, shape index: {}]
  %s5 = inlined_call_operand.vmem [shape: bf16[2,4,128], index: 5, kind: input, shape index: {}]
  %s6 = inlined_call_operand.vmem [shape: bf16[6,24,128], index: 6, kind: input, shape index: {}]
  %s7 = inlined_call_operand.vmem [shape: bf16[6,24,128], index: 7, kind: input, shape index: {}]
  %s8 = inlined_call_operand.vmem [shape: f32[1,24], index: 8, kind: input, shape index: {}]
  %s9 = inlined_call_operand.vmem [shape: f32[1,28], index: 9, kind: input, shape index: {}]
  %s10 = inlined_call_operand.vmem [shape: f32[1,24], index: 10, kind: input, shape index: {}]
  %s11 = inlined_call_operand.vmem [shape: f32[1,128], index: 11, kind: input, shape index: {}]
  %s12 = inlined_call_operand.vmem [shape: f32[2,328,128], index: 12, kind: output, shape index: {}]
  %s13 = sld [smem:[#allocation0]]
  $region81: #{inception_e_forward.1} parent=0
    _
  %s15 = ssub.s32 1, %s13
  %s16 = scalar_select 0, %s15, %s13
  loop: start=0, step=1, limit=4
  $region2: #{inception_e_forward.1} parent=0 // loop_pre_header
    _
  $region3: #{inception_e_forward.1} parent=0 // loop_header
    %s18 = sphi 0, %s22
    %p19 = scmp.ge.s32.totalorder %s18, 4
    %s28 = sphi 0, %s30
    %s31 = sphi 0, %s28
    %s32 = sphi 0, %s31
    %s48 = sphi 0, %s32
    %s52 = sphi 0, %s52
    %s54 = sphi 0, %s52
    %s55 = sphi 0, %s54
    %s69 = sphi 0, %s55
    %s73 = sphi 0, %s73
    %s75 = sphi 0, %s73
    %s76 = sphi 0, %s75
    %s90 = sphi 0, %s76
    %s94 = sphi 0, %s94
    %s96 = sphi 0, %s94
    %s97 = sphi 0, %s96
    %s111 = sphi 0, %s97
    %s115 = sphi 0, %s115
    %s117 = sphi 0, %s115
    %s118 = sphi 0, %s117
    %s132 = sphi 0, %s118
    %s136 = sphi 0, %s136
    %s138 = sphi 0, %s136
    %s139 = sphi 0, %s138
    %s153 = sphi 0, %s139
    %s157 = sphi 0, %s157
    %s159 = sphi 0, %s157
    %s160 = sphi 0, %s159
    %s174 = sphi 0, %s160
    %s178 = sphi 0, %s178
    %s180 = sphi 0, %s178
    %s181 = sphi 0, %s180
    %s195 = sphi 0, %s181
    %s199 = sphi 0, %s199
    %s201 = sphi 0, %s199
    %s202 = sphi 0, %s201
    %s216 = sphi 0, %s202
    %s220 = sphi 0, %s220
    %s222 = sphi 0, %s220
    %s223 = sphi 0, %s222
    %s237 = sphi 0, %s223
    %s241 = sphi 0, %s241
    %s243 = sphi 0, %s241
    %s244 = sphi 0, %s243
    %s258 = sphi 0, %s244
    %s262 = sphi 0, %s262
    %s264 = sphi 0, %s262
    %s265 = sphi 0, %s264
    %s279 = sphi 0, %s265
    %s285 = sphi 0, %s287
    %s288 = sphi 0, %s285
    %s289 = sphi 0, %s288
    %s305 = sphi 0, %s289
  $region4: #{inception_e_forward.1} parent=0 // loop_header_branch
    %21 = sbr.rel (%p19) target = $region8
  $region5: #{inception_e_forward.1} parent=0 // loop_body
    %s23 = ssub.s32 %s18, 1
    %s24 = ssub.s32 %s18, 2
    %s25 = sadd.s32 %s18, 1
    %s26 = ssub.s32 %s18, %s25
    %p27 = scmp.eq.s32.totalorder %s26, 0
    %s29 = sadd.s32 %s28, 1
    %s30 = scalar_select %p27, %s28, %s29
    %p33 = pneg %p27
    %p34 = scmp.eq.s32.totalorder %s18, 1
    %p35 = por %p33, %p34
    %p36 = scmp.ne.s32.totalorder %s28, %s31
    %p37 = scmp.eq.s32.totalorder %s18, 0
    %p38 = por %p36, %p37
    %p39 = scmp.ne.s32.totalorder %s28, %s31
    %p40 = scmp.eq.s32.totalorder %s23, 1
    %p41 = por %p39, %p40
    %p42 = scmp.ne.s32.totalorder %s31, %s32
    %p43 = scmp.eq.s32.totalorder %s23, 0
    %p44 = por %p42, %p43
    %p45 = scmp.ne.s32.totalorder %s31, %s32
    %p46 = scmp.eq.s32.totalorder %s24, 1
    %p47 = por %p45, %p46
    %p49 = scmp.ne.s32.totalorder %s32, %s48
    %p50 = scmp.eq.s32.totalorder %s24, 0
    %p51 = por %p49, %p50
    %s53 = sadd.s32 %s52, 1
    %p56 = scmp.eq.s32.totalorder %s18, 1
    %p57 = scmp.ne.s32.totalorder %s52, %s54
    %p58 = scmp.eq.s32.totalorder %s18, 0
    %p59 = por %p57, %p58
    %p60 = scmp.ne.s32.totalorder %s52, %s54
    %p61 = scmp.eq.s32.totalorder %s23, 1
    %p62 = por %p60, %p61
    %p63 = scmp.ne.s32.totalorder %s54, %s55
    %p64 = scmp.eq.s32.totalorder %s23, 0
    %p65 = por %p63, %p64
    %p66 = scmp.ne.s32.totalorder %s54, %s55
    %p67 = scmp.eq.s32.totalorder %s24, 1
    %p68 = por %p66, %p67
    %p70 = scmp.ne.s32.totalorder %s55, %s69
    %p71 = scmp.eq.s32.totalorder %s24, 0
    %p72 = por %p70, %p71
    %s74 = sadd.s32 %s73, 1
    %p77 = scmp.eq.s32.totalorder %s18, 1
    %p78 = scmp.ne.s32.totalorder %s73, %s75
    %p79 = scmp.eq.s32.totalorder %s18, 0
    %p80 = por %p78, %p79
    %p81 = scmp.ne.s32.totalorder %s73, %s75
    %p82 = scmp.eq.s32.totalorder %s23, 1
    %p83 = por %p81, %p82
    %p84 = scmp.ne.s32.totalorder %s75, %s76
    %p85 = scmp.eq.s32.totalorder %s23, 0
    %p86 = por %p84, %p85
    %p87 = scmp.ne.s32.totalorder %s75, %s76
    %p88 = scmp.eq.s32.totalorder %s24, 1
    %p89 = por %p87, %p88
    %p91 = scmp.ne.s32.totalorder %s76, %s90
    %p92 = scmp.eq.s32.totalorder %s24, 0
    %p93 = por %p91, %p92
    %s95 = sadd.s32 %s94, 1
    %p98 = scmp.eq.s32.totalorder %s18, 1
    %p99 = scmp.ne.s32.totalorder %s94, %s96
    %p100 = scmp.eq.s32.totalorder %s18, 0
    %p101 = por %p99, %p100
    %p102 = scmp.ne.s32.totalorder %s94, %s96
    %p103 = scmp.eq.s32.totalorder %s23, 1
    %p104 = por %p102, %p103
    %p105 = scmp.ne.s32.totalorder %s96, %s97
    %p106 = scmp.eq.s32.totalorder %s23, 0
    %p107 = por %p105, %p106
    %p108 = scmp.ne.s32.totalorder %s96, %s97
    %p109 = scmp.eq.s32.totalorder %s24, 1
    %p110 = por %p108, %p109
    %p112 = scmp.ne.s32.totalorder %s97, %s111
    %p113 = scmp.eq.s32.totalorder %s24, 0
    %p114 = por %p112, %p113
    %s116 = sadd.s32 %s115, 1
    %p119 = scmp.eq.s32.totalorder %s18, 1
    %p120 = scmp.ne.s32.totalorder %s115, %s117
    %p121 = scmp.eq.s32.totalorder %s18, 0
    %p122 = por %p120, %p121
    %p123 = scmp.ne.s32.totalorder %s115, %s117
    %p124 = scmp.eq.s32.totalorder %s23, 1
    %p125 = por %p123, %p124
    %p126 = scmp.ne.s32.totalorder %s117, %s118
    %p127 = scmp.eq.s32.totalorder %s23, 0
    %p128 = por %p126, %p127
    %p129 = scmp.ne.s32.totalorder %s117, %s118
    %p130 = scmp.eq.s32.totalorder %s24, 1
    %p131 = por %p129, %p130
    %p133 = scmp.ne.s32.totalorder %s118, %s132
    %p134 = scmp.eq.s32.totalorder %s24, 0
    %p135 = por %p133, %p134
    %s137 = sadd.s32 %s136, 1
    %p140 = scmp.eq.s32.totalorder %s18, 1
    %p141 = scmp.ne.s32.totalorder %s136, %s138
    %p142 = scmp.eq.s32.totalorder %s18, 0
    %p143 = por %p141, %p142
    %p144 = scmp.ne.s32.totalorder %s136, %s138
    %p145 = scmp.eq.s32.totalorder %s23, 1
    %p146 = por %p144, %p145
    %p147 = scmp.ne.s32.totalorder %s138, %s139
    %p148 = scmp.eq.s32.totalorder %s23, 0
    %p149 = por %p147, %p148
    %p150 = scmp.ne.s32.totalorder %s138, %s139
    %p151 = scmp.eq.s32.totalorder %s24, 1
    %p152 = por %p150, %p151
    %p154 = scmp.ne.s32.totalorder %s139, %s153
    %p155 = scmp.eq.s32.totalorder %s24, 0
    %p156 = por %p154, %p155
    %s158 = sadd.s32 %s157, 1
    %p161 = scmp.eq.s32.totalorder %s18, 1
    %p162 = scmp.ne.s32.totalorder %s157, %s159
    %p163 = scmp.eq.s32.totalorder %s18, 0
    %p164 = por %p162, %p163
    %p165 = scmp.ne.s32.totalorder %s157, %s159
    %p166 = scmp.eq.s32.totalorder %s23, 1
    %p167 = por %p165, %p166
    %p168 = scmp.ne.s32.totalorder %s159, %s160
    %p169 = scmp.eq.s32.totalorder %s23, 0
    %p170 = por %p168, %p169
    %p171 = scmp.ne.s32.totalorder %s159, %s160
    %p172 = scmp.eq.s32.totalorder %s24, 1
    %p173 = por %p171, %p172
    %p175 = scmp.ne.s32.totalorder %s160, %s174
    %p176 = scmp.eq.s32.totalorder %s24, 0
    %p177 = por %p175, %p176
    %s179 = sadd.s32 %s178, 1
    %p182 = scmp.eq.s32.totalorder %s18, 1
    %p183 = scmp.ne.s32.totalorder %s178, %s180
    %p184 = scmp.eq.s32.totalorder %s18, 0
    %p185 = por %p183, %p184
    %p186 = scmp.ne.s32.totalorder %s178, %s180
    %p187 = scmp.eq.s32.totalorder %s23, 1
    %p188 = por %p186, %p187
    %p189 = scmp.ne.s32.totalorder %s180, %s181
    %p190 = scmp.eq.s32.totalorder %s23, 0
    %p191 = por %p189, %p190
    %p192 = scmp.ne.s32.totalorder %s180, %s181
    %p193 = scmp.eq.s32.totalorder %s24, 1
    %p194 = por %p192, %p193
    %p196 = scmp.ne.s32.totalorder %s181, %s195
    %p197 = scmp.eq.s32.totalorder %s24, 0
    %p198 = por %p196, %p197
    %s200 = sadd.s32 %s199, 1
    %p203 = scmp.eq.s32.totalorder %s18, 1
    %p204 = scmp.ne.s32.totalorder %s199, %s201
    %p205 = scmp.eq.s32.totalorder %s18, 0
    %p206 = por %p204, %p205
    %p207 = scmp.ne.s32.totalorder %s199, %s201
    %p208 = scmp.eq.s32.totalorder %s23, 1
    %p209 = por %p207, %p208
    %p210 = scmp.ne.s32.totalorder %s201, %s202
    %p211 = scmp.eq.s32.totalorder %s23, 0
    %p212 = por %p210, %p211
    %p213 = scmp.ne.s32.totalorder %s201, %s202
    %p214 = scmp.eq.s32.totalorder %s24, 1
    %p215 = por %p213, %p214
    %p217 = scmp.ne.s32.totalorder %s202, %s216
    %p218 = scmp.eq.s32.totalorder %s24, 0
    %p219 = por %p217, %p218
    %s221 = sadd.s32 %s220, 1
    %p224 = scmp.eq.s32.totalorder %s18, 1
    %p225 = scmp.ne.s32.totalorder %s220, %s222
    %p226 = scmp.eq.s32.totalorder %s18, 0
    %p227 = por %p225, %p226
    %p228 = scmp.ne.s32.totalorder %s220, %s222
    %p229 = scmp.eq.s32.totalorder %s23, 1
    %p230 = por %p228, %p229
    %p231 = scmp.ne.s32.totalorder %s222, %s223
    %p232 = scmp.eq.s32.totalorder %s23, 0
    %p233 = por %p231, %p232
    %p234 = scmp.ne.s32.totalorder %s222, %s223
    %p235 = scmp.eq.s32.totalorder %s24, 1
    %p236 = por %p234, %p235
    %p238 = scmp.ne.s32.totalorder %s223, %s237
    %p239 = scmp.eq.s32.totalorder %s24, 0
    %p240 = por %p238, %p239
    %s242 = sadd.s32 %s241, 1
    %p245 = scmp.eq.s32.totalorder %s18, 1
    %p246 = scmp.ne.s32.totalorder %s241, %s243
    %p247 = scmp.eq.s32.totalorder %s18, 0
    %p248 = por %p246, %p247
    %p249 = scmp.ne.s32.totalorder %s241, %s243
    %p250 = scmp.eq.s32.totalorder %s23, 1
    %p251 = por %p249, %p250
    %p252 = scmp.ne.s32.totalorder %s243, %s244
    %p253 = scmp.eq.s32.totalorder %s23, 0
    %p254 = por %p252, %p253
    %p255 = scmp.ne.s32.totalorder %s243, %s244
    %p256 = scmp.eq.s32.totalorder %s24, 1
    %p257 = por %p255, %p256
    %p259 = scmp.ne.s32.totalorder %s244, %s258
    %p260 = scmp.eq.s32.totalorder %s24, 0
    %p261 = por %p259, %p260
    %s263 = sadd.s32 %s262, 1
    %p266 = scmp.eq.s32.totalorder %s18, 1
    %p267 = scmp.ne.s32.totalorder %s262, %s264
    %p268 = scmp.eq.s32.totalorder %s18, 0
    %p269 = por %p267, %p268
    %p270 = scmp.ne.s32.totalorder %s262, %s264
    %p271 = scmp.eq.s32.totalorder %s23, 1
    %p272 = por %p270, %p271
    %p273 = scmp.ne.s32.totalorder %s264, %s265
    %p274 = scmp.eq.s32.totalorder %s23, 0
    %p275 = por %p273, %p274
    %p276 = scmp.ne.s32.totalorder %s264, %s265
    %p277 = scmp.eq.s32.totalorder %s24, 1
    %p278 = por %p276, %p277
    %p280 = scmp.ne.s32.totalorder %s265, %s279
    %p281 = scmp.eq.s32.totalorder %s24, 0
    %p282 = por %p280, %p281
    %s283 = ssub.s32 %s18, %s25
    %p284 = scmp.eq.s32.totalorder %s283, 0
    %s286 = sadd.s32 %s285, 1
    %s287 = scalar_select %p284, %s285, %s286
    %p290 = pneg %p284
    %p291 = scmp.eq.s32.totalorder %s18, 1
    %p292 = por %p290, %p291
    %p293 = scmp.ne.s32.totalorder %s285, %s288
    %p294 = scmp.eq.s32.totalorder %s18, 0
    %p295 = por %p293, %p294
    %p296 = scmp.ne.s32.totalorder %s285, %s288
    %p297 = scmp.eq.s32.totalorder %s23, 1
    %p298 = por %p296, %p297
    %p299 = scmp.ne.s32.totalorder %s288, %s289
    %p300 = scmp.eq.s32.totalorder %s23, 0
    %p301 = por %p299, %p300
    %p302 = scmp.ne.s32.totalorder %s288, %s289
    %p303 = scmp.eq.s32.totalorder %s24, 1
    %p304 = por %p302, %p303
    %p306 = scmp.ne.s32.totalorder %s289, %s305
    %p307 = scmp.eq.s32.totalorder %s24, 0
    %p308 = por %p306, %p307
    %p309 = scmp.le.s32.totalorder 1, %s18
    %p310 = scmp.lt.s32.totalorder %s18, 3
    %p311 = pnand %p309, %p310
    %p312 = pneg %p311
    // Predicated region
    $region9: #{inception_e_forward.1} parent=5 // pred_check
      _
    $region10: #{inception_e_forward.1} parent=5 // pred_check_branch
      %314 = sbr.rel (%p311) target = $region12
    $region11: #{inception_e_forward.1} parent=5 // pred_region
      %s315 = ssub.s32 %s18, 1
      // Predicated region
      $region13: #{inception_e_forward.1} parent=11 // pred_check
        %p316 = pneg %p65
      $region14: #{inception_e_forward.1} parent=11 // pred_check_branch
        %318 = sbr.rel (%p316) target = $region16
      $region15: #{inception_e_forward.1} parent=11 // pred_region
        _
      $region16: #{inception_e_forward.1} parent=11 // pred_fallthru
        _
      // Predicated region
      $region17: #{inception_e_forward.1} parent=11 // pred_check
        %p319 = pneg %p86
      $region18: #{inception_e_forward.1} parent=11 // pred_check_branch
        %321 = sbr.rel (%p319) target = $region20
      $region19: #{inception_e_forward.1} parent=11 // pred_region
        _
      $region20: #{inception_e_forward.1} parent=11 // pred_fallthru
        _
      // Predicated region
      $region21: #{inception_e_forward.1} parent=11 // pred_check
        %p322 = pneg %p107
      $region22: #{inception_e_forward.1} parent=11 // pred_check_branch
        %324 = sbr.rel (%p322) target = $region24
      $region23: #{inception_e_forward.1} parent=11 // pred_region
        _
      $region24: #{inception_e_forward.1} parent=11 // pred_fallthru
        _
      // Predicated region
      $region25: #{inception_e_forward.1} parent=11 // pred_check
        %p325 = pneg %p128
      $region26: #{inception_e_forward.1} parent=11 // pred_check_branch
        %327 = sbr.rel (%p325) target = $region28
      $region27: #{inception_e_forward.1} parent=11 // pred_region
        _
      $region28: #{inception_e_forward.1} parent=11 // pred_fallthru
        _
      // Predicated region
      $region29: #{inception_e_forward.1} parent=11 // pred_check
        %p328 = pneg %p149
      $region30: #{inception_e_forward.1} parent=11 // pred_check_branch
        %330 = sbr.rel (%p328) target = $region32
      $region31: #{inception_e_forward.1} parent=11 // pred_region
        _
      $region32: #{inception_e_forward.1} parent=11 // pred_fallthru
        _
      // Predicated region
      $region33: #{inception_e_forward.1} parent=11 // pred_check
        %p331 = pneg %p170
      $region34: #{inception_e_forward.1} parent=11 // pred_check_branch
        %333 = sbr.rel (%p331) target = $region36
      $region35: #{inception_e_forward.1} parent=11 // pred_region
        _
      $region36: #{inception_e_forward.1} parent=11 // pred_fallthru
        _
      // Predicated region
      $region37: #{inception_e_forward.1} parent=11 // pred_check
        %p334 = pneg %p191
      $region38: #{inception_e_forward.1} parent=11 // pred_check_branch
        %336 = sbr.rel (%p334) target = $region40
      $region39: #{inception_e_forward.1} parent=11 // pred_region
        _
      $region40: #{inception_e_forward.1} parent=11 // pred_fallthru
        _
      // Predicated region
      $region41: #{inception_e_forward.1} parent=11 // pred_check
        %p337 = pneg %p212
      $region42: #{inception_e_forward.1} parent=11 // pred_check_branch
        %339 = sbr.rel (%p337) target = $region44
      $region43: #{inception_e_forward.1} parent=11 // pred_region
        _
      $region44: #{inception_e_forward.1} parent=11 // pred_fallthru
        _
      // Predicated region
      $region45: #{inception_e_forward.1} parent=11 // pred_check
        %p340 = pneg %p233
      $region46: #{inception_e_forward.1} parent=11 // pred_check_branch
        %342 = sbr.rel (%p340) target = $region48
      $region47: #{inception_e_forward.1} parent=11 // pred_region
        _
      $region48: #{inception_e_forward.1} parent=11 // pred_fallthru
        _
      // Predicated region
      $region49: #{inception_e_forward.1} parent=11 // pred_check
        %p343 = pneg %p254
      $region50: #{inception_e_forward.1} parent=11 // pred_check_branch
        %345 = sbr.rel (%p343) target = $region52
      $region51: #{inception_e_forward.1} parent=11 // pred_region
        _
      $region52: #{inception_e_forward.1} parent=11 // pred_fallthru
        _
      // Predicated region
      $region53: #{inception_e_forward.1} parent=11 // pred_check
        %p346 = pneg %p275
      $region54: #{inception_e_forward.1} parent=11 // pred_check_branch
        %348 = sbr.rel (%p346) target = $region56
      $region55: #{inception_e_forward.1} parent=11 // pred_region
        _
      $region56: #{inception_e_forward.1} parent=11 // pred_fallthru
        _
    $region12: #{inception_e_forward.1} parent=5 // pred_fallthru
      _
    %p349 = scmp.lt.s32.totalorder %s18, 2
    // Predicated region
    $region57: #{inception_e_forward.1} parent=5 // pred_check
      %p350 = pneg %p349
    $region58: #{inception_e_forward.1} parent=5 // pred_check_branch
      %352 = sbr.rel (%p350) target = $region60
    $region59: #{inception_e_forward.1} parent=5 // pred_region
      // Predicated region
      $region61: #{inception_e_forward.1} parent=59 // pred_check
        %p353 = pneg %p38
      $region62: #{inception_e_forward.1} parent=59 // pred_check_branch
        %355 = sbr.rel (%p353) target = $region64
      $region63: #{inception_e_forward.1} parent=59 // pred_region
        %p356 = scmp.lt.s32.totalorder %s18, 1
        %s357 = scalar_select %p356, %s18, 1
        %s358 = smul.addr %s357, 47
        %s359 = smul.addr %s358, 8
        %s360 = scalar_lea.vmem %s0, %s359
      $region64: #{inception_e_forward.1} parent=59 // pred_fallthru
        _
    $region60: #{inception_e_forward.1} parent=5 // pred_fallthru
      _
    %p361 = scmp.le.s32.totalorder 1, %s18
    %p362 = scmp.lt.s32.totalorder %s18, 3
    %p363 = pnand %p361, %p362
    %p364 = pneg %p363
    // Predicated region
    $region65: #{inception_e_forward.1} parent=5 // pred_check
      _
    $region66: #{inception_e_forward.1} parent=5 // pred_check_branch
      %366 = sbr.rel (%p363) target = $region68
    $region67: #{inception_e_forward.1} parent=5 // pred_region
      %s367 = ssub.s32 %s18, 1
      %p368 = scmp.lt.s32.totalorder %s23, 1
      %s369 = scalar_select %p368, %s23, 1
      %s370 = smul.addr %s369, 47
      %s371 = smul.addr %s370, 8
      %s372 = scalar_lea.vmem %s0, %s371
      %p373 = pneg %p44
      %p374 = pneg %p41
      %p375 = pneg %p65
      %p376 = pneg %p62
      %p377 = pneg %p86
      %p378 = pneg %p83
      %p379 = pneg %p107
      %p380 = pneg %p104
      %p381 = pneg %p128
      %p382 = pneg %p125
      %p383 = pneg %p149
      %p384 = pneg %p146
      %p385 = pneg %p170
      %p386 = pneg %p167
      %p387 = pneg %p191
      %p388 = pneg %p188
      %p389 = pneg %p212
      %p390 = pneg %p209
      %p391 = pneg %p233
      %p392 = pneg %p230
      %p393 = pneg %p254
      %p394 = pneg %p251
      %p395 = pneg %p275
      %p396 = pneg %p272
      %p397 = pneg %p301
      %p398 = pneg %p298
      %p399 = scmp.lt.s32.totalorder %s23, 1
      %s400 = scalar_select %p399, %s23, 1
      %s401 = smul.addr %s400, 41
      %s402 = smul.addr %s401, 8
      %s403 = scalar_lea.vmem %s12, %s402
      %p404 = scmp.lt.s32.totalorder %s23, 1
      %s405 = scalar_select %p404, %s23, 1
      %s406 = smul.addr %s405, 47
      %s407 = smul.addr %s406, 8
      %s408 = scalar_lea.vmem %s0, %s407
      %p409 = scmp.lt.s32.totalorder %s23, 1
      %s410 = scalar_select %p409, %s23, 1
      %s411 = smul.addr %s410, 41
      %s412 = smul.addr %s411, 8
      %s413 = scalar_lea.vmem %s12, %s412
      %v415 = vld [vmem:[%s1] sm:$0xff]
      %v416 = vld [vmem:[%s1 + $0x8] sm:$0xff]
      %v417 = vld [vmem:[%s1 + $0x10] sm:$0xff]
      %v418 = vld [vmem:[%s1 + $0x18] sm:$0xff]
      %v419 = vld [vmem:[%s1 + $0x20] sm:$0xff]
      %v420 = vld [vmem:[%s1 + $0x28] sm:$0xff]
      %v421 = vld [vmem:[%s1 + $0x30] sm:$0xff]
      %v422 = vld [vmem:[%s1 + $0x38] sm:$0xff]
      %v423 = vld [vmem:[%s1 + $0x40] sm:$0xff]
      %v424 = vld [vmem:[%s1 + $0x48] sm:$0xff]
      %v425 = vld [vmem:[%s1 + $0x50] sm:$0xff]
      %v426 = vld [vmem:[%s1 + $0x58] sm:$0xff]
      %v427 = vld [vmem:[%s1 + $0x60] sm:$0xff]
      %v428 = vld [vmem:[%s1 + $0x68] sm:$0xff]
      %v429 = vld [vmem:[%s1 + $0x70] sm:$0xff]
      %v430 = vld [vmem:[%s1 + $0x78] sm:$0xff]
      %v431 = vld [vmem:[%s1 + $0x80] sm:$0xff]
      %v432 = vld [vmem:[%s1 + $0x88] sm:$0xff]
      %v433 = vld [vmem:[%s1 + $0x90] sm:$0xff]
      %v434 = vld [vmem:[%s1 + $0x98] sm:$0xff]
      %v435 = vld [vmem:[%s1 + $0xa0] sm:$0xff]
      %v436 = vld [vmem:[%s1 + $0xa8] sm:$0xff]
      %v437 = vld [vmem:[%s1 + $0xb0] sm:$0xff]
      %v438 = vld [vmem:[%s1 + $0xb8] sm:$0xff]
      %v439 = vld [vmem:[%s1 + $0xc0] sm:$0xff]
      %v440 = vld [vmem:[%s1 + $0xc8] sm:$0xff]
      %v441 = vld [vmem:[%s1 + $0xd0] sm:$0xff]
      %v442 = vld [vmem:[%s1 + $0xd8] sm:$0xff]
      %v443 = vld [vmem:[%s1 + $0xe0] sm:$0xff]
      %v444 = vld [vmem:[%s1 + $0xe8] sm:$0xff]
      %v445 = vld [vmem:[%s1 + $0xf0] sm:$0xff]
      %v446 = vld [vmem:[%s1 + $0xf8] sm:$0xff]
      %v447 = vld [vmem:[%s1 + $0x100] sm:$0xff]
      %v448 = vld [vmem:[%s1 + $0x108] sm:$0xff]
      %v449 = vld [vmem:[%s1 + $0x110] sm:$0xff]
      %v450 = vld [vmem:[%s1 + $0x118] sm:$0xff]
      %v451 = vld [vmem:[%s1 + $0x120] sm:$0xff]
      %v452 = vld [vmem:[%s1 + $0x128] sm:$0xff]
      %v453 = vld [vmem:[%s1 + $0x130] sm:$0xff]
      %v454 = vld [vmem:[%s1 + $0x138] sm:$0xff]
      %v455 = vld [vmem:[%s1 + $0x140] sm:$0xff]
      %v456 = vld [vmem:[%s408 + $0x18] sm:$0xff]
      %v457 = vld [vmem:[%s408 + $0x20] sm:$0xff]
      %v458 = vld [vmem:[%s408 + $0x28] sm:$0xff]
      %v459 = vld [vmem:[%s408 + $0x30] sm:$0xff]
      %v460 = vld [vmem:[%s408 + $0x38] sm:$0xff]
      %v461 = vld [vmem:[%s408 + $0x40] sm:$0xff]
      %v462 = vld [vmem:[%s408 + $0x48] sm:$0xff]
      %v463 = vld [vmem:[%s408 + $0x50] sm:$0xff]
      %v464 = vld [vmem:[%s408 + $0x58] sm:$0xff]
      %v465 = vld [vmem:[%s408 + $0x60] sm:$0xff]
      %v466 = vld [vmem:[%s408 + $0x68] sm:$0xff]
      %v467 = vld [vmem:[%s408 + $0x70] sm:$0xff]
      %v468 = vld [vmem:[%s408 + $0x78] sm:$0xff]
      %v469 = vld [vmem:[%s408 + $0x80] sm:$0xff]
      %v470 = vld [vmem:[%s408 + $0x88] sm:$0xff]
      %v471 = vld [vmem:[%s408 + $0x90] sm:$0xff]
      %v472 = vld [vmem:[%s408 + $0x98] sm:$0xff]
      %v473 = vld [vmem:[%s408 + $0xa0] sm:$0xff]
      %v474 = vld [vmem:[%s408 + $0xa8] sm:$0xff]
      %v475 = vld [vmem:[%s408 + $0xb0] sm:$0xff]
      %v476 = vld [vmem:[%s408 + $0xb8] sm:$0xff]
      %v477 = vld [vmem:[%s408 + $0xc0] sm:$0xff]
      %v478 = vld [vmem:[%s408 + $0xc8] sm:$0xff]
      %v479 = vld [vmem:[%s408 + $0xd0] sm:$0xff]
      %v480 = vld [vmem:[%s408 + $0xd8] sm:$0xff]
      %v481 = vld [vmem:[%s408 + $0xe0] sm:$0xff]
      %v482 = vld [vmem:[%s408 + $0xe8] sm:$0xff]
      %v483 = vld [vmem:[%s408 + $0xf0] sm:$0xff]
      %v484 = vld [vmem:[%s408 + $0xf8] sm:$0xff]
      %v485 = vld [vmem:[%s408 + $0x100] sm:$0xff]
      %v486 = vld [vmem:[%s408 + $0x108] sm:$0xff]
      %v487 = vld [vmem:[%s408 + $0x110] sm:$0xff]
      %v488 = vld [vmem:[%s408 + $0x118] sm:$0xff]
      %v489 = vld [vmem:[%s408 + $0x120] sm:$0xff]
      %v490 = vld [vmem:[%s408 + $0x128] sm:$0xff]
      %v491 = vld [vmem:[%s408 + $0x130] sm:$0xff]
      %v492 = vld [vmem:[%s408 + $0x138] sm:$0xff]
      %v493 = vld [vmem:[%s408 + $0x140] sm:$0xff]
      %v494 = vld [vmem:[%s408 + $0x148] sm:$0xff]
      %v495 = vld [vmem:[%s408 + $0x150] sm:$0xff]
      %v496 = vld [vmem:[%s408 + $0x158] sm:$0xff]
      %v497 = vpack.c.bf16 %v457, %v456
      %v498 = vpack.c.bf16 %v459, %v458
      %v499 = vpack.c.bf16 %v461, %v460
      %v500 = vpack.c.bf16 %v463, %v462
      %v501 = vpack.c.bf16 %v465, %v464
      %v502 = vpack.c.bf16 %v467, %v466
      %v503 = vpack.c.bf16 %v469, %v468
      %v504 = vpack.c.bf16 %v471, %v470
      %v505 = vpack.c.bf16 %v473, %v472
      %v506 = vpack.c.bf16 %v475, %v474
      %v507 = vpack.c.bf16 %v477, %v476
      %v508 = vpack.c.bf16 %v479, %v478
      %v509 = vpack.c.bf16 %v481, %v480
      %v510 = vpack.c.bf16 %v483, %v482
      %v511 = vpack.c.bf16 %v485, %v484
      %v512 = vpack.c.bf16 %v487, %v486
      %v513 = vpack.c.bf16 %v489, %v488
      %v514 = vpack.c.bf16 %v491, %v490
      %v515 = vpack.c.bf16 %v493, %v492
      %v516 = vpack.c.bf16 %v495, %v494
      %v517 = vpack.c.bf16 %v496, %v496
      %v518 = vld [vmem:[%s2] sm:$0x3]
      %v519 = vld [vmem:[%s8] sm:$0x1]
      %v521 = vlaneseq
      %v522 = vshrl.u32 %v521, 7
      %v523 = vsub.s32 0, %v522
      %v524 = vrot.slane %v519, %v523
      %vm526 = vcmask 31744
      %v528 = vsel %vm526, %v497, 0
      %v531 = vsel %vm526, %v498, 0
      %v534 = vsel %vm526, %v499, 0
      %v537 = vsel %vm526, %v500, 0
      %v540 = vsel %vm526, %v501, 0
      %v543 = vsel %vm526, %v502, 0
      %v546 = vsel %vm526, %v503, 0
      %v549 = vsel %vm526, %v504, 0
      %v552 = vsel %vm526, %v505, 0
      %v555 = vsel %vm526, %v506, 0
      %v558 = vsel %vm526, %v507, 0
      %v561 = vsel %vm526, %v508, 0
      %v564 = vsel %vm526, %v509, 0
      %v567 = vsel %vm526, %v510, 0
      %v570 = vsel %vm526, %v511, 0
      %v573 = vsel %vm526, %v512, 0
      %v576 = vsel %vm526, %v513, 0
      %v579 = vsel %vm526, %v514, 0
      %v582 = vsel %vm526, %v515, 0
      %v585 = vsel %vm526, %v516, 0
      %v588 = vsel %vm526, %v517, 0
      %vm590 = vcmask 1041408
      %v592 = vsel %vm590, %v518, 0
      %594 = vmatprep.subr.bf16.mxu0 0
      %595 = vmatpush1.bf16.msra.mxu0 %v592
      %596 = vmatprep.subr.bf16.mxu0 0
      %597 = vmatpush1.bf16.msra.mxu0 0
      %598 = vmatprep.subr.bf16.mxu0 0
      %599 = vmatpush1.bf16.msra.mxu0 0
      %600 = vmatprep.subr.bf16.mxu0 0
      %601 = vmatpush1.bf16.msra.mxu0 0
      %602 = vmatprep.subr.bf16.mxu0 0
      %603 = vmatpush1.bf16.msra.mxu0 0
      %604 = vmatprep.subr.bf16.mxu0 0
      %605 = vmatpush1.bf16.msra.mxu0 0
      %606 = vmatprep.subr.bf16.mxu0 0
      %607 = vmatpush1.bf16.msra.mxu0 0
      %608 = vmatprep.subr.bf16.mxu0 0
      %609 = vmatpush1.bf16.msra.mxu0 0
      %610 = vmatprep.subr.bf16.mxu0 0
      %611 = vmatpush1.bf16.msra.mxu0 0
      %612 = vmatprep.subr.bf16.mxu0 0
      %613 = vmatpush1.bf16.msra.mxu0 0
      %614 = vmatprep.subr.bf16.mxu0 0
      %615 = vmatpush1.bf16.msra.mxu0 0
      %616 = vmatprep.subr.bf16.mxu0 0
      %617 = vmatpush1.bf16.msra.mxu0 0
      %618 = vmatprep.subr.bf16.mxu0 0
      %619 = vmatpush1.bf16.msra.mxu0 0
      %620 = vmatprep.subr.bf16.mxu0 0
      %621 = vmatpush1.bf16.msra.mxu0 0
      %622 = vmatprep.subr.bf16.mxu0 0
      %623 = vmatpush1.bf16.msra.mxu0 0
      %624 = vmatprep.subr.bf16.mxu0 0
      %625 = vmatpush1.bf16.msra.mxu0 0
      %626 = vmatprep.mubr.bf16.mxu0 0
      %627 = vmatmul.mubr.bf16.gmra.mrb[0].mxu0 %v528
      %v628 = vpop.f32.mrb[0].mxu0
      %v629 = vadd.f32 %v524, %v628
      %v630 = vpop.f32.mrb[0].mxu0
      %v631 = vpop.f32.mrb[0].mxu0
      %v632 = vadd.f32 %v524, %v631
      %v633 = vpop.f32.mrb[0].mxu0
      %634 = vmatprep.mubr.bf16.mxu0 0
      %635 = vmatmul.mubr.bf16.gmra.mrb[0].mxu0 %v531
      %v636 = vpop.f32.mrb[0].mxu0
      %v637 = vadd.f32 %v524, %v636
      %v638 = vpop.f32.mrb[0].mxu0
      %v639 = vpop.f32.mrb[0].mxu0
      %v640 = vadd.f32 %v524, %v639
      %v641 = vpop.f32.mrb[0].mxu0
      %642 = vmatprep.mubr.bf16.mxu0 0
      %643 = vmatmul.mubr.bf16.gmra.mrb[0].mxu0 %v534
      %v644 = vpop.f32.mrb[0].mxu0
      %v645 = vadd.f32 %v524, %v644
      %v646 = vpop.f32.mrb[0].mxu0
      %v647 = vpop.f32.mrb[0].mxu0
      %v648 = vadd.f32 %v524, %v647
      %v649 = vpop.f32.mrb[0].mxu0
      %650 = vmatprep.mubr.bf16.mxu0 0
      %651 = vmatmul.mubr.bf16.gmra.mrb[0].mxu0 %v537
      %v652 = vpop.f32.mrb[0].mxu0
      %v653 = vadd.f32 %v524, %v652
      %v654 = vpop.f32.mrb[0].mxu0
      %v655 = vpop.f32.mrb[0].mxu0
      %v656 = vadd.f32 %v524, %v655
      %v657 = vpop.f32.mrb[0].mxu0
      %658 = vmatprep.mubr.bf16.mxu0 0
      %659 = vmatmul.mubr.bf16.gmra.mrb[0].mxu0 %v540
      %v660 = vpop.f32.mrb[0].mxu0
      %v661 = vadd.f32 %v524, %v660
      %v662 = vpop.f32.mrb[0].mxu0
      %v663 = vpop.f32.mrb[0].mxu0
      %v664 = vadd.f32 %v524, %v663
      %v665 = vpop.f32.mrb[0].mxu0
      %666 = vmatprep.mubr.bf16.mxu0 0
      %667 = vmatmul.mubr.bf16.gmra.mrb[0].mxu0 %v543
      %v668 = vpop.f32.mrb[0].mxu0
      %v669 = vadd.f32 %v524, %v668
      %v670 = vpop.f32.mrb[0].mxu0
      %v671 = vpop.f32.mrb[0].mxu0
      %v672 = vadd.f32 %v524, %v671
      %v673 = vpop.f32.mrb[0].mxu0
      %674 = vmatprep.mubr.bf16.mxu0 0
      %675 = vmatmul.mubr.bf16.gmra.mrb[0].mxu0 %v546
      %v676 = vpop.f32.mrb[0].mxu0
      %v677 = vadd.f32 %v524, %v676
      %v678 = vpop.f32.mrb[0].mxu0
      %v679 = vpop.f32.mrb[0].mxu0
      %v680 = vadd.f32 %v524, %v679
      %v681 = vpop.f32.mrb[0].mxu0
      %682 = vmatprep.mubr.bf16.mxu0 0
      %683 = vmatmul.mubr.bf16.gmra.mrb[0].mxu0 %v549
      %v684 = vpop.f32.mrb[0].mxu0
      %v685 = vadd.f32 %v524, %v684
      %v686 = vpop.f32.mrb[0].mxu0
      %v687 = vpop.f32.mrb[0].mxu0
      %v688 = vadd.f32 %v524, %v687
      %v689 = vpop.f32.mrb[0].mxu0
      %690 = vmatprep.mubr.bf16.mxu0 0
      %691 = vmatmul.mubr.bf16.gmra.mrb[0].mxu0 %v552
      %v692 = vpop.f32.mrb[0].mxu0
      %v693 = vadd.f32 %v524, %v692
      %v694 = vpop.f32.mrb[0].mxu0
      %v695 = vpop.f32.mrb[0].mxu0
      %v696 = vadd.f32 %v524, %v695
      %v697 = vpop.f32.mrb[0].mxu0
      %698 = vmatprep.mubr.bf16.mxu0 0
      %699 = vmatmul.mubr.bf16.gmra.mrb[0].mxu0 %v555
      %v700 = vpop.f32.mrb[0].mxu0
      %v701 = vadd.f32 %v524, %v700
      %v702 = vpop.f32.mrb[0].mxu0
      %v703 = vpop.f32.mrb[0].mxu0
      %v704 = vadd.f32 %v524, %v703
      %v705 = vpop.f32.mrb[0].mxu0
      %706 = vmatprep.mubr.bf16.mxu0 0
      %707 = vmatmul.mubr.bf16.gmra.mrb[0].mxu0 %v558
      %v708 = vpop.f32.mrb[0].mxu0
      %v709 = vadd.f32 %v524, %v708
      %v710 = vpop.f32.mrb[0].mxu0
      %v711 = vpop.f32.mrb[0].mxu0
      %v712 = vadd.f32 %v524, %v711
      %v713 = vpop.f32.mrb[0].mxu0
      %714 = vmatprep.mubr.bf16.mxu0 0
      %715 = vmatmul.mubr.bf16.gmra.mrb[0].mxu0 %v561
      %v716 = vpop.f32.mrb[0].mxu0
      %v717 = vadd.f32 %v524, %v716
      %v718 = vpop.f32.mrb[0].mxu0
      %v719 = vpop.f32.mrb[0].mxu0
      %v720 = vadd.f32 %v524, %v719
      %v721 = vpop.f32.mrb[0].mxu0
      %722 = vmatprep.mubr.bf16.mxu0 0
      %723 = vmatmul.mubr.bf16.gmra.mrb[0].mxu0 %v564
      %v724 = vpop.f32.mrb[0].mxu0
      %v725 = vadd.f32 %v524, %v724
      %v726 = vpop.f32.mrb[0].mxu0
      %v727 = vpop.f32.mrb[0].mxu0
      %v728 = vadd.f32 %v524, %v727
      %v729 = vpop.f32.mrb[0].mxu0
      %730 = vmatprep.mubr.bf16.mxu0 0
      %731 = vmatmul.mubr.bf16.gmra.mrb[0].mxu0 %v567
      %v732 = vpop.f32.mrb[0].mxu0
      %v733 = vadd.f32 %v524, %v732
      %v734 = vpop.f32.mrb[0].mxu0
      %v735 = vpop.f32.mrb[0].mxu0
      %v736 = vadd.f32 %v524, %v735
      %v737 = vpop.f32.mrb[0].mxu0
      %738 = vmatprep.mubr.bf16.mxu0 0
      %739 = vmatmul.mubr.bf16.gmra.mrb[0].mxu0 %v570
      %v740 = vpop.f32.mrb[0].mxu0
      %v741 = vadd.f32 %v524, %v740
      %v742 = vpop.f32.mrb[0].mxu0
      %v743 = vpop.f32.mrb[0].mxu0
      %v744 = vadd.f32 %v524, %v743
      %v745 = vpop.f32.mrb[0].mxu0
      %746 = vmatprep.mubr.bf16.mxu0 0
      %747 = vmatmul.mubr.bf16.gmra.mrb[0].mxu0 %v573
      %v748 = vpop.f32.mrb[0].mxu0
      %v749 = vadd.f32 %v524, %v748
      %v750 = vpop.f32.mrb[0].mxu0
      %v751 = vpop.f32.mrb[0].mxu0
      %v752 = vadd.f32 %v524, %v751
      %v753 = vpop.f32.mrb[0].mxu0
      %754 = vmatprep.mubr.bf16.mxu0 0
      %755 = vmatmul.mubr.bf16.gmra.mrb[0].mxu0 %v576
      %v756 = vpop.f32.mrb[0].mxu0
      %v757 = vadd.f32 %v524, %v756
      %v758 = vpop.f32.mrb[0].mxu0
      %v759 = vpop.f32.mrb[0].mxu0
      %v760 = vadd.f32 %v524, %v759
      %v761 = vpop.f32.mrb[0].mxu0
      %762 = vmatprep.mubr.bf16.mxu0 0
      %763 = vmatmul.mubr.bf16.gmra.mrb[0].mxu0 %v579
      %v764 = vpop.f32.mrb[0].mxu0
      %v765 = vadd.f32 %v524, %v764
      %v766 = vpop.f32.mrb[0].mxu0
      %v767 = vpop.f32.mrb[0].mxu0
      %v768 = vadd.f32 %v524, %v767
      %v769 = vpop.f32.mrb[0].mxu0
      %770 = vmatprep.mubr.bf16.mxu0 0
      %771 = vmatmul.mubr.bf16.gmra.mrb[0].mxu0 %v582
      %v772 = vpop.f32.mrb[0].mxu0
      %v773 = vadd.f32 %v524, %v772
      %v774 = vpop.f32.mrb[0].mxu0
      %v775 = vpop.f32.mrb[0].mxu0
      %v776 = vadd.f32 %v524, %v775
      %v777 = vpop.f32.mrb[0].mxu0
      %778 = vmatprep.mubr.bf16.mxu0 0
      %779 = vmatmul.mubr.bf16.gmra.mrb[0].mxu0 %v585
      %v780 = vpop.f32.mrb[0].mxu0
      %v781 = vadd.f32 %v524, %v780
      %v782 = vpop.f32.mrb[0].mxu0
      %v783 = vpop.f32.mrb[0].mxu0
      %v784 = vadd.f32 %v524, %v783
      %v785 = vpop.f32.mrb[0].mxu0
      %786 = vmatprep.mubr.bf16.mxu0 0
      %787 = vmatmul.mubr.bf16.gmra.mrb[0].mxu0 %v588
      %v788 = vpop.f32.mrb[0].mxu0
      %v789 = vadd.f32 %v524, %v788
      %v790 = vpop.f32.mrb[0].mxu0
      %v791 = vpop.f32.mrb[0].mxu0
      %v792 = vpop.f32.mrb[0].mxu0
      %793 = vdwg.mxu0
      %v794 = vmax.f32 %v629, 0.0
      %v795 = vmax.f32 %v632, 0.0
      %v796 = vmax.f32 %v637, 0.0
      %v797 = vmax.f32 %v640, 0.0
      %v798 = vmax.f32 %v645, 0.0
      %v799 = vmax.f32 %v648, 0.0
      %v800 = vmax.f32 %v653, 0.0
      %v801 = vmax.f32 %v656, 0.0
      %v802 = vmax.f32 %v661, 0.0
      %v803 = vmax.f32 %v664, 0.0
      %v804 = vmax.f32 %v669, 0.0
      %v805 = vmax.f32 %v672, 0.0
      %v806 = vmax.f32 %v677, 0.0
      %v807 = vmax.f32 %v680, 0.0
      %v808 = vmax.f32 %v685, 0.0
      %v809 = vmax.f32 %v688, 0.0
      %v810 = vmax.f32 %v693, 0.0
      %v811 = vmax.f32 %v696, 0.0
      %v812 = vmax.f32 %v701, 0.0
      %v813 = vmax.f32 %v704, 0.0
      %v814 = vmax.f32 %v709, 0.0
      %v815 = vmax.f32 %v712, 0.0
      %v816 = vmax.f32 %v717, 0.0
      %v817 = vmax.f32 %v720, 0.0
      %v818 = vmax.f32 %v725, 0.0
      %v819 = vmax.f32 %v728, 0.0
      %v820 = vmax.f32 %v733, 0.0
      %v821 = vmax.f32 %v736, 0.0
      %v822 = vmax.f32 %v741, 0.0
      %v823 = vmax.f32 %v744, 0.0
      %v824 = vmax.f32 %v749, 0.0
      %v825 = vmax.f32 %v752, 0.0
      %v826 = vmax.f32 %v757, 0.0
      %v827 = vmax.f32 %v760, 0.0
      %v828 = vmax.f32 %v765, 0.0
      %v829 = vmax.f32 %v768, 0.0
      %v830 = vmax.f32 %v773, 0.0
      %v831 = vmax.f32 %v776, 0.0
      %v832 = vmax.f32 %v781, 0.0
      %v833 = vmax.f32 %v784, 0.0
      %v834 = vmax.f32 %v789, 0.0
      %vm835 = vcmask 195584
      %836 = vst.msk [vmem:[#allocation2] sm:$0xff] %vm835, 0.0
      %837 = vst.msk [vmem:[#allocation2 + $0x8] sm:$0xff] %vm835, 0.0
      %838 = vst.msk [vmem:[#allocation2 + $0x10] sm:$0xff] %vm835, 0.0
      %839 = vst.msk [vmem:[#allocation2 + $0x160] sm:$0xff] %vm835, 0.0
      %840 = vst.msk [vmem:[#allocation2 + $0x168] sm:$0xff] %vm835, 0.0
      %841 = vst.msk [vmem:[#allocation2 + $0x170] sm:$0xff] %vm835, 0.0
      %843 = vset.pattern.permute.xlu0 0
      %844 = vperm.xlu0 %843, %v415
      %v845 = vpop.permute.xlu0 %844
      %848 = vset.pattern.permute.xlu0 0
      %849 = vperm.xlu0 %848, %v416
      %v850 = vpop.permute.xlu0 %849
      %853 = vset.pattern.permute.xlu0 0
      %854 = vperm.xlu0 %853, %v417
      %v855 = vpop.permute.xlu0 %854
      %858 = vset.pattern.permute.xlu0 0
      %859 = vperm.xlu0 %858, %v418
      %v860 = vpop.permute.xlu0 %859
      %863 = vset.pattern.permute.xlu0 0
      %864 = vperm.xlu0 %863, %v419
      %v865 = vpop.permute.xlu0 %864
      %868 = vset.pattern.permute.xlu0 0
      %869 = vperm.xlu0 %868, %v420
      %v870 = vpop.permute.xlu0 %869
      %873 = vset.pattern.permute.xlu0 0
      %874 = vperm.xlu0 %873, %v421
      %v875 = vpop.permute.xlu0 %874
      %878 = vset.pattern.permute.xlu0 0
      %879 = vperm.xlu0 %878, %v422
      %v880 = vpop.permute.xlu0 %879
      %883 = vset.pattern.permute.xlu0 0
      %884 = vperm.xlu0 %883, %v423
      %v885 = vpop.permute.xlu0 %884
      %888 = vset.pattern.permute.xlu0 0
      %889 = vperm.xlu0 %888, %v424
      %v890 = vpop.permute.xlu0 %889
      %893 = vset.pattern.permute.xlu0 0
      %894 = vperm.xlu0 %893, %v425
      %v895 = vpop.permute.xlu0 %894
      %898 = vset.pattern.permute.xlu0 0
      %899 = vperm.xlu0 %898, %v426
      %v900 = vpop.permute.xlu0 %899
      %903 = vset.pattern.permute.xlu0 0
      %904 = vperm.xlu0 %903, %v427
      %v905 = vpop.permute.xlu0 %904
      %908 = vset.pattern.permute.xlu0 0
      %909 = vperm.xlu0 %908, %v428
      %v910 = vpop.permute.xlu0 %909
      %913 = vset.pattern.permute.xlu0 0
      %914 = vperm.xlu0 %913, %v429
      %v915 = vpop.permute.xlu0 %914
      %918 = vset.pattern.permute.xlu0 0
      %919 = vperm.xlu0 %918, %v430
      %v920 = vpop.permute.xlu0 %919
      %923 = vset.pattern.permute.xlu0 0
      %924 = vperm.xlu0 %923, %v431
      %v925 = vpop.permute.xlu0 %924
      %928 = vset.pattern.permute.xlu0 0
      %929 = vperm.xlu0 %928, %v432
      %v930 = vpop.permute.xlu0 %929
      %933 = vset.pattern.permute.xlu0 0
      %934 = vperm.xlu0 %933, %v433
      %v935 = vpop.permute.xlu0 %934
      %938 = vset.pattern.permute.xlu0 0
      %939 = vperm.xlu0 %938, %v434
      %v940 = vpop.permute.xlu0 %939
      %943 = vset.pattern.permute.xlu0 0
      %944 = vperm.xlu0 %943, %v435
      %v945 = vpop.permute.xlu0 %944
      %948 = vset.pattern.permute.xlu0 0
      %949 = vperm.xlu0 %948, %v436
      %v950 = vpop.permute.xlu0 %949
      %953 = vset.pattern.permute.xlu0 0
      %954 = vperm.xlu0 %953, %v437
      %v955 = vpop.permute.xlu0 %954
      %958 = vset.pattern.permute.xlu0 0
      %959 = vperm.xlu0 %958, %v438
      %v960 = vpop.permute.xlu0 %959
      %963 = vset.pattern.permute.xlu0 0
      %964 = vperm.xlu0 %963, %v439
      %v965 = vpop.permute.xlu0 %964
      %968 = vset.pattern.permute.xlu0 0
      %969 = vperm.xlu0 %968, %v440
      %v970 = vpop.permute.xlu0 %969
      %973 = vset.pattern.permute.xlu0 0
      %974 = vperm.xlu0 %973, %v441
      %v975 = vpop.permute.xlu0 %974
      %978 = vset.pattern.permute.xlu0 0
      %979 = vperm.xlu0 %978, %v442
      %v980 = vpop.permute.xlu0 %979
      %983 = vset.pattern.permute.xlu0 0
      %984 = vperm.xlu0 %983, %v443
      %v985 = vpop.permute.xlu0 %984
      %988 = vset.pattern.permute.xlu0 0
      %989 = vperm.xlu0 %988, %v444
      %v990 = vpop.permute.xlu0 %989
      %993 = vset.pattern.permute.xlu0 0
      %994 = vperm.xlu0 %993, %v445
      %v995 = vpop.permute.xlu0 %994
      %998 = vset.pattern.permute.xlu0 0
      %999 = vperm.xlu0 %998, %v446
      %v1000 = vpop.permute.xlu0 %999
      %1003 = vset.pattern.permute.xlu0 0
      %1004 = vperm.xlu0 %1003, %v447
      %v1005 = vpop.permute.xlu0 %1004
      %1008 = vset.pattern.permute.xlu0 0
      %1009 = vperm.xlu0 %1008, %v448
      %v1010 = vpop.permute.xlu0 %1009
      %1013 = vset.pattern.permute.xlu0 0
      %1014 = vperm.xlu0 %1013, %v449
      %v1015 = vpop.permute.xlu0 %1014
      %1018 = vset.pattern.permute.xlu0 0
      %1019 = vperm.xlu0 %1018, %v450
      %v1020 = vpop.permute.xlu0 %1019
      %1023 = vset.pattern.permute.xlu0 0
      %1024 = vperm.xlu0 %1023, %v451
      %v1025 = vpop.permute.xlu0 %1024
      %1028 = vset.pattern.permute.xlu0 0
      %1029 = vperm.xlu0 %1028, %v452
      %v1030 = vpop.permute.xlu0 %1029
      %1033 = vset.pattern.permute.xlu0 0
      %1034 = vperm.xlu0 %1033, %v453
      %v1035 = vpop.permute.xlu0 %1034
      %1038 = vset.pattern.permute.xlu0 0
      %1039 = vperm.xlu0 %1038, %v454
      %v1040 = vpop.permute.xlu0 %1039
      %1043 = vset.pattern.permute.xlu0 0
      %1044 = vperm.xlu0 %1043, %v455
      %v1045 = vpop.permute.xlu0 %1044
      %v1047 = vmul.f32 %v794, %v845
      %v1048 = vmul.f32 %v795, %v850
      %v1049 = vmul.f32 %v796, %v855
      %v1050 = vmul.f32 %v797, %v860
      %v1051 = vmul.f32 %v798, %v865
      %v1052 = vmul.f32 %v799, %v870
      %v1053 = vmul.f32 %v800, %v875
      %v1054 = vmul.f32 %v801, %v880
      %v1055 = vmul.f32 %v802, %v885
      %v1056 = vmul.f32 %v803, %v890
      %v1057 = vmul.f32 %v804, %v895
      %v1058 = vmul.f32 %v805, %v900
      %v1059 = vmul.f32 %v806, %v905
      %v1060 = vmul.f32 %v807, %v910
      %v1061 = vmul.f32 %v808, %v915
      %v1062 = vmul.f32 %v809, %v920
      %v1063 = vmul.f32 %v810, %v925
      %v1064 = vmul.f32 %v811, %v930
      %v1065 = vmul.f32 %v812, %v935
      %v1066 = vmul.f32 %v813, %v940
      %v1067 = vmul.f32 %v814, %v945
      %v1068 = vmul.f32 %v815, %v950
      %v1069 = vmul.f32 %v816, %v955
      %v1070 = vmul.f32 %v817, %v960
      %v1071 = vmul.f32 %v818, %v965
      %v1072 = vmul.f32 %v819, %v970
      %v1073 = vmul.f32 %v820, %v975
      %v1074 = vmul.f32 %v821, %v980
      %v1075 = vmul.f32 %v822, %v985
      %v1076 = vmul.f32 %v823, %v990
      %v1077 = vmul.f32 %v824, %v995
      %v1078 = vmul.f32 %v825, %v1000
      %v1079 = vmul.f32 %v826, %v1005
      %v1080 = vmul.f32 %v827, %v1010
      %v1081 = vmul.f32 %v828, %v1015
      %v1082 = vmul.f32 %v829, %v1020
      %v1083 = vmul.f32 %v830, %v1025
      %v1084 = vmul.f32 %v831, %v1030
      %v1085 = vmul.f32 %v832, %v1035
      %v1086 = vmul.f32 %v833, %v1040
      %v1087 = vmul.f32 %v834, %v1045
      %1088 = vst.msk [vmem:[#allocation2 + $0x18] sm:$0xff] %vm835, %v1047
      %1089 = vst.msk [vmem:[#allocation2 + $0x20] sm:$0xff] %vm835, %v1048
      %1090 = vst.msk [vmem:[#allocation2 + $0x28] sm:$0xff] %vm835, %v1049
      %1091 = vst.msk [vmem:[#allocation2 + $0x30] sm:$0xff] %vm835, %v1050
      %1092 = vst.msk [vmem:[#allocation2 + $0x38] sm:$0xff] %vm835, %v1051
      %1093 = vst.msk [vmem:[#allocation2 + $0x40] sm:$0xff] %vm835, %v1052
      %1094 = vst.msk [vmem:[#allocation2 + $0x48] sm:$0xff] %vm835, %v1053
      %1095 = vst.msk [vmem:[#allocation2 + $0x50] sm:$0xff] %vm835, %v1054
      %1096 = vst.msk [vmem:[#allocation2 + $0x58] sm:$0xff] %vm835, %v1055
      %1097 = vst.msk [vmem:[#allocation2 + $0x60] sm:$0xff] %vm835, %v1056
      %1098 = vst.msk [vmem:[#allocation2 + $0x68] sm:$0xff] %vm835, %v1057
      %1099 = vst.msk [vmem:[#allocation2 + $0x70] sm:$0xff] %vm835, %v1058
      %1100 = vst.msk [vmem:[#allocation2 + $0x78] sm:$0xff] %vm835, %v1059
      %1101 = vst.msk [vmem:[#allocation2 + $0x80] sm:$0xff] %vm835, %v1060
      %1102 = vst.msk [vmem:[#allocation2 + $0x88] sm:$0xff] %vm835, %v1061
      %1103 = vst.msk [vmem:[#allocation2 + $0x90] sm:$0xff] %vm835, %v1062
      %1104 = vst.msk [vmem:[#allocation2 + $0x98] sm:$0xff] %vm835, %v1063
      %1105 = vst.msk [vmem:[#allocation2 + $0xa0] sm:$0xff] %vm835, %v1064
      %1106 = vst.msk [vmem:[#allocation2 + $0xa8] sm:$0xff] %vm835, %v1065
      %1107 = vst.msk [vmem:[#allocation2 + $0xb0] sm:$0xff] %vm835, %v1066
      %1108 = vst.msk [vmem:[#allocation2 + $0xb8] sm:$0xff] %vm835, %v1067
      %1109 = vst.msk [vmem:[#allocation2 + $0xc0] sm:$0xff] %vm835, %v1068
      %1110 = vst.msk [vmem:[#allocation2 + $0xc8] sm:$0xff] %vm835, %v1069
      %1111 = vst.msk [vmem:[#allocation2 + $0xd0] sm:$0xff] %vm835, %v1070
      %1112 = vst.msk [vmem:[#allocation2 + $0xd8] sm:$0xff] %vm835, %v1071
      %1113 = vst.msk [vmem:[#allocation2 + $0xe0] sm:$0xff] %vm835, %v1072
      %1114 = vst.msk [vmem:[#allocation2 + $0xe8] sm:$0xff] %vm835, %v1073
      %1115 = vst.msk [vmem:[#allocation2 + $0xf0] sm:$0xff] %vm835, %v1074
      %1116 = vst.msk [vmem:[#allocation2 + $0xf8] sm:$0xff] %vm835, %v1075
      %1117 = vst.msk [vmem:[#allocation2 + $0x100] sm:$0xff] %vm835, %v1076
      %1118 = vst.msk [vmem:[#allocation2 + $0x108] sm:$0xff] %vm835, %v1077
      %1119 = vst.msk [vmem:[#allocation2 + $0x110] sm:$0xff] %vm835, %v1078
      %1120 = vst.msk [vmem:[#allocation2 + $0x118] sm:$0xff] %vm835, %v1079
      %1121 = vst.msk [vmem:[#allocation2 + $0x120] sm:$0xff] %vm835, %v1080
      %1122 = vst.msk [vmem:[#allocation2 + $0x128] sm:$0xff] %vm835, %v1081
      %1123 = vst.msk [vmem:[#allocation2 + $0x130] sm:$0xff] %vm835, %v1082
      %1124 = vst.msk [vmem:[#allocation2 + $0x138] sm:$0xff] %vm835, %v1083
      %1125 = vst.msk [vmem:[#allocation2 + $0x140] sm:$0xff] %vm835, %v1084
      %1126 = vst.msk [vmem:[#allocation2 + $0x148] sm:$0xff] %vm835, %v1085
      %1127 = vst.msk [vmem:[#allocation2 + $0x150] sm:$0xff] %vm835, %v1086
      %1128 = vst.msk [vmem:[#allocation2 + $0x158] sm:$0xff] %vm835, %v1087
      %v1129 = vld [vmem:[%s3] sm:$0x3]
      %v1130 = vld [vmem:[%s9] sm:$0x1]
      %v1132 = vlaneseq
      %v1133 = vshrl.u32 %v1132, 7
      %v1134 = vsub.s32 0, %v1133
      %v1135 = vrot.slane %v1130, %v1134
      %v1138 = vsel %vm590, %v1129, 0
      %1140 = vmatprep.subr.bf16.mxu0 0
      %1141 = vmatpush1.bf16.msra.mxu0 %v1138
      %1142 = vmatprep.subr.bf16.mxu0 0
      %1143 = vmatpush1.bf16.msra.mxu0 0
      %1144 = vmatprep.subr.bf16.mxu0 0
      %1145 = vmatpush1.bf16.msra.mxu0 0
      %1146 = vmatprep.subr.bf16.mxu0 0
      %1147 = vmatpush1.bf16.msra.mxu0 0
      %1148 = vmatprep.subr.bf16.mxu0 0
      %1149 = vmatpush1.bf16.msra.mxu0 0
      %1150 = vmatprep.subr.bf16.mxu0 0
      %1151 = vmatpush1.bf16.msra.mxu0 0
      %1152 = vmatprep.subr.bf16.mxu0 0
      %1153 = vmatpush1.bf16.msra.mxu0 0
      %1154 = vmatprep.subr.bf16.mxu0 0
      %1155 = vmatpush1.bf16.msra.mxu0 0
      %1156 = vmatprep.subr.bf16.mxu0 0
      %1157 = vmatpush1.bf16.msra.mxu0 0
      %1158 = vmatprep.subr.bf16.mxu0 0
      %1159 = vmatpush1.bf16.msra.mxu0 0
      %1160 = vmatprep.subr.bf16.mxu0 0
      %1161 = vmatpush1.bf16.msra.mxu0 0
      %1162 = vmatprep.subr.bf16.mxu0 0
      %1163 = vmatpush1.bf16.msra.mxu0 0
      %1164 = vmatprep.subr.bf16.mxu0 0
      %1165 = vmatpush1.bf16.msra.mxu0 0
      %1166 = vmatprep.subr.bf16.mxu0 0
      %1167 = vmatpush1.bf16.msra.mxu0 0
      %1168 = vmatprep.subr.bf16.mxu0 0
      %1169 = vmatpush1.bf16.msra.mxu0 0
      %1170 = vmatprep.subr.bf16.mxu0 0
      %1171 = vmatpush1.bf16.msra.mxu0 0
      %1172 = vmatprep.mubr.bf16.mxu0 0
      %1173 = vmatmul.mubr.bf16.gmra.mrb[0].mxu0 %v528
      %v1174 = vpop.f32.mrb[0].mxu0
      %v1175 = vadd.f32 %v1135, %v1174
      %v1176 = vpop.f32.mrb[0].mxu0
      %v1177 = vpop.f32.mrb[0].mxu0
      %v1178 = vadd.f32 %v1135, %v1177
      %v1179 = vpop.f32.mrb[0].mxu0
      %1180 = vmatprep.mubr.bf16.mxu0 0
      %1181 = vmatmul.mubr.bf16.gmra.mrb[0].mxu0 %v531
      %v1182 = vpop.f32.mrb[0].mxu0
      %v1183 = vadd.f32 %v1135, %v1182
      %v1184 = vpop.f32.mrb[0].mxu0
      %v1185 = vpop.f32.mrb[0].mxu0
      %v1186 = vadd.f32 %v1135, %v1185
      %v1187 = vpop.f32.mrb[0].mxu0
      %1188 = vmatprep.mubr.bf16.mxu0 0
      %1189 = vmatmul.mubr.bf16.gmra.mrb[0].mxu0 %v534
      %v1190 = vpop.f32.mrb[0].mxu0
      %v1191 = vadd.f32 %v1135, %v1190
      %v1192 = vpop.f32.mrb[0].mxu0
      %v1193 = vpop.f32.mrb[0].mxu0
      %v1194 = vadd.f32 %v1135, %v1193
      %v1195 = vpop.f32.mrb[0].mxu0
      %1196 = vmatprep.mubr.bf16.mxu0 0
      %1197 = vmatmul.mubr.bf16.gmra.mrb[0].mxu0 %v537
      %v1198 = vpop.f32.mrb[0].mxu0
      %v1199 = vadd.f32 %v1135, %v1198
      %v1200 = vpop.f32.mrb[0].mxu0
      %v1201 = vpop.f32.mrb[0].mxu0
      %v1202 = vadd.f32 %v1135, %v1201
      %v1203 = vpop.f32.mrb[0].mxu0
      %1204 = vmatprep.mubr.bf16.mxu0 0
      %1205 = vmatmul.mubr.bf16.gmra.mrb[0].mxu0 %v540
      %v1206 = vpop.f32.mrb[0].mxu0
      %v1207 = vadd.f32 %v1135, %v1206
      %v1208 = vpop.f32.mrb[0].mxu0
      %v1209 = vpop.f32.mrb[0].mxu0
      %v1210 = vadd.f32 %v1135, %v1209
      %v1211 = vpop.f32.mrb[0].mxu0
      %1212 = vmatprep.mubr.bf16.mxu0 0
      %1213 = vmatmul.mubr.bf16.gmra.mrb[0].mxu0 %v543
      %v1214 = vpop.f32.mrb[0].mxu0
      %v1215 = vadd.f32 %v1135, %v1214
      %v1216 = vpop.f32.mrb[0].mxu0
      %v1217 = vpop.f32.mrb[0].mxu0
      %v1218 = vadd.f32 %v1135, %v1217
      %v1219 = vpop.f32.mrb[0].mxu0
      %1220 = vmatprep.mubr.bf16.mxu0 0
      %1221 = vmatmul.mubr.bf16.gmra.mrb[0].mxu0 %v546
      %v1222 = vpop.f32.mrb[0].mxu0
      %v1223 = vadd.f32 %v1135, %v1222
      %v1224 = vpop.f32.mrb[0].mxu0
      %v1225 = vpop.f32.mrb[0].mxu0
      %v1226 = vadd.f32 %v1135, %v1225
      %v1227 = vpop.f32.mrb[0].mxu0
      %1228 = vmatprep.mubr.bf16.mxu0 0
      %1229 = vmatmul.mubr.bf16.gmra.mrb[0].mxu0 %v549
      %v1230 = vpop.f32.mrb[0].mxu0
      %v1231 = vadd.f32 %v1135, %v1230
      %v1232 = vpop.f32.mrb[0].mxu0
      %v1233 = vpop.f32.mrb[0].mxu0
      %v1234 = vadd.f32 %v1135, %v1233
      %v1235 = vpop.f32.mrb[0].mxu0
      %1236 = vmatprep.mubr.bf16.mxu0 0
      %1237 = vmatmul.mubr.bf16.gmra.mrb[0].mxu0 %v552
      %v1238 = vpop.f32.mrb[0].mxu0
      %v1239 = vadd.f32 %v1135, %v1238
      %v1240 = vpop.f32.mrb[0].mxu0
      %v1241 = vpop.f32.mrb[0].mxu0
      %v1242 = vadd.f32 %v1135, %v1241
      %v1243 = vpop.f32.mrb[0].mxu0
      %1244 = vmatprep.mubr.bf16.mxu0 0
      %1245 = vmatmul.mubr.bf16.gmra.mrb[0].mxu0 %v555
      %v1246 = vpop.f32.mrb[0].mxu0
      %v1247 = vadd.f32 %v1135, %v1246
      %v1248 = vpop.f32.mrb[0].mxu0
      %v1249 = vpop.f32.mrb[0].mxu0
      %v1250 = vadd.f32 %v1135, %v1249
      %v1251 = vpop.f32.mrb[0].mxu0
      %1252 = vmatprep.mubr.bf16.mxu0 0
      %1253 = vmatmul.mubr.bf16.gmra.mrb[0].mxu0 %v558
      %v1254 = vpop.f32.mrb[0].mxu0
      %v1255 = vadd.f32 %v1135, %v1254
      %v1256 = vpop.f32.mrb[0].mxu0
      %v1257 = vpop.f32.mrb[0].mxu0
      %v1258 = vadd.f32 %v1135, %v1257
      %v1259 = vpop.f32.mrb[0].mxu0
      %1260 = vmatprep.mubr.bf16.mxu0 0
      %1261 = vmatmul.mubr.bf16.gmra.mrb[0].mxu0 %v561
      %v1262 = vpop.f32.mrb[0].mxu0
      %v1263 = vadd.f32 %v1135, %v1262
      %v1264 = vpop.f32.mrb[0].mxu0
      %v1265 = vpop.f32.mrb[0].mxu0
      %v1266 = vadd.f32 %v1135, %v1265
      %v1267 = vpop.f32.mrb[0].mxu0
      %1268 = vmatprep.mubr.bf16.mxu0 0
      %1269 = vmatmul.mubr.bf16.gmra.mrb[0].mxu0 %v564
      %v1270 = vpop.f32.mrb[0].mxu0
      %v1271 = vadd.f32 %v1135, %v1270
      %v1272 = vpop.f32.mrb[0].mxu0
      %v1273 = vpop.f32.mrb[0].mxu0
      %v1274 = vadd.f32 %v1135, %v1273
      %v1275 = vpop.f32.mrb[0].mxu0
      %1276 = vmatprep.mubr.bf16.mxu0 0
      %1277 = vmatmul.mubr.bf16.gmra.mrb[0].mxu0 %v567
      %v1278 = vpop.f32.mrb[0].mxu0
      %v1279 = vadd.f32 %v1135, %v1278
      %v1280 = vpop.f32.mrb[0].mxu0
      %v1281 = vpop.f32.mrb[0].mxu0
      %v1282 = vadd.f32 %v1135, %v1281
      %v1283 = vpop.f32.mrb[0].mxu0
      %1284 = vmatprep.mubr.bf16.mxu0 0
      %1285 = vmatmul.mubr.bf16.gmra.mrb[0].mxu0 %v570
      %v1286 = vpop.f32.mrb[0].mxu0
      %v1287 = vadd.f32 %v1135, %v1286
      %v1288 = vpop.f32.mrb[0].mxu0
      %v1289 = vpop.f32.mrb[0].mxu0
      %v1290 = vadd.f32 %v1135, %v1289
      %v1291 = vpop.f32.mrb[0].mxu0
      %1292 = vmatprep.mubr.bf16.mxu0 0
      %1293 = vmatmul.mubr.bf16.gmra.mrb[0].mxu0 %v573
      %v1294 = vpop.f32.mrb[0].mxu0
      %v1295 = vadd.f32 %v1135, %v1294
      %v1296 = vpop.f32.mrb[0].mxu0
      %v1297 = vpop.f32.mrb[0].mxu0
      %v1298 = vadd.f32 %v1135, %v1297
      %v1299 = vpop.f32.mrb[0].mxu0
      %1300 = vmatprep.mubr.bf16.mxu0 0
      %1301 = vmatmul.mubr.bf16.gmra.mrb[0].mxu0 %v576
      %v1302 = vpop.f32.mrb[0].mxu0
      %v1303 = vadd.f32 %v1135, %v1302
      %v1304 = vpop.f32.mrb[0].mxu0
      %v1305 = vpop.f32.mrb[0].mxu0
      %v1306 = vadd.f32 %v1135, %v1305
      %v1307 = vpop.f32.mrb[0].mxu0
      %1308 = vmatprep.mubr.bf16.mxu0 0
      %1309 = vmatmul.mubr.bf16.gmra.mrb[0].mxu0 %v579
      %v1310 = vpop.f32.mrb[0].mxu0
      %v1311 = vadd.f32 %v1135, %v1310
      %v1312 = vpop.f32.mrb[0].mxu0
      %v1313 = vpop.f32.mrb[0].mxu0
      %v1314 = vadd.f32 %v1135, %v1313
      %v1315 = vpop.f32.mrb[0].mxu0
      %1316 = vmatprep.mubr.bf16.mxu0 0
      %1317 = vmatmul.mubr.bf16.gmra.mrb[0].mxu0 %v582
      %v1318 = vpop.f32.mrb[0].mxu0
      %v1319 = vadd.f32 %v1135, %v1318
      %v1320 = vpop.f32.mrb[0].mxu0
      %v1321 = vpop.f32.mrb[0].mxu0
      %v1322 = vadd.f32 %v1135, %v1321
      %v1323 = vpop.f32.mrb[0].mxu0
      %1324 = vmatprep.mubr.bf16.mxu0 0
      %1325 = vmatmul.mubr.bf16.gmra.mrb[0].mxu0 %v585
      %v1326 = vpop.f32.mrb[0].mxu0
      %v1327 = vadd.f32 %v1135, %v1326
      %v1328 = vpop.f32.mrb[0].mxu0
      %v1329 = vpop.f32.mrb[0].mxu0
      %v1330 = vadd.f32 %v1135, %v1329
      %v1331 = vpop.f32.mrb[0].mxu0
      %1332 = vmatprep.mubr.bf16.mxu0 0
      %1333 = vmatmul.mubr.bf16.gmra.mrb[0].mxu0 %v588
      %v1334 = vpop.f32.mrb[0].mxu0
      %v1335 = vadd.f32 %v1135, %v1334
      %v1336 = vpop.f32.mrb[0].mxu0
      %v1337 = vpop.f32.mrb[0].mxu0
      %v1338 = vpop.f32.mrb[0].mxu0
      %1339 = vdwg.mxu0
      %v1340 = vmax.f32 %v1175, 0.0
      %v1341 = vmax.f32 %v1178, 0.0
      %v1342 = vmax.f32 %v1183, 0.0
      %v1343 = vmax.f32 %v1186, 0.0
      %v1344 = vmax.f32 %v1191, 0.0
      %v1345 = vmax.f32 %v1194, 0.0
      %v1346 = vmax.f32 %v1199, 0.0
      %v1347 = vmax.f32 %v1202, 0.0
      %v1348 = vmax.f32 %v1207, 0.0
      %v1349 = vmax.f32 %v1210, 0.0
      %v1350 = vmax.f32 %v1215, 0.0
      %v1351 = vmax.f32 %v1218, 0.0
      %v1352 = vmax.f32 %v1223, 0.0
      %v1353 = vmax.f32 %v1226, 0.0
      %v1354 = vmax.f32 %v1231, 0.0
      %v1355 = vmax.f32 %v1234, 0.0
      %v1356 = vmax.f32 %v1239, 0.0
      %v1357 = vmax.f32 %v1242, 0.0
      %v1358 = vmax.f32 %v1247, 0.0
      %v1359 = vmax.f32 %v1250, 0.0
      %v1360 = vmax.f32 %v1255, 0.0
      %v1361 = vmax.f32 %v1258, 0.0
      %v1362 = vmax.f32 %v1263, 0.0
      %v1363 = vmax.f32 %v1266, 0.0
      %v1364 = vmax.f32 %v1271, 0.0
      %v1365 = vmax.f32 %v1274, 0.0
      %v1366 = vmax.f32 %v1279, 0.0
      %v1367 = vmax.f32 %v1282, 0.0
      %v1368 = vmax.f32 %v1287, 0.0
      %v1369 = vmax.f32 %v1290, 0.0
      %v1370 = vmax.f32 %v1295, 0.0
      %v1371 = vmax.f32 %v1298, 0.0
      %v1372 = vmax.f32 %v1303, 0.0
      %v1373 = vmax.f32 %v1306, 0.0
      %v1374 = vmax.f32 %v1311, 0.0
      %v1375 = vmax.f32 %v1314, 0.0
      %v1376 = vmax.f32 %v1319, 0.0
      %v1377 = vmax.f32 %v1322, 0.0
      %v1378 = vmax.f32 %v1327, 0.0
      %v1379 = vmax.f32 %v1330, 0.0
      %v1380 = vmax.f32 %v1335, 0.0
      %vm1381 = vcmask 228352
      %1382 = vst.msk [vmem:[#allocation3] sm:$0xff] %vm1381, 0.0
      %1383 = vst.msk [vmem:[#allocation3 + $0x8] sm:$0xff] %vm1381, 0.0
      %1384 = vst.msk [vmem:[#allocation3 + $0x10] sm:$0xff] %vm1381, 0.0
      %1385 = vst.msk [vmem:[#allocation3 + $0x160] sm:$0xff] %vm1381, 0.0
      %1386 = vst.msk [vmem:[#allocation3 + $0x168] sm:$0xff] %vm1381, 0.0
      %1387 = vst.msk [vmem:[#allocation3 + $0x170] sm:$0xff] %vm1381, 0.0
      %v1388 = vmul.f32 %v1340, %v845
      %v1389 = vmul.f32 %v1341, %v850
      %v1390 = vmul.f32 %v1342, %v855
      %v1391 = vmul.f32 %v1343, %v860
      %v1392 = vmul.f32 %v1344, %v865
      %v1393 = vmul.f32 %v1345, %v870
      %v1394 = vmul.f32 %v1346, %v875
      %v1395 = vmul.f32 %v1347, %v880
      %v1396 = vmul.f32 %v1348, %v885
      %v1397 = vmul.f32 %v1349, %v890
      %v1398 = vmul.f32 %v1350, %v895
      %v1399 = vmul.f32 %v1351, %v900
      %v1400 = vmul.f32 %v1352, %v905
      %v1401 = vmul.f32 %v1353, %v910
      %v1402 = vmul.f32 %v1354, %v915
      %v1403 = vmul.f32 %v1355, %v920
      %v1404 = vmul.f32 %v1356, %v925
      %v1405 = vmul.f32 %v1357, %v930
      %v1406 = vmul.f32 %v1358, %v935
      %v1407 = vmul.f32 %v1359, %v940
      %v1408 = vmul.f32 %v1360, %v945
      %v1409 = vmul.f32 %v1361, %v950
      %v1410 = vmul.f32 %v1362, %v955
      %v1411 = vmul.f32 %v1363, %v960
      %v1412 = vmul.f32 %v1364, %v965
      %v1413 = vmul.f32 %v1365, %v970
      %v1414 = vmul.f32 %v1366, %v975
      %v1415 = vmul.f32 %v1367, %v980
      %v1416 = vmul.f32 %v1368, %v985
      %v1417 = vmul.f32 %v1369, %v990
      %v1418 = vmul.f32 %v1370, %v995
      %v1419 = vmul.f32 %v1371, %v1000
      %v1420 = vmul.f32 %v1372, %v1005
      %v1421 = vmul.f32 %v1373, %v1010
      %v1422 = vmul.f32 %v1374, %v1015
      %v1423 = vmul.f32 %v1375, %v1020
      %v1424 = vmul.f32 %v1376, %v1025
      %v1425 = vmul.f32 %v1377, %v1030
      %v1426 = vmul.f32 %v1378, %v1035
      %v1427 = vmul.f32 %v1379, %v1040
      %v1428 = vmul.f32 %v1380, %v1045
      %1429 = vst.msk [vmem:[#allocation3 + $0x18] sm:$0xff] %vm1381, %v1388
      %1430 = vst.msk [vmem:[#allocation3 + $0x20] sm:$0xff] %vm1381, %v1389
      %1431 = vst.msk [vmem:[#allocation3 + $0x28] sm:$0xff] %vm1381, %v1390
      %1432 = vst.msk [vmem:[#allocation3 + $0x30] sm:$0xff] %vm1381, %v1391
      %1433 = vst.msk [vmem:[#allocation3 + $0x38] sm:$0xff] %vm1381, %v1392
      %1434 = vst.msk [vmem:[#allocation3 + $0x40] sm:$0xff] %vm1381, %v1393
      %1435 = vst.msk [vmem:[#allocation3 + $0x48] sm:$0xff] %vm1381, %v1394
      %1436 = vst.msk [vmem:[#allocation3 + $0x50] sm:$0xff] %vm1381, %v1395
      %1437 = vst.msk [vmem:[#allocation3 + $0x58] sm:$0xff] %vm1381, %v1396
      %1438 = vst.msk [vmem:[#allocation3 + $0x60] sm:$0xff] %vm1381, %v1397
      %1439 = vst.msk [vmem:[#allocation3 + $0x68] sm:$0xff] %vm1381, %v1398
      %1440 = vst.msk [vmem:[#allocation3 + $0x70] sm:$0xff] %vm1381, %v1399
      %1441 = vst.msk [vmem:[#allocation3 + $0x78] sm:$0xff] %vm1381, %v1400
      %1442 = vst.msk [vmem:[#allocation3 + $0x80] sm:$0xff] %vm1381, %v1401
      %1443 = vst.msk [vmem:[#allocation3 + $0x88] sm:$0xff] %vm1381, %v1402
      %1444 = vst.msk [vmem:[#allocation3 + $0x90] sm:$0xff] %vm1381, %v1403
      %1445 = vst.msk [vmem:[#allocation3 + $0x98] sm:$0xff] %vm1381, %v1404
      %1446 = vst.msk [vmem:[#allocation3 + $0xa0] sm:$0xff] %vm1381, %v1405
      %1447 = vst.msk [vmem:[#allocation3 + $0xa8] sm:$0xff] %vm1381, %v1406
      %1448 = vst.msk [vmem:[#allocation3 + $0xb0] sm:$0xff] %vm1381, %v1407
      %1449 = vst.msk [vmem:[#allocation3 + $0xb8] sm:$0xff] %vm1381, %v1408
      %1450 = vst.msk [vmem:[#allocation3 + $0xc0] sm:$0xff] %vm1381, %v1409
      %1451 = vst.msk [vmem:[#allocation3 + $0xc8] sm:$0xff] %vm1381, %v1410
      %1452 = vst.msk [vmem:[#allocation3 + $0xd0] sm:$0xff] %vm1381, %v1411
      %1453 = vst.msk [vmem:[#allocation3 + $0xd8] sm:$0xff] %vm1381, %v1412
      %1454 = vst.msk [vmem:[#allocation3 + $0xe0] sm:$0xff] %vm1381, %v1413
      %1455 = vst.msk [vmem:[#allocation3 + $0xe8] sm:$0xff] %vm1381, %v1414
      %1456 = vst.msk [vmem:[#allocation3 + $0xf0] sm:$0xff] %vm1381, %v1415
      %1457 = vst.msk [vmem:[#allocation3 + $0xf8] sm:$0xff] %vm1381, %v1416
      %1458 = vst.msk [vmem:[#allocation3 + $0x100] sm:$0xff] %vm1381, %v1417
      %1459 = vst.msk [vmem:[#allocation3 + $0x108] sm:$0xff] %vm1381, %v1418
      %1460 = vst.msk [vmem:[#allocation3 + $0x110] sm:$0xff] %vm1381, %v1419
      %1461 = vst.msk [vmem:[#allocation3 + $0x118] sm:$0xff] %vm1381, %v1420
      %1462 = vst.msk [vmem:[#allocation3 + $0x120] sm:$0xff] %vm1381, %v1421
      %1463 = vst.msk [vmem:[#allocation3 + $0x128] sm:$0xff] %vm1381, %v1422
      %1464 = vst.msk [vmem:[#allocation3 + $0x130] sm:$0xff] %vm1381, %v1423
      %1465 = vst.msk [vmem:[#allocation3 + $0x138] sm:$0xff] %vm1381, %v1424
      %1466 = vst.msk [vmem:[#allocation3 + $0x140] sm:$0xff] %vm1381, %v1425
      %1467 = vst.msk [vmem:[#allocation3 + $0x148] sm:$0xff] %vm1381, %v1426
      %1468 = vst.msk [vmem:[#allocation3 + $0x150] sm:$0xff] %vm1381, %v1427
      %1469 = vst.msk [vmem:[#allocation3 + $0x158] sm:$0xff] %vm1381, %v1428
      %v1470 = vld [vmem:[#allocation3 + $0x5] sm:$0xff]
      %v1471 = vld [vmem:[#allocation3 + $0xd] sm:$0xff]
      %v1472 = vld [vmem:[#allocation3 + $0x15] sm:$0xff]
      %v1473 = vld [vmem:[#allocation3 + $0x1d] sm:$0xff]
      %v1474 = vld [vmem:[#allocation3 + $0x25] sm:$0xff]
      %v1475 = vld [vmem:[#allocation3 + $0x2d] sm:$0xff]
      %v1476 = vld [vmem:[#allocation3 + $0x35] sm:$0xff]
      %v1477 = vld [vmem:[#allocation3 + $0x3d] sm:$0xff]
      %v1478 = vld [vmem:[#allocation3 + $0x45] sm:$0xff]
      %v1479 = vld [vmem:[#allocation3 + $0x4d] sm:$0xff]
      %v1480 = vld [vmem:[#allocation3 + $0x55] sm:$0xff]
      %v1481 = vld [vmem:[#allocation3 + $0x5d] sm:$0xff]
      %v1482 = vld [vmem:[#allocation3 + $0x65] sm:$0xff]
      %v1483 = vld [vmem:[#allocation3 + $0x6d] sm:$0xff]
      %v1484 = vld [vmem:[#allocation3 + $0x75] sm:$0xff]
      %v1485 = vld [vmem:[#allocation3 + $0x7d] sm:$0xff]
      %v1486 = vld [vmem:[#allocation3 + $0x85] sm:$0xff]
      %v1487 = vld [vmem:[#allocation3 + $0x8d] sm:$0xff]
      %v1488 = vld [vmem:[#allocation3 + $0x95] sm:$0xff]
      %v1489 = vld [vmem:[#allocation3 + $0x9d] sm:$0xff]
      %v1490 = vld [vmem:[#allocation3 + $0xa5] sm:$0xff]
      %v1491 = vld [vmem:[#allocation3 + $0xad] sm:$0xff]
      %v1492 = vld [vmem:[#allocation3 + $0xb5] sm:$0xff]
      %v1493 = vld [vmem:[#allocation3 + $0xbd] sm:$0xff]
      %v1494 = vld [vmem:[#allocation3 + $0xc5] sm:$0xff]
      %v1495 = vld [vmem:[#allocation3 + $0xcd] sm:$0xff]
      %v1496 = vld [vmem:[#allocation3 + $0xd5] sm:$0xff]
      %v1497 = vld [vmem:[#allocation3 + $0xdd] sm:$0xff]
      %v1498 = vld [vmem:[#allocation3 + $0xe5] sm:$0xff]
      %v1499 = vld [vmem:[#allocation3 + $0xed] sm:$0xff]
      %v1500 = vld [vmem:[#allocation3 + $0xf5] sm:$0xff]
      %v1501 = vld [vmem:[#allocation3 + $0xfd] sm:$0xff]
      %v1502 = vld [vmem:[#allocation3 + $0x105] sm:$0xff]
      %v1503 = vld [vmem:[#allocation3 + $0x10d] sm:$0xff]
      %v1504 = vld [vmem:[#allocation3 + $0x115] sm:$0xff]
      %v1505 = vld [vmem:[#allocation3 + $0x11d] sm:$0xff]
      %v1506 = vld [vmem:[#allocation3 + $0x125] sm:$0xff]
      %v1507 = vld [vmem:[#allocation3 + $0x12d] sm:$0xff]
      %v1508 = vld [vmem:[#allocation3 + $0x135] sm:$0xff]
      %v1509 = vld [vmem:[#allocation3 + $0x13d] sm:$0xff]
      %v1510 = vld [vmem:[#allocation3 + $0x145] sm:$0xff]
      %v1511 = vpack.c.bf16 %v1471, %v1470
      %v1512 = vpack.c.bf16 %v1473, %v1472
      %v1513 = vpack.c.bf16 %v1475, %v1474
      %v1514 = vpack.c.bf16 %v1477, %v1476
      %v1515 = vpack.c.bf16 %v1479, %v1478
      %v1516 = vpack.c.bf16 %v1481, %v1480
      %v1517 = vpack.c.bf16 %v1483, %v1482
      %v1518 = vpack.c.bf16 %v1485, %v1484
      %v1519 = vpack.c.bf16 %v1487, %v1486
      %v1520 = vpack.c.bf16 %v1489, %v1488
      %v1521 = vpack.c.bf16 %v1491, %v1490
      %v1522 = vpack.c.bf16 %v1493, %v1492
      %v1523 = vpack.c.bf16 %v1495, %v1494
      %v1524 = vpack.c.bf16 %v1497, %v1496
      %v1525 = vpack.c.bf16 %v1499, %v1498
      %v1526 = vpack.c.bf16 %v1501, %v1500
      %v1527 = vpack.c.bf16 %v1503, %v1502
      %v1528 = vpack.c.bf16 %v1505, %v1504
      %v1529 = vpack.c.bf16 %v1507, %v1506
      %v1530 = vpack.c.bf16 %v1509, %v1508
      %v1531 = vpack.c.bf16 %v1510, %v1510
      %v1532 = vld [vmem:[%s4] sm:$0xf]
      %v1533 = vld [vmem:[%s4 + $0x4] sm:$0xf]
      %v1534 = vld [vmem:[%s4 + $0x8] sm:$0xf]
      %v1535 = vld [vmem:[%s4 + $0xc] sm:$0x3]
      %v1536 = vld [vmem:[#allocation3 + $0x6] sm:$0xff]
      %v1537 = vld [vmem:[#allocation3 + $0xe] sm:$0xff]
      %v1538 = vld [vmem:[#allocation3 + $0x16] sm:$0xff]
      %v1539 = vld [vmem:[#allocation3 + $0x1e] sm:$0xff]
      %v1540 = vld [vmem:[#allocation3 + $0x26] sm:$0xff]
      %v1541 = vld [vmem:[#allocation3 + $0x2e] sm:$0xff]
      %v1542 = vld [vmem:[#allocation3 + $0x36] sm:$0xff]
      %v1543 = vld [vmem:[#allocation3 + $0x3e] sm:$0xff]
      %v1544 = vld [vmem:[#allocation3 + $0x46] sm:$0xff]
      %v1545 = vld [vmem:[#allocation3 + $0x4e] sm:$0xff]
      %v1546 = vld [vmem:[#allocation3 + $0x56] sm:$0xff]
      %v1547 = vld [vmem:[#allocation3 + $0x5e] sm:$0xff]
      %v1548 = vld [vmem:[#allocation3 + $0x66] sm:$0xff]
      %v1549 = vld [vmem:[#allocation3 + $0x6e] sm:$0xff]
      %v1550 = vld [vmem:[#allocation3 + $0x76] sm:$0xff]
      %v1551 = vld [vmem:[#allocation3 + $0x7e] sm:$0xff]
      %v1552 = vld [vmem:[#allocation3 + $0x86] sm:$0xff]
      %v1553 = vld [vmem:[#allocation3 + $0x8e] sm:$0xff]
      %v1554 = vld [vmem:[#allocation3 + $0x96] sm:$0xff]
      %v1555 = vld [vmem:[#allocation3 + $0x9e] sm:$0xff]
      %v1556 = vld [vmem:[#allocation3 + $0xa6] sm:$0xff]
      %v1557 = vld [vmem:[#allocation3 + $0xae] sm:$0xff]
      %v1558 = vld [vmem:[#allocation3 + $0xb6] sm:$0xff]
      %v1559 = vld [vmem:[#allocation3 + $0xbe] sm:$0xff]
      %v1560 = vld [vmem:[#allocation3 + $0xc6] sm:$0xff]
      %v1561 = vld [vmem:[#allocation3 + $0xce] sm:$0xff]
      %v1562 = vld [vmem:[#allocation3 + $0xd6] sm:$0xff]
      %v1563 = vld [vmem:[#allocation3 + $0xde] sm:$0xff]
      %v1564 = vld [vmem:[#allocation3 + $0xe6] sm:$0xff]
      %v1565 = vld [vmem:[#allocation3 + $0xee] sm:$0xff]
      %v1566 = vld [vmem:[#allocation3 + $0xf6] sm:$0xff]
      %v1567 = vld [vmem:[#allocation3 + $0xfe] sm:$0xff]
      %v1568 = vld [vmem:[#allocation3 + $0x106] sm:$0xff]
      %v1569 = vld [vmem:[#allocation3 + $0x10e] sm:$0xff]
      %v1570 = vld [vmem:[#allocation3 + $0x116] sm:$0xff]
      %v1571 = vld [vmem:[#allocation3 + $0x11e] sm:$0xff]
      %v1572 = vld [vmem:[#allocation3 + $0x126] sm:$0xff]
      %v1573 = vld [vmem:[#allocation3 + $0x12e] sm:$0xff]
      %v1574 = vld [vmem:[#allocation3 + $0x136] sm:$0xff]
      %v1575 = vld [vmem:[#allocation3 + $0x13e] sm:$0xff]
      %v1576 = vld [vmem:[#allocation3 + $0x146] sm:$0xff]
      %v1577 = vpack.c.bf16 %v1537, %v1536
      %v1578 = vpack.c.bf16 %v1539, %v1538
      %v1579 = vpack.c.bf16 %v1541, %v1540
      %v1580 = vpack.c.bf16 %v1543, %v1542
      %v1581 = vpack.c.bf16 %v1545, %v1544
      %v1582 = vpack.c.bf16 %v1547, %v1546
      %v1583 = vpack.c.bf16 %v1549, %v1548
      %v1584 = vpack.c.bf16 %v1551, %v1550
      %v1585 = vpack.c.bf16 %v1553, %v1552
      %v1586 = vpack.c.bf16 %v1555, %v1554
      %v1587 = vpack.c.bf16 %v1557, %v1556
      %v1588 = vpack.c.bf16 %v1559, %v1558
      %v1589 = vpack.c.bf16 %v1561, %v1560
      %v1590 = vpack.c.bf16 %v1563, %v1562
      %v1591 = vpack.c.bf16 %v1565, %v1564
      %v1592 = vpack.c.bf16 %v1567, %v1566
      %v1593 = vpack.c.bf16 %v1569, %v1568
      %v1594 = vpack.c.bf16 %v1571, %v1570
      %v1595 = vpack.c.bf16 %v1573, %v1572
      %v1596 = vpack.c.bf16 %v1575, %v1574
      %v1597 = vpack.c.bf16 %v1576, %v1576
      %s1598 = scalar_lea.vmem %s4, 16
      %v1599 = vld [vmem:[%s1598] sm:$0xf]
      %v1600 = vld [vmem:[%s1598 + $0x4] sm:$0xf]
      %v1601 = vld [vmem:[%s1598 + $0x8] sm:$0xf]
      %v1602 = vld [vmem:[%s1598 + $0xc] sm:$0x3]
      %v1607 = vunpack.c.l.b16 %v1599
      %v1608 = vunpack.c.l.b16 %v1600
      %v1609 = vunpack.c.l.b16 %v1601
      %v1610 = vunpack.c.l.b16 %v1602
      %v1611 = vpack.c.b16 %v1608, %v1607
      %v1612 = vpack.c.b16 %v1610, %v1609
      %v1615 = vsel %vm1381, %v1577, 0
      %v1618 = vsel %vm1381, %v1578, 0
      %v1621 = vsel %vm1381, %v1579, 0
      %v1624 = vsel %vm1381, %v1580, 0
      %v1627 = vsel %vm1381, %v1581, 0
      %v1630 = vsel %vm1381, %v1582, 0
      %v1633 = vsel %vm1381, %v1583, 0
      %v1636 = vsel %vm1381, %v1584, 0
      %v1639 = vsel %vm1381, %v1585, 0
      %v1642 = vsel %vm1381, %v1586, 0
      %v1645 = vsel %vm1381, %v1587, 0
      %v1648 = vsel %vm1381, %v1588, 0
      %v1651 = vsel %vm1381, %v1589, 0
      %v1654 = vsel %vm1381, %v1590, 0
      %v1657 = vsel %vm1381, %v1591, 0
      %v1660 = vsel %vm1381, %v1592, 0
      %v1663 = vsel %vm1381, %v1593, 0
      %v1666 = vsel %vm1381, %v1594, 0
      %v1669 = vsel %vm1381, %v1595, 0
      %v1672 = vsel %vm1381, %v1596, 0
      %v1675 = vsel %vm1381, %v1597, 0
      %vm1677 = vcmask 1045504
      %v1679 = vsel %vm1677, %v1612, 0
      %1681 = vmatprep.subr.bf16.mxu0 0
      %1682 = vmatpush1.bf16.msra.mxu0 %v1611
      %1683 = vmatprep.subr.bf16.mxu0 0
      %1684 = vmatpush1.bf16.msra.mxu0 %v1679
      %1685 = vmatprep.subr.bf16.mxu0 0
      %1686 = vmatpush1.bf16.msra.mxu0 0
      %1687 = vmatprep.subr.bf16.mxu0 0
      %1688 = vmatpush1.bf16.msra.mxu0 0
      %1689 = vmatprep.subr.bf16.mxu0 0
      %1690 = vmatpush1.bf16.msra.mxu0 0
      %1691 = vmatprep.subr.bf16.mxu0 0
      %1692 = vmatpush1.bf16.msra.mxu0 0
      %1693 = vmatprep.subr.bf16.mxu0 0
      %1694 = vmatpush1.bf16.msra.mxu0 0
      %1695 = vmatprep.subr.bf16.mxu0 0
      %1696 = vmatpush1.bf16.msra.mxu0 0
      %1697 = vmatprep.subr.bf16.mxu0 0
      %1698 = vmatpush1.bf16.msra.mxu0 0
      %1699 = vmatprep.subr.bf16.mxu0 0
      %1700 = vmatpush1.bf16.msra.mxu0 0
      %1701 = vmatprep.subr.bf16.mxu0 0
      %1702 = vmatpush1.bf16.msra.mxu0 0
      %1703 = vmatprep.subr.bf16.mxu0 0
      %1704 = vmatpush1.bf16.msra.mxu0 0
      %1705 = vmatprep.subr.bf16.mxu0 0
      %1706 = vmatpush1.bf16.msra.mxu0 0
      %1707 = vmatprep.subr.bf16.mxu0 0
      %1708 = vmatpush1.bf16.msra.mxu0 0
      %1709 = vmatprep.subr.bf16.mxu0 0
      %1710 = vmatpush1.bf16.msra.mxu0 0
      %1711 = vmatprep.subr.bf16.mxu0 0
      %1712 = vmatpush1.bf16.msra.mxu0 0
      %1713 = vmatprep.mubr.bf16.mxu0 0
      %1714 = vmatmul.mubr.bf16.gmra.mrb[0].mxu0 %v1615
      %v1715 = vpop.f32.mrb[0].mxu0
      %v1716 = vadd.f32 0.0, %v1715
      %v1717 = vpop.f32.mrb[0].mxu0
      %v1718 = vpop.f32.mrb[0].mxu0
      %v1719 = vadd.f32 0.0, %v1718
      %v1720 = vpop.f32.mrb[0].mxu0
      %1721 = vmatprep.mubr.bf16.mxu0 0
      %1722 = vmatmul.mubr.bf16.gmra.mrb[0].mxu0 %v1618
      %v1723 = vpop.f32.mrb[0].mxu0
      %v1724 = vadd.f32 0.0, %v1723
      %v1725 = vpop.f32.mrb[0].mxu0
      %v1726 = vpop.f32.mrb[0].mxu0
      %v1727 = vadd.f32 0.0, %v1726
      %v1728 = vpop.f32.mrb[0].mxu0
      %1729 = vmatprep.mubr.bf16.mxu0 0
      %1730 = vmatmul.mubr.bf16.gmra.mrb[0].mxu0 %v1621
      %v1731 = vpop.f32.mrb[0].mxu0
      %v1732 = vadd.f32 0.0, %v1731
      %v1733 = vpop.f32.mrb[0].mxu0
      %v1734 = vpop.f32.mrb[0].mxu0
      %v1735 = vadd.f32 0.0, %v1734
      %v1736 = vpop.f32.mrb[0].mxu0
      %1737 = vmatprep.mubr.bf16.mxu0 0
      %1738 = vmatmul.mubr.bf16.gmra.mrb[0].mxu0 %v1624
      %v1739 = vpop.f32.mrb[0].mxu0
      %v1740 = vadd.f32 0.0, %v1739
      %v1741 = vpop.f32.mrb[0].mxu0
      %v1742 = vpop.f32.mrb[0].mxu0
      %v1743 = vadd.f32 0.0, %v1742
      %v1744 = vpop.f32.mrb[0].mxu0
      %1745 = vmatprep.mubr.bf16.mxu0 0
      %1746 = vmatmul.mubr.bf16.gmra.mrb[0].mxu0 %v1627
      %v1747 = vpop.f32.mrb[0].mxu0
      %v1748 = vadd.f32 0.0, %v1747
      %v1749 = vpop.f32.mrb[0].mxu0
      %v1750 = vpop.f32.mrb[0].mxu0
      %v1751 = vadd.f32 0.0, %v1750
      %v1752 = vpop.f32.mrb[0].mxu0
      %1753 = vmatprep.mubr.bf16.mxu0 0
      %1754 = vmatmul.mubr.bf16.gmra.mrb[0].mxu0 %v1630
      %v1755 = vpop.f32.mrb[0].mxu0
      %v1756 = vadd.f32 0.0, %v1755
      %v1757 = vpop.f32.mrb[0].mxu0
      %v1758 = vpop.f32.mrb[0].mxu0
      %v1759 = vadd.f32 0.0, %v1758
      %v1760 = vpop.f32.mrb[0].mxu0
      %1761 = vmatprep.mubr.bf16.mxu0 0
      %1762 = vmatmul.mubr.bf16.gmra.mrb[0].mxu0 %v1633
      %v1763 = vpop.f32.mrb[0].mxu0
      %v1764 = vadd.f32 0.0, %v1763
      %v1765 = vpop.f32.mrb[0].mxu0
      %v1766 = vpop.f32.mrb[0].mxu0
      %v1767 = vadd.f32 0.0, %v1766
      %v1768 = vpop.f32.mrb[0].mxu0
      %1769 = vmatprep.mubr.bf16.mxu0 0
      %1770 = vmatmul.mubr.bf16.gmra.mrb[0].mxu0 %v1636
      %v1771 = vpop.f32.mrb[0].mxu0
      %v1772 = vadd.f32 0.0, %v1771
      %v1773 = vpop.f32.mrb[0].mxu0
      %v1774 = vpop.f32.mrb[0].mxu0
      %v1775 = vadd.f32 0.0, %v1774
      %v1776 = vpop.f32.mrb[0].mxu0
      %1777 = vmatprep.mubr.bf16.mxu0 0
      %1778 = vmatmul.mubr.bf16.gmra.mrb[0].mxu0 %v1639
      %v1779 = vpop.f32.mrb[0].mxu0
      %v1780 = vadd.f32 0.0, %v1779
      %v1781 = vpop.f32.mrb[0].mxu0
      %v1782 = vpop.f32.mrb[0].mxu0
      %v1783 = vadd.f32 0.0, %v1782
      %v1784 = vpop.f32.mrb[0].mxu0
      %1785 = vmatprep.mubr.bf16.mxu0 0
      %1786 = vmatmul.mubr.bf16.gmra.mrb[0].mxu0 %v1642
      %v1787 = vpop.f32.mrb[0].mxu0
      %v1788 = vadd.f32 0.0, %v1787
      %v1789 = vpop.f32.mrb[0].mxu0
      %v1790 = vpop.f32.mrb[0].mxu0
      %v1791 = vadd.f32 0.0, %v1790
      %v1792 = vpop.f32.mrb[0].mxu0
      %1793 = vmatprep.mubr.bf16.mxu0 0
      %1794 = vmatmul.mubr.bf16.gmra.mrb[0].mxu0 %v1645
      %v1795 = vpop.f32.mrb[0].mxu0
      %v1796 = vadd.f32 0.0, %v1795
      %v1797 = vpop.f32.mrb[0].mxu0
      %v1798 = vpop.f32.mrb[0].mxu0
      %v1799 = vadd.f32 0.0, %v1798
      %v1800 = vpop.f32.mrb[0].mxu0
      %1801 = vmatprep.mubr.bf16.mxu0 0
      %1802 = vmatmul.mubr.bf16.gmra.mrb[0].mxu0 %v1648
      %v1803 = vpop.f32.mrb[0].mxu0
      %v1804 = vadd.f32 0.0, %v1803
      %v1805 = vpop.f32.mrb[0].mxu0
      %v1806 = vpop.f32.mrb[0].mxu0
      %v1807 = vadd.f32 0.0, %v1806
      %v1808 = vpop.f32.mrb[0].mxu0
      %1809 = vmatprep.mubr.bf16.mxu0 0
      %1810 = vmatmul.mubr.bf16.gmra.mrb[0].mxu0 %v1651
      %v1811 = vpop.f32.mrb[0].mxu0
      %v1812 = vadd.f32 0.0, %v1811
      %v1813 = vpop.f32.mrb[0].mxu0
      %v1814 = vpop.f32.mrb[0].mxu0
      %v1815 = vadd.f32 0.0, %v1814
      %v1816 = vpop.f32.mrb[0].mxu0
      %1817 = vmatprep.mubr.bf16.mxu0 0
      %1818 = vmatmul.mubr.bf16.gmra.mrb[0].mxu0 %v1654
      %v1819 = vpop.f32.mrb[0].mxu0
      %v1820 = vadd.f32 0.0, %v1819
      %v1821 = vpop.f32.mrb[0].mxu0
      %v1822 = vpop.f32.mrb[0].mxu0
      %v1823 = vadd.f32 0.0, %v1822
      %v1824 = vpop.f32.mrb[0].mxu0
      %1825 = vmatprep.mubr.bf16.mxu0 0
      %1826 = vmatmul.mubr.bf16.gmra.mrb[0].mxu0 %v1657
      %v1827 = vpop.f32.mrb[0].mxu0
      %v1828 = vadd.f32 0.0, %v1827
      %v1829 = vpop.f32.mrb[0].mxu0
      %v1830 = vpop.f32.mrb[0].mxu0
      %v1831 = vadd.f32 0.0, %v1830
      %v1832 = vpop.f32.mrb[0].mxu0
      %1833 = vmatprep.mubr.bf16.mxu0 0
      %1834 = vmatmul.mubr.bf16.gmra.mrb[0].mxu0 %v1660
      %v1835 = vpop.f32.mrb[0].mxu0
      %v1836 = vadd.f32 0.0, %v1835
      %v1837 = vpop.f32.mrb[0].mxu0
      %v1838 = vpop.f32.mrb[0].mxu0
      %v1839 = vadd.f32 0.0, %v1838
      %v1840 = vpop.f32.mrb[0].mxu0
      %1841 = vmatprep.mubr.bf16.mxu0 0
      %1842 = vmatmul.mubr.bf16.gmra.mrb[0].mxu0 %v1663
      %v1843 = vpop.f32.mrb[0].mxu0
      %v1844 = vadd.f32 0.0, %v1843
      %v1845 = vpop.f32.mrb[0].mxu0
      %v1846 = vpop.f32.mrb[0].mxu0
      %v1847 = vadd.f32 0.0, %v1846
      %v1848 = vpop.f32.mrb[0].mxu0
      %1849 = vmatprep.mubr.bf16.mxu0 0
      %1850 = vmatmul.mubr.bf16.gmra.mrb[0].mxu0 %v1666
      %v1851 = vpop.f32.mrb[0].mxu0
      %v1852 = vadd.f32 0.0, %v1851
      %v1853 = vpop.f32.mrb[0].mxu0
      %v1854 = vpop.f32.mrb[0].mxu0
      %v1855 = vadd.f32 0.0, %v1854
      %v1856 = vpop.f32.mrb[0].mxu0
      %1857 = vmatprep.mubr.bf16.mxu0 0
      %1858 = vmatmul.mubr.bf16.gmra.mrb[0].mxu0 %v1669
      %v1859 = vpop.f32.mrb[0].mxu0
      %v1860 = vadd.f32 0.0, %v1859
      %v1861 = vpop.f32.mrb[0].mxu0
      %v1862 = vpop.f32.mrb[0].mxu0
      %v1863 = vadd.f32 0.0, %v1862
      %v1864 = vpop.f32.mrb[0].mxu0
      %1865 = vmatprep.mubr.bf16.mxu0 0
      %1866 = vmatmul.mubr.bf16.gmra.mrb[0].mxu0 %v1672
      %v1867 = vpop.f32.mrb[0].mxu0
      %v1868 = vadd.f32 0.0, %v1867
      %v1869 = vpop.f32.mrb[0].mxu0
      %v1870 = vpop.f32.mrb[0].mxu0
      %v1871 = vadd.f32 0.0, %v1870
      %v1872 = vpop.f32.mrb[0].mxu0
      %1873 = vmatprep.mubr.bf16.mxu0 0
      %1874 = vmatmul.mubr.bf16.gmra.mrb[0].mxu0 %v1675
      %v1875 = vpop.f32.mrb[0].mxu0
      %v1876 = vadd.f32 0.0, %v1875
      %v1877 = vpop.f32.mrb[0].mxu0
      %v1878 = vpop.f32.mrb[0].mxu0
      %v1879 = vpop.f32.mrb[0].mxu0
      %1880 = vdwg.mxu0
      %v1885 = vunpack.c.l.b16 %v1532
      %v1886 = vunpack.c.l.b16 %v1533
      %v1887 = vunpack.c.l.b16 %v1534
      %v1888 = vunpack.c.l.b16 %v1535
      %v1889 = vpack.c.b16 %v1886, %v1885
      %v1890 = vpack.c.b16 %v1888, %v1887
      %v1893 = vsel %vm1381, %v1511, 0
      %v1896 = vsel %vm1381, %v1512, 0
      %v1899 = vsel %vm1381, %v1513, 0
      %v1902 = vsel %vm1381, %v1514, 0
      %v1905 = vsel %vm1381, %v1515, 0
      %v1908 = vsel %vm1381, %v1516, 0
      %v1911 = vsel %vm1381, %v1517, 0
      %v1914 = vsel %vm1381, %v1518, 0
      %v1917 = vsel %vm1381, %v1519, 0
      %v1920 = vsel %vm1381, %v1520, 0
      %v1923 = vsel %vm1381, %v1521, 0
      %v1926 = vsel %vm1381, %v1522, 0
      %v1929 = vsel %vm1381, %v1523, 0
      %v1932 = vsel %vm1381, %v1524, 0
      %v1935 = vsel %vm1381, %v1525, 0
      %v1938 = vsel %vm1381, %v1526, 0
      %v1941 = vsel %vm1381, %v1527, 0
      %v1944 = vsel %vm1381, %v1528, 0
      %v1947 = vsel %vm1381, %v1529, 0
      %v1950 = vsel %vm1381, %v1530, 0
      %v1953 = vsel %vm1381, %v1531, 0
      %v1956 = vsel %vm1677, %v1890, 0
      %1958 = vmatprep.subr.bf16.mxu0 0
      %1959 = vmatpush1.bf16.msra.mxu0 %v1889
      %1960 = vmatprep.subr.bf16.mxu0 0
      %1961 = vmatpush1.bf16.msra.mxu0 %v1956
      %1962 = vmatprep.subr.bf16.mxu0 0
      %1963 = vmatpush1.bf16.msra.mxu0 0
      %1964 = vmatprep.subr.bf16.mxu0 0
      %1965 = vmatpush1.bf16.msra.mxu0 0
      %1966 = vmatprep.subr.bf16.mxu0 0
      %1967 = vmatpush1.bf16.msra.mxu0 0
      %1968 = vmatprep.subr.bf16.mxu0 0
      %1969 = vmatpush1.bf16.msra.mxu0 0
      %1970 = vmatprep.subr.bf16.mxu0 0
      %1971 = vmatpush1.bf16.msra.mxu0 0
      %1972 = vmatprep.subr.bf16.mxu0 0
      %1973 = vmatpush1.bf16.msra.mxu0 0
      %1974 = vmatprep.subr.bf16.mxu0 0
      %1975 = vmatpush1.bf16.msra.mxu0 0
      %1976 = vmatprep.subr.bf16.mxu0 0
      %1977 = vmatpush1.bf16.msra.mxu0 0
      %1978 = vmatprep.subr.bf16.mxu0 0
      %1979 = vmatpush1.bf16.msra.mxu0 0
      %1980 = vmatprep.subr.bf16.mxu0 0
      %1981 = vmatpush1.bf16.msra.mxu0 0
      %1982 = vmatprep.subr.bf16.mxu0 0
      %1983 = vmatpush1.bf16.msra.mxu0 0
      %1984 = vmatprep.subr.bf16.mxu0 0
      %1985 = vmatpush1.bf16.msra.mxu0 0
      %1986 = vmatprep.subr.bf16.mxu0 0
      %1987 = vmatpush1.bf16.msra.mxu0 0
      %1988 = vmatprep.subr.bf16.mxu0 0
      %1989 = vmatpush1.bf16.msra.mxu0 0
      %1990 = vmatprep.mubr.bf16.mxu0 0
      %1991 = vmatmul.mubr.bf16.gmra.mrb[0].mxu0 %v1893
      %v1992 = vpop.f32.mrb[0].mxu0
      %v1993 = vadd.f32 %v1716, %v1992
      %v1994 = vpop.f32.mrb[0].mxu0
      %v1995 = vpop.f32.mrb[0].mxu0
      %v1996 = vadd.f32 %v1719, %v1995
      %v1997 = vpop.f32.mrb[0].mxu0
      %1998 = vmatprep.mubr.bf16.mxu0 0
      %1999 = vmatmul.mubr.bf16.gmra.mrb[0].mxu0 %v1896
      %v2000 = vpop.f32.mrb[0].mxu0
      %v2001 = vadd.f32 %v1724, %v2000
      %v2002 = vpop.f32.mrb[0].mxu0
      %v2003 = vpop.f32.mrb[0].mxu0
      %v2004 = vadd.f32 %v1727, %v2003
      %v2005 = vpop.f32.mrb[0].mxu0
      %2006 = vmatprep.mubr.bf16.mxu0 0
      %2007 = vmatmul.mubr.bf16.gmra.mrb[0].mxu0 %v1899
      %v2008 = vpop.f32.mrb[0].mxu0
      %v2009 = vadd.f32 %v1732, %v2008
      %v2010 = vpop.f32.mrb[0].mxu0
      %v2011 = vpop.f32.mrb[0].mxu0
      %v2012 = vadd.f32 %v1735, %v2011
      %v2013 = vpop.f32.mrb[0].mxu0
      %2014 = vmatprep.mubr.bf16.mxu0 0
      %2015 = vmatmul.mubr.bf16.gmra.mrb[0].mxu0 %v1902
      %v2016 = vpop.f32.mrb[0].mxu0
      %v2017 = vadd.f32 %v1740, %v2016
      %v2018 = vpop.f32.mrb[0].mxu0
      %v2019 = vpop.f32.mrb[0].mxu0
      %v2020 = vadd.f32 %v1743, %v2019
      %v2021 = vpop.f32.mrb[0].mxu0
      %2022 = vmatprep.mubr.bf16.mxu0 0
      %2023 = vmatmul.mubr.bf16.gmra.mrb[0].mxu0 %v1905
      %v2024 = vpop.f32.mrb[0].mxu0
      %v2025 = vadd.f32 %v1748, %v2024
      %v2026 = vpop.f32.mrb[0].mxu0
      %v2027 = vpop.f32.mrb[0].mxu0
      %v2028 = vadd.f32 %v1751, %v2027
      %v2029 = vpop.f32.mrb[0].mxu0
      %2030 = vmatprep.mubr.bf16.mxu0 0
      %2031 = vmatmul.mubr.bf16.gmra.mrb[0].mxu0 %v1908
      %v2032 = vpop.f32.mrb[0].mxu0
      %v2033 = vadd.f32 %v1756, %v2032
      %v2034 = vpop.f32.mrb[0].mxu0
      %v2035 = vpop.f32.mrb[0].mxu0
      %v2036 = vadd.f32 %v1759, %v2035
      %v2037 = vpop.f32.mrb[0].mxu0
      %2038 = vmatprep.mubr.bf16.mxu0 0
      %2039 = vmatmul.mubr.bf16.gmra.mrb[0].mxu0 %v1911
      %v2040 = vpop.f32.mrb[0].mxu0
      %v2041 = vadd.f32 %v1764, %v2040
      %v2042 = vpop.f32.mrb[0].mxu0
      %v2043 = vpop.f32.mrb[0].mxu0
      %v2044 = vadd.f32 %v1767, %v2043
      %v2045 = vpop.f32.mrb[0].mxu0
      %2046 = vmatprep.mubr.bf16.mxu0 0
      %2047 = vmatmul.mubr.bf16.gmra.mrb[0].mxu0 %v1914
      %v2048 = vpop.f32.mrb[0].mxu0
      %v2049 = vadd.f32 %v1772, %v2048
      %v2050 = vpop.f32.mrb[0].mxu0
      %v2051 = vpop.f32.mrb[0].mxu0
      %v2052 = vadd.f32 %v1775, %v2051
      %v2053 = vpop.f32.mrb[0].mxu0
      %2054 = vmatprep.mubr.bf16.mxu0 0
      %2055 = vmatmul.mubr.bf16.gmra.mrb[0].mxu0 %v1917
      %v2056 = vpop.f32.mrb[0].mxu0
      %v2057 = vadd.f32 %v1780, %v2056
      %v2058 = vpop.f32.mrb[0].mxu0
      %v2059 = vpop.f32.mrb[0].mxu0
      %v2060 = vadd.f32 %v1783, %v2059
      %v2061 = vpop.f32.mrb[0].mxu0
      %2062 = vmatprep.mubr.bf16.mxu0 0
      %2063 = vmatmul.mubr.bf16.gmra.mrb[0].mxu0 %v1920
      %v2064 = vpop.f32.mrb[0].mxu0
      %v2065 = vadd.f32 %v1788, %v2064
      %v2066 = vpop.f32.mrb[0].mxu0
      %v2067 = vpop.f32.mrb[0].mxu0
      %v2068 = vadd.f32 %v1791, %v2067
      %v2069 = vpop.f32.mrb[0].mxu0
      %2070 = vmatprep.mubr.bf16.mxu0 0
      %2071 = vmatmul.mubr.bf16.gmra.mrb[0].mxu0 %v1923
      %v2072 = vpop.f32.mrb[0].mxu0
      %v2073 = vadd.f32 %v1796, %v2072
      %v2074 = vpop.f32.mrb[0].mxu0
      %v2075 = vpop.f32.mrb[0].mxu0
      %v2076 = vadd.f32 %v1799, %v2075
      %v2077 = vpop.f32.mrb[0].mxu0
      %2078 = vmatprep.mubr.bf16.mxu0 0
      %2079 = vmatmul.mubr.bf16.gmra.mrb[0].mxu0 %v1926
      %v2080 = vpop.f32.mrb[0].mxu0
      %v2081 = vadd.f32 %v1804, %v2080
      %v2082 = vpop.f32.mrb[0].mxu0
      %v2083 = vpop.f32.mrb[0].mxu0
      %v2084 = vadd.f32 %v1807, %v2083
      %v2085 = vpop.f32.mrb[0].mxu0
      %2086 = vmatprep.mubr.bf16.mxu0 0
      %2087 = vmatmul.mubr.bf16.gmra.mrb[0].mxu0 %v1929
      %v2088 = vpop.f32.mrb[0].mxu0
      %v2089 = vadd.f32 %v1812, %v2088
      %v2090 = vpop.f32.mrb[0].mxu0
      %v2091 = vpop.f32.mrb[0].mxu0
      %v2092 = vadd.f32 %v1815, %v2091
      %v2093 = vpop.f32.mrb[0].mxu0
      %2094 = vmatprep.mubr.bf16.mxu0 0
      %2095 = vmatmul.mubr.bf16.gmra.mrb[0].mxu0 %v1932
      %v2096 = vpop.f32.mrb[0].mxu0
      %v2097 = vadd.f32 %v1820, %v2096
      %v2098 = vpop.f32.mrb[0].mxu0
      %v2099 = vpop.f32.mrb[0].mxu0
      %v2100 = vadd.f32 %v1823, %v2099
      %v2101 = vpop.f32.mrb[0].mxu0
      %2102 = vmatprep.mubr.bf16.mxu0 0
      %2103 = vmatmul.mubr.bf16.gmra.mrb[0].mxu0 %v1935
      %v2104 = vpop.f32.mrb[0].mxu0
      %v2105 = vadd.f32 %v1828, %v2104
      %v2106 = vpop.f32.mrb[0].mxu0
      %v2107 = vpop.f32.mrb[0].mxu0
      %v2108 = vadd.f32 %v1831, %v2107
      %v2109 = vpop.f32.mrb[0].mxu0
      %2110 = vmatprep.mubr.bf16.mxu0 0
      %2111 = vmatmul.mubr.bf16.gmra.mrb[0].mxu0 %v1938
      %v2112 = vpop.f32.mrb[0].mxu0
      %v2113 = vadd.f32 %v1836, %v2112
      %v2114 = vpop.f32.mrb[0].mxu0
      %v2115 = vpop.f32.mrb[0].mxu0
      %v2116 = vadd.f32 %v1839, %v2115
      %v2117 = vpop.f32.mrb[0].mxu0
      %2118 = vmatprep.mubr.bf16.mxu0 0
      %2119 = vmatmul.mubr.bf16.gmra.mrb[0].mxu0 %v1941
      %v2120 = vpop.f32.mrb[0].mxu0
      %v2121 = vadd.f32 %v1844, %v2120
      %v2122 = vpop.f32.mrb[0].mxu0
      %v2123 = vpop.f32.mrb[0].mxu0
      %v2124 = vadd.f32 %v1847, %v2123
      %v2125 = vpop.f32.mrb[0].mxu0
      %2126 = vmatprep.mubr.bf16.mxu0 0
      %2127 = vmatmul.mubr.bf16.gmra.mrb[0].mxu0 %v1944
      %v2128 = vpop.f32.mrb[0].mxu0
      %v2129 = vadd.f32 %v1852, %v2128
      %v2130 = vpop.f32.mrb[0].mxu0
      %v2131 = vpop.f32.mrb[0].mxu0
      %v2132 = vadd.f32 %v1855, %v2131
      %v2133 = vpop.f32.mrb[0].mxu0
      %2134 = vmatprep.mubr.bf16.mxu0 0
      %2135 = vmatmul.mubr.bf16.gmra.mrb[0].mxu0 %v1947
      %v2136 = vpop.f32.mrb[0].mxu0
      %v2137 = vadd.f32 %v1860, %v2136
      %v2138 = vpop.f32.mrb[0].mxu0
      %v2139 = vpop.f32.mrb[0].mxu0
      %v2140 = vadd.f32 %v1863, %v2139
      %v2141 = vpop.f32.mrb[0].mxu0
      %2142 = vmatprep.mubr.bf16.mxu0 0
      %2143 = vmatmul.mubr.bf16.gmra.mrb[0].mxu0 %v1950
      %v2144 = vpop.f32.mrb[0].mxu0
      %v2145 = vadd.f32 %v1868, %v2144
      %v2146 = vpop.f32.mrb[0].mxu0
      %v2147 = vpop.f32.mrb[0].mxu0
      %v2148 = vadd.f32 %v1871, %v2147
      %v2149 = vpop.f32.mrb[0].mxu0
      %2150 = vmatprep.mubr.bf16.mxu0 0
      %2151 = vmatmul.mubr.bf16.gmra.mrb[0].mxu0 %v1953
      %v2152 = vpop.f32.mrb[0].mxu0
      %v2153 = vadd.f32 %v1876, %v2152
      %v2154 = vpop.f32.mrb[0].mxu0
      %v2155 = vpop.f32.mrb[0].mxu0
      %v2156 = vpop.f32.mrb[0].mxu0
      %2157 = vdwg.mxu0
      %v2158 = vld [vmem:[#allocation3 + $0x7] sm:$0xff]
      %v2159 = vld [vmem:[#allocation3 + $0xf] sm:$0xff]
      %v2160 = vld [vmem:[#allocation3 + $0x17] sm:$0xff]
      %v2161 = vld [vmem:[#allocation3 + $0x1f] sm:$0xff]
      %v2162 = vld [vmem:[#allocation3 + $0x27] sm:$0xff]
      %v2163 = vld [vmem:[#allocation3 + $0x2f] sm:$0xff]
      %v2164 = vld [vmem:[#allocation3 + $0x37] sm:$0xff]
      %v2165 = vld [vmem:[#allocation3 + $0x3f] sm:$0xff]
      %v2166 = vld [vmem:[#allocation3 + $0x47] sm:$0xff]
      %v2167 = vld [vmem:[#allocation3 + $0x4f] sm:$0xff]
      %v2168 = vld [vmem:[#allocation3 + $0x57] sm:$0xff]
      %v2169 = vld [vmem:[#allocation3 + $0x5f] sm:$0xff]
      %v2170 = vld [vmem:[#allocation3 + $0x67] sm:$0xff]
      %v2171 = vld [vmem:[#allocation3 + $0x6f] sm:$0xff]
      %v2172 = vld [vmem:[#allocation3 + $0x77] sm:$0xff]
      %v2173 = vld [vmem:[#allocation3 + $0x7f] sm:$0xff]
      %v2174 = vld [vmem:[#allocation3 + $0x87] sm:$0xff]
      %v2175 = vld [vmem:[#allocation3 + $0x8f] sm:$0xff]
      %v2176 = vld [vmem:[#allocation3 + $0x97] sm:$0xff]
      %v2177 = vld [vmem:[#allocation3 + $0x9f] sm:$0xff]
      %v2178 = vld [vmem:[#allocation3 + $0xa7] sm:$0xff]
      %v2179 = vld [vmem:[#allocation3 + $0xaf] sm:$0xff]
      %v2180 = vld [vmem:[#allocation3 + $0xb7] sm:$0xff]
      %v2181 = vld [vmem:[#allocation3 + $0xbf] sm:$0xff]
      %v2182 = vld [vmem:[#allocation3 + $0xc7] sm:$0xff]
      %v2183 = vld [vmem:[#allocation3 + $0xcf] sm:$0xff]
      %v2184 = vld [vmem:[#allocation3 + $0xd7] sm:$0xff]
      %v2185 = vld [vmem:[#allocation3 + $0xdf] sm:$0xff]
      %v2186 = vld [vmem:[#allocation3 + $0xe7] sm:$0xff]
      %v2187 = vld [vmem:[#allocation3 + $0xef] sm:$0xff]
      %v2188 = vld [vmem:[#allocation3 + $0xf7] sm:$0xff]
      %v2189 = vld [vmem:[#allocation3 + $0xff] sm:$0xff]
      %v2190 = vld [vmem:[#allocation3 + $0x107] sm:$0xff]
      %v2191 = vld [vmem:[#allocation3 + $0x10f] sm:$0xff]
      %v2192 = vld [vmem:[#allocation3 + $0x117] sm:$0xff]
      %v2193 = vld [vmem:[#allocation3 + $0x11f] sm:$0xff]
      %v2194 = vld [vmem:[#allocation3 + $0x127] sm:$0xff]
      %v2195 = vld [vmem:[#allocation3 + $0x12f] sm:$0xff]
      %v2196 = vld [vmem:[#allocation3 + $0x137] sm:$0xff]
      %v2197 = vld [vmem:[#allocation3 + $0x13f] sm:$0xff]
      %v2198 = vld [vmem:[#allocation3 + $0x147] sm:$0xff]
      %v2199 = vpack.c.bf16 %v2159, %v2158
      %v2200 = vpack.c.bf16 %v2161, %v2160
      %v2201 = vpack.c.bf16 %v2163, %v2162
      %v2202 = vpack.c.bf16 %v2165, %v2164
      %v2203 = vpack.c.bf16 %v2167, %v2166
      %v2204 = vpack.c.bf16 %v2169, %v2168
      %v2205 = vpack.c.bf16 %v2171, %v2170
      %v2206 = vpack.c.bf16 %v2173, %v2172
      %v2207 = vpack.c.bf16 %v2175, %v2174
      %v2208 = vpack.c.bf16 %v2177, %v2176
      %v2209 = vpack.c.bf16 %v2179, %v2178
      %v2210 = vpack.c.bf16 %v2181, %v2180
      %v2211 = vpack.c.bf16 %v2183, %v2182
      %v2212 = vpack.c.bf16 %v2185, %v2184
      %v2213 = vpack.c.bf16 %v2187, %v2186
      %v2214 = vpack.c.bf16 %v2189, %v2188
      %v2215 = vpack.c.bf16 %v2191, %v2190
      %v2216 = vpack.c.bf16 %v2193, %v2192
      %v2217 = vpack.c.bf16 %v2195, %v2194
      %v2218 = vpack.c.bf16 %v2197, %v2196
      %v2219 = vpack.c.bf16 %v2198, %v2198
      %s2220 = scalar_lea.vmem %s4, 32
      %v2221 = vld [vmem:[%s2220] sm:$0xf]
      %v2222 = vld [vmem:[%s2220 + $0x4] sm:$0xf]
      %v2223 = vld [vmem:[%s2220 + $0x8] sm:$0xf]
      %v2224 = vld [vmem:[%s2220 + $0xc] sm:$0x3]
      %v2229 = vunpack.c.l.b16 %v2221
      %v2230 = vunpack.c.l.b16 %v2222
      %v2231 = vunpack.c.l.b16 %v2223
      %v2232 = vunpack.c.l.b16 %v2224
      %v2233 = vpack.c.b16 %v2230, %v2229
      %v2234 = vpack.c.b16 %v2232, %v2231
      %v2237 = vsel %vm1381, %v2199, 0
      %v2240 = vsel %vm1381, %v2200, 0
      %v2243 = vsel %vm1381, %v2201, 0
      %v2246 = vsel %vm1381, %v2202, 0
      %v2249 = vsel %vm1381, %v2203, 0
      %v2252 = vsel %vm1381, %v2204, 0
      %v2255 = vsel %vm1381, %v2205, 0
      %v2258 = vsel %vm1381, %v2206, 0
      %v2261 = vsel %vm1381, %v2207, 0
      %v2264 = vsel %vm1381, %v2208, 0
      %v2267 = vsel %vm1381, %v2209, 0
      %v2270 = vsel %vm1381, %v2210, 0
      %v2273 = vsel %vm1381, %v2211, 0
      %v2276 = vsel %vm1381, %v2212, 0
      %v2279 = vsel %vm1381, %v2213, 0
      %v2282 = vsel %vm1381, %v2214, 0
      %v2285 = vsel %vm1381, %v2215, 0
      %v2288 = vsel %vm1381, %v2216, 0
      %v2291 = vsel %vm1381, %v2217, 0
      %v2294 = vsel %vm1381, %v2218, 0
      %v2297 = vsel %vm1381, %v2219, 0
      %v2300 = vsel %vm1677, %v2234, 0
      %2302 = vmatprep.subr.bf16.mxu0 0
      %2303 = vmatpush1.bf16.msra.mxu0 %v2233
      %2304 = vmatprep.subr.bf16.mxu0 0
      %2305 = vmatpush1.bf16.msra.mxu0 %v2300
      %2306 = vmatprep.subr.bf16.mxu0 0
      %2307 = vmatpush1.bf16.msra.mxu0 0
      %2308 = vmatprep.subr.bf16.mxu0 0
      %2309 = vmatpush1.bf16.msra.mxu0 0
      %2310 = vmatprep.subr.bf16.mxu0 0
      %2311 = vmatpush1.bf16.msra.mxu0 0
      %2312 = vmatprep.subr.bf16.mxu0 0
      %2313 = vmatpush1.bf16.msra.mxu0 0
      %2314 = vmatprep.subr.bf16.mxu0 0
      %2315 = vmatpush1.bf16.msra.mxu0 0
      %2316 = vmatprep.subr.bf16.mxu0 0
      %2317 = vmatpush1.bf16.msra.mxu0 0
      %2318 = vmatprep.subr.bf16.mxu0 0
      %2319 = vmatpush1.bf16.msra.mxu0 0
      %2320 = vmatprep.subr.bf16.mxu0 0
      %2321 = vmatpush1.bf16.msra.mxu0 0
      %2322 = vmatprep.subr.bf16.mxu0 0
      %2323 = vmatpush1.bf16.msra.mxu0 0
      %2324 = vmatprep.subr.bf16.mxu0 0
      %2325 = vmatpush1.bf16.msra.mxu0 0
      %2326 = vmatprep.subr.bf16.mxu0 0
      %2327 = vmatpush1.bf16.msra.mxu0 0
      %2328 = vmatprep.subr.bf16.mxu0 0
      %2329 = vmatpush1.bf16.msra.mxu0 0
      %2330 = vmatprep.subr.bf16.mxu0 0
      %2331 = vmatpush1.bf16.msra.mxu0 0
      %2332 = vmatprep.subr.bf16.mxu0 0
      %2333 = vmatpush1.bf16.msra.mxu0 0
      %2334 = vmatprep.mubr.bf16.mxu0 0
      %2335 = vmatmul.mubr.bf16.gmra.mrb[0].mxu0 %v2237
      %v2336 = vpop.f32.mrb[0].mxu0
      %v2337 = vadd.f32 0.0, %v2336
      %v2338 = vpop.f32.mrb[0].mxu0
      %v2339 = vpop.f32.mrb[0].mxu0
      %v2340 = vadd.f32 0.0, %v2339
      %v2341 = vpop.f32.mrb[0].mxu0
      %2342 = vmatprep.mubr.bf16.mxu0 0
      %2343 = vmatmul.mubr.bf16.gmra.mrb[0].mxu0 %v2240
      %v2344 = vpop.f32.mrb[0].mxu0
      %v2345 = vadd.f32 0.0, %v2344
      %v2346 = vpop.f32.mrb[0].mxu0
      %v2347 = vpop.f32.mrb[0].mxu0
      %v2348 = vadd.f32 0.0, %v2347
      %v2349 = vpop.f32.mrb[0].mxu0
      %2350 = vmatprep.mubr.bf16.mxu0 0
      %2351 = vmatmul.mubr.bf16.gmra.mrb[0].mxu0 %v2243
      %v2352 = vpop.f32.mrb[0].mxu0
      %v2353 = vadd.f32 0.0, %v2352
      %v2354 = vpop.f32.mrb[0].mxu0
      %v2355 = vpop.f32.mrb[0].mxu0
      %v2356 = vadd.f32 0.0, %v2355
      %v2357 = vpop.f32.mrb[0].mxu0
      %2358 = vmatprep.mubr.bf16.mxu0 0
      %2359 = vmatmul.mubr.bf16.gmra.mrb[0].mxu0 %v2246
      %v2360 = vpop.f32.mrb[0].mxu0
      %v2361 = vadd.f32 0.0, %v2360
      %v2362 = vpop.f32.mrb[0].mxu0
      %v2363 = vpop.f32.mrb[0].mxu0
      %v2364 = vadd.f32 0.0, %v2363
      %v2365 = vpop.f32.mrb[0].mxu0
      %2366 = vmatprep.mubr.bf16.mxu0 0
      %2367 = vmatmul.mubr.bf16.gmra.mrb[0].mxu0 %v2249
      %v2368 = vpop.f32.mrb[0].mxu0
      %v2369 = vadd.f32 0.0, %v2368
      %v2370 = vpop.f32.mrb[0].mxu0
      %v2371 = vpop.f32.mrb[0].mxu0
      %v2372 = vadd.f32 0.0, %v2371
      %v2373 = vpop.f32.mrb[0].mxu0
      %2374 = vmatprep.mubr.bf16.mxu0 0
      %2375 = vmatmul.mubr.bf16.gmra.mrb[0].mxu0 %v2252
      %v2376 = vpop.f32.mrb[0].mxu0
      %v2377 = vadd.f32 0.0, %v2376
      %v2378 = vpop.f32.mrb[0].mxu0
      %v2379 = vpop.f32.mrb[0].mxu0
      %v2380 = vadd.f32 0.0, %v2379
      %v2381 = vpop.f32.mrb[0].mxu0
      %2382 = vmatprep.mubr.bf16.mxu0 0
      %2383 = vmatmul.mubr.bf16.gmra.mrb[0].mxu0 %v2255
      %v2384 = vpop.f32.mrb[0].mxu0
      %v2385 = vadd.f32 0.0, %v2384
      %v2386 = vpop.f32.mrb[0].mxu0
      %v2387 = vpop.f32.mrb[0].mxu0
      %v2388 = vadd.f32 0.0, %v2387
      %v2389 = vpop.f32.mrb[0].mxu0
      %2390 = vmatprep.mubr.bf16.mxu0 0
      %2391 = vmatmul.mubr.bf16.gmra.mrb[0].mxu0 %v2258
      %v2392 = vpop.f32.mrb[0].mxu0
      %v2393 = vadd.f32 0.0, %v2392
      %v2394 = vpop.f32.mrb[0].mxu0
      %v2395 = vpop.f32.mrb[0].mxu0
      %v2396 = vadd.f32 0.0, %v2395
      %v2397 = vpop.f32.mrb[0].mxu0
      %2398 = vmatprep.mubr.bf16.mxu0 0
      %2399 = vmatmul.mubr.bf16.gmra.mrb[0].mxu0 %v2261
      %v2400 = vpop.f32.mrb[0].mxu0
      %v2401 = vadd.f32 0.0, %v2400
      %v2402 = vpop.f32.mrb[0].mxu0
      %v2403 = vpop.f32.mrb[0].mxu0
      %v2404 = vadd.f32 0.0, %v2403
      %v2405 = vpop.f32.mrb[0].mxu0
      %2406 = vmatprep.mubr.bf16.mxu0 0
      %2407 = vmatmul.mubr.bf16.gmra.mrb[0].mxu0 %v2264
      %v2408 = vpop.f32.mrb[0].mxu0
      %v2409 = vadd.f32 0.0, %v2408
      %v2410 = vpop.f32.mrb[0].mxu0
      %v2411 = vpop.f32.mrb[0].mxu0
      %v2412 = vadd.f32 0.0, %v2411
      %v2413 = vpop.f32.mrb[0].mxu0
      %2414 = vmatprep.mubr.bf16.mxu0 0
      %2415 = vmatmul.mubr.bf16.gmra.mrb[0].mxu0 %v2267
      %v2416 = vpop.f32.mrb[0].mxu0
      %v2417 = vadd.f32 0.0, %v2416
      %v2418 = vpop.f32.mrb[0].mxu0
      %v2419 = vpop.f32.mrb[0].mxu0
      %v2420 = vadd.f32 0.0, %v2419
      %v2421 = vpop.f32.mrb[0].mxu0
      %2422 = vmatprep.mubr.bf16.mxu0 0
      %2423 = vmatmul.mubr.bf16.gmra.mrb[0].mxu0 %v2270
      %v2424 = vpop.f32.mrb[0].mxu0
      %v2425 = vadd.f32 0.0, %v2424
      %v2426 = vpop.f32.mrb[0].mxu0
      %v2427 = vpop.f32.mrb[0].mxu0
      %v2428 = vadd.f32 0.0, %v2427
      %v2429 = vpop.f32.mrb[0].mxu0
      %2430 = vmatprep.mubr.bf16.mxu0 0
      %2431 = vmatmul.mubr.bf16.gmra.mrb[0].mxu0 %v2273
      %v2432 = vpop.f32.mrb[0].mxu0
      %v2433 = vadd.f32 0.0, %v2432
      %v2434 = vpop.f32.mrb[0].mxu0
      %v2435 = vpop.f32.mrb[0].mxu0
      %v2436 = vadd.f32 0.0, %v2435
      %v2437 = vpop.f32.mrb[0].mxu0
      %2438 = vmatprep.mubr.bf16.mxu0 0
      %2439 = vmatmul.mubr.bf16.gmra.mrb[0].mxu0 %v2276
      %v2440 = vpop.f32.mrb[0].mxu0
      %v2441 = vadd.f32 0.0, %v2440
      %v2442 = vpop.f32.mrb[0].mxu0
      %v2443 = vpop.f32.mrb[0].mxu0
      %v2444 = vadd.f32 0.0, %v2443
      %v2445 = vpop.f32.mrb[0].mxu0
      %2446 = vmatprep.mubr.bf16.mxu0 0
      %2447 = vmatmul.mubr.bf16.gmra.mrb[0].mxu0 %v2279
      %v2448 = vpop.f32.mrb[0].mxu0
      %v2449 = vadd.f32 0.0, %v2448
      %v2450 = vpop.f32.mrb[0].mxu0
      %v2451 = vpop.f32.mrb[0].mxu0
      %v2452 = vadd.f32 0.0, %v2451
      %v2453 = vpop.f32.mrb[0].mxu0
      %2454 = vmatprep.mubr.bf16.mxu0 0
      %2455 = vmatmul.mubr.bf16.gmra.mrb[0].mxu0 %v2282
      %v2456 = vpop.f32.mrb[0].mxu0
      %v2457 = vadd.f32 0.0, %v2456
      %v2458 = vpop.f32.mrb[0].mxu0
      %v2459 = vpop.f32.mrb[0].mxu0
      %v2460 = vadd.f32 0.0, %v2459
      %v2461 = vpop.f32.mrb[0].mxu0
      %2462 = vmatprep.mubr.bf16.mxu0 0
      %2463 = vmatmul.mubr.bf16.gmra.mrb[0].mxu0 %v2285
      %v2464 = vpop.f32.mrb[0].mxu0
      %v2465 = vadd.f32 0.0, %v2464
      %v2466 = vpop.f32.mrb[0].mxu0
      %v2467 = vpop.f32.mrb[0].mxu0
      %v2468 = vadd.f32 0.0, %v2467
      %v2469 = vpop.f32.mrb[0].mxu0
      %2470 = vmatprep.mubr.bf16.mxu0 0
      %2471 = vmatmul.mubr.bf16.gmra.mrb[0].mxu0 %v2288
      %v2472 = vpop.f32.mrb[0].mxu0
      %v2473 = vadd.f32 0.0, %v2472
      %v2474 = vpop.f32.mrb[0].mxu0
      %v2475 = vpop.f32.mrb[0].mxu0
      %v2476 = vadd.f32 0.0, %v2475
      %v2477 = vpop.f32.mrb[0].mxu0
      %2478 = vmatprep.mubr.bf16.mxu0 0
      %2479 = vmatmul.mubr.bf16.gmra.mrb[0].mxu0 %v2291
      %v2480 = vpop.f32.mrb[0].mxu0
      %v2481 = vadd.f32 0.0, %v2480
      %v2482 = vpop.f32.mrb[0].mxu0
      %v2483 = vpop.f32.mrb[0].mxu0
      %v2484 = vadd.f32 0.0, %v2483
      %v2485 = vpop.f32.mrb[0].mxu0
      %2486 = vmatprep.mubr.bf16.mxu0 0
      %2487 = vmatmul.mubr.bf16.gmra.mrb[0].mxu0 %v2294
      %v2488 = vpop.f32.mrb[0].mxu0
      %v2489 = vadd.f32 0.0, %v2488
      %v2490 = vpop.f32.mrb[0].mxu0
      %v2491 = vpop.f32.mrb[0].mxu0
      %v2492 = vadd.f32 0.0, %v2491
      %v2493 = vpop.f32.mrb[0].mxu0
      %2494 = vmatprep.mubr.bf16.mxu0 0
      %2495 = vmatmul.mubr.bf16.gmra.mrb[0].mxu0 %v2297
      %v2496 = vpop.f32.mrb[0].mxu0
      %v2497 = vadd.f32 0.0, %v2496
      %v2498 = vpop.f32.mrb[0].mxu0
      %v2499 = vpop.f32.mrb[0].mxu0
      %v2500 = vpop.f32.mrb[0].mxu0
      %2501 = vdwg.mxu0
      %v2502 = vadd.f32 %v1993, %v2337
      %v2503 = vadd.f32 %v1996, %v2340
      %v2504 = vadd.f32 %v2001, %v2345
      %v2505 = vadd.f32 %v2004, %v2348
      %v2506 = vadd.f32 %v2009, %v2353
      %v2507 = vadd.f32 %v2012, %v2356
      %v2508 = vadd.f32 %v2017, %v2361
      %v2509 = vadd.f32 %v2020, %v2364
      %v2510 = vadd.f32 %v2025, %v2369
      %v2511 = vadd.f32 %v2028, %v2372
      %v2512 = vadd.f32 %v2033, %v2377
      %v2513 = vadd.f32 %v2036, %v2380
      %v2514 = vadd.f32 %v2041, %v2385
      %v2515 = vadd.f32 %v2044, %v2388
      %v2516 = vadd.f32 %v2049, %v2393
      %v2517 = vadd.f32 %v2052, %v2396
      %v2518 = vadd.f32 %v2057, %v2401
      %v2519 = vadd.f32 %v2060, %v2404
      %v2520 = vadd.f32 %v2065, %v2409
      %v2521 = vadd.f32 %v2068, %v2412
      %v2522 = vadd.f32 %v2073, %v2417
      %v2523 = vadd.f32 %v2076, %v2420
      %v2524 = vadd.f32 %v2081, %v2425
      %v2525 = vadd.f32 %v2084, %v2428
      %v2526 = vadd.f32 %v2089, %v2433
      %v2527 = vadd.f32 %v2092, %v2436
      %v2528 = vadd.f32 %v2097, %v2441
      %v2529 = vadd.f32 %v2100, %v2444
      %v2530 = vadd.f32 %v2105, %v2449
      %v2531 = vadd.f32 %v2108, %v2452
      %v2532 = vadd.f32 %v2113, %v2457
      %v2533 = vadd.f32 %v2116, %v2460
      %v2534 = vadd.f32 %v2121, %v2465
      %v2535 = vadd.f32 %v2124, %v2468
      %v2536 = vadd.f32 %v2129, %v2473
      %v2537 = vadd.f32 %v2132, %v2476
      %v2538 = vadd.f32 %v2137, %v2481
      %v2539 = vadd.f32 %v2140, %v2484
      %v2540 = vadd.f32 %v2145, %v2489
      %v2541 = vadd.f32 %v2148, %v2492
      %v2542 = vadd.f32 %v2153, %v2497
      %v2543 = vld [vmem:[#allocation3 + $0x17] sm:$0xff]
      %v2544 = vld [vmem:[#allocation3 + $0x1f] sm:$0xff]
      %v2545 = vld [vmem:[#allocation3 + $0x27] sm:$0xff]
      %v2546 = vld [vmem:[#allocation3 + $0x2f] sm:$0xff]
      %v2547 = vld [vmem:[#allocation3 + $0x37] sm:$0xff]
      %v2548 = vld [vmem:[#allocation3 + $0x3f] sm:$0xff]
      %v2549 = vld [vmem:[#allocation3 + $0x47] sm:$0xff]
      %v2550 = vld [vmem:[#allocation3 + $0x4f] sm:$0xff]
      %v2551 = vld [vmem:[#allocation3 + $0x57] sm:$0xff]
      %v2552 = vld [vmem:[#allocation3 + $0x5f] sm:$0xff]
      %v2553 = vld [vmem:[#allocation3 + $0x67] sm:$0xff]
      %v2554 = vld [vmem:[#allocation3 + $0x6f] sm:$0xff]
      %v2555 = vld [vmem:[#allocation3 + $0x77] sm:$0xff]
      %v2556 = vld [vmem:[#allocation3 + $0x7f] sm:$0xff]
      %v2557 = vld [vmem:[#allocation3 + $0x87] sm:$0xff]
      %v2558 = vld [vmem:[#allocation3 + $0x8f] sm:$0xff]
      %v2559 = vld [vmem:[#allocation3 + $0x97] sm:$0xff]
      %v2560 = vld [vmem:[#allocation3 + $0x9f] sm:$0xff]
      %v2561 = vld [vmem:[#allocation3 + $0xa7] sm:$0xff]
      %v2562 = vld [vmem:[#allocation3 + $0xaf] sm:$0xff]
      %v2563 = vld [vmem:[#allocation3 + $0xb7] sm:$0xff]
      %v2564 = vld [vmem:[#allocation3 + $0xbf] sm:$0xff]
      %v2565 = vld [vmem:[#allocation3 + $0xc7] sm:$0xff]
      %v2566 = vld [vmem:[#allocation3 + $0xcf] sm:$0xff]
      %v2567 = vld [vmem:[#allocation3 + $0xd7] sm:$0xff]
      %v2568 = vld [vmem:[#allocation3 + $0xdf] sm:$0xff]
      %v2569 = vld [vmem:[#allocation3 + $0xe7] sm:$0xff]
      %v2570 = vld [vmem:[#allocation3 + $0xef] sm:$0xff]
      %v2571 = vld [vmem:[#allocation3 + $0xf7] sm:$0xff]
      %v2572 = vld [vmem:[#allocation3 + $0xff] sm:$0xff]
      %v2573 = vld [vmem:[#allocation3 + $0x107] sm:$0xff]
      %v2574 = vld [vmem:[#allocation3 + $0x10f] sm:$0xff]
      %v2575 = vld [vmem:[#allocation3 + $0x117] sm:$0xff]
      %v2576 = vld [vmem:[#allocation3 + $0x11f] sm:$0xff]
      %v2577 = vld [vmem:[#allocation3 + $0x127] sm:$0xff]
      %v2578 = vld [vmem:[#allocation3 + $0x12f] sm:$0xff]
      %v2579 = vld [vmem:[#allocation3 + $0x137] sm:$0xff]
      %v2580 = vld [vmem:[#allocation3 + $0x13f] sm:$0xff]
      %v2581 = vld [vmem:[#allocation3 + $0x147] sm:$0xff]
      %v2582 = vld [vmem:[#allocation3 + $0x14f] sm:$0xff]
      %v2583 = vld [vmem:[#allocation3 + $0x157] sm:$0xff]
      %v2584 = vpack.c.bf16 %v2544, %v2543
      %v2585 = vpack.c.bf16 %v2546, %v2545
      %v2586 = vpack.c.bf16 %v2548, %v2547
      %v2587 = vpack.c.bf16 %v2550, %v2549
      %v2588 = vpack.c.bf16 %v2552, %v2551
      %v2589 = vpack.c.bf16 %v2554, %v2553
      %v2590 = vpack.c.bf16 %v2556, %v2555
      %v2591 = vpack.c.bf16 %v2558, %v2557
      %v2592 = vpack.c.bf16 %v2560, %v2559
      %v2593 = vpack.c.bf16 %v2562, %v2561
      %v2594 = vpack.c.bf16 %v2564, %v2563
      %v2595 = vpack.c.bf16 %v2566, %v2565
      %v2596 = vpack.c.bf16 %v2568, %v2567
      %v2597 = vpack.c.bf16 %v2570, %v2569
      %v2598 = vpack.c.bf16 %v2572, %v2571
      %v2599 = vpack.c.bf16 %v2574, %v2573
      %v2600 = vpack.c.bf16 %v2576, %v2575
      %v2601 = vpack.c.bf16 %v2578, %v2577
      %v2602 = vpack.c.bf16 %v2580, %v2579
      %v2603 = vpack.c.bf16 %v2582, %v2581
      %v2604 = vpack.c.bf16 %v2583, %v2583
      %s2605 = scalar_lea.vmem %s4, 48
      %v2606 = vld [vmem:[%s2605] sm:$0xf]
      %v2607 = vld [vmem:[%s2605 + $0x4] sm:$0xf]
      %v2608 = vld [vmem:[%s2605 + $0x8] sm:$0xf]
      %v2609 = vld [vmem:[%s2605 + $0xc] sm:$0x3]
      %v2614 = vunpack.c.l.b16 %v2606
      %v2615 = vunpack.c.l.b16 %v2607
      %v2616 = vunpack.c.l.b16 %v2608
      %v2617 = vunpack.c.l.b16 %v2609
      %v2618 = vpack.c.b16 %v2615, %v2614
      %v2619 = vpack.c.b16 %v2617, %v2616
      %v2622 = vsel %vm1381, %v2584, 0
      %v2625 = vsel %vm1381, %v2585, 0
      %v2628 = vsel %vm1381, %v2586, 0
      %v2631 = vsel %vm1381, %v2587, 0
      %v2634 = vsel %vm1381, %v2588, 0
      %v2637 = vsel %vm1381, %v2589, 0
      %v2640 = vsel %vm1381, %v2590, 0
      %v2643 = vsel %vm1381, %v2591, 0
      %v2646 = vsel %vm1381, %v2592, 0
      %v2649 = vsel %vm1381, %v2593, 0
      %v2652 = vsel %vm1381, %v2594, 0
      %v2655 = vsel %vm1381, %v2595, 0
      %v2658 = vsel %vm1381, %v2596, 0
      %v2661 = vsel %vm1381, %v2597, 0
      %v2664 = vsel %vm1381, %v2598, 0
      %v2667 = vsel %vm1381, %v2599, 0
      %v2670 = vsel %vm1381, %v2600, 0
      %v2673 = vsel %vm1381, %v2601, 0
      %v2676 = vsel %vm1381, %v2602, 0
      %v2679 = vsel %vm1381, %v2603, 0
      %v2682 = vsel %vm1381, %v2604, 0
      %v2685 = vsel %vm1677, %v2619, 0
      %2687 = vmatprep.subr.bf16.mxu0 0
      %2688 = vmatpush1.bf16.msra.mxu0 %v2618
      %2689 = vmatprep.subr.bf16.mxu0 0
      %2690 = vmatpush1.bf16.msra.mxu0 %v2685
      %2691 = vmatprep.subr.bf16.mxu0 0
      %2692 = vmatpush1.bf16.msra.mxu0 0
      %2693 = vmatprep.subr.bf16.mxu0 0
      %2694 = vmatpush1.bf16.msra.mxu0 0
      %2695 = vmatprep.subr.bf16.mxu0 0
      %2696 = vmatpush1.bf16.msra.mxu0 0
      %2697 = vmatprep.subr.bf16.mxu0 0
      %2698 = vmatpush1.bf16.msra.mxu0 0
      %2699 = vmatprep.subr.bf16.mxu0 0
      %2700 = vmatpush1.bf16.msra.mxu0 0
      %2701 = vmatprep.subr.bf16.mxu0 0
      %2702 = vmatpush1.bf16.msra.mxu0 0
      %2703 = vmatprep.subr.bf16.mxu0 0
      %2704 = vmatpush1.bf16.msra.mxu0 0
      %2705 = vmatprep.subr.bf16.mxu0 0
      %2706 = vmatpush1.bf16.msra.mxu0 0
      %2707 = vmatprep.subr.bf16.mxu0 0
      %2708 = vmatpush1.bf16.msra.mxu0 0
      %2709 = vmatprep.subr.bf16.mxu0 0
      %2710 = vmatpush1.bf16.msra.mxu0 0
      %2711 = vmatprep.subr.bf16.mxu0 0
      %2712 = vmatpush1.bf16.msra.mxu0 0
      %2713 = vmatprep.subr.bf16.mxu0 0
      %2714 = vmatpush1.bf16.msra.mxu0 0
      %2715 = vmatprep.subr.bf16.mxu0 0
      %2716 = vmatpush1.bf16.msra.mxu0 0
      %2717 = vmatprep.subr.bf16.mxu0 0
      %2718 = vmatpush1.bf16.msra.mxu0 0
      %2719 = vmatprep.mubr.bf16.mxu0 0
      %2720 = vmatmul.mubr.bf16.gmra.mrb[0].mxu0 %v2622
      %v2721 = vpop.f32.mrb[0].mxu0
      %v2722 = vadd.f32 0.0, %v2721
      %v2723 = vpop.f32.mrb[0].mxu0
      %v2724 = vpop.f32.mrb[0].mxu0
      %v2725 = vadd.f32 0.0, %v2724
      %v2726 = vpop.f32.mrb[0].mxu0
      %2727 = vmatprep.mubr.bf16.mxu0 0
      %2728 = vmatmul.mubr.bf16.gmra.mrb[0].mxu0 %v2625
      %v2729 = vpop.f32.mrb[0].mxu0
      %v2730 = vadd.f32 0.0, %v2729
      %v2731 = vpop.f32.mrb[0].mxu0
      %v2732 = vpop.f32.mrb[0].mxu0
      %v2733 = vadd.f32 0.0, %v2732
      %v2734 = vpop.f32.mrb[0].mxu0
      %2735 = vmatprep.mubr.bf16.mxu0 0
      %2736 = vmatmul.mubr.bf16.gmra.mrb[0].mxu0 %v2628
      %v2737 = vpop.f32.mrb[0].mxu0
      %v2738 = vadd.f32 0.0, %v2737
      %v2739 = vpop.f32.mrb[0].mxu0
      %v2740 = vpop.f32.mrb[0].mxu0
      %v2741 = vadd.f32 0.0, %v2740
      %v2742 = vpop.f32.mrb[0].mxu0
      %2743 = vmatprep.mubr.bf16.mxu0 0
      %2744 = vmatmul.mubr.bf16.gmra.mrb[0].mxu0 %v2631
      %v2745 = vpop.f32.mrb[0].mxu0
      %v2746 = vadd.f32 0.0, %v2745
      %v2747 = vpop.f32.mrb[0].mxu0
      %v2748 = vpop.f32.mrb[0].mxu0
      %v2749 = vadd.f32 0.0, %v2748
      %v2750 = vpop.f32.mrb[0].mxu0
      %2751 = vmatprep.mubr.bf16.mxu0 0
      %2752 = vmatmul.mubr.bf16.gmra.mrb[0].mxu0 %v2634
      %v2753 = vpop.f32.mrb[0].mxu0
      %v2754 = vadd.f32 0.0, %v2753
      %v2755 = vpop.f32.mrb[0].mxu0
      %v2756 = vpop.f32.mrb[0].mxu0
      %v2757 = vadd.f32 0.0, %v2756
      %v2758 = vpop.f32.mrb[0].mxu0
      %2759 = vmatprep.mubr.bf16.mxu0 0
      %2760 = vmatmul.mubr.bf16.gmra.mrb[0].mxu0 %v2637
      %v2761 = vpop.f32.mrb[0].mxu0
      %v2762 = vadd.f32 0.0, %v2761
      %v2763 = vpop.f32.mrb[0].mxu0
      %v2764 = vpop.f32.mrb[0].mxu0
      %v2765 = vadd.f32 0.0, %v2764
      %v2766 = vpop.f32.mrb[0].mxu0
      %2767 = vmatprep.mubr.bf16.mxu0 0
      %2768 = vmatmul.mubr.bf16.gmra.mrb[0].mxu0 %v2640
      %v2769 = vpop.f32.mrb[0].mxu0
      %v2770 = vadd.f32 0.0, %v2769
      %v2771 = vpop.f32.mrb[0].mxu0
      %v2772 = vpop.f32.mrb[0].mxu0
      %v2773 = vadd.f32 0.0, %v2772
      %v2774 = vpop.f32.mrb[0].mxu0
      %2775 = vmatprep.mubr.bf16.mxu0 0
      %2776 = vmatmul.mubr.bf16.gmra.mrb[0].mxu0 %v2643
      %v2777 = vpop.f32.mrb[0].mxu0
      %v2778 = vadd.f32 0.0, %v2777
      %v2779 = vpop.f32.mrb[0].mxu0
      %v2780 = vpop.f32.mrb[0].mxu0
      %v2781 = vadd.f32 0.0, %v2780
      %v2782 = vpop.f32.mrb[0].mxu0
      %2783 = vmatprep.mubr.bf16.mxu0 0
      %2784 = vmatmul.mubr.bf16.gmra.mrb[0].mxu0 %v2646
      %v2785 = vpop.f32.mrb[0].mxu0
      %v2786 = vadd.f32 0.0, %v2785
      %v2787 = vpop.f32.mrb[0].mxu0
      %v2788 = vpop.f32.mrb[0].mxu0
      %v2789 = vadd.f32 0.0, %v2788
      %v2790 = vpop.f32.mrb[0].mxu0
      %2791 = vmatprep.mubr.bf16.mxu0 0
      %2792 = vmatmul.mubr.bf16.gmra.mrb[0].mxu0 %v2649
      %v2793 = vpop.f32.mrb[0].mxu0
      %v2794 = vadd.f32 0.0, %v2793
      %v2795 = vpop.f32.mrb[0].mxu0
      %v2796 = vpop.f32.mrb[0].mxu0
      %v2797 = vadd.f32 0.0, %v2796
      %v2798 = vpop.f32.mrb[0].mxu0
      %2799 = vmatprep.mubr.bf16.mxu0 0
      %2800 = vmatmul.mubr.bf16.gmra.mrb[0].mxu0 %v2652
      %v2801 = vpop.f32.mrb[0].mxu0
      %v2802 = vadd.f32 0.0, %v2801
      %v2803 = vpop.f32.mrb[0].mxu0
      %v2804 = vpop.f32.mrb[0].mxu0
      %v2805 = vadd.f32 0.0, %v2804
      %v2806 = vpop.f32.mrb[0].mxu0
      %2807 = vmatprep.mubr.bf16.mxu0 0
      %2808 = vmatmul.mubr.bf16.gmra.mrb[0].mxu0 %v2655
      %v2809 = vpop.f32.mrb[0].mxu0
      %v2810 = vadd.f32 0.0, %v2809
      %v2811 = vpop.f32.mrb[0].mxu0
      %v2812 = vpop.f32.mrb[0].mxu0
      %v2813 = vadd.f32 0.0, %v2812
      %v2814 = vpop.f32.mrb[0].mxu0
      %2815 = vmatprep.mubr.bf16.mxu0 0
      %2816 = vmatmul.mubr.bf16.gmra.mrb[0].mxu0 %v2658
      %v2817 = vpop.f32.mrb[0].mxu0
      %v2818 = vadd.f32 0.0, %v2817
      %v2819 = vpop.f32.mrb[0].mxu0
      %v2820 = vpop.f32.mrb[0].mxu0
      %v2821 = vadd.f32 0.0, %v2820
      %v2822 = vpop.f32.mrb[0].mxu0
      %2823 = vmatprep.mubr.bf16.mxu0 0
      %2824 = vmatmul.mubr.bf16.gmra.mrb[0].mxu0 %v2661
      %v2825 = vpop.f32.mrb[0].mxu0
      %v2826 = vadd.f32 0.0, %v2825
      %v2827 = vpop.f32.mrb[0].mxu0
      %v2828 = vpop.f32.mrb[0].mxu0
      %v2829 = vadd.f32 0.0, %v2828
      %v2830 = vpop.f32.mrb[0].mxu0
      %2831 = vmatprep.mubr.bf16.mxu0 0
      %2832 = vmatmul.mubr.bf16.gmra.mrb[0].mxu0 %v2664
      %v2833 = vpop.f32.mrb[0].mxu0
      %v2834 = vadd.f32 0.0, %v2833
      %v2835 = vpop.f32.mrb[0].mxu0
      %v2836 = vpop.f32.mrb[0].mxu0
      %v2837 = vadd.f32 0.0, %v2836
      %v2838 = vpop.f32.mrb[0].mxu0
      %2839 = vmatprep.mubr.bf16.mxu0 0
      %2840 = vmatmul.mubr.bf16.gmra.mrb[0].mxu0 %v2667
      %v2841 = vpop.f32.mrb[0].mxu0
      %v2842 = vadd.f32 0.0, %v2841
      %v2843 = vpop.f32.mrb[0].mxu0
      %v2844 = vpop.f32.mrb[0].mxu0
      %v2845 = vadd.f32 0.0, %v2844
      %v2846 = vpop.f32.mrb[0].mxu0
      %2847 = vmatprep.mubr.bf16.mxu0 0
      %2848 = vmatmul.mubr.bf16.gmra.mrb[0].mxu0 %v2670
      %v2849 = vpop.f32.mrb[0].mxu0
      %v2850 = vadd.f32 0.0, %v2849
      %v2851 = vpop.f32.mrb[0].mxu0
      %v2852 = vpop.f32.mrb[0].mxu0
      %v2853 = vadd.f32 0.0, %v2852
      %v2854 = vpop.f32.mrb[0].mxu0
      %2855 = vmatprep.mubr.bf16.mxu0 0
      %2856 = vmatmul.mubr.bf16.gmra.mrb[0].mxu0 %v2673
      %v2857 = vpop.f32.mrb[0].mxu0
      %v2858 = vadd.f32 0.0, %v2857
      %v2859 = vpop.f32.mrb[0].mxu0
      %v2860 = vpop.f32.mrb[0].mxu0
      %v2861 = vadd.f32 0.0, %v2860
      %v2862 = vpop.f32.mrb[0].mxu0
      %2863 = vmatprep.mubr.bf16.mxu0 0
      %2864 = vmatmul.mubr.bf16.gmra.mrb[0].mxu0 %v2676
      %v2865 = vpop.f32.mrb[0].mxu0
      %v2866 = vadd.f32 0.0, %v2865
      %v2867 = vpop.f32.mrb[0].mxu0
      %v2868 = vpop.f32.mrb[0].mxu0
      %v2869 = vadd.f32 0.0, %v2868
      %v2870 = vpop.f32.mrb[0].mxu0
      %2871 = vmatprep.mubr.bf16.mxu0 0
      %2872 = vmatmul.mubr.bf16.gmra.mrb[0].mxu0 %v2679
      %v2873 = vpop.f32.mrb[0].mxu0
      %v2874 = vadd.f32 0.0, %v2873
      %v2875 = vpop.f32.mrb[0].mxu0
      %v2876 = vpop.f32.mrb[0].mxu0
      %v2877 = vadd.f32 0.0, %v2876
      %v2878 = vpop.f32.mrb[0].mxu0
      %2879 = vmatprep.mubr.bf16.mxu0 0
      %2880 = vmatmul.mubr.bf16.gmra.mrb[0].mxu0 %v2682
      %v2881 = vpop.f32.mrb[0].mxu0
      %v2882 = vadd.f32 0.0, %v2881
      %v2883 = vpop.f32.mrb[0].mxu0
      %v2884 = vpop.f32.mrb[0].mxu0
      %v2885 = vpop.f32.mrb[0].mxu0
      %2886 = vdwg.mxu0
      %v2887 = vadd.f32 %v2502, %v2722
      %v2888 = vadd.f32 %v2503, %v2725
      %v2889 = vadd.f32 %v2504, %v2730
      %v2890 = vadd.f32 %v2505, %v2733
      %v2891 = vadd.f32 %v2506, %v2738
      %v2892 = vadd.f32 %v2507, %v2741
      %v2893 = vadd.f32 %v2508, %v2746
      %v2894 = vadd.f32 %v2509, %v2749
      %v2895 = vadd.f32 %v2510, %v2754
      %v2896 = vadd.f32 %v2511, %v2757
      %v2897 = vadd.f32 %v2512, %v2762
      %v2898 = vadd.f32 %v2513, %v2765
      %v2899 = vadd.f32 %v2514, %v2770
      %v2900 = vadd.f32 %v2515, %v2773
      %v2901 = vadd.f32 %v2516, %v2778
      %v2902 = vadd.f32 %v2517, %v2781
      %v2903 = vadd.f32 %v2518, %v2786
      %v2904 = vadd.f32 %v2519, %v2789
      %v2905 = vadd.f32 %v2520, %v2794
      %v2906 = vadd.f32 %v2521, %v2797
      %v2907 = vadd.f32 %v2522, %v2802
      %v2908 = vadd.f32 %v2523, %v2805
      %v2909 = vadd.f32 %v2524, %v2810
      %v2910 = vadd.f32 %v2525, %v2813
      %v2911 = vadd.f32 %v2526, %v2818
      %v2912 = vadd.f32 %v2527, %v2821
      %v2913 = vadd.f32 %v2528, %v2826
      %v2914 = vadd.f32 %v2529, %v2829
      %v2915 = vadd.f32 %v2530, %v2834
      %v2916 = vadd.f32 %v2531, %v2837
      %v2917 = vadd.f32 %v2532, %v2842
      %v2918 = vadd.f32 %v2533, %v2845
      %v2919 = vadd.f32 %v2534, %v2850
      %v2920 = vadd.f32 %v2535, %v2853
      %v2921 = vadd.f32 %v2536, %v2858
      %v2922 = vadd.f32 %v2537, %v2861
      %v2923 = vadd.f32 %v2538, %v2866
      %v2924 = vadd.f32 %v2539, %v2869
      %v2925 = vadd.f32 %v2540, %v2874
      %v2926 = vadd.f32 %v2541, %v2877
      %v2927 = vadd.f32 %v2542, %v2882
      %v2928 = vld [vmem:[#allocation3 + $0x18] sm:$0xff]
      %v2929 = vld [vmem:[#allocation3 + $0x20] sm:$0xff]
      %v2930 = vld [vmem:[#allocation3 + $0x28] sm:$0xff]
      %v2931 = vld [vmem:[#allocation3 + $0x30] sm:$0xff]
      %v2932 = vld [vmem:[#allocation3 + $0x38] sm:$0xff]
      %v2933 = vld [vmem:[#allocation3 + $0x40] sm:$0xff]
      %v2934 = vld [vmem:[#allocation3 + $0x48] sm:$0xff]
      %v2935 = vld [vmem:[#allocation3 + $0x50] sm:$0xff]
      %v2936 = vld [vmem:[#allocation3 + $0x58] sm:$0xff]
      %v2937 = vld [vmem:[#allocation3 + $0x60] sm:$0xff]
      %v2938 = vld [vmem:[#allocation3 + $0x68] sm:$0xff]
      %v2939 = vld [vmem:[#allocation3 + $0x70] sm:$0xff]
      %v2940 = vld [vmem:[#allocation3 + $0x78] sm:$0xff]
      %v2941 = vld [vmem:[#allocation3 + $0x80] sm:$0xff]
      %v2942 = vld [vmem:[#allocation3 + $0x88] sm:$0xff]
      %v2943 = vld [vmem:[#allocation3 + $0x90] sm:$0xff]
      %v2944 = vld [vmem:[#allocation3 + $0x98] sm:$0xff]
      %v2945 = vld [vmem:[#allocation3 + $0xa0] sm:$0xff]
      %v2946 = vld [vmem:[#allocation3 + $0xa8] sm:$0xff]
      %v2947 = vld [vmem:[#allocation3 + $0xb0] sm:$0xff]
      %v2948 = vld [vmem:[#allocation3 + $0xb8] sm:$0xff]
      %v2949 = vld [vmem:[#allocation3 + $0xc0] sm:$0xff]
      %v2950 = vld [vmem:[#allocation3 + $0xc8] sm:$0xff]
      %v2951 = vld [vmem:[#allocation3 + $0xd0] sm:$0xff]
      %v2952 = vld [vmem:[#allocation3 + $0xd8] sm:$0xff]
      %v2953 = vld [vmem:[#allocation3 + $0xe0] sm:$0xff]
      %v2954 = vld [vmem:[#allocation3 + $0xe8] sm:$0xff]
      %v2955 = vld [vmem:[#allocation3 + $0xf0] sm:$0xff]
      %v2956 = vld [vmem:[#allocation3 + $0xf8] sm:$0xff]
      %v2957 = vld [vmem:[#allocation3 + $0x100] sm:$0xff]
      %v2958 = vld [vmem:[#allocation3 + $0x108] sm:$0xff]
      %v2959 = vld [vmem:[#allocation3 + $0x110] sm:$0xff]
      %v2960 = vld [vmem:[#allocation3 + $0x118] sm:$0xff]
      %v2961 = vld [vmem:[#allocation3 + $0x120] sm:$0xff]
      %v2962 = vld [vmem:[#allocation3 + $0x128] sm:$0xff]
      %v2963 = vld [vmem:[#allocation3 + $0x130] sm:$0xff]
      %v2964 = vld [vmem:[#allocation3 + $0x138] sm:$0xff]
      %v2965 = vld [vmem:[#allocation3 + $0x140] sm:$0xff]
      %v2966 = vld [vmem:[#allocation3 + $0x148] sm:$0xff]
      %v2967 = vld [vmem:[#allocation3 + $0x150] sm:$0xff]
      %v2968 = vld [vmem:[#allocation3 + $0x158] sm:$0xff]
      %v2969 = vpack.c.bf16 %v2929, %v2928
      %v2970 = vpack.c.bf16 %v2931, %v2930
      %v2971 = vpack.c.bf16 %v2933, %v2932
      %v2972 = vpack.c.bf16 %v2935, %v2934
      %v2973 = vpack.c.bf16 %v2937, %v2936
      %v2974 = vpack.c.bf16 %v2939, %v2938
      %v2975 = vpack.c.bf16 %v2941, %v2940
      %v2976 = vpack.c.bf16 %v2943, %v2942
      %v2977 = vpack.c.bf16 %v2945, %v2944
      %v2978 = vpack.c.bf16 %v2947, %v2946
      %v2979 = vpack.c.bf16 %v2949, %v2948
      %v2980 = vpack.c.bf16 %v2951, %v2950
      %v2981 = vpack.c.bf16 %v2953, %v2952
      %v2982 = vpack.c.bf16 %v2955, %v2954
      %v2983 = vpack.c.bf16 %v2957, %v2956
      %v2984 = vpack.c.bf16 %v2959, %v2958
      %v2985 = vpack.c.bf16 %v2961, %v2960
      %v2986 = vpack.c.bf16 %v2963, %v2962
      %v2987 = vpack.c.bf16 %v2965, %v2964
      %v2988 = vpack.c.bf16 %v2967, %v2966
      %v2989 = vpack.c.bf16 %v2968, %v2968
      %s2990 = scalar_lea.vmem %s4, 64
      %v2991 = vld [vmem:[%s2990] sm:$0xf]
      %v2992 = vld [vmem:[%s2990 + $0x4] sm:$0xf]
      %v2993 = vld [vmem:[%s2990 + $0x8] sm:$0xf]
      %v2994 = vld [vmem:[%s2990 + $0xc] sm:$0x3]
      %v2999 = vunpack.c.l.b16 %v2991
      %v3000 = vunpack.c.l.b16 %v2992
      %v3001 = vunpack.c.l.b16 %v2993
      %v3002 = vunpack.c.l.b16 %v2994
      %v3003 = vpack.c.b16 %v3000, %v2999
      %v3004 = vpack.c.b16 %v3002, %v3001
      %v3007 = vsel %vm1381, %v2969, 0
      %v3010 = vsel %vm1381, %v2970, 0
      %v3013 = vsel %vm1381, %v2971, 0
      %v3016 = vsel %vm1381, %v2972, 0
      %v3019 = vsel %vm1381, %v2973, 0
      %v3022 = vsel %vm1381, %v2974, 0
      %v3025 = vsel %vm1381, %v2975, 0
      %v3028 = vsel %vm1381, %v2976, 0
      %v3031 = vsel %vm1381, %v2977, 0
      %v3034 = vsel %vm1381, %v2978, 0
      %v3037 = vsel %vm1381, %v2979, 0
      %v3040 = vsel %vm1381, %v2980, 0
      %v3043 = vsel %vm1381, %v2981, 0
      %v3046 = vsel %vm1381, %v2982, 0
      %v3049 = vsel %vm1381, %v2983, 0
      %v3052 = vsel %vm1381, %v2984, 0
      %v3055 = vsel %vm1381, %v2985, 0
      %v3058 = vsel %vm1381, %v2986, 0
      %v3061 = vsel %vm1381, %v2987, 0
      %v3064 = vsel %vm1381, %v2988, 0
      %v3067 = vsel %vm1381, %v2989, 0
      %v3070 = vsel %vm1677, %v3004, 0
      %3072 = vmatprep.subr.bf16.mxu0 0
      %3073 = vmatpush1.bf16.msra.mxu0 %v3003
      %3074 = vmatprep.subr.bf16.mxu0 0
      %3075 = vmatpush1.bf16.msra.mxu0 %v3070
      %3076 = vmatprep.subr.bf16.mxu0 0
      %3077 = vmatpush1.bf16.msra.mxu0 0
      %3078 = vmatprep.subr.bf16.mxu0 0
      %3079 = vmatpush1.bf16.msra.mxu0 0
      %3080 = vmatprep.subr.bf16.mxu0 0
      %3081 = vmatpush1.bf16.msra.mxu0 0
      %3082 = vmatprep.subr.bf16.mxu0 0
      %3083 = vmatpush1.bf16.msra.mxu0 0
      %3084 = vmatprep.subr.bf16.mxu0 0
      %3085 = vmatpush1.bf16.msra.mxu0 0
      %3086 = vmatprep.subr.bf16.mxu0 0
      %3087 = vmatpush1.bf16.msra.mxu0 0
      %3088 = vmatprep.subr.bf16.mxu0 0
      %3089 = vmatpush1.bf16.msra.mxu0 0
      %3090 = vmatprep.subr.bf16.mxu0 0
      %3091 = vmatpush1.bf16.msra.mxu0 0
      %3092 = vmatprep.subr.bf16.mxu0 0
      %3093 = vmatpush1.bf16.msra.mxu0 0
      %3094 = vmatprep.subr.bf16.mxu0 0
      %3095 = vmatpush1.bf16.msra.mxu0 0
      %3096 = vmatprep.subr.bf16.mxu0 0
      %3097 = vmatpush1.bf16.msra.mxu0 0
      %3098 = vmatprep.subr.bf16.mxu0 0
      %3099 = vmatpush1.bf16.msra.mxu0 0
      %3100 = vmatprep.subr.bf16.mxu0 0
      %3101 = vmatpush1.bf16.msra.mxu0 0
      %3102 = vmatprep.subr.bf16.mxu0 0
      %3103 = vmatpush1.bf16.msra.mxu0 0
      %3104 = vmatprep.mubr.bf16.mxu0 0
      %3105 = vmatmul.mubr.bf16.gmra.mrb[0].mxu0 %v3007
      %v3106 = vpop.f32.mrb[0].mxu0
      %v3107 = vadd.f32 0.0, %v3106
      %v3108 = vpop.f32.mrb[0].mxu0
      %v3109 = vpop.f32.mrb[0].mxu0
      %v3110 = vadd.f32 0.0, %v3109
      %v3111 = vpop.f32.mrb[0].mxu0
      %3112 = vmatprep.mubr.bf16.mxu0 0
      %3113 = vmatmul.mubr.bf16.gmra.mrb[0].mxu0 %v3010
      %v3114 = vpop.f32.mrb[0].mxu0
      %v3115 = vadd.f32 0.0, %v3114
      %v3116 = vpop.f32.mrb[0].mxu0
      %v3117 = vpop.f32.mrb[0].mxu0
      %v3118 = vadd.f32 0.0, %v3117
      %v3119 = vpop.f32.mrb[0].mxu0
      %3120 = vmatprep.mubr.bf16.mxu0 0
      %3121 = vmatmul.mubr.bf16.gmra.mrb[0].mxu0 %v3013
      %v3122 = vpop.f32.mrb[0].mxu0
      %v3123 = vadd.f32 0.0, %v3122
      %v3124 = vpop.f32.mrb[0].mxu0
      %v3125 = vpop.f32.mrb[0].mxu0
      %v3126 = vadd.f32 0.0, %v3125
      %v3127 = vpop.f32.mrb[0].mxu0
      %3128 = vmatprep.mubr.bf16.mxu0 0
      %3129 = vmatmul.mubr.bf16.gmra.mrb[0].mxu0 %v3016
      %v3130 = vpop.f32.mrb[0].mxu0
      %v3131 = vadd.f32 0.0, %v3130
      %v3132 = vpop.f32.mrb[0].mxu0
      %v3133 = vpop.f32.mrb[0].mxu0
      %v3134 = vadd.f32 0.0, %v3133
      %v3135 = vpop.f32.mrb[0].mxu0
      %3136 = vmatprep.mubr.bf16.mxu0 0
      %3137 = vmatmul.mubr.bf16.gmra.mrb[0].mxu0 %v3019
      %v3138 = vpop.f32.mrb[0].mxu0
      %v3139 = vadd.f32 0.0, %v3138
      %v3140 = vpop.f32.mrb[0].mxu0
      %v3141 = vpop.f32.mrb[0].mxu0
      %v3142 = vadd.f32 0.0, %v3141
      %v3143 = vpop.f32.mrb[0].mxu0
      %3144 = vmatprep.mubr.bf16.mxu0 0
      %3145 = vmatmul.mubr.bf16.gmra.mrb[0].mxu0 %v3022
      %v3146 = vpop.f32.mrb[0].mxu0
      %v3147 = vadd.f32 0.0, %v3146
      %v3148 = vpop.f32.mrb[0].mxu0
      %v3149 = vpop.f32.mrb[0].mxu0
      %v3150 = vadd.f32 0.0, %v3149
      %v3151 = vpop.f32.mrb[0].mxu0
      %3152 = vmatprep.mubr.bf16.mxu0 0
      %3153 = vmatmul.mubr.bf16.gmra.mrb[0].mxu0 %v3025
      %v3154 = vpop.f32.mrb[0].mxu0
      %v3155 = vadd.f32 0.0, %v3154
      %v3156 = vpop.f32.mrb[0].mxu0
      %v3157 = vpop.f32.mrb[0].mxu0
      %v3158 = vadd.f32 0.0, %v3157
      %v3159 = vpop.f32.mrb[0].mxu0
      %3160 = vmatprep.mubr.bf16.mxu0 0
      %3161 = vmatmul.mubr.bf16.gmra.mrb[0].mxu0 %v3028
      %v3162 = vpop.f32.mrb[0].mxu0
      %v3163 = vadd.f32 0.0, %v3162
      %v3164 = vpop.f32.mrb[0].mxu0
      %v3165 = vpop.f32.mrb[0].mxu0
      %v3166 = vadd.f32 0.0, %v3165
      %v3167 = vpop.f32.mrb[0].mxu0
      %3168 = vmatprep.mubr.bf16.mxu0 0
      %3169 = vmatmul.mubr.bf16.gmra.mrb[0].mxu0 %v3031
      %v3170 = vpop.f32.mrb[0].mxu0
      %v3171 = vadd.f32 0.0, %v3170
      %v3172 = vpop.f32.mrb[0].mxu0
      %v3173 = vpop.f32.mrb[0].mxu0
      %v3174 = vadd.f32 0.0, %v3173
      %v3175 = vpop.f32.mrb[0].mxu0
      %3176 = vmatprep.mubr.bf16.mxu0 0
      %3177 = vmatmul.mubr.bf16.gmra.mrb[0].mxu0 %v3034
      %v3178 = vpop.f32.mrb[0].mxu0
      %v3179 = vadd.f32 0.0, %v3178
      %v3180 = vpop.f32.mrb[0].mxu0
      %v3181 = vpop.f32.mrb[0].mxu0
      %v3182 = vadd.f32 0.0, %v3181
      %v3183 = vpop.f32.mrb[0].mxu0
      %3184 = vmatprep.mubr.bf16.mxu0 0
      %3185 = vmatmul.mubr.bf16.gmra.mrb[0].mxu0 %v3037
      %v3186 = vpop.f32.mrb[0].mxu0
      %v3187 = vadd.f32 0.0, %v3186
      %v3188 = vpop.f32.mrb[0].mxu0
      %v3189 = vpop.f32.mrb[0].mxu0
      %v3190 = vadd.f32 0.0, %v3189
      %v3191 = vpop.f32.mrb[0].mxu0
      %3192 = vmatprep.mubr.bf16.mxu0 0
      %3193 = vmatmul.mubr.bf16.gmra.mrb[0].mxu0 %v3040
      %v3194 = vpop.f32.mrb[0].mxu0
      %v3195 = vadd.f32 0.0, %v3194
      %v3196 = vpop.f32.mrb[0].mxu0
      %v3197 = vpop.f32.mrb[0].mxu0
      %v3198 = vadd.f32 0.0, %v3197
      %v3199 = vpop.f32.mrb[0].mxu0
      %3200 = vmatprep.mubr.bf16.mxu0 0
      %3201 = vmatmul.mubr.bf16.gmra.mrb[0].mxu0 %v3043
      %v3202 = vpop.f32.mrb[0].mxu0
      %v3203 = vadd.f32 0.0, %v3202
      %v3204 = vpop.f32.mrb[0].mxu0
      %v3205 = vpop.f32.mrb[0].mxu0
      %v3206 = vadd.f32 0.0, %v3205
      %v3207 = vpop.f32.mrb[0].mxu0
      %3208 = vmatprep.mubr.bf16.mxu0 0
      %3209 = vmatmul.mubr.bf16.gmra.mrb[0].mxu0 %v3046
      %v3210 = vpop.f32.mrb[0].mxu0
      %v3211 = vadd.f32 0.0, %v3210
      %v3212 = vpop.f32.mrb[0].mxu0
      %v3213 = vpop.f32.mrb[0].mxu0
      %v3214 = vadd.f32 0.0, %v3213
      %v3215 = vpop.f32.mrb[0].mxu0
      %3216 = vmatprep.mubr.bf16.mxu0 0
      %3217 = vmatmul.mubr.bf16.gmra.mrb[0].mxu0 %v3049
      %v3218 = vpop.f32.mrb[0].mxu0
      %v3219 = vadd.f32 0.0, %v3218
      %v3220 = vpop.f32.mrb[0].mxu0
      %v3221 = vpop.f32.mrb[0].mxu0
      %v3222 = vadd.f32 0.0, %v3221
      %v3223 = vpop.f32.mrb[0].mxu0
      %3224 = vmatprep.mubr.bf16.mxu0 0
      %3225 = vmatmul.mubr.bf16.gmra.mrb[0].mxu0 %v3052
      %v3226 = vpop.f32.mrb[0].mxu0
      %v3227 = vadd.f32 0.0, %v3226
      %v3228 = vpop.f32.mrb[0].mxu0
      %v3229 = vpop.f32.mrb[0].mxu0
      %v3230 = vadd.f32 0.0, %v3229
      %v3231 = vpop.f32.mrb[0].mxu0
      %3232 = vmatprep.mubr.bf16.mxu0 0
      %3233 = vmatmul.mubr.bf16.gmra.mrb[0].mxu0 %v3055
      %v3234 = vpop.f32.mrb[0].mxu0
      %v3235 = vadd.f32 0.0, %v3234
      %v3236 = vpop.f32.mrb[0].mxu0
      %v3237 = vpop.f32.mrb[0].mxu0
      %v3238 = vadd.f32 0.0, %v3237
      %v3239 = vpop.f32.mrb[0].mxu0
      %3240 = vmatprep.mubr.bf16.mxu0 0
      %3241 = vmatmul.mubr.bf16.gmra.mrb[0].mxu0 %v3058
      %v3242 = vpop.f32.mrb[0].mxu0
      %v3243 = vadd.f32 0.0, %v3242
      %v3244 = vpop.f32.mrb[0].mxu0
      %v3245 = vpop.f32.mrb[0].mxu0
      %v3246 = vadd.f32 0.0, %v3245
      %v3247 = vpop.f32.mrb[0].mxu0
      %3248 = vmatprep.mubr.bf16.mxu0 0
      %3249 = vmatmul.mubr.bf16.gmra.mrb[0].mxu0 %v3061
      %v3250 = vpop.f32.mrb[0].mxu0
      %v3251 = vadd.f32 0.0, %v3250
      %v3252 = vpop.f32.mrb[0].mxu0
      %v3253 = vpop.f32.mrb[0].mxu0
      %v3254 = vadd.f32 0.0, %v3253
      %v3255 = vpop.f32.mrb[0].mxu0
      %3256 = vmatprep.mubr.bf16.mxu0 0
      %3257 = vmatmul.mubr.bf16.gmra.mrb[0].mxu0 %v3064
      %v3258 = vpop.f32.mrb[0].mxu0
      %v3259 = vadd.f32 0.0, %v3258
      %v3260 = vpop.f32.mrb[0].mxu0
      %v3261 = vpop.f32.mrb[0].mxu0
      %v3262 = vadd.f32 0.0, %v3261
      %v3263 = vpop.f32.mrb[0].mxu0
      %3264 = vmatprep.mubr.bf16.mxu0 0
      %3265 = vmatmul.mubr.bf16.gmra.mrb[0].mxu0 %v3067
      %v3266 = vpop.f32.mrb[0].mxu0
      %v3267 = vadd.f32 0.0, %v3266
      %v3268 = vpop.f32.mrb[0].mxu0
      %v3269 = vpop.f32.mrb[0].mxu0
      %v3270 = vpop.f32.mrb[0].mxu0
      %3271 = vdwg.mxu0
      %v3272 = vadd.f32 %v2887, %v3107
      %v3273 = vadd.f32 %v2888, %v3110
      %v3274 = vadd.f32 %v2889, %v3115
      %v3275 = vadd.f32 %v2890, %v3118
      %v3276 = vadd.f32 %v2891, %v3123
      %v3277 = vadd.f32 %v2892, %v3126
      %v3278 = vadd.f32 %v2893, %v3131
      %v3279 = vadd.f32 %v2894, %v3134
      %v3280 = vadd.f32 %v2895, %v3139
      %v3281 = vadd.f32 %v2896, %v3142
      %v3282 = vadd.f32 %v2897, %v3147
      %v3283 = vadd.f32 %v2898, %v3150
      %v3284 = vadd.f32 %v2899, %v3155
      %v3285 = vadd.f32 %v2900, %v3158
      %v3286 = vadd.f32 %v2901, %v3163
      %v3287 = vadd.f32 %v2902, %v3166
      %v3288 = vadd.f32 %v2903, %v3171
      %v3289 = vadd.f32 %v2904, %v3174
      %v3290 = vadd.f32 %v2905, %v3179
      %v3291 = vadd.f32 %v2906, %v3182
      %v3292 = vadd.f32 %v2907, %v3187
      %v3293 = vadd.f32 %v2908, %v3190
      %v3294 = vadd.f32 %v2909, %v3195
      %v3295 = vadd.f32 %v2910, %v3198
      %v3296 = vadd.f32 %v2911, %v3203
      %v3297 = vadd.f32 %v2912, %v3206
      %v3298 = vadd.f32 %v2913, %v3211
      %v3299 = vadd.f32 %v2914, %v3214
      %v3300 = vadd.f32 %v2915, %v3219
      %v3301 = vadd.f32 %v2916, %v3222
      %v3302 = vadd.f32 %v2917, %v3227
      %v3303 = vadd.f32 %v2918, %v3230
      %v3304 = vadd.f32 %v2919, %v3235
      %v3305 = vadd.f32 %v2920, %v3238
      %v3306 = vadd.f32 %v2921, %v3243
      %v3307 = vadd.f32 %v2922, %v3246
      %v3308 = vadd.f32 %v2923, %v3251
      %v3309 = vadd.f32 %v2924, %v3254
      %v3310 = vadd.f32 %v2925, %v3259
      %v3311 = vadd.f32 %v2926, %v3262
      %v3312 = vadd.f32 %v2927, %v3267
      %v3313 = vld [vmem:[#allocation3 + $0x19] sm:$0xff]
      %v3314 = vld [vmem:[#allocation3 + $0x21] sm:$0xff]
      %v3315 = vld [vmem:[#allocation3 + $0x29] sm:$0xff]
      %v3316 = vld [vmem:[#allocation3 + $0x31] sm:$0xff]
      %v3317 = vld [vmem:[#allocation3 + $0x39] sm:$0xff]
      %v3318 = vld [vmem:[#allocation3 + $0x41] sm:$0xff]
      %v3319 = vld [vmem:[#allocation3 + $0x49] sm:$0xff]
      %v3320 = vld [vmem:[#allocation3 + $0x51] sm:$0xff]
      %v3321 = vld [vmem:[#allocation3 + $0x59] sm:$0xff]
      %v3322 = vld [vmem:[#allocation3 + $0x61] sm:$0xff]
      %v3323 = vld [vmem:[#allocation3 + $0x69] sm:$0xff]
      %v3324 = vld [vmem:[#allocation3 + $0x71] sm:$0xff]
      %v3325 = vld [vmem:[#allocation3 + $0x79] sm:$0xff]
      %v3326 = vld [vmem:[#allocation3 + $0x81] sm:$0xff]
      %v3327 = vld [vmem:[#allocation3 + $0x89] sm:$0xff]
      %v3328 = vld [vmem:[#allocation3 + $0x91] sm:$0xff]
      %v3329 = vld [vmem:[#allocation3 + $0x99] sm:$0xff]
      %v3330 = vld [vmem:[#allocation3 + $0xa1] sm:$0xff]
      %v3331 = vld [vmem:[#allocation3 + $0xa9] sm:$0xff]
      %v3332 = vld [vmem:[#allocation3 + $0xb1] sm:$0xff]
      %v3333 = vld [vmem:[#allocation3 + $0xb9] sm:$0xff]
      %v3334 = vld [vmem:[#allocation3 + $0xc1] sm:$0xff]
      %v3335 = vld [vmem:[#allocation3 + $0xc9] sm:$0xff]
      %v3336 = vld [vmem:[#allocation3 + $0xd1] sm:$0xff]
      %v3337 = vld [vmem:[#allocation3 + $0xd9] sm:$0xff]
      %v3338 = vld [vmem:[#allocation3 + $0xe1] sm:$0xff]
      %v3339 = vld [vmem:[#allocation3 + $0xe9] sm:$0xff]
      %v3340 = vld [vmem:[#allocation3 + $0xf1] sm:$0xff]
      %v3341 = vld [vmem:[#allocation3 + $0xf9] sm:$0xff]
      %v3342 = vld [vmem:[#allocation3 + $0x101] sm:$0xff]
      %v3343 = vld [vmem:[#allocation3 + $0x109] sm:$0xff]
      %v3344 = vld [vmem:[#allocation3 + $0x111] sm:$0xff]
      %v3345 = vld [vmem:[#allocation3 + $0x119] sm:$0xff]
      %v3346 = vld [vmem:[#allocation3 + $0x121] sm:$0xff]
      %v3347 = vld [vmem:[#allocation3 + $0x129] sm:$0xff]
      %v3348 = vld [vmem:[#allocation3 + $0x131] sm:$0xff]
      %v3349 = vld [vmem:[#allocation3 + $0x139] sm:$0xff]
      %v3350 = vld [vmem:[#allocation3 + $0x141] sm:$0xff]
      %v3351 = vld [vmem:[#allocation3 + $0x149] sm:$0xff]
      %v3352 = vld [vmem:[#allocation3 + $0x151] sm:$0xff]
      %v3353 = vld [vmem:[#allocation3 + $0x159] sm:$0xff]
      %v3354 = vpack.c.bf16 %v3314, %v3313
      %v3355 = vpack.c.bf16 %v3316, %v3315
      %v3356 = vpack.c.bf16 %v3318, %v3317
      %v3357 = vpack.c.bf16 %v3320, %v3319
      %v3358 = vpack.c.bf16 %v3322, %v3321
      %v3359 = vpack.c.bf16 %v3324, %v3323
      %v3360 = vpack.c.bf16 %v3326, %v3325
      %v3361 = vpack.c.bf16 %v3328, %v3327
      %v3362 = vpack.c.bf16 %v3330, %v3329
      %v3363 = vpack.c.bf16 %v3332, %v3331
      %v3364 = vpack.c.bf16 %v3334, %v3333
      %v3365 = vpack.c.bf16 %v3336, %v3335
      %v3366 = vpack.c.bf16 %v3338, %v3337
      %v3367 = vpack.c.bf16 %v3340, %v3339
      %v3368 = vpack.c.bf16 %v3342, %v3341
      %v3369 = vpack.c.bf16 %v3344, %v3343
      %v3370 = vpack.c.bf16 %v3346, %v3345
      %v3371 = vpack.c.bf16 %v3348, %v3347
      %v3372 = vpack.c.bf16 %v3350, %v3349
      %v3373 = vpack.c.bf16 %v3352, %v3351
      %v3374 = vpack.c.bf16 %v3353, %v3353
      %s3375 = scalar_lea.vmem %s4, 80
      %v3376 = vld [vmem:[%s3375] sm:$0xf]
      %v3377 = vld [vmem:[%s3375 + $0x4] sm:$0xf]
      %v3378 = vld [vmem:[%s3375 + $0x8] sm:$0xf]
      %v3379 = vld [vmem:[%s3375 + $0xc] sm:$0x3]
      %v3384 = vunpack.c.l.b16 %v3376
      %v3385 = vunpack.c.l.b16 %v3377
      %v3386 = vunpack.c.l.b16 %v3378
      %v3387 = vunpack.c.l.b16 %v3379
      %v3388 = vpack.c.b16 %v3385, %v3384
      %v3389 = vpack.c.b16 %v3387, %v3386
      %v3392 = vsel %vm1381, %v3354, 0
      %v3395 = vsel %vm1381, %v3355, 0
      %v3398 = vsel %vm1381, %v3356, 0
      %v3401 = vsel %vm1381, %v3357, 0
      %v3404 = vsel %vm1381, %v3358, 0
      %v3407 = vsel %vm1381, %v3359, 0
      %v3410 = vsel %vm1381, %v3360, 0
      %v3413 = vsel %vm1381, %v3361, 0
      %v3416 = vsel %vm1381, %v3362, 0
      %v3419 = vsel %vm1381, %v3363, 0
      %v3422 = vsel %vm1381, %v3364, 0
      %v3425 = vsel %vm1381, %v3365, 0
      %v3428 = vsel %vm1381, %v3366, 0
      %v3431 = vsel %vm1381, %v3367, 0
      %v3434 = vsel %vm1381, %v3368, 0
      %v3437 = vsel %vm1381, %v3369, 0
      %v3440 = vsel %vm1381, %v3370, 0
      %v3443 = vsel %vm1381, %v3371, 0
      %v3446 = vsel %vm1381, %v3372, 0
      %v3449 = vsel %vm1381, %v3373, 0
      %v3452 = vsel %vm1381, %v3374, 0
      %v3455 = vsel %vm1677, %v3389, 0
      %3457 = vmatprep.subr.bf16.mxu0 0
      %3458 = vmatpush1.bf16.msra.mxu0 %v3388
      %3459 = vmatprep.subr.bf16.mxu0 0
      %3460 = vmatpush1.bf16.msra.mxu0 %v3455
      %3461 = vmatprep.subr.bf16.mxu0 0
      %3462 = vmatpush1.bf16.msra.mxu0 0
      %3463 = vmatprep.subr.bf16.mxu0 0
      %3464 = vmatpush1.bf16.msra.mxu0 0
      %3465 = vmatprep.subr.bf16.mxu0 0
      %3466 = vmatpush1.bf16.msra.mxu0 0
      %3467 = vmatprep.subr.bf16.mxu0 0
      %3468 = vmatpush1.bf16.msra.mxu0 0
      %3469 = vmatprep.subr.bf16.mxu0 0
      %3470 = vmatpush1.bf16.msra.mxu0 0
      %3471 = vmatprep.subr.bf16.mxu0 0
      %3472 = vmatpush1.bf16.msra.mxu0 0
      %3473 = vmatprep.subr.bf16.mxu0 0
      %3474 = vmatpush1.bf16.msra.mxu0 0
      %3475 = vmatprep.subr.bf16.mxu0 0
      %3476 = vmatpush1.bf16.msra.mxu0 0
      %3477 = vmatprep.subr.bf16.mxu0 0
      %3478 = vmatpush1.bf16.msra.mxu0 0
      %3479 = vmatprep.subr.bf16.mxu0 0
      %3480 = vmatpush1.bf16.msra.mxu0 0
      %3481 = vmatprep.subr.bf16.mxu0 0
      %3482 = vmatpush1.bf16.msra.mxu0 0
      %3483 = vmatprep.subr.bf16.mxu0 0
      %3484 = vmatpush1.bf16.msra.mxu0 0
      %3485 = vmatprep.subr.bf16.mxu0 0
      %3486 = vmatpush1.bf16.msra.mxu0 0
      %3487 = vmatprep.subr.bf16.mxu0 0
      %3488 = vmatpush1.bf16.msra.mxu0 0
      %3489 = vmatprep.mubr.bf16.mxu0 0
      %3490 = vmatmul.mubr.bf16.gmra.mrb[0].mxu0 %v3392
      %v3491 = vpop.f32.mrb[0].mxu0
      %v3492 = vadd.f32 0.0, %v3491
      %v3493 = vpop.f32.mrb[0].mxu0
      %v3494 = vpop.f32.mrb[0].mxu0
      %v3495 = vadd.f32 0.0, %v3494
      %v3496 = vpop.f32.mrb[0].mxu0
      %3497 = vmatprep.mubr.bf16.mxu0 0
      %3498 = vmatmul.mubr.bf16.gmra.mrb[0].mxu0 %v3395
      %v3499 = vpop.f32.mrb[0].mxu0
      %v3500 = vadd.f32 0.0, %v3499
      %v3501 = vpop.f32.mrb[0].mxu0
      %v3502 = vpop.f32.mrb[0].mxu0
      %v3503 = vadd.f32 0.0, %v3502
      %v3504 = vpop.f32.mrb[0].mxu0
      %3505 = vmatprep.mubr.bf16.mxu0 0
      %3506 = vmatmul.mubr.bf16.gmra.mrb[0].mxu0 %v3398
      %v3507 = vpop.f32.mrb[0].mxu0
      %v3508 = vadd.f32 0.0, %v3507
      %v3509 = vpop.f32.mrb[0].mxu0
      %v3510 = vpop.f32.mrb[0].mxu0
      %v3511 = vadd.f32 0.0, %v3510
      %v3512 = vpop.f32.mrb[0].mxu0
      %3513 = vmatprep.mubr.bf16.mxu0 0
      %3514 = vmatmul.mubr.bf16.gmra.mrb[0].mxu0 %v3401
      %v3515 = vpop.f32.mrb[0].mxu0
      %v3516 = vadd.f32 0.0, %v3515
      %v3517 = vpop.f32.mrb[0].mxu0
      %v3518 = vpop.f32.mrb[0].mxu0
      %v3519 = vadd.f32 0.0, %v3518
      %v3520 = vpop.f32.mrb[0].mxu0
      %3521 = vmatprep.mubr.bf16.mxu0 0
      %3522 = vmatmul.mubr.bf16.gmra.mrb[0].mxu0 %v3404
      %v3523 = vpop.f32.mrb[0].mxu0
      %v3524 = vadd.f32 0.0, %v3523
      %v3525 = vpop.f32.mrb[0].mxu0
      %v3526 = vpop.f32.mrb[0].mxu0
      %v3527 = vadd.f32 0.0, %v3526
      %v3528 = vpop.f32.mrb[0].mxu0
      %3529 = vmatprep.mubr.bf16.mxu0 0
      %3530 = vmatmul.mubr.bf16.gmra.mrb[0].mxu0 %v3407
      %v3531 = vpop.f32.mrb[0].mxu0
      %v3532 = vadd.f32 0.0, %v3531
      %v3533 = vpop.f32.mrb[0].mxu0
      %v3534 = vpop.f32.mrb[0].mxu0
      %v3535 = vadd.f32 0.0, %v3534
      %v3536 = vpop.f32.mrb[0].mxu0
      %3537 = vmatprep.mubr.bf16.mxu0 0
      %3538 = vmatmul.mubr.bf16.gmra.mrb[0].mxu0 %v3410
      %v3539 = vpop.f32.mrb[0].mxu0
      %v3540 = vadd.f32 0.0, %v3539
      %v3541 = vpop.f32.mrb[0].mxu0
      %v3542 = vpop.f32.mrb[0].mxu0
      %v3543 = vadd.f32 0.0, %v3542
      %v3544 = vpop.f32.mrb[0].mxu0
      %3545 = vmatprep.mubr.bf16.mxu0 0
      %3546 = vmatmul.mubr.bf16.gmra.mrb[0].mxu0 %v3413
      %v3547 = vpop.f32.mrb[0].mxu0
      %v3548 = vadd.f32 0.0, %v3547
      %v3549 = vpop.f32.mrb[0].mxu0
      %v3550 = vpop.f32.mrb[0].mxu0
      %v3551 = vadd.f32 0.0, %v3550
      %v3552 = vpop.f32.mrb[0].mxu0
      %3553 = vmatprep.mubr.bf16.mxu0 0
      %3554 = vmatmul.mubr.bf16.gmra.mrb[0].mxu0 %v3416
      %v3555 = vpop.f32.mrb[0].mxu0
      %v3556 = vadd.f32 0.0, %v3555
      %v3557 = vpop.f32.mrb[0].mxu0
      %v3558 = vpop.f32.mrb[0].mxu0
      %v3559 = vadd.f32 0.0, %v3558
      %v3560 = vpop.f32.mrb[0].mxu0
      %3561 = vmatprep.mubr.bf16.mxu0 0
      %3562 = vmatmul.mubr.bf16.gmra.mrb[0].mxu0 %v3419
      %v3563 = vpop.f32.mrb[0].mxu0
      %v3564 = vadd.f32 0.0, %v3563
      %v3565 = vpop.f32.mrb[0].mxu0
      %v3566 = vpop.f32.mrb[0].mxu0
      %v3567 = vadd.f32 0.0, %v3566
      %v3568 = vpop.f32.mrb[0].mxu0
      %3569 = vmatprep.mubr.bf16.mxu0 0
      %3570 = vmatmul.mubr.bf16.gmra.mrb[0].mxu0 %v3422
      %v3571 = vpop.f32.mrb[0].mxu0
      %v3572 = vadd.f32 0.0, %v3571
      %v3573 = vpop.f32.mrb[0].mxu0
      %v3574 = vpop.f32.mrb[0].mxu0
      %v3575 = vadd.f32 0.0, %v3574
      %v3576 = vpop.f32.mrb[0].mxu0
      %3577 = vmatprep.mubr.bf16.mxu0 0
      %3578 = vmatmul.mubr.bf16.gmra.mrb[0].mxu0 %v3425
      %v3579 = vpop.f32.mrb[0].mxu0
      %v3580 = vadd.f32 0.0, %v3579
      %v3581 = vpop.f32.mrb[0].mxu0
      %v3582 = vpop.f32.mrb[0].mxu0
      %v3583 = vadd.f32 0.0, %v3582
      %v3584 = vpop.f32.mrb[0].mxu0
      %3585 = vmatprep.mubr.bf16.mxu0 0
      %3586 = vmatmul.mubr.bf16.gmra.mrb[0].mxu0 %v3428
      %v3587 = vpop.f32.mrb[0].mxu0
      %v3588 = vadd.f32 0.0, %v3587
      %v3589 = vpop.f32.mrb[0].mxu0
      %v3590 = vpop.f32.mrb[0].mxu0
      %v3591 = vadd.f32 0.0, %v3590
      %v3592 = vpop.f32.mrb[0].mxu0
      %3593 = vmatprep.mubr.bf16.mxu0 0
      %3594 = vmatmul.mubr.bf16.gmra.mrb[0].mxu0 %v3431
      %v3595 = vpop.f32.mrb[0].mxu0
      %v3596 = vadd.f32 0.0, %v3595
      %v3597 = vpop.f32.mrb[0].mxu0
      %v3598 = vpop.f32.mrb[0].mxu0
      %v3599 = vadd.f32 0.0, %v3598
      %v3600 = vpop.f32.mrb[0].mxu0
      %3601 = vmatprep.mubr.bf16.mxu0 0
      %3602 = vmatmul.mubr.bf16.gmra.mrb[0].mxu0 %v3434
      %v3603 = vpop.f32.mrb[0].mxu0
      %v3604 = vadd.f32 0.0, %v3603
      %v3605 = vpop.f32.mrb[0].mxu0
      %v3606 = vpop.f32.mrb[0].mxu0
      %v3607 = vadd.f32 0.0, %v3606
      %v3608 = vpop.f32.mrb[0].mxu0
      %3609 = vmatprep.mubr.bf16.mxu0 0
      %3610 = vmatmul.mubr.bf16.gmra.mrb[0].mxu0 %v3437
      %v3611 = vpop.f32.mrb[0].mxu0
      %v3612 = vadd.f32 0.0, %v3611
      %v3613 = vpop.f32.mrb[0].mxu0
      %v3614 = vpop.f32.mrb[0].mxu0
      %v3615 = vadd.f32 0.0, %v3614
      %v3616 = vpop.f32.mrb[0].mxu0
      %3617 = vmatprep.mubr.bf16.mxu0 0
      %3618 = vmatmul.mubr.bf16.gmra.mrb[0].mxu0 %v3440
      %v3619 = vpop.f32.mrb[0].mxu0
      %v3620 = vadd.f32 0.0, %v3619
      %v3621 = vpop.f32.mrb[0].mxu0
      %v3622 = vpop.f32.mrb[0].mxu0
      %v3623 = vadd.f32 0.0, %v3622
      %v3624 = vpop.f32.mrb[0].mxu0
      %3625 = vmatprep.mubr.bf16.mxu0 0
      %3626 = vmatmul.mubr.bf16.gmra.mrb[0].mxu0 %v3443
      %v3627 = vpop.f32.mrb[0].mxu0
      %v3628 = vadd.f32 0.0, %v3627
      %v3629 = vpop.f32.mrb[0].mxu0
      %v3630 = vpop.f32.mrb[0].mxu0
      %v3631 = vadd.f32 0.0, %v3630
      %v3632 = vpop.f32.mrb[0].mxu0
      %3633 = vmatprep.mubr.bf16.mxu0 0
      %3634 = vmatmul.mubr.bf16.gmra.mrb[0].mxu0 %v3446
      %v3635 = vpop.f32.mrb[0].mxu0
      %v3636 = vadd.f32 0.0, %v3635
      %v3637 = vpop.f32.mrb[0].mxu0
      %v3638 = vpop.f32.mrb[0].mxu0
      %v3639 = vadd.f32 0.0, %v3638
      %v3640 = vpop.f32.mrb[0].mxu0
      %3641 = vmatprep.mubr.bf16.mxu0 0
      %3642 = vmatmul.mubr.bf16.gmra.mrb[0].mxu0 %v3449
      %v3643 = vpop.f32.mrb[0].mxu0
      %v3644 = vadd.f32 0.0, %v3643
      %v3645 = vpop.f32.mrb[0].mxu0
      %v3646 = vpop.f32.mrb[0].mxu0
      %v3647 = vadd.f32 0.0, %v3646
      %v3648 = vpop.f32.mrb[0].mxu0
      %3649 = vmatprep.mubr.bf16.mxu0 0
      %3650 = vmatmul.mubr.bf16.gmra.mrb[0].mxu0 %v3452
      %v3651 = vpop.f32.mrb[0].mxu0
      %v3652 = vadd.f32 0.0, %v3651
      %v3653 = vpop.f32.mrb[0].mxu0
      %v3654 = vpop.f32.mrb[0].mxu0
      %v3655 = vpop.f32.mrb[0].mxu0
      %3656 = vdwg.mxu0
      %v3657 = vadd.f32 %v3272, %v3492
      %v3658 = vadd.f32 %v3273, %v3495
      %v3659 = vadd.f32 %v3274, %v3500
      %v3660 = vadd.f32 %v3275, %v3503
      %v3661 = vadd.f32 %v3276, %v3508
      %v3662 = vadd.f32 %v3277, %v3511
      %v3663 = vadd.f32 %v3278, %v3516
      %v3664 = vadd.f32 %v3279, %v3519
      %v3665 = vadd.f32 %v3280, %v3524
      %v3666 = vadd.f32 %v3281, %v3527
      %v3667 = vadd.f32 %v3282, %v3532
      %v3668 = vadd.f32 %v3283, %v3535
      %v3669 = vadd.f32 %v3284, %v3540
      %v3670 = vadd.f32 %v3285, %v3543
      %v3671 = vadd.f32 %v3286, %v3548
      %v3672 = vadd.f32 %v3287, %v3551
      %v3673 = vadd.f32 %v3288, %v3556
      %v3674 = vadd.f32 %v3289, %v3559
      %v3675 = vadd.f32 %v3290, %v3564
      %v3676 = vadd.f32 %v3291, %v3567
      %v3677 = vadd.f32 %v3292, %v3572
      %v3678 = vadd.f32 %v3293, %v3575
      %v3679 = vadd.f32 %v3294, %v3580
      %v3680 = vadd.f32 %v3295, %v3583
      %v3681 = vadd.f32 %v3296, %v3588
      %v3682 = vadd.f32 %v3297, %v3591
      %v3683 = vadd.f32 %v3298, %v3596
      %v3684 = vadd.f32 %v3299, %v3599
      %v3685 = vadd.f32 %v3300, %v3604
      %v3686 = vadd.f32 %v3301, %v3607
      %v3687 = vadd.f32 %v3302, %v3612
      %v3688 = vadd.f32 %v3303, %v3615
      %v3689 = vadd.f32 %v3304, %v3620
      %v3690 = vadd.f32 %v3305, %v3623
      %v3691 = vadd.f32 %v3306, %v3628
      %v3692 = vadd.f32 %v3307, %v3631
      %v3693 = vadd.f32 %v3308, %v3636
      %v3694 = vadd.f32 %v3309, %v3639
      %v3695 = vadd.f32 %v3310, %v3644
      %v3696 = vadd.f32 %v3311, %v3647
      %v3697 = vadd.f32 %v3312, %v3652
      %v3698 = vld [vmem:[#allocation3 + $0x29] sm:$0xff]
      %v3699 = vld [vmem:[#allocation3 + $0x31] sm:$0xff]
      %v3700 = vld [vmem:[#allocation3 + $0x39] sm:$0xff]
      %v3701 = vld [vmem:[#allocation3 + $0x41] sm:$0xff]
      %v3702 = vld [vmem:[#allocation3 + $0x49] sm:$0xff]
      %v3703 = vld [vmem:[#allocation3 + $0x51] sm:$0xff]
      %v3704 = vld [vmem:[#allocation3 + $0x59] sm:$0xff]
      %v3705 = vld [vmem:[#allocation3 + $0x61] sm:$0xff]
      %v3706 = vld [vmem:[#allocation3 + $0x69] sm:$0xff]
      %v3707 = vld [vmem:[#allocation3 + $0x71] sm:$0xff]
      %v3708 = vld [vmem:[#allocation3 + $0x79] sm:$0xff]
      %v3709 = vld [vmem:[#allocation3 + $0x81] sm:$0xff]
      %v3710 = vld [vmem:[#allocation3 + $0x89] sm:$0xff]
      %v3711 = vld [vmem:[#allocation3 + $0x91] sm:$0xff]
      %v3712 = vld [vmem:[#allocation3 + $0x99] sm:$0xff]
      %v3713 = vld [vmem:[#allocation3 + $0xa1] sm:$0xff]
      %v3714 = vld [vmem:[#allocation3 + $0xa9] sm:$0xff]
      %v3715 = vld [vmem:[#allocation3 + $0xb1] sm:$0xff]
      %v3716 = vld [vmem:[#allocation3 + $0xb9] sm:$0xff]
      %v3717 = vld [vmem:[#allocation3 + $0xc1] sm:$0xff]
      %v3718 = vld [vmem:[#allocation3 + $0xc9] sm:$0xff]
      %v3719 = vld [vmem:[#allocation3 + $0xd1] sm:$0xff]
      %v3720 = vld [vmem:[#allocation3 + $0xd9] sm:$0xff]
      %v3721 = vld [vmem:[#allocation3 + $0xe1] sm:$0xff]
      %v3722 = vld [vmem:[#allocation3 + $0xe9] sm:$0xff]
      %v3723 = vld [vmem:[#allocation3 + $0xf1] sm:$0xff]
      %v3724 = vld [vmem:[#allocation3 + $0xf9] sm:$0xff]
      %v3725 = vld [vmem:[#allocation3 + $0x101] sm:$0xff]
      %v3726 = vld [vmem:[#allocation3 + $0x109] sm:$0xff]
      %v3727 = vld [vmem:[#allocation3 + $0x111] sm:$0xff]
      %v3728 = vld [vmem:[#allocation3 + $0x119] sm:$0xff]
      %v3729 = vld [vmem:[#allocation3 + $0x121] sm:$0xff]
      %v3730 = vld [vmem:[#allocation3 + $0x129] sm:$0xff]
      %v3731 = vld [vmem:[#allocation3 + $0x131] sm:$0xff]
      %v3732 = vld [vmem:[#allocation3 + $0x139] sm:$0xff]
      %v3733 = vld [vmem:[#allocation3 + $0x141] sm:$0xff]
      %v3734 = vld [vmem:[#allocation3 + $0x149] sm:$0xff]
      %v3735 = vld [vmem:[#allocation3 + $0x151] sm:$0xff]
      %v3736 = vld [vmem:[#allocation3 + $0x159] sm:$0xff]
      %v3737 = vld [vmem:[#allocation3 + $0x161] sm:$0xff]
      %v3738 = vld [vmem:[#allocation3 + $0x169] sm:$0xff]
      %v3739 = vpack.c.bf16 %v3699, %v3698
      %v3740 = vpack.c.bf16 %v3701, %v3700
      %v3741 = vpack.c.bf16 %v3703, %v3702
      %v3742 = vpack.c.bf16 %v3705, %v3704
      %v3743 = vpack.c.bf16 %v3707, %v3706
      %v3744 = vpack.c.bf16 %v3709, %v3708
      %v3745 = vpack.c.bf16 %v3711, %v3710
      %v3746 = vpack.c.bf16 %v3713, %v3712
      %v3747 = vpack.c.bf16 %v3715, %v3714
      %v3748 = vpack.c.bf16 %v3717, %v3716
      %v3749 = vpack.c.bf16 %v3719, %v3718
      %v3750 = vpack.c.bf16 %v3721, %v3720
      %v3751 = vpack.c.bf16 %v3723, %v3722
      %v3752 = vpack.c.bf16 %v3725, %v3724
      %v3753 = vpack.c.bf16 %v3727, %v3726
      %v3754 = vpack.c.bf16 %v3729, %v3728
      %v3755 = vpack.c.bf16 %v3731, %v3730
      %v3756 = vpack.c.bf16 %v3733, %v3732
      %v3757 = vpack.c.bf16 %v3735, %v3734
      %v3758 = vpack.c.bf16 %v3737, %v3736
      %v3759 = vpack.c.bf16 %v3738, %v3738
      %s3760 = scalar_lea.vmem %s4, 96
      %v3761 = vld [vmem:[%s3760] sm:$0xf]
      %v3762 = vld [vmem:[%s3760 + $0x4] sm:$0xf]
      %v3763 = vld [vmem:[%s3760 + $0x8] sm:$0xf]
      %v3764 = vld [vmem:[%s3760 + $0xc] sm:$0x3]
      %v3769 = vunpack.c.l.b16 %v3761
      %v3770 = vunpack.c.l.b16 %v3762
      %v3771 = vunpack.c.l.b16 %v3763
      %v3772 = vunpack.c.l.b16 %v3764
      %v3773 = vpack.c.b16 %v3770, %v3769
      %v3774 = vpack.c.b16 %v3772, %v3771
      %v3777 = vsel %vm1381, %v3739, 0
      %v3780 = vsel %vm1381, %v3740, 0
      %v3783 = vsel %vm1381, %v3741, 0
      %v3786 = vsel %vm1381, %v3742, 0
      %v3789 = vsel %vm1381, %v3743, 0
      %v3792 = vsel %vm1381, %v3744, 0
      %v3795 = vsel %vm1381, %v3745, 0
      %v3798 = vsel %vm1381, %v3746, 0
      %v3801 = vsel %vm1381, %v3747, 0
      %v3804 = vsel %vm1381, %v3748, 0
      %v3807 = vsel %vm1381, %v3749, 0
      %v3810 = vsel %vm1381, %v3750, 0
      %v3813 = vsel %vm1381, %v3751, 0
      %v3816 = vsel %vm1381, %v3752, 0
      %v3819 = vsel %vm1381, %v3753, 0
      %v3822 = vsel %vm1381, %v3754, 0
      %v3825 = vsel %vm1381, %v3755, 0
      %v3828 = vsel %vm1381, %v3756, 0
      %v3831 = vsel %vm1381, %v3757, 0
      %v3834 = vsel %vm1381, %v3758, 0
      %v3837 = vsel %vm1381, %v3759, 0
      %v3840 = vsel %vm1677, %v3774, 0
      %3842 = vmatprep.subr.bf16.mxu0 0
      %3843 = vmatpush1.bf16.msra.mxu0 %v3773
      %3844 = vmatprep.subr.bf16.mxu0 0
      %3845 = vmatpush1.bf16.msra.mxu0 %v3840
      %3846 = vmatprep.subr.bf16.mxu0 0
      %3847 = vmatpush1.bf16.msra.mxu0 0
      %3848 = vmatprep.subr.bf16.mxu0 0
      %3849 = vmatpush1.bf16.msra.mxu0 0
      %3850 = vmatprep.subr.bf16.mxu0 0
      %3851 = vmatpush1.bf16.msra.mxu0 0
      %3852 = vmatprep.subr.bf16.mxu0 0
      %3853 = vmatpush1.bf16.msra.mxu0 0
      %3854 = vmatprep.subr.bf16.mxu0 0
      %3855 = vmatpush1.bf16.msra.mxu0 0
      %3856 = vmatprep.subr.bf16.mxu0 0
      %3857 = vmatpush1.bf16.msra.mxu0 0
      %3858 = vmatprep.subr.bf16.mxu0 0
      %3859 = vmatpush1.bf16.msra.mxu0 0
      %3860 = vmatprep.subr.bf16.mxu0 0
      %3861 = vmatpush1.bf16.msra.mxu0 0
      %3862 = vmatprep.subr.bf16.mxu0 0
      %3863 = vmatpush1.bf16.msra.mxu0 0
      %3864 = vmatprep.subr.bf16.mxu0 0
      %3865 = vmatpush1.bf16.msra.mxu0 0
      %3866 = vmatprep.subr.bf16.mxu0 0
      %3867 = vmatpush1.bf16.msra.mxu0 0
      %3868 = vmatprep.subr.bf16.mxu0 0
      %3869 = vmatpush1.bf16.msra.mxu0 0
      %3870 = vmatprep.subr.bf16.mxu0 0
      %3871 = vmatpush1.bf16.msra.mxu0 0
      %3872 = vmatprep.subr.bf16.mxu0 0
      %3873 = vmatpush1.bf16.msra.mxu0 0
      %3874 = vmatprep.mubr.bf16.mxu0 0
      %3875 = vmatmul.mubr.bf16.gmra.mrb[0].mxu0 %v3777
      %v3876 = vpop.f32.mrb[0].mxu0
      %v3877 = vadd.f32 0.0, %v3876
      %v3878 = vpop.f32.mrb[0].mxu0
      %v3879 = vpop.f32.mrb[0].mxu0
      %v3880 = vadd.f32 0.0, %v3879
      %v3881 = vpop.f32.mrb[0].mxu0
      %3882 = vmatprep.mubr.bf16.mxu0 0
      %3883 = vmatmul.mubr.bf16.gmra.mrb[0].mxu0 %v3780
      %v3884 = vpop.f32.mrb[0].mxu0
      %v3885 = vadd.f32 0.0, %v3884
      %v3886 = vpop.f32.mrb[0].mxu0
      %v3887 = vpop.f32.mrb[0].mxu0
      %v3888 = vadd.f32 0.0, %v3887
      %v3889 = vpop.f32.mrb[0].mxu0
      %3890 = vmatprep.mubr.bf16.mxu0 0
      %3891 = vmatmul.mubr.bf16.gmra.mrb[0].mxu0 %v3783
      %v3892 = vpop.f32.mrb[0].mxu0
      %v3893 = vadd.f32 0.0, %v3892
      %v3894 = vpop.f32.mrb[0].mxu0
      %v3895 = vpop.f32.mrb[0].mxu0
      %v3896 = vadd.f32 0.0, %v3895
      %v3897 = vpop.f32.mrb[0].mxu0
      %3898 = vmatprep.mubr.bf16.mxu0 0
      %3899 = vmatmul.mubr.bf16.gmra.mrb[0].mxu0 %v3786
      %v3900 = vpop.f32.mrb[0].mxu0
      %v3901 = vadd.f32 0.0, %v3900
      %v3902 = vpop.f32.mrb[0].mxu0
      %v3903 = vpop.f32.mrb[0].mxu0
      %v3904 = vadd.f32 0.0, %v3903
      %v3905 = vpop.f32.mrb[0].mxu0
      %3906 = vmatprep.mubr.bf16.mxu0 0
      %3907 = vmatmul.mubr.bf16.gmra.mrb[0].mxu0 %v3789
      %v3908 = vpop.f32.mrb[0].mxu0
      %v3909 = vadd.f32 0.0, %v3908
      %v3910 = vpop.f32.mrb[0].mxu0
      %v3911 = vpop.f32.mrb[0].mxu0
      %v3912 = vadd.f32 0.0, %v3911
      %v3913 = vpop.f32.mrb[0].mxu0
      %3914 = vmatprep.mubr.bf16.mxu0 0
      %3915 = vmatmul.mubr.bf16.gmra.mrb[0].mxu0 %v3792
      %v3916 = vpop.f32.mrb[0].mxu0
      %v3917 = vadd.f32 0.0, %v3916
      %v3918 = vpop.f32.mrb[0].mxu0
      %v3919 = vpop.f32.mrb[0].mxu0
      %v3920 = vadd.f32 0.0, %v3919
      %v3921 = vpop.f32.mrb[0].mxu0
      %3922 = vmatprep.mubr.bf16.mxu0 0
      %3923 = vmatmul.mubr.bf16.gmra.mrb[0].mxu0 %v3795
      %v3924 = vpop.f32.mrb[0].mxu0
      %v3925 = vadd.f32 0.0, %v3924
      %v3926 = vpop.f32.mrb[0].mxu0
      %v3927 = vpop.f32.mrb[0].mxu0
      %v3928 = vadd.f32 0.0, %v3927
      %v3929 = vpop.f32.mrb[0].mxu0
      %3930 = vmatprep.mubr.bf16.mxu0 0
      %3931 = vmatmul.mubr.bf16.gmra.mrb[0].mxu0 %v3798
      %v3932 = vpop.f32.mrb[0].mxu0
      %v3933 = vadd.f32 0.0, %v3932
      %v3934 = vpop.f32.mrb[0].mxu0
      %v3935 = vpop.f32.mrb[0].mxu0
      %v3936 = vadd.f32 0.0, %v3935
      %v3937 = vpop.f32.mrb[0].mxu0
      %3938 = vmatprep.mubr.bf16.mxu0 0
      %3939 = vmatmul.mubr.bf16.gmra.mrb[0].mxu0 %v3801
      %v3940 = vpop.f32.mrb[0].mxu0
      %v3941 = vadd.f32 0.0, %v3940
      %v3942 = vpop.f32.mrb[0].mxu0
      %v3943 = vpop.f32.mrb[0].mxu0
      %v3944 = vadd.f32 0.0, %v3943
      %v3945 = vpop.f32.mrb[0].mxu0
      %3946 = vmatprep.mubr.bf16.mxu0 0
      %3947 = vmatmul.mubr.bf16.gmra.mrb[0].mxu0 %v3804
      %v3948 = vpop.f32.mrb[0].mxu0
      %v3949 = vadd.f32 0.0, %v3948
      %v3950 = vpop.f32.mrb[0].mxu0
      %v3951 = vpop.f32.mrb[0].mxu0
      %v3952 = vadd.f32 0.0, %v3951
      %v3953 = vpop.f32.mrb[0].mxu0
      %3954 = vmatprep.mubr.bf16.mxu0 0
      %3955 = vmatmul.mubr.bf16.gmra.mrb[0].mxu0 %v3807
      %v3956 = vpop.f32.mrb[0].mxu0
      %v3957 = vadd.f32 0.0, %v3956
      %v3958 = vpop.f32.mrb[0].mxu0
      %v3959 = vpop.f32.mrb[0].mxu0
      %v3960 = vadd.f32 0.0, %v3959
      %v3961 = vpop.f32.mrb[0].mxu0
      %3962 = vmatprep.mubr.bf16.mxu0 0
      %3963 = vmatmul.mubr.bf16.gmra.mrb[0].mxu0 %v3810
      %v3964 = vpop.f32.mrb[0].mxu0
      %v3965 = vadd.f32 0.0, %v3964
      %v3966 = vpop.f32.mrb[0].mxu0
      %v3967 = vpop.f32.mrb[0].mxu0
      %v3968 = vadd.f32 0.0, %v3967
      %v3969 = vpop.f32.mrb[0].mxu0
      %3970 = vmatprep.mubr.bf16.mxu0 0
      %3971 = vmatmul.mubr.bf16.gmra.mrb[0].mxu0 %v3813
      %v3972 = vpop.f32.mrb[0].mxu0
      %v3973 = vadd.f32 0.0, %v3972
      %v3974 = vpop.f32.mrb[0].mxu0
      %v3975 = vpop.f32.mrb[0].mxu0
      %v3976 = vadd.f32 0.0, %v3975
      %v3977 = vpop.f32.mrb[0].mxu0
      %3978 = vmatprep.mubr.bf16.mxu0 0
      %3979 = vmatmul.mubr.bf16.gmra.mrb[0].mxu0 %v3816
      %v3980 = vpop.f32.mrb[0].mxu0
      %v3981 = vadd.f32 0.0, %v3980
      %v3982 = vpop.f32.mrb[0].mxu0
      %v3983 = vpop.f32.mrb[0].mxu0
      %v3984 = vadd.f32 0.0, %v3983
      %v3985 = vpop.f32.mrb[0].mxu0
      %3986 = vmatprep.mubr.bf16.mxu0 0
      %3987 = vmatmul.mubr.bf16.gmra.mrb[0].mxu0 %v3819
      %v3988 = vpop.f32.mrb[0].mxu0
      %v3989 = vadd.f32 0.0, %v3988
      %v3990 = vpop.f32.mrb[0].mxu0
      %v3991 = vpop.f32.mrb[0].mxu0
      %v3992 = vadd.f32 0.0, %v3991
      %v3993 = vpop.f32.mrb[0].mxu0
      %3994 = vmatprep.mubr.bf16.mxu0 0
      %3995 = vmatmul.mubr.bf16.gmra.mrb[0].mxu0 %v3822
      %v3996 = vpop.f32.mrb[0].mxu0
      %v3997 = vadd.f32 0.0, %v3996
      %v3998 = vpop.f32.mrb[0].mxu0
      %v3999 = vpop.f32.mrb[0].mxu0
      %v4000 = vadd.f32 0.0, %v3999
      %v4001 = vpop.f32.mrb[0].mxu0
      %4002 = vmatprep.mubr.bf16.mxu0 0
      %4003 = vmatmul.mubr.bf16.gmra.mrb[0].mxu0 %v3825
      %v4004 = vpop.f32.mrb[0].mxu0
      %v4005 = vadd.f32 0.0, %v4004
      %v4006 = vpop.f32.mrb[0].mxu0
      %v4007 = vpop.f32.mrb[0].mxu0
      %v4008 = vadd.f32 0.0, %v4007
      %v4009 = vpop.f32.mrb[0].mxu0
      %4010 = vmatprep.mubr.bf16.mxu0 0
      %4011 = vmatmul.mubr.bf16.gmra.mrb[0].mxu0 %v3828
      %v4012 = vpop.f32.mrb[0].mxu0
      %v4013 = vadd.f32 0.0, %v4012
      %v4014 = vpop.f32.mrb[0].mxu0
      %v4015 = vpop.f32.mrb[0].mxu0
      %v4016 = vadd.f32 0.0, %v4015
      %v4017 = vpop.f32.mrb[0].mxu0
      %4018 = vmatprep.mubr.bf16.mxu0 0
      %4019 = vmatmul.mubr.bf16.gmra.mrb[0].mxu0 %v3831
      %v4020 = vpop.f32.mrb[0].mxu0
      %v4021 = vadd.f32 0.0, %v4020
      %v4022 = vpop.f32.mrb[0].mxu0
      %v4023 = vpop.f32.mrb[0].mxu0
      %v4024 = vadd.f32 0.0, %v4023
      %v4025 = vpop.f32.mrb[0].mxu0
      %4026 = vmatprep.mubr.bf16.mxu0 0
      %4027 = vmatmul.mubr.bf16.gmra.mrb[0].mxu0 %v3834
      %v4028 = vpop.f32.mrb[0].mxu0
      %v4029 = vadd.f32 0.0, %v4028
      %v4030 = vpop.f32.mrb[0].mxu0
      %v4031 = vpop.f32.mrb[0].mxu0
      %v4032 = vadd.f32 0.0, %v4031
      %v4033 = vpop.f32.mrb[0].mxu0
      %4034 = vmatprep.mubr.bf16.mxu0 0
      %4035 = vmatmul.mubr.bf16.gmra.mrb[0].mxu0 %v3837
      %v4036 = vpop.f32.mrb[0].mxu0
      %v4037 = vadd.f32 0.0, %v4036
      %v4038 = vpop.f32.mrb[0].mxu0
      %v4039 = vpop.f32.mrb[0].mxu0
      %v4040 = vpop.f32.mrb[0].mxu0
      %4041 = vdwg.mxu0
      %v4042 = vadd.f32 %v3657, %v3877
      %v4043 = vadd.f32 %v3658, %v3880
      %v4044 = vadd.f32 %v3659, %v3885
      %v4045 = vadd.f32 %v3660, %v3888
      %v4046 = vadd.f32 %v3661, %v3893
      %v4047 = vadd.f32 %v3662, %v3896
      %v4048 = vadd.f32 %v3663, %v3901
      %v4049 = vadd.f32 %v3664, %v3904
      %v4050 = vadd.f32 %v3665, %v3909
      %v4051 = vadd.f32 %v3666, %v3912
      %v4052 = vadd.f32 %v3667, %v3917
      %v4053 = vadd.f32 %v3668, %v3920
      %v4054 = vadd.f32 %v3669, %v3925
      %v4055 = vadd.f32 %v3670, %v3928
      %v4056 = vadd.f32 %v3671, %v3933
      %v4057 = vadd.f32 %v3672, %v3936
      %v4058 = vadd.f32 %v3673, %v3941
      %v4059 = vadd.f32 %v3674, %v3944
      %v4060 = vadd.f32 %v3675, %v3949
      %v4061 = vadd.f32 %v3676, %v3952
      %v4062 = vadd.f32 %v3677, %v3957
      %v4063 = vadd.f32 %v3678, %v3960
      %v4064 = vadd.f32 %v3679, %v3965
      %v4065 = vadd.f32 %v3680, %v3968
      %v4066 = vadd.f32 %v3681, %v3973
      %v4067 = vadd.f32 %v3682, %v3976
      %v4068 = vadd.f32 %v3683, %v3981
      %v4069 = vadd.f32 %v3684, %v3984
      %v4070 = vadd.f32 %v3685, %v3989
      %v4071 = vadd.f32 %v3686, %v3992
      %v4072 = vadd.f32 %v3687, %v3997
      %v4073 = vadd.f32 %v3688, %v4000
      %v4074 = vadd.f32 %v3689, %v4005
      %v4075 = vadd.f32 %v3690, %v4008
      %v4076 = vadd.f32 %v3691, %v4013
      %v4077 = vadd.f32 %v3692, %v4016
      %v4078 = vadd.f32 %v3693, %v4021
      %v4079 = vadd.f32 %v3694, %v4024
      %v4080 = vadd.f32 %v3695, %v4029
      %v4081 = vadd.f32 %v3696, %v4032
      %v4082 = vadd.f32 %v3697, %v4037
      %v4083 = vld [vmem:[#allocation3 + $0x2a] sm:$0xff]
      %v4084 = vld [vmem:[#allocation3 + $0x32] sm:$0xff]
      %v4085 = vld [vmem:[#allocation3 + $0x3a] sm:$0xff]
      %v4086 = vld [vmem:[#allocation3 + $0x42] sm:$0xff]
      %v4087 = vld [vmem:[#allocation3 + $0x4a] sm:$0xff]
      %v4088 = vld [vmem:[#allocation3 + $0x52] sm:$0xff]
      %v4089 = vld [vmem:[#allocation3 + $0x5a] sm:$0xff]
      %v4090 = vld [vmem:[#allocation3 + $0x62] sm:$0xff]
      %v4091 = vld [vmem:[#allocation3 + $0x6a] sm:$0xff]
      %v4092 = vld [vmem:[#allocation3 + $0x72] sm:$0xff]
      %v4093 = vld [vmem:[#allocation3 + $0x7a] sm:$0xff]
      %v4094 = vld [vmem:[#allocation3 + $0x82] sm:$0xff]
      %v4095 = vld [vmem:[#allocation3 + $0x8a] sm:$0xff]
      %v4096 = vld [vmem:[#allocation3 + $0x92] sm:$0xff]
      %v4097 = vld [vmem:[#allocation3 + $0x9a] sm:$0xff]
      %v4098 = vld [vmem:[#allocation3 + $0xa2] sm:$0xff]
      %v4099 = vld [vmem:[#allocation3 + $0xaa] sm:$0xff]
      %v4100 = vld [vmem:[#allocation3 + $0xb2] sm:$0xff]
      %v4101 = vld [vmem:[#allocation3 + $0xba] sm:$0xff]
      %v4102 = vld [vmem:[#allocation3 + $0xc2] sm:$0xff]
      %v4103 = vld [vmem:[#allocation3 + $0xca] sm:$0xff]
      %v4104 = vld [vmem:[#allocation3 + $0xd2] sm:$0xff]
      %v4105 = vld [vmem:[#allocation3 + $0xda] sm:$0xff]
      %v4106 = vld [vmem:[#allocation3 + $0xe2] sm:$0xff]
      %v4107 = vld [vmem:[#allocation3 + $0xea] sm:$0xff]
      %v4108 = vld [vmem:[#allocation3 + $0xf2] sm:$0xff]
      %v4109 = vld [vmem:[#allocation3 + $0xfa] sm:$0xff]
      %v4110 = vld [vmem:[#allocation3 + $0x102] sm:$0xff]
      %v4111 = vld [vmem:[#allocation3 + $0x10a] sm:$0xff]
      %v4112 = vld [vmem:[#allocation3 + $0x112] sm:$0xff]
      %v4113 = vld [vmem:[#allocation3 + $0x11a] sm:$0xff]
      %v4114 = vld [vmem:[#allocation3 + $0x122] sm:$0xff]
      %v4115 = vld [vmem:[#allocation3 + $0x12a] sm:$0xff]
      %v4116 = vld [vmem:[#allocation3 + $0x132] sm:$0xff]
      %v4117 = vld [vmem:[#allocation3 + $0x13a] sm:$0xff]
      %v4118 = vld [vmem:[#allocation3 + $0x142] sm:$0xff]
      %v4119 = vld [vmem:[#allocation3 + $0x14a] sm:$0xff]
      %v4120 = vld [vmem:[#allocation3 + $0x152] sm:$0xff]
      %v4121 = vld [vmem:[#allocation3 + $0x15a] sm:$0xff]
      %v4122 = vld [vmem:[#allocation3 + $0x162] sm:$0xff]
      %v4123 = vld [vmem:[#allocation3 + $0x16a] sm:$0xff]
      %v4124 = vpack.c.bf16 %v4084, %v4083
      %v4125 = vpack.c.bf16 %v4086, %v4085
      %v4126 = vpack.c.bf16 %v4088, %v4087
      %v4127 = vpack.c.bf16 %v4090, %v4089
      %v4128 = vpack.c.bf16 %v4092, %v4091
      %v4129 = vpack.c.bf16 %v4094, %v4093
      %v4130 = vpack.c.bf16 %v4096, %v4095
      %v4131 = vpack.c.bf16 %v4098, %v4097
      %v4132 = vpack.c.bf16 %v4100, %v4099
      %v4133 = vpack.c.bf16 %v4102, %v4101
      %v4134 = vpack.c.bf16 %v4104, %v4103
      %v4135 = vpack.c.bf16 %v4106, %v4105
      %v4136 = vpack.c.bf16 %v4108, %v4107
      %v4137 = vpack.c.bf16 %v4110, %v4109
      %v4138 = vpack.c.bf16 %v4112, %v4111
      %v4139 = vpack.c.bf16 %v4114, %v4113
      %v4140 = vpack.c.bf16 %v4116, %v4115
      %v4141 = vpack.c.bf16 %v4118, %v4117
      %v4142 = vpack.c.bf16 %v4120, %v4119
      %v4143 = vpack.c.bf16 %v4122, %v4121
      %v4144 = vpack.c.bf16 %v4123, %v4123
      %s4145 = scalar_lea.vmem %s4, 112
      %v4146 = vld [vmem:[%s4145] sm:$0xf]
      %v4147 = vld [vmem:[%s4145 + $0x4] sm:$0xf]
      %v4148 = vld [vmem:[%s4145 + $0x8] sm:$0xf]
      %v4149 = vld [vmem:[%s4145 + $0xc] sm:$0x3]
      %v4154 = vunpack.c.l.b16 %v4146
      %v4155 = vunpack.c.l.b16 %v4147
      %v4156 = vunpack.c.l.b16 %v4148
      %v4157 = vunpack.c.l.b16 %v4149
      %v4158 = vpack.c.b16 %v4155, %v4154
      %v4159 = vpack.c.b16 %v4157, %v4156
      %v4162 = vsel %vm1381, %v4124, 0
      %v4165 = vsel %vm1381, %v4125, 0
      %v4168 = vsel %vm1381, %v4126, 0
      %v4171 = vsel %vm1381, %v4127, 0
      %v4174 = vsel %vm1381, %v4128, 0
      %v4177 = vsel %vm1381, %v4129, 0
      %v4180 = vsel %vm1381, %v4130, 0
      %v4183 = vsel %vm1381, %v4131, 0
      %v4186 = vsel %vm1381, %v4132, 0
      %v4189 = vsel %vm1381, %v4133, 0
      %v4192 = vsel %vm1381, %v4134, 0
      %v4195 = vsel %vm1381, %v4135, 0
      %v4198 = vsel %vm1381, %v4136, 0
      %v4201 = vsel %vm1381, %v4137, 0
      %v4204 = vsel %vm1381, %v4138, 0
      %v4207 = vsel %vm1381, %v4139, 0
      %v4210 = vsel %vm1381, %v4140, 0
      %v4213 = vsel %vm1381, %v4141, 0
      %v4216 = vsel %vm1381, %v4142, 0
      %v4219 = vsel %vm1381, %v4143, 0
      %v4222 = vsel %vm1381, %v4144, 0
      %v4225 = vsel %vm1677, %v4159, 0
      %4227 = vmatprep.subr.bf16.mxu0 0
      %4228 = vmatpush1.bf16.msra.mxu0 %v4158
      %4229 = vmatprep.subr.bf16.mxu0 0
      %4230 = vmatpush1.bf16.msra.mxu0 %v4225
      %4231 = vmatprep.subr.bf16.mxu0 0
      %4232 = vmatpush1.bf16.msra.mxu0 0
      %4233 = vmatprep.subr.bf16.mxu0 0
      %4234 = vmatpush1.bf16.msra.mxu0 0
      %4235 = vmatprep.subr.bf16.mxu0 0
      %4236 = vmatpush1.bf16.msra.mxu0 0
      %4237 = vmatprep.subr.bf16.mxu0 0
      %4238 = vmatpush1.bf16.msra.mxu0 0
      %4239 = vmatprep.subr.bf16.mxu0 0
      %4240 = vmatpush1.bf16.msra.mxu0 0
      %4241 = vmatprep.subr.bf16.mxu0 0
      %4242 = vmatpush1.bf16.msra.mxu0 0
      %4243 = vmatprep.subr.bf16.mxu0 0
      %4244 = vmatpush1.bf16.msra.mxu0 0
      %4245 = vmatprep.subr.bf16.mxu0 0
      %4246 = vmatpush1.bf16.msra.mxu0 0
      %4247 = vmatprep.subr.bf16.mxu0 0
      %4248 = vmatpush1.bf16.msra.mxu0 0
      %4249 = vmatprep.subr.bf16.mxu0 0
      %4250 = vmatpush1.bf16.msra.mxu0 0
      %4251 = vmatprep.subr.bf16.mxu0 0
      %4252 = vmatpush1.bf16.msra.mxu0 0
      %4253 = vmatprep.subr.bf16.mxu0 0
      %4254 = vmatpush1.bf16.msra.mxu0 0
      %4255 = vmatprep.subr.bf16.mxu0 0
      %4256 = vmatpush1.bf16.msra.mxu0 0
      %4257 = vmatprep.subr.bf16.mxu0 0
      %4258 = vmatpush1.bf16.msra.mxu0 0
      %4259 = vmatprep.mubr.bf16.mxu0 0
      %4260 = vmatmul.mubr.bf16.gmra.mrb[0].mxu0 %v4162
      %v4261 = vpop.f32.mrb[0].mxu0
      %v4262 = vadd.f32 0.0, %v4261
      %v4263 = vpop.f32.mrb[0].mxu0
      %v4264 = vpop.f32.mrb[0].mxu0
      %v4265 = vadd.f32 0.0, %v4264
      %v4266 = vpop.f32.mrb[0].mxu0
      %4267 = vmatprep.mubr.bf16.mxu0 0
      %4268 = vmatmul.mubr.bf16.gmra.mrb[0].mxu0 %v4165
      %v4269 = vpop.f32.mrb[0].mxu0
      %v4270 = vadd.f32 0.0, %v4269
      %v4271 = vpop.f32.mrb[0].mxu0
      %v4272 = vpop.f32.mrb[0].mxu0
      %v4273 = vadd.f32 0.0, %v4272
      %v4274 = vpop.f32.mrb[0].mxu0
      %4275 = vmatprep.mubr.bf16.mxu0 0
      %4276 = vmatmul.mubr.bf16.gmra.mrb[0].mxu0 %v4168
      %v4277 = vpop.f32.mrb[0].mxu0
      %v4278 = vadd.f32 0.0, %v4277
      %v4279 = vpop.f32.mrb[0].mxu0
      %v4280 = vpop.f32.mrb[0].mxu0
      %v4281 = vadd.f32 0.0, %v4280
      %v4282 = vpop.f32.mrb[0].mxu0
      %4283 = vmatprep.mubr.bf16.mxu0 0
      %4284 = vmatmul.mubr.bf16.gmra.mrb[0].mxu0 %v4171
      %v4285 = vpop.f32.mrb[0].mxu0
      %v4286 = vadd.f32 0.0, %v4285
      %v4287 = vpop.f32.mrb[0].mxu0
      %v4288 = vpop.f32.mrb[0].mxu0
      %v4289 = vadd.f32 0.0, %v4288
      %v4290 = vpop.f32.mrb[0].mxu0
      %4291 = vmatprep.mubr.bf16.mxu0 0
      %4292 = vmatmul.mubr.bf16.gmra.mrb[0].mxu0 %v4174
      %v4293 = vpop.f32.mrb[0].mxu0
      %v4294 = vadd.f32 0.0, %v4293
      %v4295 = vpop.f32.mrb[0].mxu0
      %v4296 = vpop.f32.mrb[0].mxu0
      %v4297 = vadd.f32 0.0, %v4296
      %v4298 = vpop.f32.mrb[0].mxu0
      %4299 = vmatprep.mubr.bf16.mxu0 0
      %4300 = vmatmul.mubr.bf16.gmra.mrb[0].mxu0 %v4177
      %v4301 = vpop.f32.mrb[0].mxu0
      %v4302 = vadd.f32 0.0, %v4301
      %v4303 = vpop.f32.mrb[0].mxu0
      %v4304 = vpop.f32.mrb[0].mxu0
      %v4305 = vadd.f32 0.0, %v4304
      %v4306 = vpop.f32.mrb[0].mxu0
      %4307 = vmatprep.mubr.bf16.mxu0 0
      %4308 = vmatmul.mubr.bf16.gmra.mrb[0].mxu0 %v4180
      %v4309 = vpop.f32.mrb[0].mxu0
      %v4310 = vadd.f32 0.0, %v4309
      %v4311 = vpop.f32.mrb[0].mxu0
      %v4312 = vpop.f32.mrb[0].mxu0
      %v4313 = vadd.f32 0.0, %v4312
      %v4314 = vpop.f32.mrb[0].mxu0
      %4315 = vmatprep.mubr.bf16.mxu0 0
      %4316 = vmatmul.mubr.bf16.gmra.mrb[0].mxu0 %v4183
      %v4317 = vpop.f32.mrb[0].mxu0
      %v4318 = vadd.f32 0.0, %v4317
      %v4319 = vpop.f32.mrb[0].mxu0
      %v4320 = vpop.f32.mrb[0].mxu0
      %v4321 = vadd.f32 0.0, %v4320
      %v4322 = vpop.f32.mrb[0].mxu0
      %4323 = vmatprep.mubr.bf16.mxu0 0
      %4324 = vmatmul.mubr.bf16.gmra.mrb[0].mxu0 %v4186
      %v4325 = vpop.f32.mrb[0].mxu0
      %v4326 = vadd.f32 0.0, %v4325
      %v4327 = vpop.f32.mrb[0].mxu0
      %v4328 = vpop.f32.mrb[0].mxu0
      %v4329 = vadd.f32 0.0, %v4328
      %v4330 = vpop.f32.mrb[0].mxu0
      %4331 = vmatprep.mubr.bf16.mxu0 0
      %4332 = vmatmul.mubr.bf16.gmra.mrb[0].mxu0 %v4189
      %v4333 = vpop.f32.mrb[0].mxu0
      %v4334 = vadd.f32 0.0, %v4333
      %v4335 = vpop.f32.mrb[0].mxu0
      %v4336 = vpop.f32.mrb[0].mxu0
      %v4337 = vadd.f32 0.0, %v4336
      %v4338 = vpop.f32.mrb[0].mxu0
      %4339 = vmatprep.mubr.bf16.mxu0 0
      %4340 = vmatmul.mubr.bf16.gmra.mrb[0].mxu0 %v4192
      %v4341 = vpop.f32.mrb[0].mxu0
      %v4342 = vadd.f32 0.0, %v4341
      %v4343 = vpop.f32.mrb[0].mxu0
      %v4344 = vpop.f32.mrb[0].mxu0
      %v4345 = vadd.f32 0.0, %v4344
      %v4346 = vpop.f32.mrb[0].mxu0
      %4347 = vmatprep.mubr.bf16.mxu0 0
      %4348 = vmatmul.mubr.bf16.gmra.mrb[0].mxu0 %v4195
      %v4349 = vpop.f32.mrb[0].mxu0
      %v4350 = vadd.f32 0.0, %v4349
      %v4351 = vpop.f32.mrb[0].mxu0
      %v4352 = vpop.f32.mrb[0].mxu0
      %v4353 = vadd.f32 0.0, %v4352
      %v4354 = vpop.f32.mrb[0].mxu0
      %4355 = vmatprep.mubr.bf16.mxu0 0
      %4356 = vmatmul.mubr.bf16.gmra.mrb[0].mxu0 %v4198
      %v4357 = vpop.f32.mrb[0].mxu0
      %v4358 = vadd.f32 0.0, %v4357
      %v4359 = vpop.f32.mrb[0].mxu0
      %v4360 = vpop.f32.mrb[0].mxu0
      %v4361 = vadd.f32 0.0, %v4360
      %v4362 = vpop.f32.mrb[0].mxu0
      %4363 = vmatprep.mubr.bf16.mxu0 0
      %4364 = vmatmul.mubr.bf16.gmra.mrb[0].mxu0 %v4201
      %v4365 = vpop.f32.mrb[0].mxu0
      %v4366 = vadd.f32 0.0, %v4365
      %v4367 = vpop.f32.mrb[0].mxu0
      %v4368 = vpop.f32.mrb[0].mxu0
      %v4369 = vadd.f32 0.0, %v4368
      %v4370 = vpop.f32.mrb[0].mxu0
      %4371 = vmatprep.mubr.bf16.mxu0 0
      %4372 = vmatmul.mubr.bf16.gmra.mrb[0].mxu0 %v4204
      %v4373 = vpop.f32.mrb[0].mxu0
      %v4374 = vadd.f32 0.0, %v4373
      %v4375 = vpop.f32.mrb[0].mxu0
      %v4376 = vpop.f32.mrb[0].mxu0
      %v4377 = vadd.f32 0.0, %v4376
      %v4378 = vpop.f32.mrb[0].mxu0
      %4379 = vmatprep.mubr.bf16.mxu0 0
      %4380 = vmatmul.mubr.bf16.gmra.mrb[0].mxu0 %v4207
      %v4381 = vpop.f32.mrb[0].mxu0
      %v4382 = vadd.f32 0.0, %v4381
      %v4383 = vpop.f32.mrb[0].mxu0
      %v4384 = vpop.f32.mrb[0].mxu0
      %v4385 = vadd.f32 0.0, %v4384
      %v4386 = vpop.f32.mrb[0].mxu0
      %4387 = vmatprep.mubr.bf16.mxu0 0
      %4388 = vmatmul.mubr.bf16.gmra.mrb[0].mxu0 %v4210
      %v4389 = vpop.f32.mrb[0].mxu0
      %v4390 = vadd.f32 0.0, %v4389
      %v4391 = vpop.f32.mrb[0].mxu0
      %v4392 = vpop.f32.mrb[0].mxu0
      %v4393 = vadd.f32 0.0, %v4392
      %v4394 = vpop.f32.mrb[0].mxu0
      %4395 = vmatprep.mubr.bf16.mxu0 0
      %4396 = vmatmul.mubr.bf16.gmra.mrb[0].mxu0 %v4213
      %v4397 = vpop.f32.mrb[0].mxu0
      %v4398 = vadd.f32 0.0, %v4397
      %v4399 = vpop.f32.mrb[0].mxu0
      %v4400 = vpop.f32.mrb[0].mxu0
      %v4401 = vadd.f32 0.0, %v4400
      %v4402 = vpop.f32.mrb[0].mxu0
      %4403 = vmatprep.mubr.bf16.mxu0 0
      %4404 = vmatmul.mubr.bf16.gmra.mrb[0].mxu0 %v4216
      %v4405 = vpop.f32.mrb[0].mxu0
      %v4406 = vadd.f32 0.0, %v4405
      %v4407 = vpop.f32.mrb[0].mxu0
      %v4408 = vpop.f32.mrb[0].mxu0
      %v4409 = vadd.f32 0.0, %v4408
      %v4410 = vpop.f32.mrb[0].mxu0
      %4411 = vmatprep.mubr.bf16.mxu0 0
      %4412 = vmatmul.mubr.bf16.gmra.mrb[0].mxu0 %v4219
      %v4413 = vpop.f32.mrb[0].mxu0
      %v4414 = vadd.f32 0.0, %v4413
      %v4415 = vpop.f32.mrb[0].mxu0
      %v4416 = vpop.f32.mrb[0].mxu0
      %v4417 = vadd.f32 0.0, %v4416
      %v4418 = vpop.f32.mrb[0].mxu0
      %4419 = vmatprep.mubr.bf16.mxu0 0
      %4420 = vmatmul.mubr.bf16.gmra.mrb[0].mxu0 %v4222
      %v4421 = vpop.f32.mrb[0].mxu0
      %v4422 = vadd.f32 0.0, %v4421
      %v4423 = vpop.f32.mrb[0].mxu0
      %v4424 = vpop.f32.mrb[0].mxu0
      %v4425 = vpop.f32.mrb[0].mxu0
      %4426 = vdwg.mxu0
      %v4427 = vadd.f32 %v4042, %v4262
      %v4428 = vadd.f32 %v4043, %v4265
      %v4429 = vadd.f32 %v4044, %v4270
      %v4430 = vadd.f32 %v4045, %v4273
      %v4431 = vadd.f32 %v4046, %v4278
      %v4432 = vadd.f32 %v4047, %v4281
      %v4433 = vadd.f32 %v4048, %v4286
      %v4434 = vadd.f32 %v4049, %v4289
      %v4435 = vadd.f32 %v4050, %v4294
      %v4436 = vadd.f32 %v4051, %v4297
      %v4437 = vadd.f32 %v4052, %v4302
      %v4438 = vadd.f32 %v4053, %v4305
      %v4439 = vadd.f32 %v4054, %v4310
      %v4440 = vadd.f32 %v4055, %v4313
      %v4441 = vadd.f32 %v4056, %v4318
      %v4442 = vadd.f32 %v4057, %v4321
      %v4443 = vadd.f32 %v4058, %v4326
      %v4444 = vadd.f32 %v4059, %v4329
      %v4445 = vadd.f32 %v4060, %v4334
      %v4446 = vadd.f32 %v4061, %v4337
      %v4447 = vadd.f32 %v4062, %v4342
      %v4448 = vadd.f32 %v4063, %v4345
      %v4449 = vadd.f32 %v4064, %v4350
      %v4450 = vadd.f32 %v4065, %v4353
      %v4451 = vadd.f32 %v4066, %v4358
      %v4452 = vadd.f32 %v4067, %v4361
      %v4453 = vadd.f32 %v4068, %v4366
      %v4454 = vadd.f32 %v4069, %v4369
      %v4455 = vadd.f32 %v4070, %v4374
      %v4456 = vadd.f32 %v4071, %v4377
      %v4457 = vadd.f32 %v4072, %v4382
      %v4458 = vadd.f32 %v4073, %v4385
      %v4459 = vadd.f32 %v4074, %v4390
      %v4460 = vadd.f32 %v4075, %v4393
      %v4461 = vadd.f32 %v4076, %v4398
      %v4462 = vadd.f32 %v4077, %v4401
      %v4463 = vadd.f32 %v4078, %v4406
      %v4464 = vadd.f32 %v4079, %v4409
      %v4465 = vadd.f32 %v4080, %v4414
      %v4466 = vadd.f32 %v4081, %v4417
      %v4467 = vadd.f32 %v4082, %v4422
      %v4468 = vld [vmem:[#allocation3 + $0x2b] sm:$0xff]
      %v4469 = vld [vmem:[#allocation3 + $0x33] sm:$0xff]
      %v4470 = vld [vmem:[#allocation3 + $0x3b] sm:$0xff]
      %v4471 = vld [vmem:[#allocation3 + $0x43] sm:$0xff]
      %v4472 = vld [vmem:[#allocation3 + $0x4b] sm:$0xff]
      %v4473 = vld [vmem:[#allocation3 + $0x53] sm:$0xff]
      %v4474 = vld [vmem:[#allocation3 + $0x5b] sm:$0xff]
      %v4475 = vld [vmem:[#allocation3 + $0x63] sm:$0xff]
      %v4476 = vld [vmem:[#allocation3 + $0x6b] sm:$0xff]
      %v4477 = vld [vmem:[#allocation3 + $0x73] sm:$0xff]
      %v4478 = vld [vmem:[#allocation3 + $0x7b] sm:$0xff]
      %v4479 = vld [vmem:[#allocation3 + $0x83] sm:$0xff]
      %v4480 = vld [vmem:[#allocation3 + $0x8b] sm:$0xff]
      %v4481 = vld [vmem:[#allocation3 + $0x93] sm:$0xff]
      %v4482 = vld [vmem:[#allocation3 + $0x9b] sm:$0xff]
      %v4483 = vld [vmem:[#allocation3 + $0xa3] sm:$0xff]
      %v4484 = vld [vmem:[#allocation3 + $0xab] sm:$0xff]
      %v4485 = vld [vmem:[#allocation3 + $0xb3] sm:$0xff]
      %v4486 = vld [vmem:[#allocation3 + $0xbb] sm:$0xff]
      %v4487 = vld [vmem:[#allocation3 + $0xc3] sm:$0xff]
      %v4488 = vld [vmem:[#allocation3 + $0xcb] sm:$0xff]
      %v4489 = vld [vmem:[#allocation3 + $0xd3] sm:$0xff]
      %v4490 = vld [vmem:[#allocation3 + $0xdb] sm:$0xff]
      %v4491 = vld [vmem:[#allocation3 + $0xe3] sm:$0xff]
      %v4492 = vld [vmem:[#allocation3 + $0xeb] sm:$0xff]
      %v4493 = vld [vmem:[#allocation3 + $0xf3] sm:$0xff]
      %v4494 = vld [vmem:[#allocation3 + $0xfb] sm:$0xff]
      %v4495 = vld [vmem:[#allocation3 + $0x103] sm:$0xff]
      %v4496 = vld [vmem:[#allocation3 + $0x10b] sm:$0xff]
      %v4497 = vld [vmem:[#allocation3 + $0x113] sm:$0xff]
      %v4498 = vld [vmem:[#allocation3 + $0x11b] sm:$0xff]
      %v4499 = vld [vmem:[#allocation3 + $0x123] sm:$0xff]
      %v4500 = vld [vmem:[#allocation3 + $0x12b] sm:$0xff]
      %v4501 = vld [vmem:[#allocation3 + $0x133] sm:$0xff]
      %v4502 = vld [vmem:[#allocation3 + $0x13b] sm:$0xff]
      %v4503 = vld [vmem:[#allocation3 + $0x143] sm:$0xff]
      %v4504 = vld [vmem:[#allocation3 + $0x14b] sm:$0xff]
      %v4505 = vld [vmem:[#allocation3 + $0x153] sm:$0xff]
      %v4506 = vld [vmem:[#allocation3 + $0x15b] sm:$0xff]
      %v4507 = vld [vmem:[#allocation3 + $0x163] sm:$0xff]
      %v4508 = vld [vmem:[#allocation3 + $0x16b] sm:$0xff]
      %v4509 = vpack.c.bf16 %v4469, %v4468
      %v4510 = vpack.c.bf16 %v4471, %v4470
      %v4511 = vpack.c.bf16 %v4473, %v4472
      %v4512 = vpack.c.bf16 %v4475, %v4474
      %v4513 = vpack.c.bf16 %v4477, %v4476
      %v4514 = vpack.c.bf16 %v4479, %v4478
      %v4515 = vpack.c.bf16 %v4481, %v4480
      %v4516 = vpack.c.bf16 %v4483, %v4482
      %v4517 = vpack.c.bf16 %v4485, %v4484
      %v4518 = vpack.c.bf16 %v4487, %v4486
      %v4519 = vpack.c.bf16 %v4489, %v4488
      %v4520 = vpack.c.bf16 %v4491, %v4490
      %v4521 = vpack.c.bf16 %v4493, %v4492
      %v4522 = vpack.c.bf16 %v4495, %v4494
      %v4523 = vpack.c.bf16 %v4497, %v4496
      %v4524 = vpack.c.bf16 %v4499, %v4498
      %v4525 = vpack.c.bf16 %v4501, %v4500
      %v4526 = vpack.c.bf16 %v4503, %v4502
      %v4527 = vpack.c.bf16 %v4505, %v4504
      %v4528 = vpack.c.bf16 %v4507, %v4506
      %v4529 = vpack.c.bf16 %v4508, %v4508
      %s4530 = scalar_lea.vmem %s4, 128
      %v4531 = vld [vmem:[%s4530] sm:$0xf]
      %v4532 = vld [vmem:[%s4530 + $0x4] sm:$0xf]
      %v4533 = vld [vmem:[%s4530 + $0x8] sm:$0xf]
      %v4534 = vld [vmem:[%s4530 + $0xc] sm:$0x3]
      %v4539 = vunpack.c.l.b16 %v4531
      %v4540 = vunpack.c.l.b16 %v4532
      %v4541 = vunpack.c.l.b16 %v4533
      %v4542 = vunpack.c.l.b16 %v4534
      %v4543 = vpack.c.b16 %v4540, %v4539
      %v4544 = vpack.c.b16 %v4542, %v4541
      %v4547 = vsel %vm1381, %v4509, 0
      %v4550 = vsel %vm1381, %v4510, 0
      %v4553 = vsel %vm1381, %v4511, 0
      %v4556 = vsel %vm1381, %v4512, 0
      %v4559 = vsel %vm1381, %v4513, 0
      %v4562 = vsel %vm1381, %v4514, 0
      %v4565 = vsel %vm1381, %v4515, 0
      %v4568 = vsel %vm1381, %v4516, 0
      %v4571 = vsel %vm1381, %v4517, 0
      %v4574 = vsel %vm1381, %v4518, 0
      %v4577 = vsel %vm1381, %v4519, 0
      %v4580 = vsel %vm1381, %v4520, 0
      %v4583 = vsel %vm1381, %v4521, 0
      %v4586 = vsel %vm1381, %v4522, 0
      %v4589 = vsel %vm1381, %v4523, 0
      %v4592 = vsel %vm1381, %v4524, 0
      %v4595 = vsel %vm1381, %v4525, 0
      %v4598 = vsel %vm1381, %v4526, 0
      %v4601 = vsel %vm1381, %v4527, 0
      %v4604 = vsel %vm1381, %v4528, 0
      %v4607 = vsel %vm1381, %v4529, 0
      %v4610 = vsel %vm1677, %v4544, 0
      %4612 = vmatprep.subr.bf16.mxu0 0
      %4613 = vmatpush1.bf16.msra.mxu0 %v4543
      %4614 = vmatprep.subr.bf16.mxu0 0
      %4615 = vmatpush1.bf16.msra.mxu0 %v4610
      %4616 = vmatprep.subr.bf16.mxu0 0
      %4617 = vmatpush1.bf16.msra.mxu0 0
      %4618 = vmatprep.subr.bf16.mxu0 0
      %4619 = vmatpush1.bf16.msra.mxu0 0
      %4620 = vmatprep.subr.bf16.mxu0 0
      %4621 = vmatpush1.bf16.msra.mxu0 0
      %4622 = vmatprep.subr.bf16.mxu0 0
      %4623 = vmatpush1.bf16.msra.mxu0 0
      %4624 = vmatprep.subr.bf16.mxu0 0
      %4625 = vmatpush1.bf16.msra.mxu0 0
      %4626 = vmatprep.subr.bf16.mxu0 0
      %4627 = vmatpush1.bf16.msra.mxu0 0
      %4628 = vmatprep.subr.bf16.mxu0 0
      %4629 = vmatpush1.bf16.msra.mxu0 0
      %4630 = vmatprep.subr.bf16.mxu0 0
      %4631 = vmatpush1.bf16.msra.mxu0 0
      %4632 = vmatprep.subr.bf16.mxu0 0
      %4633 = vmatpush1.bf16.msra.mxu0 0
      %4634 = vmatprep.subr.bf16.mxu0 0
      %4635 = vmatpush1.bf16.msra.mxu0 0
      %4636 = vmatprep.subr.bf16.mxu0 0
      %4637 = vmatpush1.bf16.msra.mxu0 0
      %4638 = vmatprep.subr.bf16.mxu0 0
      %4639 = vmatpush1.bf16.msra.mxu0 0
      %4640 = vmatprep.subr.bf16.mxu0 0
      %4641 = vmatpush1.bf16.msra.mxu0 0
      %4642 = vmatprep.subr.bf16.mxu0 0
      %4643 = vmatpush1.bf16.msra.mxu0 0
      %4644 = vmatprep.mubr.bf16.mxu0 0
      %4645 = vmatmul.mubr.bf16.gmra.mrb[0].mxu0 %v4547
      %v4646 = vpop.f32.mrb[0].mxu0
      %v4647 = vadd.f32 0.0, %v4646
      %v4648 = vpop.f32.mrb[0].mxu0
      %v4649 = vpop.f32.mrb[0].mxu0
      %v4650 = vadd.f32 0.0, %v4649
      %v4651 = vpop.f32.mrb[0].mxu0
      %4652 = vmatprep.mubr.bf16.mxu0 0
      %4653 = vmatmul.mubr.bf16.gmra.mrb[0].mxu0 %v4550
      %v4654 = vpop.f32.mrb[0].mxu0
      %v4655 = vadd.f32 0.0, %v4654
      %v4656 = vpop.f32.mrb[0].mxu0
      %v4657 = vpop.f32.mrb[0].mxu0
      %v4658 = vadd.f32 0.0, %v4657
      %v4659 = vpop.f32.mrb[0].mxu0
      %4660 = vmatprep.mubr.bf16.mxu0 0
      %4661 = vmatmul.mubr.bf16.gmra.mrb[0].mxu0 %v4553
      %v4662 = vpop.f32.mrb[0].mxu0
      %v4663 = vadd.f32 0.0, %v4662
      %v4664 = vpop.f32.mrb[0].mxu0
      %v4665 = vpop.f32.mrb[0].mxu0
      %v4666 = vadd.f32 0.0, %v4665
      %v4667 = vpop.f32.mrb[0].mxu0
      %4668 = vmatprep.mubr.bf16.mxu0 0
      %4669 = vmatmul.mubr.bf16.gmra.mrb[0].mxu0 %v4556
      %v4670 = vpop.f32.mrb[0].mxu0
      %v4671 = vadd.f32 0.0, %v4670
      %v4672 = vpop.f32.mrb[0].mxu0
      %v4673 = vpop.f32.mrb[0].mxu0
      %v4674 = vadd.f32 0.0, %v4673
      %v4675 = vpop.f32.mrb[0].mxu0
      %4676 = vmatprep.mubr.bf16.mxu0 0
      %4677 = vmatmul.mubr.bf16.gmra.mrb[0].mxu0 %v4559
      %v4678 = vpop.f32.mrb[0].mxu0
      %v4679 = vadd.f32 0.0, %v4678
      %v4680 = vpop.f32.mrb[0].mxu0
      %v4681 = vpop.f32.mrb[0].mxu0
      %v4682 = vadd.f32 0.0, %v4681
      %v4683 = vpop.f32.mrb[0].mxu0
      %4684 = vmatprep.mubr.bf16.mxu0 0
      %4685 = vmatmul.mubr.bf16.gmra.mrb[0].mxu0 %v4562
      %v4686 = vpop.f32.mrb[0].mxu0
      %v4687 = vadd.f32 0.0, %v4686
      %v4688 = vpop.f32.mrb[0].mxu0
      %v4689 = vpop.f32.mrb[0].mxu0
      %v4690 = vadd.f32 0.0, %v4689
      %v4691 = vpop.f32.mrb[0].mxu0
      %4692 = vmatprep.mubr.bf16.mxu0 0
      %4693 = vmatmul.mubr.bf16.gmra.mrb[0].mxu0 %v4565
      %v4694 = vpop.f32.mrb[0].mxu0
      %v4695 = vadd.f32 0.0, %v4694
      %v4696 = vpop.f32.mrb[0].mxu0
      %v4697 = vpop.f32.mrb[0].mxu0
      %v4698 = vadd.f32 0.0, %v4697
      %v4699 = vpop.f32.mrb[0].mxu0
      %4700 = vmatprep.mubr.bf16.mxu0 0
      %4701 = vmatmul.mubr.bf16.gmra.mrb[0].mxu0 %v4568
      %v4702 = vpop.f32.mrb[0].mxu0
      %v4703 = vadd.f32 0.0, %v4702
      %v4704 = vpop.f32.mrb[0].mxu0
      %v4705 = vpop.f32.mrb[0].mxu0
      %v4706 = vadd.f32 0.0, %v4705
      %v4707 = vpop.f32.mrb[0].mxu0
      %4708 = vmatprep.mubr.bf16.mxu0 0
      %4709 = vmatmul.mubr.bf16.gmra.mrb[0].mxu0 %v4571
      %v4710 = vpop.f32.mrb[0].mxu0
      %v4711 = vadd.f32 0.0, %v4710
      %v4712 = vpop.f32.mrb[0].mxu0
      %v4713 = vpop.f32.mrb[0].mxu0
      %v4714 = vadd.f32 0.0, %v4713
      %v4715 = vpop.f32.mrb[0].mxu0
      %4716 = vmatprep.mubr.bf16.mxu0 0
      %4717 = vmatmul.mubr.bf16.gmra.mrb[0].mxu0 %v4574
      %v4718 = vpop.f32.mrb[0].mxu0
      %v4719 = vadd.f32 0.0, %v4718
      %v4720 = vpop.f32.mrb[0].mxu0
      %v4721 = vpop.f32.mrb[0].mxu0
      %v4722 = vadd.f32 0.0, %v4721
      %v4723 = vpop.f32.mrb[0].mxu0
      %4724 = vmatprep.mubr.bf16.mxu0 0
      %4725 = vmatmul.mubr.bf16.gmra.mrb[0].mxu0 %v4577
      %v4726 = vpop.f32.mrb[0].mxu0
      %v4727 = vadd.f32 0.0, %v4726
      %v4728 = vpop.f32.mrb[0].mxu0
      %v4729 = vpop.f32.mrb[0].mxu0
      %v4730 = vadd.f32 0.0, %v4729
      %v4731 = vpop.f32.mrb[0].mxu0
      %4732 = vmatprep.mubr.bf16.mxu0 0
      %4733 = vmatmul.mubr.bf16.gmra.mrb[0].mxu0 %v4580
      %v4734 = vpop.f32.mrb[0].mxu0
      %v4735 = vadd.f32 0.0, %v4734
      %v4736 = vpop.f32.mrb[0].mxu0
      %v4737 = vpop.f32.mrb[0].mxu0
      %v4738 = vadd.f32 0.0, %v4737
      %v4739 = vpop.f32.mrb[0].mxu0
      %4740 = vmatprep.mubr.bf16.mxu0 0
      %4741 = vmatmul.mubr.bf16.gmra.mrb[0].mxu0 %v4583
      %v4742 = vpop.f32.mrb[0].mxu0
      %v4743 = vadd.f32 0.0, %v4742
      %v4744 = vpop.f32.mrb[0].mxu0
      %v4745 = vpop.f32.mrb[0].mxu0
      %v4746 = vadd.f32 0.0, %v4745
      %v4747 = vpop.f32.mrb[0].mxu0
      %4748 = vmatprep.mubr.bf16.mxu0 0
      %4749 = vmatmul.mubr.bf16.gmra.mrb[0].mxu0 %v4586
      %v4750 = vpop.f32.mrb[0].mxu0
      %v4751 = vadd.f32 0.0, %v4750
      %v4752 = vpop.f32.mrb[0].mxu0
      %v4753 = vpop.f32.mrb[0].mxu0
      %v4754 = vadd.f32 0.0, %v4753
      %v4755 = vpop.f32.mrb[0].mxu0
      %4756 = vmatprep.mubr.bf16.mxu0 0
      %4757 = vmatmul.mubr.bf16.gmra.mrb[0].mxu0 %v4589
      %v4758 = vpop.f32.mrb[0].mxu0
      %v4759 = vadd.f32 0.0, %v4758
      %v4760 = vpop.f32.mrb[0].mxu0
      %v4761 = vpop.f32.mrb[0].mxu0
      %v4762 = vadd.f32 0.0, %v4761
      %v4763 = vpop.f32.mrb[0].mxu0
      %4764 = vmatprep.mubr.bf16.mxu0 0
      %4765 = vmatmul.mubr.bf16.gmra.mrb[0].mxu0 %v4592
      %v4766 = vpop.f32.mrb[0].mxu0
      %v4767 = vadd.f32 0.0, %v4766
      %v4768 = vpop.f32.mrb[0].mxu0
      %v4769 = vpop.f32.mrb[0].mxu0
      %v4770 = vadd.f32 0.0, %v4769
      %v4771 = vpop.f32.mrb[0].mxu0
      %4772 = vmatprep.mubr.bf16.mxu0 0
      %4773 = vmatmul.mubr.bf16.gmra.mrb[0].mxu0 %v4595
      %v4774 = vpop.f32.mrb[0].mxu0
      %v4775 = vadd.f32 0.0, %v4774
      %v4776 = vpop.f32.mrb[0].mxu0
      %v4777 = vpop.f32.mrb[0].mxu0
      %v4778 = vadd.f32 0.0, %v4777
      %v4779 = vpop.f32.mrb[0].mxu0
      %4780 = vmatprep.mubr.bf16.mxu0 0
      %4781 = vmatmul.mubr.bf16.gmra.mrb[0].mxu0 %v4598
      %v4782 = vpop.f32.mrb[0].mxu0
      %v4783 = vadd.f32 0.0, %v4782
      %v4784 = vpop.f32.mrb[0].mxu0
      %v4785 = vpop.f32.mrb[0].mxu0
      %v4786 = vadd.f32 0.0, %v4785
      %v4787 = vpop.f32.mrb[0].mxu0
      %4788 = vmatprep.mubr.bf16.mxu0 0
      %4789 = vmatmul.mubr.bf16.gmra.mrb[0].mxu0 %v4601
      %v4790 = vpop.f32.mrb[0].mxu0
      %v4791 = vadd.f32 0.0, %v4790
      %v4792 = vpop.f32.mrb[0].mxu0
      %v4793 = vpop.f32.mrb[0].mxu0
      %v4794 = vadd.f32 0.0, %v4793
      %v4795 = vpop.f32.mrb[0].mxu0
      %4796 = vmatprep.mubr.bf16.mxu0 0
      %4797 = vmatmul.mubr.bf16.gmra.mrb[0].mxu0 %v4604
      %v4798 = vpop.f32.mrb[0].mxu0
      %v4799 = vadd.f32 0.0, %v4798
      %v4800 = vpop.f32.mrb[0].mxu0
      %v4801 = vpop.f32.mrb[0].mxu0
      %v4802 = vadd.f32 0.0, %v4801
      %v4803 = vpop.f32.mrb[0].mxu0
      %4804 = vmatprep.mubr.bf16.mxu0 0
      %4805 = vmatmul.mubr.bf16.gmra.mrb[0].mxu0 %v4607
      %v4806 = vpop.f32.mrb[0].mxu0
      %v4807 = vadd.f32 0.0, %v4806
      %v4808 = vpop.f32.mrb[0].mxu0
      %v4809 = vpop.f32.mrb[0].mxu0
      %v4810 = vpop.f32.mrb[0].mxu0
      %4811 = vdwg.mxu0
      %v4812 = vadd.f32 %v4427, %v4647
      %v4813 = vadd.f32 %v4428, %v4650
      %v4814 = vadd.f32 %v4429, %v4655
      %v4815 = vadd.f32 %v4430, %v4658
      %v4816 = vadd.f32 %v4431, %v4663
      %v4817 = vadd.f32 %v4432, %v4666
      %v4818 = vadd.f32 %v4433, %v4671
      %v4819 = vadd.f32 %v4434, %v4674
      %v4820 = vadd.f32 %v4435, %v4679
      %v4821 = vadd.f32 %v4436, %v4682
      %v4822 = vadd.f32 %v4437, %v4687
      %v4823 = vadd.f32 %v4438, %v4690
      %v4824 = vadd.f32 %v4439, %v4695
      %v4825 = vadd.f32 %v4440, %v4698
      %v4826 = vadd.f32 %v4441, %v4703
      %v4827 = vadd.f32 %v4442, %v4706
      %v4828 = vadd.f32 %v4443, %v4711
      %v4829 = vadd.f32 %v4444, %v4714
      %v4830 = vadd.f32 %v4445, %v4719
      %v4831 = vadd.f32 %v4446, %v4722
      %v4832 = vadd.f32 %v4447, %v4727
      %v4833 = vadd.f32 %v4448, %v4730
      %v4834 = vadd.f32 %v4449, %v4735
      %v4835 = vadd.f32 %v4450, %v4738
      %v4836 = vadd.f32 %v4451, %v4743
      %v4837 = vadd.f32 %v4452, %v4746
      %v4838 = vadd.f32 %v4453, %v4751
      %v4839 = vadd.f32 %v4454, %v4754
      %v4840 = vadd.f32 %v4455, %v4759
      %v4841 = vadd.f32 %v4456, %v4762
      %v4842 = vadd.f32 %v4457, %v4767
      %v4843 = vadd.f32 %v4458, %v4770
      %v4844 = vadd.f32 %v4459, %v4775
      %v4845 = vadd.f32 %v4460, %v4778
      %v4846 = vadd.f32 %v4461, %v4783
      %v4847 = vadd.f32 %v4462, %v4786
      %v4848 = vadd.f32 %v4463, %v4791
      %v4849 = vadd.f32 %v4464, %v4794
      %v4850 = vadd.f32 %v4465, %v4799
      %v4851 = vadd.f32 %v4466, %v4802
      %v4852 = vadd.f32 %v4467, %v4807
      %v4853 = vld [vmem:[%s10] sm:$0x1]
      %v4855 = vlaneseq
      %v4856 = vshrl.u32 %v4855, 7
      %v4857 = vsub.s32 0, %v4856
      %v4858 = vrot.slane %v4853, %v4857
      %v4860 = vadd.f32 %v4812, %v4858
      %v4861 = vadd.f32 %v4813, %v4858
      %v4862 = vadd.f32 %v4814, %v4858
      %v4863 = vadd.f32 %v4815, %v4858
      %v4864 = vadd.f32 %v4816, %v4858
      %v4865 = vadd.f32 %v4817, %v4858
      %v4866 = vadd.f32 %v4818, %v4858
      %v4867 = vadd.f32 %v4819, %v4858
      %v4868 = vadd.f32 %v4820, %v4858
      %v4869 = vadd.f32 %v4821, %v4858
      %v4870 = vadd.f32 %v4822, %v4858
      %v4871 = vadd.f32 %v4823, %v4858
      %v4872 = vadd.f32 %v4824, %v4858
      %v4873 = vadd.f32 %v4825, %v4858
      %v4874 = vadd.f32 %v4826, %v4858
      %v4875 = vadd.f32 %v4827, %v4858
      %v4876 = vadd.f32 %v4828, %v4858
      %v4877 = vadd.f32 %v4829, %v4858
      %v4878 = vadd.f32 %v4830, %v4858
      %v4879 = vadd.f32 %v4831, %v4858
      %v4880 = vadd.f32 %v4832, %v4858
      %v4881 = vadd.f32 %v4833, %v4858
      %v4882 = vadd.f32 %v4834, %v4858
      %v4883 = vadd.f32 %v4835, %v4858
      %v4884 = vadd.f32 %v4836, %v4858
      %v4885 = vadd.f32 %v4837, %v4858
      %v4886 = vadd.f32 %v4838, %v4858
      %v4887 = vadd.f32 %v4839, %v4858
      %v4888 = vadd.f32 %v4840, %v4858
      %v4889 = vadd.f32 %v4841, %v4858
      %v4890 = vadd.f32 %v4842, %v4858
      %v4891 = vadd.f32 %v4843, %v4858
      %v4892 = vadd.f32 %v4844, %v4858
      %v4893 = vadd.f32 %v4845, %v4858
      %v4894 = vadd.f32 %v4846, %v4858
      %v4895 = vadd.f32 %v4847, %v4858
      %v4896 = vadd.f32 %v4848, %v4858
      %v4897 = vadd.f32 %v4849, %v4858
      %v4898 = vadd.f32 %v4850, %v4858
      %v4899 = vadd.f32 %v4851, %v4858
      %v4900 = vadd.f32 %v4852, %v4858
      %v4901 = vmax.f32 %v4860, 0.0
      %v4902 = vmax.f32 %v4861, 0.0
      %v4903 = vmax.f32 %v4862, 0.0
      %v4904 = vmax.f32 %v4863, 0.0
      %v4905 = vmax.f32 %v4864, 0.0
      %v4906 = vmax.f32 %v4865, 0.0
      %v4907 = vmax.f32 %v4866, 0.0
      %v4908 = vmax.f32 %v4867, 0.0
      %v4909 = vmax.f32 %v4868, 0.0
      %v4910 = vmax.f32 %v4869, 0.0
      %v4911 = vmax.f32 %v4870, 0.0
      %v4912 = vmax.f32 %v4871, 0.0
      %v4913 = vmax.f32 %v4872, 0.0
      %v4914 = vmax.f32 %v4873, 0.0
      %v4915 = vmax.f32 %v4874, 0.0
      %v4916 = vmax.f32 %v4875, 0.0
      %v4917 = vmax.f32 %v4876, 0.0
      %v4918 = vmax.f32 %v4877, 0.0
      %v4919 = vmax.f32 %v4878, 0.0
      %v4920 = vmax.f32 %v4879, 0.0
      %v4921 = vmax.f32 %v4880, 0.0
      %v4922 = vmax.f32 %v4881, 0.0
      %v4923 = vmax.f32 %v4882, 0.0
      %v4924 = vmax.f32 %v4883, 0.0
      %v4925 = vmax.f32 %v4884, 0.0
      %v4926 = vmax.f32 %v4885, 0.0
      %v4927 = vmax.f32 %v4886, 0.0
      %v4928 = vmax.f32 %v4887, 0.0
      %v4929 = vmax.f32 %v4888, 0.0
      %v4930 = vmax.f32 %v4889, 0.0
      %v4931 = vmax.f32 %v4890, 0.0
      %v4932 = vmax.f32 %v4891, 0.0
      %v4933 = vmax.f32 %v4892, 0.0
      %v4934 = vmax.f32 %v4893, 0.0
      %v4935 = vmax.f32 %v4894, 0.0
      %v4936 = vmax.f32 %v4895, 0.0
      %v4937 = vmax.f32 %v4896, 0.0
      %v4938 = vmax.f32 %v4897, 0.0
      %v4939 = vmax.f32 %v4898, 0.0
      %v4940 = vmax.f32 %v4899, 0.0
      %v4941 = vmax.f32 %v4900, 0.0
      %4942 = vst.msk [vmem:[#allocation4] sm:$0xff] %vm835, 0.0
      %4943 = vst.msk [vmem:[#allocation4 + $0x8] sm:$0xff] %vm835, 0.0
      %4944 = vst.msk [vmem:[#allocation4 + $0x10] sm:$0xff] %vm835, 0.0
      %4945 = vst.msk [vmem:[#allocation4 + $0x160] sm:$0xff] %vm835, 0.0
      %4946 = vst.msk [vmem:[#allocation4 + $0x168] sm:$0xff] %vm835, 0.0
      %4947 = vst.msk [vmem:[#allocation4 + $0x170] sm:$0xff] %vm835, 0.0
      %v4948 = vmul.f32 %v4901, %v845
      %v4949 = vmul.f32 %v4902, %v850
      %v4950 = vmul.f32 %v4903, %v855
      %v4951 = vmul.f32 %v4904, %v860
      %v4952 = vmul.f32 %v4905, %v865
      %v4953 = vmul.f32 %v4906, %v870
      %v4954 = vmul.f32 %v4907, %v875
      %v4955 = vmul.f32 %v4908, %v880
      %v4956 = vmul.f32 %v4909, %v885
      %v4957 = vmul.f32 %v4910, %v890
      %v4958 = vmul.f32 %v4911, %v895
      %v4959 = vmul.f32 %v4912, %v900
      %v4960 = vmul.f32 %v4913, %v905
      %v4961 = vmul.f32 %v4914, %v910
      %v4962 = vmul.f32 %v4915, %v915
      %v4963 = vmul.f32 %v4916, %v920
      %v4964 = vmul.f32 %v4917, %v925
      %v4965 = vmul.f32 %v4918, %v930
      %v4966 = vmul.f32 %v4919, %v935
      %v4967 = vmul.f32 %v4920, %v940
      %v4968 = vmul.f32 %v4921, %v945
      %v4969 = vmul.f32 %v4922, %v950
      %v4970 = vmul.f32 %v4923, %v955
      %v4971 = vmul.f32 %v4924, %v960
      %v4972 = vmul.f32 %v4925, %v965
      %v4973 = vmul.f32 %v4926, %v970
      %v4974 = vmul.f32 %v4927, %v975
      %v4975 = vmul.f32 %v4928, %v980
      %v4976 = vmul.f32 %v4929, %v985
      %v4977 = vmul.f32 %v4930, %v990
      %v4978 = vmul.f32 %v4931, %v995
      %v4979 = vmul.f32 %v4932, %v1000
      %v4980 = vmul.f32 %v4933, %v1005
      %v4981 = vmul.f32 %v4934, %v1010
      %v4982 = vmul.f32 %v4935, %v1015
      %v4983 = vmul.f32 %v4936, %v1020
      %v4984 = vmul.f32 %v4937, %v1025
      %v4985 = vmul.f32 %v4938, %v1030
      %v4986 = vmul.f32 %v4939, %v1035
      %v4987 = vmul.f32 %v4940, %v1040
      %v4988 = vmul.f32 %v4941, %v1045
      %4989 = vst.msk [vmem:[#allocation4 + $0x18] sm:$0xff] %vm835, %v4948
      %4990 = vst.msk [vmem:[#allocation4 + $0x20] sm:$0xff] %vm835, %v4949
      %4991 = vst.msk [vmem:[#allocation4 + $0x28] sm:$0xff] %vm835, %v4950
      %4992 = vst.msk [vmem:[#allocation4 + $0x30] sm:$0xff] %vm835, %v4951
      %4993 = vst.msk [vmem:[#allocation4 + $0x38] sm:$0xff] %vm835, %v4952
      %4994 = vst.msk [vmem:[#allocation4 + $0x40] sm:$0xff] %vm835, %v4953
      %4995 = vst.msk [vmem:[#allocation4 + $0x48] sm:$0xff] %vm835, %v4954
      %4996 = vst.msk [vmem:[#allocation4 + $0x50] sm:$0xff] %vm835, %v4955
      %4997 = vst.msk [vmem:[#allocation4 + $0x58] sm:$0xff] %vm835, %v4956
      %4998 = vst.msk [vmem:[#allocation4 + $0x60] sm:$0xff] %vm835, %v4957
      %4999 = vst.msk [vmem:[#allocation4 + $0x68] sm:$0xff] %vm835, %v4958
      %5000 = vst.msk [vmem:[#allocation4 + $0x70] sm:$0xff] %vm835, %v4959
      %5001 = vst.msk [vmem:[#allocation4 + $0x78] sm:$0xff] %vm835, %v4960
      %5002 = vst.msk [vmem:[#allocation4 + $0x80] sm:$0xff] %vm835, %v4961
      %5003 = vst.msk [vmem:[#allocation4 + $0x88] sm:$0xff] %vm835, %v4962
      %5004 = vst.msk [vmem:[#allocation4 + $0x90] sm:$0xff] %vm835, %v4963
      %5005 = vst.msk [vmem:[#allocation4 + $0x98] sm:$0xff] %vm835, %v4964
      %5006 = vst.msk [vmem:[#allocation4 + $0xa0] sm:$0xff] %vm835, %v4965
      %5007 = vst.msk [vmem:[#allocation4 + $0xa8] sm:$0xff] %vm835, %v4966
      %5008 = vst.msk [vmem:[#allocation4 + $0xb0] sm:$0xff] %vm835, %v4967
      %5009 = vst.msk [vmem:[#allocation4 + $0xb8] sm:$0xff] %vm835, %v4968
      %5010 = vst.msk [vmem:[#allocation4 + $0xc0] sm:$0xff] %vm835, %v4969
      %5011 = vst.msk [vmem:[#allocation4 + $0xc8] sm:$0xff] %vm835, %v4970
      %5012 = vst.msk [vmem:[#allocation4 + $0xd0] sm:$0xff] %vm835, %v4971
      %5013 = vst.msk [vmem:[#allocation4 + $0xd8] sm:$0xff] %vm835, %v4972
      %5014 = vst.msk [vmem:[#allocation4 + $0xe0] sm:$0xff] %vm835, %v4973
      %5015 = vst.msk [vmem:[#allocation4 + $0xe8] sm:$0xff] %vm835, %v4974
      %5016 = vst.msk [vmem:[#allocation4 + $0xf0] sm:$0xff] %vm835, %v4975
      %5017 = vst.msk [vmem:[#allocation4 + $0xf8] sm:$0xff] %vm835, %v4976
      %5018 = vst.msk [vmem:[#allocation4 + $0x100] sm:$0xff] %vm835, %v4977
      %5019 = vst.msk [vmem:[#allocation4 + $0x108] sm:$0xff] %vm835, %v4978
      %5020 = vst.msk [vmem:[#allocation4 + $0x110] sm:$0xff] %vm835, %v4979
      %5021 = vst.msk [vmem:[#allocation4 + $0x118] sm:$0xff] %vm835, %v4980
      %5022 = vst.msk [vmem:[#allocation4 + $0x120] sm:$0xff] %vm835, %v4981
      %5023 = vst.msk [vmem:[#allocation4 + $0x128] sm:$0xff] %vm835, %v4982
      %5024 = vst.msk [vmem:[#allocation4 + $0x130] sm:$0xff] %vm835, %v4983
      %5025 = vst.msk [vmem:[#allocation4 + $0x138] sm:$0xff] %vm835, %v4984
      %5026 = vst.msk [vmem:[#allocation4 + $0x140] sm:$0xff] %vm835, %v4985
      %5027 = vst.msk [vmem:[#allocation4 + $0x148] sm:$0xff] %vm835, %v4986
      %5028 = vst.msk [vmem:[#allocation4 + $0x150] sm:$0xff] %vm835, %v4987
      %5029 = vst.msk [vmem:[#allocation4 + $0x158] sm:$0xff] %vm835, %v4988
      %v5030 = vld [vmem:[%s5] sm:$0x3]
      %v5031 = vld [vmem:[%s408 + $0x5] sm:$0xff]
      %v5032 = vld [vmem:[%s408 + $0xd] sm:$0xff]
      %v5033 = vld [vmem:[%s408 + $0x15] sm:$0xff]
      %v5034 = vld [vmem:[%s408 + $0x1d] sm:$0xff]
      %v5035 = vld [vmem:[%s408 + $0x25] sm:$0xff]
      %v5036 = vld [vmem:[%s408 + $0x2d] sm:$0xff]
      %v5037 = vld [vmem:[%s408 + $0x35] sm:$0xff]
      %v5038 = vld [vmem:[%s408 + $0x3d] sm:$0xff]
      %v5039 = vld [vmem:[%s408 + $0x45] sm:$0xff]
      %v5040 = vld [vmem:[%s408 + $0x4d] sm:$0xff]
      %v5041 = vld [vmem:[%s408 + $0x55] sm:$0xff]
      %v5042 = vld [vmem:[%s408 + $0x5d] sm:$0xff]
      %v5043 = vld [vmem:[%s408 + $0x65] sm:$0xff]
      %v5044 = vld [vmem:[%s408 + $0x6d] sm:$0xff]
      %v5045 = vld [vmem:[%s408 + $0x75] sm:$0xff]
      %v5046 = vld [vmem:[%s408 + $0x7d] sm:$0xff]
      %v5047 = vld [vmem:[%s408 + $0x85] sm:$0xff]
      %v5048 = vld [vmem:[%s408 + $0x8d] sm:$0xff]
      %v5049 = vld [vmem:[%s408 + $0x95] sm:$0xff]
      %v5050 = vld [vmem:[%s408 + $0x9d] sm:$0xff]
      %v5051 = vld [vmem:[%s408 + $0xa5] sm:$0xff]
      %v5052 = vld [vmem:[%s408 + $0xad] sm:$0xff]
      %v5053 = vld [vmem:[%s408 + $0xb5] sm:$0xff]
      %v5054 = vld [vmem:[%s408 + $0xbd] sm:$0xff]
      %v5055 = vld [vmem:[%s408 + $0xc5] sm:$0xff]
      %v5056 = vld [vmem:[%s408 + $0xcd] sm:$0xff]
      %v5057 = vld [vmem:[%s408 + $0xd5] sm:$0xff]
      %v5058 = vld [vmem:[%s408 + $0xdd] sm:$0xff]
      %v5059 = vld [vmem:[%s408 + $0xe5] sm:$0xff]
      %v5060 = vld [vmem:[%s408 + $0xed] sm:$0xff]
      %v5061 = vld [vmem:[%s408 + $0xf5] sm:$0xff]
      %v5062 = vld [vmem:[%s408 + $0xfd] sm:$0xff]
      %v5063 = vld [vmem:[%s408 + $0x105] sm:$0xff]
      %v5064 = vld [vmem:[%s408 + $0x10d] sm:$0xff]
      %v5065 = vld [vmem:[%s408 + $0x115] sm:$0xff]
      %v5066 = vld [vmem:[%s408 + $0x11d] sm:$0xff]
      %v5067 = vld [vmem:[%s408 + $0x125] sm:$0xff]
      %v5068 = vld [vmem:[%s408 + $0x12d] sm:$0xff]
      %v5069 = vld [vmem:[%s408 + $0x135] sm:$0xff]
      %v5070 = vld [vmem:[%s408 + $0x13d] sm:$0xff]
      %v5071 = vld [vmem:[%s408 + $0x145] sm:$0xff]
      %v5072 = vld [vmem:[%s408 + $0x6] sm:$0xff]
      %v5073 = vld [vmem:[%s408 + $0xe] sm:$0xff]
      %v5074 = vld [vmem:[%s408 + $0x16] sm:$0xff]
      %v5075 = vld [vmem:[%s408 + $0x1e] sm:$0xff]
      %v5076 = vld [vmem:[%s408 + $0x26] sm:$0xff]
      %v5077 = vld [vmem:[%s408 + $0x2e] sm:$0xff]
      %v5078 = vld [vmem:[%s408 + $0x36] sm:$0xff]
      %v5079 = vld [vmem:[%s408 + $0x3e] sm:$0xff]
      %v5080 = vld [vmem:[%s408 + $0x46] sm:$0xff]
      %v5081 = vld [vmem:[%s408 + $0x4e] sm:$0xff]
      %v5082 = vld [vmem:[%s408 + $0x56] sm:$0xff]
      %v5083 = vld [vmem:[%s408 + $0x5e] sm:$0xff]
      %v5084 = vld [vmem:[%s408 + $0x66] sm:$0xff]
      %v5085 = vld [vmem:[%s408 + $0x6e] sm:$0xff]
      %v5086 = vld [vmem:[%s408 + $0x76] sm:$0xff]
      %v5087 = vld [vmem:[%s408 + $0x7e] sm:$0xff]
      %v5088 = vld [vmem:[%s408 + $0x86] sm:$0xff]
      %v5089 = vld [vmem:[%s408 + $0x8e] sm:$0xff]
      %v5090 = vld [vmem:[%s408 + $0x96] sm:$0xff]
      %v5091 = vld [vmem:[%s408 + $0x9e] sm:$0xff]
      %v5092 = vld [vmem:[%s408 + $0xa6] sm:$0xff]
      %v5093 = vld [vmem:[%s408 + $0xae] sm:$0xff]
      %v5094 = vld [vmem:[%s408 + $0xb6] sm:$0xff]
      %v5095 = vld [vmem:[%s408 + $0xbe] sm:$0xff]
      %v5096 = vld [vmem:[%s408 + $0xc6] sm:$0xff]
      %v5097 = vld [vmem:[%s408 + $0xce] sm:$0xff]
      %v5098 = vld [vmem:[%s408 + $0xd6] sm:$0xff]
      %v5099 = vld [vmem:[%s408 + $0xde] sm:$0xff]
      %v5100 = vld [vmem:[%s408 + $0xe6] sm:$0xff]
      %v5101 = vld [vmem:[%s408 + $0xee] sm:$0xff]
      %v5102 = vld [vmem:[%s408 + $0xf6] sm:$0xff]
      %v5103 = vld [vmem:[%s408 + $0xfe] sm:$0xff]
      %v5104 = vld [vmem:[%s408 + $0x106] sm:$0xff]
      %v5105 = vld [vmem:[%s408 + $0x10e] sm:$0xff]
      %v5106 = vld [vmem:[%s408 + $0x116] sm:$0xff]
      %v5107 = vld [vmem:[%s408 + $0x11e] sm:$0xff]
      %v5108 = vld [vmem:[%s408 + $0x126] sm:$0xff]
      %v5109 = vld [vmem:[%s408 + $0x12e] sm:$0xff]
      %v5110 = vld [vmem:[%s408 + $0x136] sm:$0xff]
      %v5111 = vld [vmem:[%s408 + $0x13e] sm:$0xff]
      %v5112 = vld [vmem:[%s408 + $0x146] sm:$0xff]
      %v5113 = vadd.f32 %v5031, %v5072
      %v5114 = vadd.f32 %v5032, %v5073
      %v5115 = vadd.f32 %v5033, %v5074
      %v5116 = vadd.f32 %v5034, %v5075
      %v5117 = vadd.f32 %v5035, %v5076
      %v5118 = vadd.f32 %v5036, %v5077
      %v5119 = vadd.f32 %v5037, %v5078
      %v5120 = vadd.f32 %v5038, %v5079
      %v5121 = vadd.f32 %v5039, %v5080
      %v5122 = vadd.f32 %v5040, %v5081
      %v5123 = vadd.f32 %v5041, %v5082
      %v5124 = vadd.f32 %v5042, %v5083
      %v5125 = vadd.f32 %v5043, %v5084
      %v5126 = vadd.f32 %v5044, %v5085
      %v5127 = vadd.f32 %v5045, %v5086
      %v5128 = vadd.f32 %v5046, %v5087
      %v5129 = vadd.f32 %v5047, %v5088
      %v5130 = vadd.f32 %v5048, %v5089
      %v5131 = vadd.f32 %v5049, %v5090
      %v5132 = vadd.f32 %v5050, %v5091
      %v5133 = vadd.f32 %v5051, %v5092
      %v5134 = vadd.f32 %v5052, %v5093
      %v5135 = vadd.f32 %v5053, %v5094
      %v5136 = vadd.f32 %v5054, %v5095
      %v5137 = vadd.f32 %v5055, %v5096
      %v5138 = vadd.f32 %v5056, %v5097
      %v5139 = vadd.f32 %v5057, %v5098
      %v5140 = vadd.f32 %v5058, %v5099
      %v5141 = vadd.f32 %v5059, %v5100
      %v5142 = vadd.f32 %v5060, %v5101
      %v5143 = vadd.f32 %v5061, %v5102
      %v5144 = vadd.f32 %v5062, %v5103
      %v5145 = vadd.f32 %v5063, %v5104
      %v5146 = vadd.f32 %v5064, %v5105
      %v5147 = vadd.f32 %v5065, %v5106
      %v5148 = vadd.f32 %v5066, %v5107
      %v5149 = vadd.f32 %v5067, %v5108
      %v5150 = vadd.f32 %v5068, %v5109
      %v5151 = vadd.f32 %v5069, %v5110
      %v5152 = vadd.f32 %v5070, %v5111
      %v5153 = vadd.f32 %v5071, %v5112
      %v5154 = vld [vmem:[%s408 + $0x7] sm:$0xff]
      %v5155 = vld [vmem:[%s408 + $0xf] sm:$0xff]
      %v5156 = vld [vmem:[%s408 + $0x17] sm:$0xff]
      %v5157 = vld [vmem:[%s408 + $0x1f] sm:$0xff]
      %v5158 = vld [vmem:[%s408 + $0x27] sm:$0xff]
      %v5159 = vld [vmem:[%s408 + $0x2f] sm:$0xff]
      %v5160 = vld [vmem:[%s408 + $0x37] sm:$0xff]
      %v5161 = vld [vmem:[%s408 + $0x3f] sm:$0xff]
      %v5162 = vld [vmem:[%s408 + $0x47] sm:$0xff]
      %v5163 = vld [vmem:[%s408 + $0x4f] sm:$0xff]
      %v5164 = vld [vmem:[%s408 + $0x57] sm:$0xff]
      %v5165 = vld [vmem:[%s408 + $0x5f] sm:$0xff]
      %v5166 = vld [vmem:[%s408 + $0x67] sm:$0xff]
      %v5167 = vld [vmem:[%s408 + $0x6f] sm:$0xff]
      %v5168 = vld [vmem:[%s408 + $0x77] sm:$0xff]
      %v5169 = vld [vmem:[%s408 + $0x7f] sm:$0xff]
      %v5170 = vld [vmem:[%s408 + $0x87] sm:$0xff]
      %v5171 = vld [vmem:[%s408 + $0x8f] sm:$0xff]
      %v5172 = vld [vmem:[%s408 + $0x97] sm:$0xff]
      %v5173 = vld [vmem:[%s408 + $0x9f] sm:$0xff]
      %v5174 = vld [vmem:[%s408 + $0xa7] sm:$0xff]
      %v5175 = vld [vmem:[%s408 + $0xaf] sm:$0xff]
      %v5176 = vld [vmem:[%s408 + $0xb7] sm:$0xff]
      %v5177 = vld [vmem:[%s408 + $0xbf] sm:$0xff]
      %v5178 = vld [vmem:[%s408 + $0xc7] sm:$0xff]
      %v5179 = vld [vmem:[%s408 + $0xcf] sm:$0xff]
      %v5180 = vld [vmem:[%s408 + $0xd7] sm:$0xff]
      %v5181 = vld [vmem:[%s408 + $0xdf] sm:$0xff]
      %v5182 = vld [vmem:[%s408 + $0xe7] sm:$0xff]
      %v5183 = vld [vmem:[%s408 + $0xef] sm:$0xff]
      %v5184 = vld [vmem:[%s408 + $0xf7] sm:$0xff]
      %v5185 = vld [vmem:[%s408 + $0xff] sm:$0xff]
      %v5186 = vld [vmem:[%s408 + $0x107] sm:$0xff]
      %v5187 = vld [vmem:[%s408 + $0x10f] sm:$0xff]
      %v5188 = vld [vmem:[%s408 + $0x117] sm:$0xff]
      %v5189 = vld [vmem:[%s408 + $0x11f] sm:$0xff]
      %v5190 = vld [vmem:[%s408 + $0x127] sm:$0xff]
      %v5191 = vld [vmem:[%s408 + $0x12f] sm:$0xff]
      %v5192 = vld [vmem:[%s408 + $0x137] sm:$0xff]
      %v5193 = vld [vmem:[%s408 + $0x13f] sm:$0xff]
      %v5194 = vld [vmem:[%s408 + $0x147] sm:$0xff]
      %v5195 = vadd.f32 %v5113, %v5154
      %v5196 = vadd.f32 %v5114, %v5155
      %v5197 = vadd.f32 %v5115, %v5156
      %v5198 = vadd.f32 %v5116, %v5157
      %v5199 = vadd.f32 %v5117, %v5158
      %v5200 = vadd.f32 %v5118, %v5159
      %v5201 = vadd.f32 %v5119, %v5160
      %v5202 = vadd.f32 %v5120, %v5161
      %v5203 = vadd.f32 %v5121, %v5162
      %v5204 = vadd.f32 %v5122, %v5163
      %v5205 = vadd.f32 %v5123, %v5164
      %v5206 = vadd.f32 %v5124, %v5165
      %v5207 = vadd.f32 %v5125, %v5166
      %v5208 = vadd.f32 %v5126, %v5167
      %v5209 = vadd.f32 %v5127, %v5168
      %v5210 = vadd.f32 %v5128, %v5169
      %v5211 = vadd.f32 %v5129, %v5170
      %v5212 = vadd.f32 %v5130, %v5171
      %v5213 = vadd.f32 %v5131, %v5172
      %v5214 = vadd.f32 %v5132, %v5173
      %v5215 = vadd.f32 %v5133, %v5174
      %v5216 = vadd.f32 %v5134, %v5175
      %v5217 = vadd.f32 %v5135, %v5176
      %v5218 = vadd.f32 %v5136, %v5177
      %v5219 = vadd.f32 %v5137, %v5178
      %v5220 = vadd.f32 %v5138, %v5179
      %v5221 = vadd.f32 %v5139, %v5180
      %v5222 = vadd.f32 %v5140, %v5181
      %v5223 = vadd.f32 %v5141, %v5182
      %v5224 = vadd.f32 %v5142, %v5183
      %v5225 = vadd.f32 %v5143, %v5184
      %v5226 = vadd.f32 %v5144, %v5185
      %v5227 = vadd.f32 %v5145, %v5186
      %v5228 = vadd.f32 %v5146, %v5187
      %v5229 = vadd.f32 %v5147, %v5188
      %v5230 = vadd.f32 %v5148, %v5189
      %v5231 = vadd.f32 %v5149, %v5190
      %v5232 = vadd.f32 %v5150, %v5191
      %v5233 = vadd.f32 %v5151, %v5192
      %v5234 = vadd.f32 %v5152, %v5193
      %v5235 = vadd.f32 %v5153, %v5194
      %v5236 = vld [vmem:[%s408 + $0x14f] sm:$0xff]
      %v5237 = vld [vmem:[%s408 + $0x157] sm:$0xff]
      %v5238 = vadd.f32 %v5195, %v5156
      %v5239 = vadd.f32 %v5196, %v5157
      %v5240 = vadd.f32 %v5197, %v5158
      %v5241 = vadd.f32 %v5198, %v5159
      %v5242 = vadd.f32 %v5199, %v5160
      %v5243 = vadd.f32 %v5200, %v5161
      %v5244 = vadd.f32 %v5201, %v5162
      %v5245 = vadd.f32 %v5202, %v5163
      %v5246 = vadd.f32 %v5203, %v5164
      %v5247 = vadd.f32 %v5204, %v5165
      %v5248 = vadd.f32 %v5205, %v5166
      %v5249 = vadd.f32 %v5206, %v5167
      %v5250 = vadd.f32 %v5207, %v5168
      %v5251 = vadd.f32 %v5208, %v5169
      %v5252 = vadd.f32 %v5209, %v5170
      %v5253 = vadd.f32 %v5210, %v5171
      %v5254 = vadd.f32 %v5211, %v5172
      %v5255 = vadd.f32 %v5212, %v5173
      %v5256 = vadd.f32 %v5213, %v5174
      %v5257 = vadd.f32 %v5214, %v5175
      %v5258 = vadd.f32 %v5215, %v5176
      %v5259 = vadd.f32 %v5216, %v5177
      %v5260 = vadd.f32 %v5217, %v5178
      %v5261 = vadd.f32 %v5218, %v5179
      %v5262 = vadd.f32 %v5219, %v5180
      %v5263 = vadd.f32 %v5220, %v5181
      %v5264 = vadd.f32 %v5221, %v5182
      %v5265 = vadd.f32 %v5222, %v5183
      %v5266 = vadd.f32 %v5223, %v5184
      %v5267 = vadd.f32 %v5224, %v5185
      %v5268 = vadd.f32 %v5225, %v5186
      %v5269 = vadd.f32 %v5226, %v5187
      %v5270 = vadd.f32 %v5227, %v5188
      %v5271 = vadd.f32 %v5228, %v5189
      %v5272 = vadd.f32 %v5229, %v5190
      %v5273 = vadd.f32 %v5230, %v5191
      %v5274 = vadd.f32 %v5231, %v5192
      %v5275 = vadd.f32 %v5232, %v5193
      %v5276 = vadd.f32 %v5233, %v5194
      %v5277 = vadd.f32 %v5234, %v5236
      %v5278 = vadd.f32 %v5235, %v5237
      %v5279 = vld [vmem:[%s408 + $0x18] sm:$0xff]
      %v5280 = vld [vmem:[%s408 + $0x20] sm:$0xff]
      %v5281 = vld [vmem:[%s408 + $0x28] sm:$0xff]
      %v5282 = vld [vmem:[%s408 + $0x30] sm:$0xff]
      %v5283 = vld [vmem:[%s408 + $0x38] sm:$0xff]
      %v5284 = vld [vmem:[%s408 + $0x40] sm:$0xff]
      %v5285 = vld [vmem:[%s408 + $0x48] sm:$0xff]
      %v5286 = vld [vmem:[%s408 + $0x50] sm:$0xff]
      %v5287 = vld [vmem:[%s408 + $0x58] sm:$0xff]
      %v5288 = vld [vmem:[%s408 + $0x60] sm:$0xff]
      %v5289 = vld [vmem:[%s408 + $0x68] sm:$0xff]
      %v5290 = vld [vmem:[%s408 + $0x70] sm:$0xff]
      %v5291 = vld [vmem:[%s408 + $0x78] sm:$0xff]
      %v5292 = vld [vmem:[%s408 + $0x80] sm:$0xff]
      %v5293 = vld [vmem:[%s408 + $0x88] sm:$0xff]
      %v5294 = vld [vmem:[%s408 + $0x90] sm:$0xff]
      %v5295 = vld [vmem:[%s408 + $0x98] sm:$0xff]
      %v5296 = vld [vmem:[%s408 + $0xa0] sm:$0xff]
      %v5297 = vld [vmem:[%s408 + $0xa8] sm:$0xff]
      %v5298 = vld [vmem:[%s408 + $0xb0] sm:$0xff]
      %v5299 = vld [vmem:[%s408 + $0xb8] sm:$0xff]
      %v5300 = vld [vmem:[%s408 + $0xc0] sm:$0xff]
      %v5301 = vld [vmem:[%s408 + $0xc8] sm:$0xff]
      %v5302 = vld [vmem:[%s408 + $0xd0] sm:$0xff]
      %v5303 = vld [vmem:[%s408 + $0xd8] sm:$0xff]
      %v5304 = vld [vmem:[%s408 + $0xe0] sm:$0xff]
      %v5305 = vld [vmem:[%s408 + $0xe8] sm:$0xff]
      %v5306 = vld [vmem:[%s408 + $0xf0] sm:$0xff]
      %v5307 = vld [vmem:[%s408 + $0xf8] sm:$0xff]
      %v5308 = vld [vmem:[%s408 + $0x100] sm:$0xff]
      %v5309 = vld [vmem:[%s408 + $0x108] sm:$0xff]
      %v5310 = vld [vmem:[%s408 + $0x110] sm:$0xff]
      %v5311 = vld [vmem:[%s408 + $0x118] sm:$0xff]
      %v5312 = vld [vmem:[%s408 + $0x120] sm:$0xff]
      %v5313 = vld [vmem:[%s408 + $0x128] sm:$0xff]
      %v5314 = vld [vmem:[%s408 + $0x130] sm:$0xff]
      %v5315 = vld [vmem:[%s408 + $0x138] sm:$0xff]
      %v5316 = vld [vmem:[%s408 + $0x140] sm:$0xff]
      %v5317 = vld [vmem:[%s408 + $0x148] sm:$0xff]
      %v5318 = vld [vmem:[%s408 + $0x150] sm:$0xff]
      %v5319 = vld [vmem:[%s408 + $0x158] sm:$0xff]
      %v5320 = vadd.f32 %v5238, %v5279
      %v5321 = vadd.f32 %v5239, %v5280
      %v5322 = vadd.f32 %v5240, %v5281
      %v5323 = vadd.f32 %v5241, %v5282
      %v5324 = vadd.f32 %v5242, %v5283
      %v5325 = vadd.f32 %v5243, %v5284
      %v5326 = vadd.f32 %v5244, %v5285
      %v5327 = vadd.f32 %v5245, %v5286
      %v5328 = vadd.f32 %v5246, %v5287
      %v5329 = vadd.f32 %v5247, %v5288
      %v5330 = vadd.f32 %v5248, %v5289
      %v5331 = vadd.f32 %v5249, %v5290
      %v5332 = vadd.f32 %v5250, %v5291
      %v5333 = vadd.f32 %v5251, %v5292
      %v5334 = vadd.f32 %v5252, %v5293
      %v5335 = vadd.f32 %v5253, %v5294
      %v5336 = vadd.f32 %v5254, %v5295
      %v5337 = vadd.f32 %v5255, %v5296
      %v5338 = vadd.f32 %v5256, %v5297
      %v5339 = vadd.f32 %v5257, %v5298
      %v5340 = vadd.f32 %v5258, %v5299
      %v5341 = vadd.f32 %v5259, %v5300
      %v5342 = vadd.f32 %v5260, %v5301
      %v5343 = vadd.f32 %v5261, %v5302
      %v5344 = vadd.f32 %v5262, %v5303
      %v5345 = vadd.f32 %v5263, %v5304
      %v5346 = vadd.f32 %v5264, %v5305
      %v5347 = vadd.f32 %v5265, %v5306
      %v5348 = vadd.f32 %v5266, %v5307
      %v5349 = vadd.f32 %v5267, %v5308
      %v5350 = vadd.f32 %v5268, %v5309
      %v5351 = vadd.f32 %v5269, %v5310
      %v5352 = vadd.f32 %v5270, %v5311
      %v5353 = vadd.f32 %v5271, %v5312
      %v5354 = vadd.f32 %v5272, %v5313
      %v5355 = vadd.f32 %v5273, %v5314
      %v5356 = vadd.f32 %v5274, %v5315
      %v5357 = vadd.f32 %v5275, %v5316
      %v5358 = vadd.f32 %v5276, %v5317
      %v5359 = vadd.f32 %v5277, %v5318
      %v5360 = vadd.f32 %v5278, %v5319
      %v5361 = vld [vmem:[%s408 + $0x19] sm:$0xff]
      %v5362 = vld [vmem:[%s408 + $0x21] sm:$0xff]
      %v5363 = vld [vmem:[%s408 + $0x29] sm:$0xff]
      %v5364 = vld [vmem:[%s408 + $0x31] sm:$0xff]
      %v5365 = vld [vmem:[%s408 + $0x39] sm:$0xff]
      %v5366 = vld [vmem:[%s408 + $0x41] sm:$0xff]
      %v5367 = vld [vmem:[%s408 + $0x49] sm:$0xff]
      %v5368 = vld [vmem:[%s408 + $0x51] sm:$0xff]
      %v5369 = vld [vmem:[%s408 + $0x59] sm:$0xff]
      %v5370 = vld [vmem:[%s408 + $0x61] sm:$0xff]
      %v5371 = vld [vmem:[%s408 + $0x69] sm:$0xff]
      %v5372 = vld [vmem:[%s408 + $0x71] sm:$0xff]
      %v5373 = vld [vmem:[%s408 + $0x79] sm:$0xff]
      %v5374 = vld [vmem:[%s408 + $0x81] sm:$0xff]
      %v5375 = vld [vmem:[%s408 + $0x89] sm:$0xff]
      %v5376 = vld [vmem:[%s408 + $0x91] sm:$0xff]
      %v5377 = vld [vmem:[%s408 + $0x99] sm:$0xff]
      %v5378 = vld [vmem:[%s408 + $0xa1] sm:$0xff]
      %v5379 = vld [vmem:[%s408 + $0xa9] sm:$0xff]
      %v5380 = vld [vmem:[%s408 + $0xb1] sm:$0xff]
      %v5381 = vld [vmem:[%s408 + $0xb9] sm:$0xff]
      %v5382 = vld [vmem:[%s408 + $0xc1] sm:$0xff]
      %v5383 = vld [vmem:[%s408 + $0xc9] sm:$0xff]
      %v5384 = vld [vmem:[%s408 + $0xd1] sm:$0xff]
      %v5385 = vld [vmem:[%s408 + $0xd9] sm:$0xff]
      %v5386 = vld [vmem:[%s408 + $0xe1] sm:$0xff]
      %v5387 = vld [vmem:[%s408 + $0xe9] sm:$0xff]
      %v5388 = vld [vmem:[%s408 + $0xf1] sm:$0xff]
      %v5389 = vld [vmem:[%s408 + $0xf9] sm:$0xff]
      %v5390 = vld [vmem:[%s408 + $0x101] sm:$0xff]
      %v5391 = vld [vmem:[%s408 + $0x109] sm:$0xff]
      %v5392 = vld [vmem:[%s408 + $0x111] sm:$0xff]
      %v5393 = vld [vmem:[%s408 + $0x119] sm:$0xff]
      %v5394 = vld [vmem:[%s408 + $0x121] sm:$0xff]
      %v5395 = vld [vmem:[%s408 + $0x129] sm:$0xff]
      %v5396 = vld [vmem:[%s408 + $0x131] sm:$0xff]
      %v5397 = vld [vmem:[%s408 + $0x139] sm:$0xff]
      %v5398 = vld [vmem:[%s408 + $0x141] sm:$0xff]
      %v5399 = vld [vmem:[%s408 + $0x149] sm:$0xff]
      %v5400 = vld [vmem:[%s408 + $0x151] sm:$0xff]
      %v5401 = vld [vmem:[%s408 + $0x159] sm:$0xff]
      %v5402 = vadd.f32 %v5320, %v5361
      %v5403 = vadd.f32 %v5321, %v5362
      %v5404 = vadd.f32 %v5322, %v5363
      %v5405 = vadd.f32 %v5323, %v5364
      %v5406 = vadd.f32 %v5324, %v5365
      %v5407 = vadd.f32 %v5325, %v5366
      %v5408 = vadd.f32 %v5326, %v5367
      %v5409 = vadd.f32 %v5327, %v5368
      %v5410 = vadd.f32 %v5328, %v5369
      %v5411 = vadd.f32 %v5329, %v5370
      %v5412 = vadd.f32 %v5330, %v5371
      %v5413 = vadd.f32 %v5331, %v5372
      %v5414 = vadd.f32 %v5332, %v5373
      %v5415 = vadd.f32 %v5333, %v5374
      %v5416 = vadd.f32 %v5334, %v5375
      %v5417 = vadd.f32 %v5335, %v5376
      %v5418 = vadd.f32 %v5336, %v5377
      %v5419 = vadd.f32 %v5337, %v5378
      %v5420 = vadd.f32 %v5338, %v5379
      %v5421 = vadd.f32 %v5339, %v5380
      %v5422 = vadd.f32 %v5340, %v5381
      %v5423 = vadd.f32 %v5341, %v5382
      %v5424 = vadd.f32 %v5342, %v5383
      %v5425 = vadd.f32 %v5343, %v5384
      %v5426 = vadd.f32 %v5344, %v5385
      %v5427 = vadd.f32 %v5345, %v5386
      %v5428 = vadd.f32 %v5346, %v5387
      %v5429 = vadd.f32 %v5347, %v5388
      %v5430 = vadd.f32 %v5348, %v5389
      %v5431 = vadd.f32 %v5349, %v5390
      %v5432 = vadd.f32 %v5350, %v5391
      %v5433 = vadd.f32 %v5351, %v5392
      %v5434 = vadd.f32 %v5352, %v5393
      %v5435 = vadd.f32 %v5353, %v5394
      %v5436 = vadd.f32 %v5354, %v5395
      %v5437 = vadd.f32 %v5355, %v5396
      %v5438 = vadd.f32 %v5356, %v5397
      %v5439 = vadd.f32 %v5357, %v5398
      %v5440 = vadd.f32 %v5358, %v5399
      %v5441 = vadd.f32 %v5359, %v5400
      %v5442 = vadd.f32 %v5360, %v5401
      %v5443 = vld [vmem:[%s408 + $0x161] sm:$0xff]
      %v5444 = vld [vmem:[%s408 + $0x169] sm:$0xff]
      %v5445 = vadd.f32 %v5402, %v5363
      %v5446 = vadd.f32 %v5403, %v5364
      %v5447 = vadd.f32 %v5404, %v5365
      %v5448 = vadd.f32 %v5405, %v5366
      %v5449 = vadd.f32 %v5406, %v5367
      %v5450 = vadd.f32 %v5407, %v5368
      %v5451 = vadd.f32 %v5408, %v5369
      %v5452 = vadd.f32 %v5409, %v5370
      %v5453 = vadd.f32 %v5410, %v5371
      %v5454 = vadd.f32 %v5411, %v5372
      %v5455 = vadd.f32 %v5412, %v5373
      %v5456 = vadd.f32 %v5413, %v5374
      %v5457 = vadd.f32 %v5414, %v5375
      %v5458 = vadd.f32 %v5415, %v5376
      %v5459 = vadd.f32 %v5416, %v5377
      %v5460 = vadd.f32 %v5417, %v5378
      %v5461 = vadd.f32 %v5418, %v5379
      %v5462 = vadd.f32 %v5419, %v5380
      %v5463 = vadd.f32 %v5420, %v5381
      %v5464 = vadd.f32 %v5421, %v5382
      %v5465 = vadd.f32 %v5422, %v5383
      %v5466 = vadd.f32 %v5423, %v5384
      %v5467 = vadd.f32 %v5424, %v5385
      %v5468 = vadd.f32 %v5425, %v5386
      %v5469 = vadd.f32 %v5426, %v5387
      %v5470 = vadd.f32 %v5427, %v5388
      %v5471 = vadd.f32 %v5428, %v5389
      %v5472 = vadd.f32 %v5429, %v5390
      %v5473 = vadd.f32 %v5430, %v5391
      %v5474 = vadd.f32 %v5431, %v5392
      %v5475 = vadd.f32 %v5432, %v5393
      %v5476 = vadd.f32 %v5433, %v5394
      %v5477 = vadd.f32 %v5434, %v5395
      %v5478 = vadd.f32 %v5435, %v5396
      %v5479 = vadd.f32 %v5436, %v5397
      %v5480 = vadd.f32 %v5437, %v5398
      %v5481 = vadd.f32 %v5438, %v5399
      %v5482 = vadd.f32 %v5439, %v5400
      %v5483 = vadd.f32 %v5440, %v5401
      %v5484 = vadd.f32 %v5441, %v5443
      %v5485 = vadd.f32 %v5442, %v5444
      %v5486 = vld [vmem:[%s408 + $0x2a] sm:$0xff]
      %v5487 = vld [vmem:[%s408 + $0x32] sm:$0xff]
      %v5488 = vld [vmem:[%s408 + $0x3a] sm:$0xff]
      %v5489 = vld [vmem:[%s408 + $0x42] sm:$0xff]
      %v5490 = vld [vmem:[%s408 + $0x4a] sm:$0xff]
      %v5491 = vld [vmem:[%s408 + $0x52] sm:$0xff]
      %v5492 = vld [vmem:[%s408 + $0x5a] sm:$0xff]
      %v5493 = vld [vmem:[%s408 + $0x62] sm:$0xff]
      %v5494 = vld [vmem:[%s408 + $0x6a] sm:$0xff]
      %v5495 = vld [vmem:[%s408 + $0x72] sm:$0xff]
      %v5496 = vld [vmem:[%s408 + $0x7a] sm:$0xff]
      %v5497 = vld [vmem:[%s408 + $0x82] sm:$0xff]
      %v5498 = vld [vmem:[%s408 + $0x8a] sm:$0xff]
      %v5499 = vld [vmem:[%s408 + $0x92] sm:$0xff]
      %v5500 = vld [vmem:[%s408 + $0x9a] sm:$0xff]
      %v5501 = vld [vmem:[%s408 + $0xa2] sm:$0xff]
      %v5502 = vld [vmem:[%s408 + $0xaa] sm:$0xff]
      %v5503 = vld [vmem:[%s408 + $0xb2] sm:$0xff]
      %v5504 = vld [vmem:[%s408 + $0xba] sm:$0xff]
      %v5505 = vld [vmem:[%s408 + $0xc2] sm:$0xff]
      %v5506 = vld [vmem:[%s408 + $0xca] sm:$0xff]
      %v5507 = vld [vmem:[%s408 + $0xd2] sm:$0xff]
      %v5508 = vld [vmem:[%s408 + $0xda] sm:$0xff]
      %v5509 = vld [vmem:[%s408 + $0xe2] sm:$0xff]
      %v5510 = vld [vmem:[%s408 + $0xea] sm:$0xff]
      %v5511 = vld [vmem:[%s408 + $0xf2] sm:$0xff]
      %v5512 = vld [vmem:[%s408 + $0xfa] sm:$0xff]
      %v5513 = vld [vmem:[%s408 + $0x102] sm:$0xff]
      %v5514 = vld [vmem:[%s408 + $0x10a] sm:$0xff]
      %v5515 = vld [vmem:[%s408 + $0x112] sm:$0xff]
      %v5516 = vld [vmem:[%s408 + $0x11a] sm:$0xff]
      %v5517 = vld [vmem:[%s408 + $0x122] sm:$0xff]
      %v5518 = vld [vmem:[%s408 + $0x12a] sm:$0xff]
      %v5519 = vld [vmem:[%s408 + $0x132] sm:$0xff]
      %v5520 = vld [vmem:[%s408 + $0x13a] sm:$0xff]
      %v5521 = vld [vmem:[%s408 + $0x142] sm:$0xff]
      %v5522 = vld [vmem:[%s408 + $0x14a] sm:$0xff]
      %v5523 = vld [vmem:[%s408 + $0x152] sm:$0xff]
      %v5524 = vld [vmem:[%s408 + $0x15a] sm:$0xff]
      %v5525 = vld [vmem:[%s408 + $0x162] sm:$0xff]
      %v5526 = vld [vmem:[%s408 + $0x16a] sm:$0xff]
      %v5527 = vadd.f32 %v5445, %v5486
      %v5528 = vadd.f32 %v5446, %v5487
      %v5529 = vadd.f32 %v5447, %v5488
      %v5530 = vadd.f32 %v5448, %v5489
      %v5531 = vadd.f32 %v5449, %v5490
      %v5532 = vadd.f32 %v5450, %v5491
      %v5533 = vadd.f32 %v5451, %v5492
      %v5534 = vadd.f32 %v5452, %v5493
      %v5535 = vadd.f32 %v5453, %v5494
      %v5536 = vadd.f32 %v5454, %v5495
      %v5537 = vadd.f32 %v5455, %v5496
      %v5538 = vadd.f32 %v5456, %v5497
      %v5539 = vadd.f32 %v5457, %v5498
      %v5540 = vadd.f32 %v5458, %v5499
      %v5541 = vadd.f32 %v5459, %v5500
      %v5542 = vadd.f32 %v5460, %v5501
      %v5543 = vadd.f32 %v5461, %v5502
      %v5544 = vadd.f32 %v5462, %v5503
      %v5545 = vadd.f32 %v5463, %v5504
      %v5546 = vadd.f32 %v5464, %v5505
      %v5547 = vadd.f32 %v5465, %v5506
      %v5548 = vadd.f32 %v5466, %v5507
      %v5549 = vadd.f32 %v5467, %v5508
      %v5550 = vadd.f32 %v5468, %v5509
      %v5551 = vadd.f32 %v5469, %v5510
      %v5552 = vadd.f32 %v5470, %v5511
      %v5553 = vadd.f32 %v5471, %v5512
      %v5554 = vadd.f32 %v5472, %v5513
      %v5555 = vadd.f32 %v5473, %v5514
      %v5556 = vadd.f32 %v5474, %v5515
      %v5557 = vadd.f32 %v5475, %v5516
      %v5558 = vadd.f32 %v5476, %v5517
      %v5559 = vadd.f32 %v5477, %v5518
      %v5560 = vadd.f32 %v5478, %v5519
      %v5561 = vadd.f32 %v5479, %v5520
      %v5562 = vadd.f32 %v5480, %v5521
      %v5563 = vadd.f32 %v5481, %v5522
      %v5564 = vadd.f32 %v5482, %v5523
      %v5565 = vadd.f32 %v5483, %v5524
      %v5566 = vadd.f32 %v5484, %v5525
      %v5567 = vadd.f32 %v5485, %v5526
      %v5568 = vld [vmem:[%s408 + $0x2b] sm:$0xff]
      %v5569 = vld [vmem:[%s408 + $0x33] sm:$0xff]
      %v5570 = vld [vmem:[%s408 + $0x3b] sm:$0xff]
      %v5571 = vld [vmem:[%s408 + $0x43] sm:$0xff]
      %v5572 = vld [vmem:[%s408 + $0x4b] sm:$0xff]
      %v5573 = vld [vmem:[%s408 + $0x53] sm:$0xff]
      %v5574 = vld [vmem:[%s408 + $0x5b] sm:$0xff]
      %v5575 = vld [vmem:[%s408 + $0x63] sm:$0xff]
      %v5576 = vld [vmem:[%s408 + $0x6b] sm:$0xff]
      %v5577 = vld [vmem:[%s408 + $0x73] sm:$0xff]
      %v5578 = vld [vmem:[%s408 + $0x7b] sm:$0xff]
      %v5579 = vld [vmem:[%s408 + $0x83] sm:$0xff]
      %v5580 = vld [vmem:[%s408 + $0x8b] sm:$0xff]
      %v5581 = vld [vmem:[%s408 + $0x93] sm:$0xff]
      %v5582 = vld [vmem:[%s408 + $0x9b] sm:$0xff]
      %v5583 = vld [vmem:[%s408 + $0xa3] sm:$0xff]
      %v5584 = vld [vmem:[%s408 + $0xab] sm:$0xff]
      %v5585 = vld [vmem:[%s408 + $0xb3] sm:$0xff]
      %v5586 = vld [vmem:[%s408 + $0xbb] sm:$0xff]
      %v5587 = vld [vmem:[%s408 + $0xc3] sm:$0xff]
      %v5588 = vld [vmem:[%s408 + $0xcb] sm:$0xff]
      %v5589 = vld [vmem:[%s408 + $0xd3] sm:$0xff]
      %v5590 = vld [vmem:[%s408 + $0xdb] sm:$0xff]
      %v5591 = vld [vmem:[%s408 + $0xe3] sm:$0xff]
      %v5592 = vld [vmem:[%s408 + $0xeb] sm:$0xff]
      %v5593 = vld [vmem:[%s408 + $0xf3] sm:$0xff]
      %v5594 = vld [vmem:[%s408 + $0xfb] sm:$0xff]
      %v5595 = vld [vmem:[%s408 + $0x103] sm:$0xff]
      %v5596 = vld [vmem:[%s408 + $0x10b] sm:$0xff]
      %v5597 = vld [vmem:[%s408 + $0x113] sm:$0xff]
      %v5598 = vld [vmem:[%s408 + $0x11b] sm:$0xff]
      %v5599 = vld [vmem:[%s408 + $0x123] sm:$0xff]
      %v5600 = vld [vmem:[%s408 + $0x12b] sm:$0xff]
      %v5601 = vld [vmem:[%s408 + $0x133] sm:$0xff]
      %v5602 = vld [vmem:[%s408 + $0x13b] sm:$0xff]
      %v5603 = vld [vmem:[%s408 + $0x143] sm:$0xff]
      %v5604 = vld [vmem:[%s408 + $0x14b] sm:$0xff]
      %v5605 = vld [vmem:[%s408 + $0x153] sm:$0xff]
      %v5606 = vld [vmem:[%s408 + $0x15b] sm:$0xff]
      %v5607 = vld [vmem:[%s408 + $0x163] sm:$0xff]
      %v5608 = vld [vmem:[%s408 + $0x16b] sm:$0xff]
      %v5609 = vadd.f32 %v5527, %v5568
      %v5610 = vadd.f32 %v5528, %v5569
      %v5611 = vadd.f32 %v5529, %v5570
      %v5612 = vadd.f32 %v5530, %v5571
      %v5613 = vadd.f32 %v5531, %v5572
      %v5614 = vadd.f32 %v5532, %v5573
      %v5615 = vadd.f32 %v5533, %v5574
      %v5616 = vadd.f32 %v5534, %v5575
      %v5617 = vadd.f32 %v5535, %v5576
      %v5618 = vadd.f32 %v5536, %v5577
      %v5619 = vadd.f32 %v5537, %v5578
      %v5620 = vadd.f32 %v5538, %v5579
      %v5621 = vadd.f32 %v5539, %v5580
      %v5622 = vadd.f32 %v5540, %v5581
      %v5623 = vadd.f32 %v5541, %v5582
      %v5624 = vadd.f32 %v5542, %v5583
      %v5625 = vadd.f32 %v5543, %v5584
      %v5626 = vadd.f32 %v5544, %v5585
      %v5627 = vadd.f32 %v5545, %v5586
      %v5628 = vadd.f32 %v5546, %v5587
      %v5629 = vadd.f32 %v5547, %v5588
      %v5630 = vadd.f32 %v5548, %v5589
      %v5631 = vadd.f32 %v5549, %v5590
      %v5632 = vadd.f32 %v5550, %v5591
      %v5633 = vadd.f32 %v5551, %v5592
      %v5634 = vadd.f32 %v5552, %v5593
      %v5635 = vadd.f32 %v5553, %v5594
      %v5636 = vadd.f32 %v5554, %v5595
      %v5637 = vadd.f32 %v5555, %v5596
      %v5638 = vadd.f32 %v5556, %v5597
      %v5639 = vadd.f32 %v5557, %v5598
      %v5640 = vadd.f32 %v5558, %v5599
      %v5641 = vadd.f32 %v5559, %v5600
      %v5642 = vadd.f32 %v5560, %v5601
      %v5643 = vadd.f32 %v5561, %v5602
      %v5644 = vadd.f32 %v5562, %v5603
      %v5645 = vadd.f32 %v5563, %v5604
      %v5646 = vadd.f32 %v5564, %v5605
      %v5647 = vadd.f32 %v5565, %v5606
      %v5648 = vadd.f32 %v5566, %v5607
      %v5649 = vadd.f32 %v5567, %v5608
      %v5650 = vmul.f32 %v5609, 0.11111111
      %v5651 = vmul.f32 %v5610, 0.11111111
      %v5652 = vmul.f32 %v5611, 0.11111111
      %v5653 = vmul.f32 %v5612, 0.11111111
      %v5654 = vmul.f32 %v5613, 0.11111111
      %v5655 = vmul.f32 %v5614, 0.11111111
      %v5656 = vmul.f32 %v5615, 0.11111111
      %v5657 = vmul.f32 %v5616, 0.11111111
      %v5658 = vmul.f32 %v5617, 0.11111111
      %v5659 = vmul.f32 %v5618, 0.11111111
      %v5660 = vmul.f32 %v5619, 0.11111111
      %v5661 = vmul.f32 %v5620, 0.11111111
      %v5662 = vmul.f32 %v5621, 0.11111111
      %v5663 = vmul.f32 %v5622, 0.11111111
      %v5664 = vmul.f32 %v5623, 0.11111111
      %v5665 = vmul.f32 %v5624, 0.11111111
      %v5666 = vmul.f32 %v5625, 0.11111111
      %v5667 = vmul.f32 %v5626, 0.11111111
      %v5668 = vmul.f32 %v5627, 0.11111111
      %v5669 = vmul.f32 %v5628, 0.11111111
      %v5670 = vmul.f32 %v5629, 0.11111111
      %v5671 = vmul.f32 %v5630, 0.11111111
      %v5672 = vmul.f32 %v5631, 0.11111111
      %v5673 = vmul.f32 %v5632, 0.11111111
      %v5674 = vmul.f32 %v5633, 0.11111111
      %v5675 = vmul.f32 %v5634, 0.11111111
      %v5676 = vmul.f32 %v5635, 0.11111111
      %v5677 = vmul.f32 %v5636, 0.11111111
      %v5678 = vmul.f32 %v5637, 0.11111111
      %v5679 = vmul.f32 %v5638, 0.11111111
      %v5680 = vmul.f32 %v5639, 0.11111111
      %v5681 = vmul.f32 %v5640, 0.11111111
      %v5682 = vmul.f32 %v5641, 0.11111111
      %v5683 = vmul.f32 %v5642, 0.11111111
      %v5684 = vmul.f32 %v5643, 0.11111111
      %v5685 = vmul.f32 %v5644, 0.11111111
      %v5686 = vmul.f32 %v5645, 0.11111111
      %v5687 = vmul.f32 %v5646, 0.11111111
      %v5688 = vmul.f32 %v5647, 0.11111111
      %v5689 = vmul.f32 %v5648, 0.11111111
      %v5690 = vmul.f32 %v5649, 0.11111111
      %v5691 = vpack.c.bf16 %v5651, %v5650
      %v5692 = vpack.c.bf16 %v5653, %v5652
      %v5693 = vpack.c.bf16 %v5655, %v5654
      %v5694 = vpack.c.bf16 %v5657, %v5656
      %v5695 = vpack.c.bf16 %v5659, %v5658
      %v5696 = vpack.c.bf16 %v5661, %v5660
      %v5697 = vpack.c.bf16 %v5663, %v5662
      %v5698 = vpack.c.bf16 %v5665, %v5664
      %v5699 = vpack.c.bf16 %v5667, %v5666
      %v5700 = vpack.c.bf16 %v5669, %v5668
      %v5701 = vpack.c.bf16 %v5671, %v5670
      %v5702 = vpack.c.bf16 %v5673, %v5672
      %v5703 = vpack.c.bf16 %v5675, %v5674
      %v5704 = vpack.c.bf16 %v5677, %v5676
      %v5705 = vpack.c.bf16 %v5679, %v5678
      %v5706 = vpack.c.bf16 %v5681, %v5680
      %v5707 = vpack.c.bf16 %v5683, %v5682
      %v5708 = vpack.c.bf16 %v5685, %v5684
      %v5709 = vpack.c.bf16 %v5687, %v5686
      %v5710 = vpack.c.bf16 %v5689, %v5688
      %v5711 = vpack.c.bf16 %v5690, %v5690
      %s5712 = scalar_lea.vmem %s5, 2
      %v5713 = vld [vmem:[%s5712] sm:$0x3]
      %v5715 = vsel %vm526, %v5691, 0
      %v5718 = vsel %vm526, %v5692, 0
      %v5721 = vsel %vm526, %v5693, 0
      %v5724 = vsel %vm526, %v5694, 0
      %v5727 = vsel %vm526, %v5695, 0
      %v5730 = vsel %vm526, %v5696, 0
      %v5733 = vsel %vm526, %v5697, 0
      %v5736 = vsel %vm526, %v5698, 0
      %v5739 = vsel %vm526, %v5699, 0
      %v5742 = vsel %vm526, %v5700, 0
      %v5745 = vsel %vm526, %v5701, 0
      %v5748 = vsel %vm526, %v5702, 0
      %v5751 = vsel %vm526, %v5703, 0
      %v5754 = vsel %vm526, %v5704, 0
      %v5757 = vsel %vm526, %v5705, 0
      %v5760 = vsel %vm526, %v5706, 0
      %v5763 = vsel %vm526, %v5707, 0
      %v5766 = vsel %vm526, %v5708, 0
      %v5769 = vsel %vm526, %v5709, 0
      %v5772 = vsel %vm526, %v5710, 0
      %v5775 = vsel %vm526, %v5711, 0
      %v5778 = vsel %vm590, %v5713, 0
      %5780 = vmatprep.subr.bf16.mxu0 0
      %5781 = vmatpush1.bf16.msra.mxu0 %v5778
      %5782 = vmatprep.subr.bf16.mxu0 0
      %5783 = vmatpush1.bf16.msra.mxu0 0
      %5784 = vmatprep.subr.bf16.mxu0 0
      %5785 = vmatpush1.bf16.msra.mxu0 0
      %5786 = vmatprep.subr.bf16.mxu0 0
      %5787 = vmatpush1.bf16.msra.mxu0 0
      %5788 = vmatprep.subr.bf16.mxu0 0
      %5789 = vmatpush1.bf16.msra.mxu0 0
      %5790 = vmatprep.subr.bf16.mxu0 0
      %5791 = vmatpush1.bf16.msra.mxu0 0
      %5792 = vmatprep.subr.bf16.mxu0 0
      %5793 = vmatpush1.bf16.msra.mxu0 0
      %5794 = vmatprep.subr.bf16.mxu0 0
      %5795 = vmatpush1.bf16.msra.mxu0 0
      %5796 = vmatprep.subr.bf16.mxu0 0
      %5797 = vmatpush1.bf16.msra.mxu0 0
      %5798 = vmatprep.subr.bf16.mxu0 0
      %5799 = vmatpush1.bf16.msra.mxu0 0
      %5800 = vmatprep.subr.bf16.mxu0 0
      %5801 = vmatpush1.bf16.msra.mxu0 0
      %5802 = vmatprep.subr.bf16.mxu0 0
      %5803 = vmatpush1.bf16.msra.mxu0 0
      %5804 = vmatprep.subr.bf16.mxu0 0
      %5805 = vmatpush1.bf16.msra.mxu0 0
      %5806 = vmatprep.subr.bf16.mxu0 0
      %5807 = vmatpush1.bf16.msra.mxu0 0
      %5808 = vmatprep.subr.bf16.mxu0 0
      %5809 = vmatpush1.bf16.msra.mxu0 0
      %5810 = vmatprep.subr.bf16.mxu0 0
      %5811 = vmatpush1.bf16.msra.mxu0 0
      %5812 = vmatprep.mubr.bf16.mxu0 0
      %5813 = vmatmul.mubr.bf16.gmra.mrb[0].mxu0 %v5715
      %v5814 = vpop.f32.mrb[0].mxu0
      %v5815 = vadd.f32 0.0, %v5814
      %v5816 = vpop.f32.mrb[0].mxu0
      %v5817 = vpop.f32.mrb[0].mxu0
      %v5818 = vadd.f32 0.0, %v5817
      %v5819 = vpop.f32.mrb[0].mxu0
      %5820 = vmatprep.mubr.bf16.mxu0 0
      %5821 = vmatmul.mubr.bf16.gmra.mrb[0].mxu0 %v5718
      %v5822 = vpop.f32.mrb[0].mxu0
      %v5823 = vadd.f32 0.0, %v5822
      %v5824 = vpop.f32.mrb[0].mxu0
      %v5825 = vpop.f32.mrb[0].mxu0
      %v5826 = vadd.f32 0.0, %v5825
      %v5827 = vpop.f32.mrb[0].mxu0
      %5828 = vmatprep.mubr.bf16.mxu0 0
      %5829 = vmatmul.mubr.bf16.gmra.mrb[0].mxu0 %v5721
      %v5830 = vpop.f32.mrb[0].mxu0
      %v5831 = vadd.f32 0.0, %v5830
      %v5832 = vpop.f32.mrb[0].mxu0
      %v5833 = vpop.f32.mrb[0].mxu0
      %v5834 = vadd.f32 0.0, %v5833
      %v5835 = vpop.f32.mrb[0].mxu0
      %5836 = vmatprep.mubr.bf16.mxu0 0
      %5837 = vmatmul.mubr.bf16.gmra.mrb[0].mxu0 %v5724
      %v5838 = vpop.f32.mrb[0].mxu0
      %v5839 = vadd.f32 0.0, %v5838
      %v5840 = vpop.f32.mrb[0].mxu0
      %v5841 = vpop.f32.mrb[0].mxu0
      %v5842 = vadd.f32 0.0, %v5841
      %v5843 = vpop.f32.mrb[0].mxu0
      %5844 = vmatprep.mubr.bf16.mxu0 0
      %5845 = vmatmul.mubr.bf16.gmra.mrb[0].mxu0 %v5727
      %v5846 = vpop.f32.mrb[0].mxu0
      %v5847 = vadd.f32 0.0, %v5846
      %v5848 = vpop.f32.mrb[0].mxu0
      %v5849 = vpop.f32.mrb[0].mxu0
      %v5850 = vadd.f32 0.0, %v5849
      %v5851 = vpop.f32.mrb[0].mxu0
      %5852 = vmatprep.mubr.bf16.mxu0 0
      %5853 = vmatmul.mubr.bf16.gmra.mrb[0].mxu0 %v5730
      %v5854 = vpop.f32.mrb[0].mxu0
      %v5855 = vadd.f32 0.0, %v5854
      %v5856 = vpop.f32.mrb[0].mxu0
      %v5857 = vpop.f32.mrb[0].mxu0
      %v5858 = vadd.f32 0.0, %v5857
      %v5859 = vpop.f32.mrb[0].mxu0
      %5860 = vmatprep.mubr.bf16.mxu0 0
      %5861 = vmatmul.mubr.bf16.gmra.mrb[0].mxu0 %v5733
      %v5862 = vpop.f32.mrb[0].mxu0
      %v5863 = vadd.f32 0.0, %v5862
      %v5864 = vpop.f32.mrb[0].mxu0
      %v5865 = vpop.f32.mrb[0].mxu0
      %v5866 = vadd.f32 0.0, %v5865
      %v5867 = vpop.f32.mrb[0].mxu0
      %5868 = vmatprep.mubr.bf16.mxu0 0
      %5869 = vmatmul.mubr.bf16.gmra.mrb[0].mxu0 %v5736
      %v5870 = vpop.f32.mrb[0].mxu0
      %v5871 = vadd.f32 0.0, %v5870
      %v5872 = vpop.f32.mrb[0].mxu0
      %v5873 = vpop.f32.mrb[0].mxu0
      %v5874 = vadd.f32 0.0, %v5873
      %v5875 = vpop.f32.mrb[0].mxu0
      %5876 = vmatprep.mubr.bf16.mxu0 0
      %5877 = vmatmul.mubr.bf16.gmra.mrb[0].mxu0 %v5739
      %v5878 = vpop.f32.mrb[0].mxu0
      %v5879 = vadd.f32 0.0, %v5878
      %v5880 = vpop.f32.mrb[0].mxu0
      %v5881 = vpop.f32.mrb[0].mxu0
      %v5882 = vadd.f32 0.0, %v5881
      %v5883 = vpop.f32.mrb[0].mxu0
      %5884 = vmatprep.mubr.bf16.mxu0 0
      %5885 = vmatmul.mubr.bf16.gmra.mrb[0].mxu0 %v5742
      %v5886 = vpop.f32.mrb[0].mxu0
      %v5887 = vadd.f32 0.0, %v5886
      %v5888 = vpop.f32.mrb[0].mxu0
      %v5889 = vpop.f32.mrb[0].mxu0
      %v5890 = vadd.f32 0.0, %v5889
      %v5891 = vpop.f32.mrb[0].mxu0
      %5892 = vmatprep.mubr.bf16.mxu0 0
      %5893 = vmatmul.mubr.bf16.gmra.mrb[0].mxu0 %v5745
      %v5894 = vpop.f32.mrb[0].mxu0
      %v5895 = vadd.f32 0.0, %v5894
      %v5896 = vpop.f32.mrb[0].mxu0
      %v5897 = vpop.f32.mrb[0].mxu0
      %v5898 = vadd.f32 0.0, %v5897
      %v5899 = vpop.f32.mrb[0].mxu0
      %5900 = vmatprep.mubr.bf16.mxu0 0
      %5901 = vmatmul.mubr.bf16.gmra.mrb[0].mxu0 %v5748
      %v5902 = vpop.f32.mrb[0].mxu0
      %v5903 = vadd.f32 0.0, %v5902
      %v5904 = vpop.f32.mrb[0].mxu0
      %v5905 = vpop.f32.mrb[0].mxu0
      %v5906 = vadd.f32 0.0, %v5905
      %v5907 = vpop.f32.mrb[0].mxu0
      %5908 = vmatprep.mubr.bf16.mxu0 0
      %5909 = vmatmul.mubr.bf16.gmra.mrb[0].mxu0 %v5751
      %v5910 = vpop.f32.mrb[0].mxu0
      %v5911 = vadd.f32 0.0, %v5910
      %v5912 = vpop.f32.mrb[0].mxu0
      %v5913 = vpop.f32.mrb[0].mxu0
      %v5914 = vadd.f32 0.0, %v5913
      %v5915 = vpop.f32.mrb[0].mxu0
      %5916 = vmatprep.mubr.bf16.mxu0 0
      %5917 = vmatmul.mubr.bf16.gmra.mrb[0].mxu0 %v5754
      %v5918 = vpop.f32.mrb[0].mxu0
      %v5919 = vadd.f32 0.0, %v5918
      %v5920 = vpop.f32.mrb[0].mxu0
      %v5921 = vpop.f32.mrb[0].mxu0
      %v5922 = vadd.f32 0.0, %v5921
      %v5923 = vpop.f32.mrb[0].mxu0
      %5924 = vmatprep.mubr.bf16.mxu0 0
      %5925 = vmatmul.mubr.bf16.gmra.mrb[0].mxu0 %v5757
      %v5926 = vpop.f32.mrb[0].mxu0
      %v5927 = vadd.f32 0.0, %v5926
      %v5928 = vpop.f32.mrb[0].mxu0
      %v5929 = vpop.f32.mrb[0].mxu0
      %v5930 = vadd.f32 0.0, %v5929
      %v5931 = vpop.f32.mrb[0].mxu0
      %5932 = vmatprep.mubr.bf16.mxu0 0
      %5933 = vmatmul.mubr.bf16.gmra.mrb[0].mxu0 %v5760
      %v5934 = vpop.f32.mrb[0].mxu0
      %v5935 = vadd.f32 0.0, %v5934
      %v5936 = vpop.f32.mrb[0].mxu0
      %v5937 = vpop.f32.mrb[0].mxu0
      %v5938 = vadd.f32 0.0, %v5937
      %v5939 = vpop.f32.mrb[0].mxu0
      %5940 = vmatprep.mubr.bf16.mxu0 0
      %5941 = vmatmul.mubr.bf16.gmra.mrb[0].mxu0 %v5763
      %v5942 = vpop.f32.mrb[0].mxu0
      %v5943 = vadd.f32 0.0, %v5942
      %v5944 = vpop.f32.mrb[0].mxu0
      %v5945 = vpop.f32.mrb[0].mxu0
      %v5946 = vadd.f32 0.0, %v5945
      %v5947 = vpop.f32.mrb[0].mxu0
      %5948 = vmatprep.mubr.bf16.mxu0 0
      %5949 = vmatmul.mubr.bf16.gmra.mrb[0].mxu0 %v5766
      %v5950 = vpop.f32.mrb[0].mxu0
      %v5951 = vadd.f32 0.0, %v5950
      %v5952 = vpop.f32.mrb[0].mxu0
      %v5953 = vpop.f32.mrb[0].mxu0
      %v5954 = vadd.f32 0.0, %v5953
      %v5955 = vpop.f32.mrb[0].mxu0
      %5956 = vmatprep.mubr.bf16.mxu0 0
      %5957 = vmatmul.mubr.bf16.gmra.mrb[0].mxu0 %v5769
      %v5958 = vpop.f32.mrb[0].mxu0
      %v5959 = vadd.f32 0.0, %v5958
      %v5960 = vpop.f32.mrb[0].mxu0
      %v5961 = vpop.f32.mrb[0].mxu0
      %v5962 = vadd.f32 0.0, %v5961
      %v5963 = vpop.f32.mrb[0].mxu0
      %5964 = vmatprep.mubr.bf16.mxu0 0
      %5965 = vmatmul.mubr.bf16.gmra.mrb[0].mxu0 %v5772
      %v5966 = vpop.f32.mrb[0].mxu0
      %v5967 = vadd.f32 0.0, %v5966
      %v5968 = vpop.f32.mrb[0].mxu0
      %v5969 = vpop.f32.mrb[0].mxu0
      %v5970 = vadd.f32 0.0, %v5969
      %v5971 = vpop.f32.mrb[0].mxu0
      %5972 = vmatprep.mubr.bf16.mxu0 0
      %5973 = vmatmul.mubr.bf16.gmra.mrb[0].mxu0 %v5775
      %v5974 = vpop.f32.mrb[0].mxu0
      %v5975 = vadd.f32 0.0, %v5974
      %v5976 = vpop.f32.mrb[0].mxu0
      %v5977 = vpop.f32.mrb[0].mxu0
      %v5978 = vpop.f32.mrb[0].mxu0
      %5979 = vdwg.mxu0
      %v5981 = vsel %vm590, %v5030, 0
      %5983 = vmatprep.subr.bf16.mxu0 0
      %5984 = vmatpush1.bf16.msra.mxu0 %v5981
      %5985 = vmatprep.subr.bf16.mxu0 0
      %5986 = vmatpush1.bf16.msra.mxu0 0
      %5987 = vmatprep.subr.bf16.mxu0 0
      %5988 = vmatpush1.bf16.msra.mxu0 0
      %5989 = vmatprep.subr.bf16.mxu0 0
      %5990 = vmatpush1.bf16.msra.mxu0 0
      %5991 = vmatprep.subr.bf16.mxu0 0
      %5992 = vmatpush1.bf16.msra.mxu0 0
      %5993 = vmatprep.subr.bf16.mxu0 0
      %5994 = vmatpush1.bf16.msra.mxu0 0
      %5995 = vmatprep.subr.bf16.mxu0 0
      %5996 = vmatpush1.bf16.msra.mxu0 0
      %5997 = vmatprep.subr.bf16.mxu0 0
      %5998 = vmatpush1.bf16.msra.mxu0 0
      %5999 = vmatprep.subr.bf16.mxu0 0
      %6000 = vmatpush1.bf16.msra.mxu0 0
      %6001 = vmatprep.subr.bf16.mxu0 0
      %6002 = vmatpush1.bf16.msra.mxu0 0
      %6003 = vmatprep.subr.bf16.mxu0 0
      %6004 = vmatpush1.bf16.msra.mxu0 0
      %6005 = vmatprep.subr.bf16.mxu0 0
      %6006 = vmatpush1.bf16.msra.mxu0 0
      %6007 = vmatprep.subr.bf16.mxu0 0
      %6008 = vmatpush1.bf16.msra.mxu0 0
      %6009 = vmatprep.subr.bf16.mxu0 0
      %6010 = vmatpush1.bf16.msra.mxu0 0
      %6011 = vmatprep.subr.bf16.mxu0 0
      %6012 = vmatpush1.bf16.msra.mxu0 0
      %6013 = vmatprep.subr.bf16.mxu0 0
      %6014 = vmatpush1.bf16.msra.mxu0 0
      %6015 = vmatprep.mubr.bf16.mxu0 0
      %6016 = vmatmul.mubr.bf16.gmra.mrb[0].mxu0 %v528
      %v6017 = vpop.f32.mrb[0].mxu0
      %v6018 = vadd.f32 %v5815, %v6017
      %v6019 = vpop.f32.mrb[0].mxu0
      %v6020 = vpop.f32.mrb[0].mxu0
      %v6021 = vadd.f32 %v5818, %v6020
      %v6022 = vpop.f32.mrb[0].mxu0
      %6023 = vmatprep.mubr.bf16.mxu0 0
      %6024 = vmatmul.mubr.bf16.gmra.mrb[0].mxu0 %v531
      %v6025 = vpop.f32.mrb[0].mxu0
      %v6026 = vadd.f32 %v5823, %v6025
      %v6027 = vpop.f32.mrb[0].mxu0
      %v6028 = vpop.f32.mrb[0].mxu0
      %v6029 = vadd.f32 %v5826, %v6028
      %v6030 = vpop.f32.mrb[0].mxu0
      %6031 = vmatprep.mubr.bf16.mxu0 0
      %6032 = vmatmul.mubr.bf16.gmra.mrb[0].mxu0 %v534
      %v6033 = vpop.f32.mrb[0].mxu0
      %v6034 = vadd.f32 %v5831, %v6033
      %v6035 = vpop.f32.mrb[0].mxu0
      %v6036 = vpop.f32.mrb[0].mxu0
      %v6037 = vadd.f32 %v5834, %v6036
      %v6038 = vpop.f32.mrb[0].mxu0
      %6039 = vmatprep.mubr.bf16.mxu0 0
      %6040 = vmatmul.mubr.bf16.gmra.mrb[0].mxu0 %v537
      %v6041 = vpop.f32.mrb[0].mxu0
      %v6042 = vadd.f32 %v5839, %v6041
      %v6043 = vpop.f32.mrb[0].mxu0
      %v6044 = vpop.f32.mrb[0].mxu0
      %v6045 = vadd.f32 %v5842, %v6044
      %v6046 = vpop.f32.mrb[0].mxu0
      %6047 = vmatprep.mubr.bf16.mxu0 0
      %6048 = vmatmul.mubr.bf16.gmra.mrb[0].mxu0 %v540
      %v6049 = vpop.f32.mrb[0].mxu0
      %v6050 = vadd.f32 %v5847, %v6049
      %v6051 = vpop.f32.mrb[0].mxu0
      %v6052 = vpop.f32.mrb[0].mxu0
      %v6053 = vadd.f32 %v5850, %v6052
      %v6054 = vpop.f32.mrb[0].mxu0
      %6055 = vmatprep.mubr.bf16.mxu0 0
      %6056 = vmatmul.mubr.bf16.gmra.mrb[0].mxu0 %v543
      %v6057 = vpop.f32.mrb[0].mxu0
      %v6058 = vadd.f32 %v5855, %v6057
      %v6059 = vpop.f32.mrb[0].mxu0
      %v6060 = vpop.f32.mrb[0].mxu0
      %v6061 = vadd.f32 %v5858, %v6060
      %v6062 = vpop.f32.mrb[0].mxu0
      %6063 = vmatprep.mubr.bf16.mxu0 0
      %6064 = vmatmul.mubr.bf16.gmra.mrb[0].mxu0 %v546
      %v6065 = vpop.f32.mrb[0].mxu0
      %v6066 = vadd.f32 %v5863, %v6065
      %v6067 = vpop.f32.mrb[0].mxu0
      %v6068 = vpop.f32.mrb[0].mxu0
      %v6069 = vadd.f32 %v5866, %v6068
      %v6070 = vpop.f32.mrb[0].mxu0
      %6071 = vmatprep.mubr.bf16.mxu0 0
      %6072 = vmatmul.mubr.bf16.gmra.mrb[0].mxu0 %v549
      %v6073 = vpop.f32.mrb[0].mxu0
      %v6074 = vadd.f32 %v5871, %v6073
      %v6075 = vpop.f32.mrb[0].mxu0
      %v6076 = vpop.f32.mrb[0].mxu0
      %v6077 = vadd.f32 %v5874, %v6076
      %v6078 = vpop.f32.mrb[0].mxu0
      %6079 = vmatprep.mubr.bf16.mxu0 0
      %6080 = vmatmul.mubr.bf16.gmra.mrb[0].mxu0 %v552
      %v6081 = vpop.f32.mrb[0].mxu0
      %v6082 = vadd.f32 %v5879, %v6081
      %v6083 = vpop.f32.mrb[0].mxu0
      %v6084 = vpop.f32.mrb[0].mxu0
      %v6085 = vadd.f32 %v5882, %v6084
      %v6086 = vpop.f32.mrb[0].mxu0
      %6087 = vmatprep.mubr.bf16.mxu0 0
      %6088 = vmatmul.mubr.bf16.gmra.mrb[0].mxu0 %v555
      %v6089 = vpop.f32.mrb[0].mxu0
      %v6090 = vadd.f32 %v5887, %v6089
      %v6091 = vpop.f32.mrb[0].mxu0
      %v6092 = vpop.f32.mrb[0].mxu0
      %v6093 = vadd.f32 %v5890, %v6092
      %v6094 = vpop.f32.mrb[0].mxu0
      %6095 = vmatprep.mubr.bf16.mxu0 0
      %6096 = vmatmul.mubr.bf16.gmra.mrb[0].mxu0 %v558
      %v6097 = vpop.f32.mrb[0].mxu0
      %v6098 = vadd.f32 %v5895, %v6097
      %v6099 = vpop.f32.mrb[0].mxu0
      %v6100 = vpop.f32.mrb[0].mxu0
      %v6101 = vadd.f32 %v5898, %v6100
      %v6102 = vpop.f32.mrb[0].mxu0
      %6103 = vmatprep.mubr.bf16.mxu0 0
      %6104 = vmatmul.mubr.bf16.gmra.mrb[0].mxu0 %v561
      %v6105 = vpop.f32.mrb[0].mxu0
      %v6106 = vadd.f32 %v5903, %v6105
      %v6107 = vpop.f32.mrb[0].mxu0
      %v6108 = vpop.f32.mrb[0].mxu0
      %v6109 = vadd.f32 %v5906, %v6108
      %v6110 = vpop.f32.mrb[0].mxu0
      %6111 = vmatprep.mubr.bf16.mxu0 0
      %6112 = vmatmul.mubr.bf16.gmra.mrb[0].mxu0 %v564
      %v6113 = vpop.f32.mrb[0].mxu0
      %v6114 = vadd.f32 %v5911, %v6113
      %v6115 = vpop.f32.mrb[0].mxu0
      %v6116 = vpop.f32.mrb[0].mxu0
      %v6117 = vadd.f32 %v5914, %v6116
      %v6118 = vpop.f32.mrb[0].mxu0
      %6119 = vmatprep.mubr.bf16.mxu0 0
      %6120 = vmatmul.mubr.bf16.gmra.mrb[0].mxu0 %v567
      %v6121 = vpop.f32.mrb[0].mxu0
      %v6122 = vadd.f32 %v5919, %v6121
      %v6123 = vpop.f32.mrb[0].mxu0
      %v6124 = vpop.f32.mrb[0].mxu0
      %v6125 = vadd.f32 %v5922, %v6124
      %v6126 = vpop.f32.mrb[0].mxu0
      %6127 = vmatprep.mubr.bf16.mxu0 0
      %6128 = vmatmul.mubr.bf16.gmra.mrb[0].mxu0 %v570
      %v6129 = vpop.f32.mrb[0].mxu0
      %v6130 = vadd.f32 %v5927, %v6129
      %v6131 = vpop.f32.mrb[0].mxu0
      %v6132 = vpop.f32.mrb[0].mxu0
      %v6133 = vadd.f32 %v5930, %v6132
      %v6134 = vpop.f32.mrb[0].mxu0
      %6135 = vmatprep.mubr.bf16.mxu0 0
      %6136 = vmatmul.mubr.bf16.gmra.mrb[0].mxu0 %v573
      %v6137 = vpop.f32.mrb[0].mxu0
      %v6138 = vadd.f32 %v5935, %v6137
      %v6139 = vpop.f32.mrb[0].mxu0
      %v6140 = vpop.f32.mrb[0].mxu0
      %v6141 = vadd.f32 %v5938, %v6140
      %v6142 = vpop.f32.mrb[0].mxu0
      %6143 = vmatprep.mubr.bf16.mxu0 0
      %6144 = vmatmul.mubr.bf16.gmra.mrb[0].mxu0 %v576
      %v6145 = vpop.f32.mrb[0].mxu0
      %v6146 = vadd.f32 %v5943, %v6145
      %v6147 = vpop.f32.mrb[0].mxu0
      %v6148 = vpop.f32.mrb[0].mxu0
      %v6149 = vadd.f32 %v5946, %v6148
      %v6150 = vpop.f32.mrb[0].mxu0
      %6151 = vmatprep.mubr.bf16.mxu0 0
      %6152 = vmatmul.mubr.bf16.gmra.mrb[0].mxu0 %v579
      %v6153 = vpop.f32.mrb[0].mxu0
      %v6154 = vadd.f32 %v5951, %v6153
      %v6155 = vpop.f32.mrb[0].mxu0
      %v6156 = vpop.f32.mrb[0].mxu0
      %v6157 = vadd.f32 %v5954, %v6156
      %v6158 = vpop.f32.mrb[0].mxu0
      %6159 = vmatprep.mubr.bf16.mxu0 0
      %6160 = vmatmul.mubr.bf16.gmra.mrb[0].mxu0 %v582
      %v6161 = vpop.f32.mrb[0].mxu0
      %v6162 = vadd.f32 %v5959, %v6161
      %v6163 = vpop.f32.mrb[0].mxu0
      %v6164 = vpop.f32.mrb[0].mxu0
      %v6165 = vadd.f32 %v5962, %v6164
      %v6166 = vpop.f32.mrb[0].mxu0
      %6167 = vmatprep.mubr.bf16.mxu0 0
      %6168 = vmatmul.mubr.bf16.gmra.mrb[0].mxu0 %v585
      %v6169 = vpop.f32.mrb[0].mxu0
      %v6170 = vadd.f32 %v5967, %v6169
      %v6171 = vpop.f32.mrb[0].mxu0
      %v6172 = vpop.f32.mrb[0].mxu0
      %v6173 = vadd.f32 %v5970, %v6172
      %v6174 = vpop.f32.mrb[0].mxu0
      %6175 = vmatprep.mubr.bf16.mxu0 0
      %6176 = vmatmul.mubr.bf16.gmra.mrb[0].mxu0 %v588
      %v6177 = vpop.f32.mrb[0].mxu0
      %v6178 = vadd.f32 %v5975, %v6177
      %v6179 = vpop.f32.mrb[0].mxu0
      %v6180 = vpop.f32.mrb[0].mxu0
      %v6181 = vpop.f32.mrb[0].mxu0
      %6182 = vdwg.mxu0
      %v6183 = vld [vmem:[#allocation2 + $0x17] sm:$0xff]
      %v6184 = vld [vmem:[#allocation2 + $0x1f] sm:$0xff]
      %v6185 = vld [vmem:[#allocation2 + $0x27] sm:$0xff]
      %v6186 = vld [vmem:[#allocation2 + $0x2f] sm:$0xff]
      %v6187 = vld [vmem:[#allocation2 + $0x37] sm:$0xff]
      %v6188 = vld [vmem:[#allocation2 + $0x3f] sm:$0xff]
      %v6189 = vld [vmem:[#allocation2 + $0x47] sm:$0xff]
      %v6190 = vld [vmem:[#allocation2 + $0x4f] sm:$0xff]
      %v6191 = vld [vmem:[#allocation2 + $0x57] sm:$0xff]
      %v6192 = vld [vmem:[#allocation2 + $0x5f] sm:$0xff]
      %v6193 = vld [vmem:[#allocation2 + $0x67] sm:$0xff]
      %v6194 = vld [vmem:[#allocation2 + $0x6f] sm:$0xff]
      %v6195 = vld [vmem:[#allocation2 + $0x77] sm:$0xff]
      %v6196 = vld [vmem:[#allocation2 + $0x7f] sm:$0xff]
      %v6197 = vld [vmem:[#allocation2 + $0x87] sm:$0xff]
      %v6198 = vld [vmem:[#allocation2 + $0x8f] sm:$0xff]
      %v6199 = vld [vmem:[#allocation2 + $0x97] sm:$0xff]
      %v6200 = vld [vmem:[#allocation2 + $0x9f] sm:$0xff]
      %v6201 = vld [vmem:[#allocation2 + $0xa7] sm:$0xff]
      %v6202 = vld [vmem:[#allocation2 + $0xaf] sm:$0xff]
      %v6203 = vld [vmem:[#allocation2 + $0xb7] sm:$0xff]
      %v6204 = vld [vmem:[#allocation2 + $0xbf] sm:$0xff]
      %v6205 = vld [vmem:[#allocation2 + $0xc7] sm:$0xff]
      %v6206 = vld [vmem:[#allocation2 + $0xcf] sm:$0xff]
      %v6207 = vld [vmem:[#allocation2 + $0xd7] sm:$0xff]
      %v6208 = vld [vmem:[#allocation2 + $0xdf] sm:$0xff]
      %v6209 = vld [vmem:[#allocation2 + $0xe7] sm:$0xff]
      %v6210 = vld [vmem:[#allocation2 + $0xef] sm:$0xff]
      %v6211 = vld [vmem:[#allocation2 + $0xf7] sm:$0xff]
      %v6212 = vld [vmem:[#allocation2 + $0xff] sm:$0xff]
      %v6213 = vld [vmem:[#allocation2 + $0x107] sm:$0xff]
      %v6214 = vld [vmem:[#allocation2 + $0x10f] sm:$0xff]
      %v6215 = vld [vmem:[#allocation2 + $0x117] sm:$0xff]
      %v6216 = vld [vmem:[#allocation2 + $0x11f] sm:$0xff]
      %v6217 = vld [vmem:[#allocation2 + $0x127] sm:$0xff]
      %v6218 = vld [vmem:[#allocation2 + $0x12f] sm:$0xff]
      %v6219 = vld [vmem:[#allocation2 + $0x137] sm:$0xff]
      %v6220 = vld [vmem:[#allocation2 + $0x13f] sm:$0xff]
      %v6221 = vld [vmem:[#allocation2 + $0x147] sm:$0xff]
      %v6222 = vld [vmem:[#allocation2 + $0x14f] sm:$0xff]
      %v6223 = vld [vmem:[#allocation2 + $0x157] sm:$0xff]
      %v6224 = vpack.c.bf16 %v6184, %v6183
      %v6225 = vpack.c.bf16 %v6186, %v6185
      %v6226 = vpack.c.bf16 %v6188, %v6187
      %v6227 = vpack.c.bf16 %v6190, %v6189
      %v6228 = vpack.c.bf16 %v6192, %v6191
      %v6229 = vpack.c.bf16 %v6194, %v6193
      %v6230 = vpack.c.bf16 %v6196, %v6195
      %v6231 = vpack.c.bf16 %v6198, %v6197
      %v6232 = vpack.c.bf16 %v6200, %v6199
      %v6233 = vpack.c.bf16 %v6202, %v6201
      %v6234 = vpack.c.bf16 %v6204, %v6203
      %v6235 = vpack.c.bf16 %v6206, %v6205
      %v6236 = vpack.c.bf16 %v6208, %v6207
      %v6237 = vpack.c.bf16 %v6210, %v6209
      %v6238 = vpack.c.bf16 %v6212, %v6211
      %v6239 = vpack.c.bf16 %v6214, %v6213
      %v6240 = vpack.c.bf16 %v6216, %v6215
      %v6241 = vpack.c.bf16 %v6218, %v6217
      %v6242 = vpack.c.bf16 %v6220, %v6219
      %v6243 = vpack.c.bf16 %v6222, %v6221
      %v6244 = vpack.c.bf16 %v6223, %v6223
      %v6245 = vld [vmem:[%s6] sm:$0xf]
      %v6246 = vld [vmem:[%s6 + $0x4] sm:$0xf]
      %v6247 = vld [vmem:[%s6 + $0x8] sm:$0xf]
      %v6251 = vunpack.c.l.b16 %v6245
      %v6252 = vunpack.c.l.b16 %v6246
      %v6253 = vunpack.c.l.b16 %v6247
      %v6254 = vpack.c.b16 %v6252, %v6251
      %v6255 = vpack.c.b16 %v6253, %v6253
      %v6258 = vsel %vm835, %v6224, 0
      %v6261 = vsel %vm835, %v6225, 0
      %v6264 = vsel %vm835, %v6226, 0
      %v6267 = vsel %vm835, %v6227, 0
      %v6270 = vsel %vm835, %v6228, 0
      %v6273 = vsel %vm835, %v6229, 0
      %v6276 = vsel %vm835, %v6230, 0
      %v6279 = vsel %vm835, %v6231, 0
      %v6282 = vsel %vm835, %v6232, 0
      %v6285 = vsel %vm835, %v6233, 0
      %v6288 = vsel %vm835, %v6234, 0
      %v6291 = vsel %vm835, %v6235, 0
      %v6294 = vsel %vm835, %v6236, 0
      %v6297 = vsel %vm835, %v6237, 0
      %v6300 = vsel %vm835, %v6238, 0
      %v6303 = vsel %vm835, %v6239, 0
      %v6306 = vsel %vm835, %v6240, 0
      %v6309 = vsel %vm835, %v6241, 0
      %v6312 = vsel %vm835, %v6242, 0
      %v6315 = vsel %vm835, %v6243, 0
      %v6318 = vsel %vm835, %v6244, 0
      %vm6320 = vcmask 1043456
      %v6322 = vsel %vm6320, %v6255, 0
      %6324 = vmatprep.subr.bf16.mxu0 0
      %6325 = vmatpush1.bf16.msra.mxu0 %v6254
      %6326 = vmatprep.subr.bf16.mxu0 0
      %6327 = vmatpush1.bf16.msra.mxu0 %v6322
      %6328 = vmatprep.subr.bf16.mxu0 0
      %6329 = vmatpush1.bf16.msra.mxu0 0
      %6330 = vmatprep.subr.bf16.mxu0 0
      %6331 = vmatpush1.bf16.msra.mxu0 0
      %6332 = vmatprep.subr.bf16.mxu0 0
      %6333 = vmatpush1.bf16.msra.mxu0 0
      %6334 = vmatprep.subr.bf16.mxu0 0
      %6335 = vmatpush1.bf16.msra.mxu0 0
      %6336 = vmatprep.subr.bf16.mxu0 0
      %6337 = vmatpush1.bf16.msra.mxu0 0
      %6338 = vmatprep.subr.bf16.mxu0 0
      %6339 = vmatpush1.bf16.msra.mxu0 0
      %6340 = vmatprep.subr.bf16.mxu0 0
      %6341 = vmatpush1.bf16.msra.mxu0 0
      %6342 = vmatprep.subr.bf16.mxu0 0
      %6343 = vmatpush1.bf16.msra.mxu0 0
      %6344 = vmatprep.subr.bf16.mxu0 0
      %6345 = vmatpush1.bf16.msra.mxu0 0
      %6346 = vmatprep.subr.bf16.mxu0 0
      %6347 = vmatpush1.bf16.msra.mxu0 0
      %6348 = vmatprep.subr.bf16.mxu0 0
      %6349 = vmatpush1.bf16.msra.mxu0 0
      %6350 = vmatprep.subr.bf16.mxu0 0
      %6351 = vmatpush1.bf16.msra.mxu0 0
      %6352 = vmatprep.subr.bf16.mxu0 0
      %6353 = vmatpush1.bf16.msra.mxu0 0
      %6354 = vmatprep.subr.bf16.mxu0 0
      %6355 = vmatpush1.bf16.msra.mxu0 0
      %6356 = vmatprep.mubr.bf16.mxu0 0
      %6357 = vmatmul.mubr.bf16.gmra.mrb[0].mxu0 %v6258
      %v6358 = vpop.f32.mrb[0].mxu0
      %v6359 = vadd.f32 0.0, %v6358
      %v6360 = vpop.f32.mrb[0].mxu0
      %v6361 = vpop.f32.mrb[0].mxu0
      %v6362 = vadd.f32 0.0, %v6361
      %v6363 = vpop.f32.mrb[0].mxu0
      %6364 = vmatprep.mubr.bf16.mxu0 0
      %6365 = vmatmul.mubr.bf16.gmra.mrb[0].mxu0 %v6261
      %v6366 = vpop.f32.mrb[0].mxu0
      %v6367 = vadd.f32 0.0, %v6366
      %v6368 = vpop.f32.mrb[0].mxu0
      %v6369 = vpop.f32.mrb[0].mxu0
      %v6370 = vadd.f32 0.0, %v6369
      %v6371 = vpop.f32.mrb[0].mxu0
      %6372 = vmatprep.mubr.bf16.mxu0 0
      %6373 = vmatmul.mubr.bf16.gmra.mrb[0].mxu0 %v6264
      %v6374 = vpop.f32.mrb[0].mxu0
      %v6375 = vadd.f32 0.0, %v6374
      %v6376 = vpop.f32.mrb[0].mxu0
      %v6377 = vpop.f32.mrb[0].mxu0
      %v6378 = vadd.f32 0.0, %v6377
      %v6379 = vpop.f32.mrb[0].mxu0
      %6380 = vmatprep.mubr.bf16.mxu0 0
      %6381 = vmatmul.mubr.bf16.gmra.mrb[0].mxu0 %v6267
      %v6382 = vpop.f32.mrb[0].mxu0
      %v6383 = vadd.f32 0.0, %v6382
      %v6384 = vpop.f32.mrb[0].mxu0
      %v6385 = vpop.f32.mrb[0].mxu0
      %v6386 = vadd.f32 0.0, %v6385
      %v6387 = vpop.f32.mrb[0].mxu0
      %6388 = vmatprep.mubr.bf16.mxu0 0
      %6389 = vmatmul.mubr.bf16.gmra.mrb[0].mxu0 %v6270
      %v6390 = vpop.f32.mrb[0].mxu0
      %v6391 = vadd.f32 0.0, %v6390
      %v6392 = vpop.f32.mrb[0].mxu0
      %v6393 = vpop.f32.mrb[0].mxu0
      %v6394 = vadd.f32 0.0, %v6393
      %v6395 = vpop.f32.mrb[0].mxu0
      %6396 = vmatprep.mubr.bf16.mxu0 0
      %6397 = vmatmul.mubr.bf16.gmra.mrb[0].mxu0 %v6273
      %v6398 = vpop.f32.mrb[0].mxu0
      %v6399 = vadd.f32 0.0, %v6398
      %v6400 = vpop.f32.mrb[0].mxu0
      %v6401 = vpop.f32.mrb[0].mxu0
      %v6402 = vadd.f32 0.0, %v6401
      %v6403 = vpop.f32.mrb[0].mxu0
      %6404 = vmatprep.mubr.bf16.mxu0 0
      %6405 = vmatmul.mubr.bf16.gmra.mrb[0].mxu0 %v6276
      %v6406 = vpop.f32.mrb[0].mxu0
      %v6407 = vadd.f32 0.0, %v6406
      %v6408 = vpop.f32.mrb[0].mxu0
      %v6409 = vpop.f32.mrb[0].mxu0
      %v6410 = vadd.f32 0.0, %v6409
      %v6411 = vpop.f32.mrb[0].mxu0
      %6412 = vmatprep.mubr.bf16.mxu0 0
      %6413 = vmatmul.mubr.bf16.gmra.mrb[0].mxu0 %v6279
      %v6414 = vpop.f32.mrb[0].mxu0
      %v6415 = vadd.f32 0.0, %v6414
      %v6416 = vpop.f32.mrb[0].mxu0
      %v6417 = vpop.f32.mrb[0].mxu0
      %v6418 = vadd.f32 0.0, %v6417
      %v6419 = vpop.f32.mrb[0].mxu0
      %6420 = vmatprep.mubr.bf16.mxu0 0
      %6421 = vmatmul.mubr.bf16.gmra.mrb[0].mxu0 %v6282
      %v6422 = vpop.f32.mrb[0].mxu0
      %v6423 = vadd.f32 0.0, %v6422
      %v6424 = vpop.f32.mrb[0].mxu0
      %v6425 = vpop.f32.mrb[0].mxu0
      %v6426 = vadd.f32 0.0, %v6425
      %v6427 = vpop.f32.mrb[0].mxu0
      %6428 = vmatprep.mubr.bf16.mxu0 0
      %6429 = vmatmul.mubr.bf16.gmra.mrb[0].mxu0 %v6285
      %v6430 = vpop.f32.mrb[0].mxu0
      %v6431 = vadd.f32 0.0, %v6430
      %v6432 = vpop.f32.mrb[0].mxu0
      %v6433 = vpop.f32.mrb[0].mxu0
      %v6434 = vadd.f32 0.0, %v6433
      %v6435 = vpop.f32.mrb[0].mxu0
      %6436 = vmatprep.mubr.bf16.mxu0 0
      %6437 = vmatmul.mubr.bf16.gmra.mrb[0].mxu0 %v6288
      %v6438 = vpop.f32.mrb[0].mxu0
      %v6439 = vadd.f32 0.0, %v6438
      %v6440 = vpop.f32.mrb[0].mxu0
      %v6441 = vpop.f32.mrb[0].mxu0
      %v6442 = vadd.f32 0.0, %v6441
      %v6443 = vpop.f32.mrb[0].mxu0
      %6444 = vmatprep.mubr.bf16.mxu0 0
      %6445 = vmatmul.mubr.bf16.gmra.mrb[0].mxu0 %v6291
      %v6446 = vpop.f32.mrb[0].mxu0
      %v6447 = vadd.f32 0.0, %v6446
      %v6448 = vpop.f32.mrb[0].mxu0
      %v6449 = vpop.f32.mrb[0].mxu0
      %v6450 = vadd.f32 0.0, %v6449
      %v6451 = vpop.f32.mrb[0].mxu0
      %6452 = vmatprep.mubr.bf16.mxu0 0
      %6453 = vmatmul.mubr.bf16.gmra.mrb[0].mxu0 %v6294
      %v6454 = vpop.f32.mrb[0].mxu0
      %v6455 = vadd.f32 0.0, %v6454
      %v6456 = vpop.f32.mrb[0].mxu0
      %v6457 = vpop.f32.mrb[0].mxu0
      %v6458 = vadd.f32 0.0, %v6457
      %v6459 = vpop.f32.mrb[0].mxu0
      %6460 = vmatprep.mubr.bf16.mxu0 0
      %6461 = vmatmul.mubr.bf16.gmra.mrb[0].mxu0 %v6297
      %v6462 = vpop.f32.mrb[0].mxu0
      %v6463 = vadd.f32 0.0, %v6462
      %v6464 = vpop.f32.mrb[0].mxu0
      %v6465 = vpop.f32.mrb[0].mxu0
      %v6466 = vadd.f32 0.0, %v6465
      %v6467 = vpop.f32.mrb[0].mxu0
      %6468 = vmatprep.mubr.bf16.mxu0 0
      %6469 = vmatmul.mubr.bf16.gmra.mrb[0].mxu0 %v6300
      %v6470 = vpop.f32.mrb[0].mxu0
      %v6471 = vadd.f32 0.0, %v6470
      %v6472 = vpop.f32.mrb[0].mxu0
      %v6473 = vpop.f32.mrb[0].mxu0
      %v6474 = vadd.f32 0.0, %v6473
      %v6475 = vpop.f32.mrb[0].mxu0
      %6476 = vmatprep.mubr.bf16.mxu0 0
      %6477 = vmatmul.mubr.bf16.gmra.mrb[0].mxu0 %v6303
      %v6478 = vpop.f32.mrb[0].mxu0
      %v6479 = vadd.f32 0.0, %v6478
      %v6480 = vpop.f32.mrb[0].mxu0
      %v6481 = vpop.f32.mrb[0].mxu0
      %v6482 = vadd.f32 0.0, %v6481
      %v6483 = vpop.f32.mrb[0].mxu0
      %6484 = vmatprep.mubr.bf16.mxu0 0
      %6485 = vmatmul.mubr.bf16.gmra.mrb[0].mxu0 %v6306
      %v6486 = vpop.f32.mrb[0].mxu0
      %v6487 = vadd.f32 0.0, %v6486
      %v6488 = vpop.f32.mrb[0].mxu0
      %v6489 = vpop.f32.mrb[0].mxu0
      %v6490 = vadd.f32 0.0, %v6489
      %v6491 = vpop.f32.mrb[0].mxu0
      %6492 = vmatprep.mubr.bf16.mxu0 0
      %6493 = vmatmul.mubr.bf16.gmra.mrb[0].mxu0 %v6309
      %v6494 = vpop.f32.mrb[0].mxu0
      %v6495 = vadd.f32 0.0, %v6494
      %v6496 = vpop.f32.mrb[0].mxu0
      %v6497 = vpop.f32.mrb[0].mxu0
      %v6498 = vadd.f32 0.0, %v6497
      %v6499 = vpop.f32.mrb[0].mxu0
      %6500 = vmatprep.mubr.bf16.mxu0 0
      %6501 = vmatmul.mubr.bf16.gmra.mrb[0].mxu0 %v6312
      %v6502 = vpop.f32.mrb[0].mxu0
      %v6503 = vadd.f32 0.0, %v6502
      %v6504 = vpop.f32.mrb[0].mxu0
      %v6505 = vpop.f32.mrb[0].mxu0
      %v6506 = vadd.f32 0.0, %v6505
      %v6507 = vpop.f32.mrb[0].mxu0
      %6508 = vmatprep.mubr.bf16.mxu0 0
      %6509 = vmatmul.mubr.bf16.gmra.mrb[0].mxu0 %v6315
      %v6510 = vpop.f32.mrb[0].mxu0
      %v6511 = vadd.f32 0.0, %v6510
      %v6512 = vpop.f32.mrb[0].mxu0
      %v6513 = vpop.f32.mrb[0].mxu0
      %v6514 = vadd.f32 0.0, %v6513
      %v6515 = vpop.f32.mrb[0].mxu0
      %6516 = vmatprep.mubr.bf16.mxu0 0
      %6517 = vmatmul.mubr.bf16.gmra.mrb[0].mxu0 %v6318
      %v6518 = vpop.f32.mrb[0].mxu0
      %v6519 = vadd.f32 0.0, %v6518
      %v6520 = vpop.f32.mrb[0].mxu0
      %v6521 = vpop.f32.mrb[0].mxu0
      %v6522 = vpop.f32.mrb[0].mxu0
      %6523 = vdwg.mxu0
      %v6524 = vadd.f32 %v6018, %v6359
      %v6525 = vadd.f32 %v6021, %v6362
      %v6526 = vadd.f32 %v6026, %v6367
      %v6527 = vadd.f32 %v6029, %v6370
      %v6528 = vadd.f32 %v6034, %v6375
      %v6529 = vadd.f32 %v6037, %v6378
      %v6530 = vadd.f32 %v6042, %v6383
      %v6531 = vadd.f32 %v6045, %v6386
      %v6532 = vadd.f32 %v6050, %v6391
      %v6533 = vadd.f32 %v6053, %v6394
      %v6534 = vadd.f32 %v6058, %v6399
      %v6535 = vadd.f32 %v6061, %v6402
      %v6536 = vadd.f32 %v6066, %v6407
      %v6537 = vadd.f32 %v6069, %v6410
      %v6538 = vadd.f32 %v6074, %v6415
      %v6539 = vadd.f32 %v6077, %v6418
      %v6540 = vadd.f32 %v6082, %v6423
      %v6541 = vadd.f32 %v6085, %v6426
      %v6542 = vadd.f32 %v6090, %v6431
      %v6543 = vadd.f32 %v6093, %v6434
      %v6544 = vadd.f32 %v6098, %v6439
      %v6545 = vadd.f32 %v6101, %v6442
      %v6546 = vadd.f32 %v6106, %v6447
      %v6547 = vadd.f32 %v6109, %v6450
      %v6548 = vadd.f32 %v6114, %v6455
      %v6549 = vadd.f32 %v6117, %v6458
      %v6550 = vadd.f32 %v6122, %v6463
      %v6551 = vadd.f32 %v6125, %v6466
      %v6552 = vadd.f32 %v6130, %v6471
      %v6553 = vadd.f32 %v6133, %v6474
      %v6554 = vadd.f32 %v6138, %v6479
      %v6555 = vadd.f32 %v6141, %v6482
      %v6556 = vadd.f32 %v6146, %v6487
      %v6557 = vadd.f32 %v6149, %v6490
      %v6558 = vadd.f32 %v6154, %v6495
      %v6559 = vadd.f32 %v6157, %v6498
      %v6560 = vadd.f32 %v6162, %v6503
      %v6561 = vadd.f32 %v6165, %v6506
      %v6562 = vadd.f32 %v6170, %v6511
      %v6563 = vadd.f32 %v6173, %v6514
      %v6564 = vadd.f32 %v6178, %v6519
      %v6565 = vld [vmem:[#allocation2 + $0x18] sm:$0xff]
      %v6566 = vld [vmem:[#allocation2 + $0x20] sm:$0xff]
      %v6567 = vld [vmem:[#allocation2 + $0x28] sm:$0xff]
      %v6568 = vld [vmem:[#allocation2 + $0x30] sm:$0xff]
      %v6569 = vld [vmem:[#allocation2 + $0x38] sm:$0xff]
      %v6570 = vld [vmem:[#allocation2 + $0x40] sm:$0xff]
      %v6571 = vld [vmem:[#allocation2 + $0x48] sm:$0xff]
      %v6572 = vld [vmem:[#allocation2 + $0x50] sm:$0xff]
      %v6573 = vld [vmem:[#allocation2 + $0x58] sm:$0xff]
      %v6574 = vld [vmem:[#allocation2 + $0x60] sm:$0xff]
      %v6575 = vld [vmem:[#allocation2 + $0x68] sm:$0xff]
      %v6576 = vld [vmem:[#allocation2 + $0x70] sm:$0xff]
      %v6577 = vld [vmem:[#allocation2 + $0x78] sm:$0xff]
      %v6578 = vld [vmem:[#allocation2 + $0x80] sm:$0xff]
      %v6579 = vld [vmem:[#allocation2 + $0x88] sm:$0xff]
      %v6580 = vld [vmem:[#allocation2 + $0x90] sm:$0xff]
      %v6581 = vld [vmem:[#allocation2 + $0x98] sm:$0xff]
      %v6582 = vld [vmem:[#allocation2 + $0xa0] sm:$0xff]
      %v6583 = vld [vmem:[#allocation2 + $0xa8] sm:$0xff]
      %v6584 = vld [vmem:[#allocation2 + $0xb0] sm:$0xff]
      %v6585 = vld [vmem:[#allocation2 + $0xb8] sm:$0xff]
      %v6586 = vld [vmem:[#allocation2 + $0xc0] sm:$0xff]
      %v6587 = vld [vmem:[#allocation2 + $0xc8] sm:$0xff]
      %v6588 = vld [vmem:[#allocation2 + $0xd0] sm:$0xff]
      %v6589 = vld [vmem:[#allocation2 + $0xd8] sm:$0xff]
      %v6590 = vld [vmem:[#allocation2 + $0xe0] sm:$0xff]
      %v6591 = vld [vmem:[#allocation2 + $0xe8] sm:$0xff]
      %v6592 = vld [vmem:[#allocation2 + $0xf0] sm:$0xff]
      %v6593 = vld [vmem:[#allocation2 + $0xf8] sm:$0xff]
      %v6594 = vld [vmem:[#allocation2 + $0x100] sm:$0xff]
      %v6595 = vld [vmem:[#allocation2 + $0x108] sm:$0xff]
      %v6596 = vld [vmem:[#allocation2 + $0x110] sm:$0xff]
      %v6597 = vld [vmem:[#allocation2 + $0x118] sm:$0xff]
      %v6598 = vld [vmem:[#allocation2 + $0x120] sm:$0xff]
      %v6599 = vld [vmem:[#allocation2 + $0x128] sm:$0xff]
      %v6600 = vld [vmem:[#allocation2 + $0x130] sm:$0xff]
      %v6601 = vld [vmem:[#allocation2 + $0x138] sm:$0xff]
      %v6602 = vld [vmem:[#allocation2 + $0x140] sm:$0xff]
      %v6603 = vld [vmem:[#allocation2 + $0x148] sm:$0xff]
      %v6604 = vld [vmem:[#allocation2 + $0x150] sm:$0xff]
      %v6605 = vld [vmem:[#allocation2 + $0x158] sm:$0xff]
      %v6606 = vpack.c.bf16 %v6566, %v6565
      %v6607 = vpack.c.bf16 %v6568, %v6567
      %v6608 = vpack.c.bf16 %v6570, %v6569
      %v6609 = vpack.c.bf16 %v6572, %v6571
      %v6610 = vpack.c.bf16 %v6574, %v6573
      %v6611 = vpack.c.bf16 %v6576, %v6575
      %v6612 = vpack.c.bf16 %v6578, %v6577
      %v6613 = vpack.c.bf16 %v6580, %v6579
      %v6614 = vpack.c.bf16 %v6582, %v6581
      %v6615 = vpack.c.bf16 %v6584, %v6583
      %v6616 = vpack.c.bf16 %v6586, %v6585
      %v6617 = vpack.c.bf16 %v6588, %v6587
      %v6618 = vpack.c.bf16 %v6590, %v6589
      %v6619 = vpack.c.bf16 %v6592, %v6591
      %v6620 = vpack.c.bf16 %v6594, %v6593
      %v6621 = vpack.c.bf16 %v6596, %v6595
      %v6622 = vpack.c.bf16 %v6598, %v6597
      %v6623 = vpack.c.bf16 %v6600, %v6599
      %v6624 = vpack.c.bf16 %v6602, %v6601
      %v6625 = vpack.c.bf16 %v6604, %v6603
      %v6626 = vpack.c.bf16 %v6605, %v6605
      %s6627 = scalar_lea.vmem %s6, 12
      %v6628 = vld [vmem:[%s6627] sm:$0xf]
      %v6629 = vld [vmem:[%s6627 + $0x4] sm:$0xf]
      %v6630 = vld [vmem:[%s6627 + $0x8] sm:$0xf]
      %v6634 = vunpack.c.l.b16 %v6628
      %v6635 = vunpack.c.l.b16 %v6629
      %v6636 = vunpack.c.l.b16 %v6630
      %v6637 = vpack.c.b16 %v6635, %v6634
      %v6638 = vpack.c.b16 %v6636, %v6636
      %v6641 = vsel %vm835, %v6606, 0
      %v6644 = vsel %vm835, %v6607, 0
      %v6647 = vsel %vm835, %v6608, 0
      %v6650 = vsel %vm835, %v6609, 0
      %v6653 = vsel %vm835, %v6610, 0
      %v6656 = vsel %vm835, %v6611, 0
      %v6659 = vsel %vm835, %v6612, 0
      %v6662 = vsel %vm835, %v6613, 0
      %v6665 = vsel %vm835, %v6614, 0
      %v6668 = vsel %vm835, %v6615, 0
      %v6671 = vsel %vm835, %v6616, 0
      %v6674 = vsel %vm835, %v6617, 0
      %v6677 = vsel %vm835, %v6618, 0
      %v6680 = vsel %vm835, %v6619, 0
      %v6683 = vsel %vm835, %v6620, 0
      %v6686 = vsel %vm835, %v6621, 0
      %v6689 = vsel %vm835, %v6622, 0
      %v6692 = vsel %vm835, %v6623, 0
      %v6695 = vsel %vm835, %v6624, 0
      %v6698 = vsel %vm835, %v6625, 0
      %v6701 = vsel %vm835, %v6626, 0
      %v6704 = vsel %vm6320, %v6638, 0
      %6706 = vmatprep.subr.bf16.mxu0 0
      %6707 = vmatpush1.bf16.msra.mxu0 %v6637
      %6708 = vmatprep.subr.bf16.mxu0 0
      %6709 = vmatpush1.bf16.msra.mxu0 %v6704
      %6710 = vmatprep.subr.bf16.mxu0 0
      %6711 = vmatpush1.bf16.msra.mxu0 0
      %6712 = vmatprep.subr.bf16.mxu0 0
      %6713 = vmatpush1.bf16.msra.mxu0 0
      %6714 = vmatprep.subr.bf16.mxu0 0
      %6715 = vmatpush1.bf16.msra.mxu0 0
      %6716 = vmatprep.subr.bf16.mxu0 0
      %6717 = vmatpush1.bf16.msra.mxu0 0
      %6718 = vmatprep.subr.bf16.mxu0 0
      %6719 = vmatpush1.bf16.msra.mxu0 0
      %6720 = vmatprep.subr.bf16.mxu0 0
      %6721 = vmatpush1.bf16.msra.mxu0 0
      %6722 = vmatprep.subr.bf16.mxu0 0
      %6723 = vmatpush1.bf16.msra.mxu0 0
      %6724 = vmatprep.subr.bf16.mxu0 0
      %6725 = vmatpush1.bf16.msra.mxu0 0
      %6726 = vmatprep.subr.bf16.mxu0 0
      %6727 = vmatpush1.bf16.msra.mxu0 0
      %6728 = vmatprep.subr.bf16.mxu0 0
      %6729 = vmatpush1.bf16.msra.mxu0 0
      %6730 = vmatprep.subr.bf16.mxu0 0
      %6731 = vmatpush1.bf16.msra.mxu0 0
      %6732 = vmatprep.subr.bf16.mxu0 0
      %6733 = vmatpush1.bf16.msra.mxu0 0
      %6734 = vmatprep.subr.bf16.mxu0 0
      %6735 = vmatpush1.bf16.msra.mxu0 0
      %6736 = vmatprep.subr.bf16.mxu0 0
      %6737 = vmatpush1.bf16.msra.mxu0 0
      %6738 = vmatprep.mubr.bf16.mxu0 0
      %6739 = vmatmul.mubr.bf16.gmra.mrb[0].mxu0 %v6641
      %v6740 = vpop.f32.mrb[0].mxu0
      %v6741 = vadd.f32 0.0, %v6740
      %v6742 = vpop.f32.mrb[0].mxu0
      %v6743 = vpop.f32.mrb[0].mxu0
      %v6744 = vadd.f32 0.0, %v6743
      %v6745 = vpop.f32.mrb[0].mxu0
      %6746 = vmatprep.mubr.bf16.mxu0 0
      %6747 = vmatmul.mubr.bf16.gmra.mrb[0].mxu0 %v6644
      %v6748 = vpop.f32.mrb[0].mxu0
      %v6749 = vadd.f32 0.0, %v6748
      %v6750 = vpop.f32.mrb[0].mxu0
      %v6751 = vpop.f32.mrb[0].mxu0
      %v6752 = vadd.f32 0.0, %v6751
      %v6753 = vpop.f32.mrb[0].mxu0
      %6754 = vmatprep.mubr.bf16.mxu0 0
      %6755 = vmatmul.mubr.bf16.gmra.mrb[0].mxu0 %v6647
      %v6756 = vpop.f32.mrb[0].mxu0
      %v6757 = vadd.f32 0.0, %v6756
      %v6758 = vpop.f32.mrb[0].mxu0
      %v6759 = vpop.f32.mrb[0].mxu0
      %v6760 = vadd.f32 0.0, %v6759
      %v6761 = vpop.f32.mrb[0].mxu0
      %6762 = vmatprep.mubr.bf16.mxu0 0
      %6763 = vmatmul.mubr.bf16.gmra.mrb[0].mxu0 %v6650
      %v6764 = vpop.f32.mrb[0].mxu0
      %v6765 = vadd.f32 0.0, %v6764
      %v6766 = vpop.f32.mrb[0].mxu0
      %v6767 = vpop.f32.mrb[0].mxu0
      %v6768 = vadd.f32 0.0, %v6767
      %v6769 = vpop.f32.mrb[0].mxu0
      %6770 = vmatprep.mubr.bf16.mxu0 0
      %6771 = vmatmul.mubr.bf16.gmra.mrb[0].mxu0 %v6653
      %v6772 = vpop.f32.mrb[0].mxu0
      %v6773 = vadd.f32 0.0, %v6772
      %v6774 = vpop.f32.mrb[0].mxu0
      %v6775 = vpop.f32.mrb[0].mxu0
      %v6776 = vadd.f32 0.0, %v6775
      %v6777 = vpop.f32.mrb[0].mxu0
      %6778 = vmatprep.mubr.bf16.mxu0 0
      %6779 = vmatmul.mubr.bf16.gmra.mrb[0].mxu0 %v6656
      %v6780 = vpop.f32.mrb[0].mxu0
      %v6781 = vadd.f32 0.0, %v6780
      %v6782 = vpop.f32.mrb[0].mxu0
      %v6783 = vpop.f32.mrb[0].mxu0
      %v6784 = vadd.f32 0.0, %v6783
      %v6785 = vpop.f32.mrb[0].mxu0
      %6786 = vmatprep.mubr.bf16.mxu0 0
      %6787 = vmatmul.mubr.bf16.gmra.mrb[0].mxu0 %v6659
      %v6788 = vpop.f32.mrb[0].mxu0
      %v6789 = vadd.f32 0.0, %v6788
      %v6790 = vpop.f32.mrb[0].mxu0
      %v6791 = vpop.f32.mrb[0].mxu0
      %v6792 = vadd.f32 0.0, %v6791
      %v6793 = vpop.f32.mrb[0].mxu0
      %6794 = vmatprep.mubr.bf16.mxu0 0
      %6795 = vmatmul.mubr.bf16.gmra.mrb[0].mxu0 %v6662
      %v6796 = vpop.f32.mrb[0].mxu0
      %v6797 = vadd.f32 0.0, %v6796
      %v6798 = vpop.f32.mrb[0].mxu0
      %v6799 = vpop.f32.mrb[0].mxu0
      %v6800 = vadd.f32 0.0, %v6799
      %v6801 = vpop.f32.mrb[0].mxu0
      %6802 = vmatprep.mubr.bf16.mxu0 0
      %6803 = vmatmul.mubr.bf16.gmra.mrb[0].mxu0 %v6665
      %v6804 = vpop.f32.mrb[0].mxu0
      %v6805 = vadd.f32 0.0, %v6804
      %v6806 = vpop.f32.mrb[0].mxu0
      %v6807 = vpop.f32.mrb[0].mxu0
      %v6808 = vadd.f32 0.0, %v6807
      %v6809 = vpop.f32.mrb[0].mxu0
      %6810 = vmatprep.mubr.bf16.mxu0 0
      %6811 = vmatmul.mubr.bf16.gmra.mrb[0].mxu0 %v6668
      %v6812 = vpop.f32.mrb[0].mxu0
      %v6813 = vadd.f32 0.0, %v6812
      %v6814 = vpop.f32.mrb[0].mxu0
      %v6815 = vpop.f32.mrb[0].mxu0
      %v6816 = vadd.f32 0.0, %v6815
      %v6817 = vpop.f32.mrb[0].mxu0
      %6818 = vmatprep.mubr.bf16.mxu0 0
      %6819 = vmatmul.mubr.bf16.gmra.mrb[0].mxu0 %v6671
      %v6820 = vpop.f32.mrb[0].mxu0
      %v6821 = vadd.f32 0.0, %v6820
      %v6822 = vpop.f32.mrb[0].mxu0
      %v6823 = vpop.f32.mrb[0].mxu0
      %v6824 = vadd.f32 0.0, %v6823
      %v6825 = vpop.f32.mrb[0].mxu0
      %6826 = vmatprep.mubr.bf16.mxu0 0
      %6827 = vmatmul.mubr.bf16.gmra.mrb[0].mxu0 %v6674
      %v6828 = vpop.f32.mrb[0].mxu0
      %v6829 = vadd.f32 0.0, %v6828
      %v6830 = vpop.f32.mrb[0].mxu0
      %v6831 = vpop.f32.mrb[0].mxu0
      %v6832 = vadd.f32 0.0, %v6831
      %v6833 = vpop.f32.mrb[0].mxu0
      %6834 = vmatprep.mubr.bf16.mxu0 0
      %6835 = vmatmul.mubr.bf16.gmra.mrb[0].mxu0 %v6677
      %v6836 = vpop.f32.mrb[0].mxu0
      %v6837 = vadd.f32 0.0, %v6836
      %v6838 = vpop.f32.mrb[0].mxu0
      %v6839 = vpop.f32.mrb[0].mxu0
      %v6840 = vadd.f32 0.0, %v6839
      %v6841 = vpop.f32.mrb[0].mxu0
      %6842 = vmatprep.mubr.bf16.mxu0 0
      %6843 = vmatmul.mubr.bf16.gmra.mrb[0].mxu0 %v6680
      %v6844 = vpop.f32.mrb[0].mxu0
      %v6845 = vadd.f32 0.0, %v6844
      %v6846 = vpop.f32.mrb[0].mxu0
      %v6847 = vpop.f32.mrb[0].mxu0
      %v6848 = vadd.f32 0.0, %v6847
      %v6849 = vpop.f32.mrb[0].mxu0
      %6850 = vmatprep.mubr.bf16.mxu0 0
      %6851 = vmatmul.mubr.bf16.gmra.mrb[0].mxu0 %v6683
      %v6852 = vpop.f32.mrb[0].mxu0
      %v6853 = vadd.f32 0.0, %v6852
      %v6854 = vpop.f32.mrb[0].mxu0
      %v6855 = vpop.f32.mrb[0].mxu0
      %v6856 = vadd.f32 0.0, %v6855
      %v6857 = vpop.f32.mrb[0].mxu0
      %6858 = vmatprep.mubr.bf16.mxu0 0
      %6859 = vmatmul.mubr.bf16.gmra.mrb[0].mxu0 %v6686
      %v6860 = vpop.f32.mrb[0].mxu0
      %v6861 = vadd.f32 0.0, %v6860
      %v6862 = vpop.f32.mrb[0].mxu0
      %v6863 = vpop.f32.mrb[0].mxu0
      %v6864 = vadd.f32 0.0, %v6863
      %v6865 = vpop.f32.mrb[0].mxu0
      %6866 = vmatprep.mubr.bf16.mxu0 0
      %6867 = vmatmul.mubr.bf16.gmra.mrb[0].mxu0 %v6689
      %v6868 = vpop.f32.mrb[0].mxu0
      %v6869 = vadd.f32 0.0, %v6868
      %v6870 = vpop.f32.mrb[0].mxu0
      %v6871 = vpop.f32.mrb[0].mxu0
      %v6872 = vadd.f32 0.0, %v6871
      %v6873 = vpop.f32.mrb[0].mxu0
      %6874 = vmatprep.mubr.bf16.mxu0 0
      %6875 = vmatmul.mubr.bf16.gmra.mrb[0].mxu0 %v6692
      %v6876 = vpop.f32.mrb[0].mxu0
      %v6877 = vadd.f32 0.0, %v6876
      %v6878 = vpop.f32.mrb[0].mxu0
      %v6879 = vpop.f32.mrb[0].mxu0
      %v6880 = vadd.f32 0.0, %v6879
      %v6881 = vpop.f32.mrb[0].mxu0
      %6882 = vmatprep.mubr.bf16.mxu0 0
      %6883 = vmatmul.mubr.bf16.gmra.mrb[0].mxu0 %v6695
      %v6884 = vpop.f32.mrb[0].mxu0
      %v6885 = vadd.f32 0.0, %v6884
      %v6886 = vpop.f32.mrb[0].mxu0
      %v6887 = vpop.f32.mrb[0].mxu0
      %v6888 = vadd.f32 0.0, %v6887
      %v6889 = vpop.f32.mrb[0].mxu0
      %6890 = vmatprep.mubr.bf16.mxu0 0
      %6891 = vmatmul.mubr.bf16.gmra.mrb[0].mxu0 %v6698
      %v6892 = vpop.f32.mrb[0].mxu0
      %v6893 = vadd.f32 0.0, %v6892
      %v6894 = vpop.f32.mrb[0].mxu0
      %v6895 = vpop.f32.mrb[0].mxu0
      %v6896 = vadd.f32 0.0, %v6895
      %v6897 = vpop.f32.mrb[0].mxu0
      %6898 = vmatprep.mubr.bf16.mxu0 0
      %6899 = vmatmul.mubr.bf16.gmra.mrb[0].mxu0 %v6701
      %v6900 = vpop.f32.mrb[0].mxu0
      %v6901 = vadd.f32 0.0, %v6900
      %v6902 = vpop.f32.mrb[0].mxu0
      %v6903 = vpop.f32.mrb[0].mxu0
      %v6904 = vpop.f32.mrb[0].mxu0
      %6905 = vdwg.mxu0
      %v6906 = vadd.f32 %v6524, %v6741
      %v6907 = vadd.f32 %v6525, %v6744
      %v6908 = vadd.f32 %v6526, %v6749
      %v6909 = vadd.f32 %v6527, %v6752
      %v6910 = vadd.f32 %v6528, %v6757
      %v6911 = vadd.f32 %v6529, %v6760
      %v6912 = vadd.f32 %v6530, %v6765
      %v6913 = vadd.f32 %v6531, %v6768
      %v6914 = vadd.f32 %v6532, %v6773
      %v6915 = vadd.f32 %v6533, %v6776
      %v6916 = vadd.f32 %v6534, %v6781
      %v6917 = vadd.f32 %v6535, %v6784
      %v6918 = vadd.f32 %v6536, %v6789
      %v6919 = vadd.f32 %v6537, %v6792
      %v6920 = vadd.f32 %v6538, %v6797
      %v6921 = vadd.f32 %v6539, %v6800
      %v6922 = vadd.f32 %v6540, %v6805
      %v6923 = vadd.f32 %v6541, %v6808
      %v6924 = vadd.f32 %v6542, %v6813
      %v6925 = vadd.f32 %v6543, %v6816
      %v6926 = vadd.f32 %v6544, %v6821
      %v6927 = vadd.f32 %v6545, %v6824
      %v6928 = vadd.f32 %v6546, %v6829
      %v6929 = vadd.f32 %v6547, %v6832
      %v6930 = vadd.f32 %v6548, %v6837
      %v6931 = vadd.f32 %v6549, %v6840
      %v6932 = vadd.f32 %v6550, %v6845
      %v6933 = vadd.f32 %v6551, %v6848
      %v6934 = vadd.f32 %v6552, %v6853
      %v6935 = vadd.f32 %v6553, %v6856
      %v6936 = vadd.f32 %v6554, %v6861
      %v6937 = vadd.f32 %v6555, %v6864
      %v6938 = vadd.f32 %v6556, %v6869
      %v6939 = vadd.f32 %v6557, %v6872
      %v6940 = vadd.f32 %v6558, %v6877
      %v6941 = vadd.f32 %v6559, %v6880
      %v6942 = vadd.f32 %v6560, %v6885
      %v6943 = vadd.f32 %v6561, %v6888
      %v6944 = vadd.f32 %v6562, %v6893
      %v6945 = vadd.f32 %v6563, %v6896
      %v6946 = vadd.f32 %v6564, %v6901
      %v6947 = vld [vmem:[#allocation2 + $0x19] sm:$0xff]
      %v6948 = vld [vmem:[#allocation2 + $0x21] sm:$0xff]
      %v6949 = vld [vmem:[#allocation2 + $0x29] sm:$0xff]
      %v6950 = vld [vmem:[#allocation2 + $0x31] sm:$0xff]
      %v6951 = vld [vmem:[#allocation2 + $0x39] sm:$0xff]
      %v6952 = vld [vmem:[#allocation2 + $0x41] sm:$0xff]
      %v6953 = vld [vmem:[#allocation2 + $0x49] sm:$0xff]
      %v6954 = vld [vmem:[#allocation2 + $0x51] sm:$0xff]
      %v6955 = vld [vmem:[#allocation2 + $0x59] sm:$0xff]
      %v6956 = vld [vmem:[#allocation2 + $0x61] sm:$0xff]
      %v6957 = vld [vmem:[#allocation2 + $0x69] sm:$0xff]
      %v6958 = vld [vmem:[#allocation2 + $0x71] sm:$0xff]
      %v6959 = vld [vmem:[#allocation2 + $0x79] sm:$0xff]
      %v6960 = vld [vmem:[#allocation2 + $0x81] sm:$0xff]
      %v6961 = vld [vmem:[#allocation2 + $0x89] sm:$0xff]
      %v6962 = vld [vmem:[#allocation2 + $0x91] sm:$0xff]
      %v6963 = vld [vmem:[#allocation2 + $0x99] sm:$0xff]
      %v6964 = vld [vmem:[#allocation2 + $0xa1] sm:$0xff]
      %v6965 = vld [vmem:[#allocation2 + $0xa9] sm:$0xff]
      %v6966 = vld [vmem:[#allocation2 + $0xb1] sm:$0xff]
      %v6967 = vld [vmem:[#allocation2 + $0xb9] sm:$0xff]
      %v6968 = vld [vmem:[#allocation2 + $0xc1] sm:$0xff]
      %v6969 = vld [vmem:[#allocation2 + $0xc9] sm:$0xff]
      %v6970 = vld [vmem:[#allocation2 + $0xd1] sm:$0xff]
      %v6971 = vld [vmem:[#allocation2 + $0xd9] sm:$0xff]
      %v6972 = vld [vmem:[#allocation2 + $0xe1] sm:$0xff]
      %v6973 = vld [vmem:[#allocation2 + $0xe9] sm:$0xff]
      %v6974 = vld [vmem:[#allocation2 + $0xf1] sm:$0xff]
      %v6975 = vld [vmem:[#allocation2 + $0xf9] sm:$0xff]
      %v6976 = vld [vmem:[#allocation2 + $0x101] sm:$0xff]
      %v6977 = vld [vmem:[#allocation2 + $0x109] sm:$0xff]
      %v6978 = vld [vmem:[#allocation2 + $0x111] sm:$0xff]
      %v6979 = vld [vmem:[#allocation2 + $0x119] sm:$0xff]
      %v6980 = vld [vmem:[#allocation2 + $0x121] sm:$0xff]
      %v6981 = vld [vmem:[#allocation2 + $0x129] sm:$0xff]
      %v6982 = vld [vmem:[#allocation2 + $0x131] sm:$0xff]
      %v6983 = vld [vmem:[#allocation2 + $0x139] sm:$0xff]
      %v6984 = vld [vmem:[#allocation2 + $0x141] sm:$0xff]
      %v6985 = vld [vmem:[#allocation2 + $0x149] sm:$0xff]
      %v6986 = vld [vmem:[#allocation2 + $0x151] sm:$0xff]
      %v6987 = vld [vmem:[#allocation2 + $0x159] sm:$0xff]
      %v6988 = vpack.c.bf16 %v6948, %v6947
      %v6989 = vpack.c.bf16 %v6950, %v6949
      %v6990 = vpack.c.bf16 %v6952, %v6951
      %v6991 = vpack.c.bf16 %v6954, %v6953
      %v6992 = vpack.c.bf16 %v6956, %v6955
      %v6993 = vpack.c.bf16 %v6958, %v6957
      %v6994 = vpack.c.bf16 %v6960, %v6959
      %v6995 = vpack.c.bf16 %v6962, %v6961
      %v6996 = vpack.c.bf16 %v6964, %v6963
      %v6997 = vpack.c.bf16 %v6966, %v6965
      %v6998 = vpack.c.bf16 %v6968, %v6967
      %v6999 = vpack.c.bf16 %v6970, %v6969
      %v7000 = vpack.c.bf16 %v6972, %v6971
      %v7001 = vpack.c.bf16 %v6974, %v6973
      %v7002 = vpack.c.bf16 %v6976, %v6975
      %v7003 = vpack.c.bf16 %v6978, %v6977
      %v7004 = vpack.c.bf16 %v6980, %v6979
      %v7005 = vpack.c.bf16 %v6982, %v6981
      %v7006 = vpack.c.bf16 %v6984, %v6983
      %v7007 = vpack.c.bf16 %v6986, %v6985
      %v7008 = vpack.c.bf16 %v6987, %v6987
      %s7009 = scalar_lea.vmem %s6, 24
      %v7010 = vld [vmem:[%s7009] sm:$0xf]
      %v7011 = vld [vmem:[%s7009 + $0x4] sm:$0xf]
      %v7012 = vld [vmem:[%s7009 + $0x8] sm:$0xf]
      %v7016 = vunpack.c.l.b16 %v7010
      %v7017 = vunpack.c.l.b16 %v7011
      %v7018 = vunpack.c.l.b16 %v7012
      %v7019 = vpack.c.b16 %v7017, %v7016
      %v7020 = vpack.c.b16 %v7018, %v7018
      %v7023 = vsel %vm835, %v6988, 0
      %v7026 = vsel %vm835, %v6989, 0
      %v7029 = vsel %vm835, %v6990, 0
      %v7032 = vsel %vm835, %v6991, 0
      %v7035 = vsel %vm835, %v6992, 0
      %v7038 = vsel %vm835, %v6993, 0
      %v7041 = vsel %vm835, %v6994, 0
      %v7044 = vsel %vm835, %v6995, 0
      %v7047 = vsel %vm835, %v6996, 0
      %v7050 = vsel %vm835, %v6997, 0
      %v7053 = vsel %vm835, %v6998, 0
      %v7056 = vsel %vm835, %v6999, 0
      %v7059 = vsel %vm835, %v7000, 0
      %v7062 = vsel %vm835, %v7001, 0
      %v7065 = vsel %vm835, %v7002, 0
      %v7068 = vsel %vm835, %v7003, 0
      %v7071 = vsel %vm835, %v7004, 0
      %v7074 = vsel %vm835, %v7005, 0
      %v7077 = vsel %vm835, %v7006, 0
      %v7080 = vsel %vm835, %v7007, 0
      %v7083 = vsel %vm835, %v7008, 0
      %v7086 = vsel %vm6320, %v7020, 0
      %7088 = vmatprep.subr.bf16.mxu0 0
      %7089 = vmatpush1.bf16.msra.mxu0 %v7019
      %7090 = vmatprep.subr.bf16.mxu0 0
      %7091 = vmatpush1.bf16.msra.mxu0 %v7086
      %7092 = vmatprep.subr.bf16.mxu0 0
      %7093 = vmatpush1.bf16.msra.mxu0 0
      %7094 = vmatprep.subr.bf16.mxu0 0
      %7095 = vmatpush1.bf16.msra.mxu0 0
      %7096 = vmatprep.subr.bf16.mxu0 0
      %7097 = vmatpush1.bf16.msra.mxu0 0
      %7098 = vmatprep.subr.bf16.mxu0 0
      %7099 = vmatpush1.bf16.msra.mxu0 0
      %7100 = vmatprep.subr.bf16.mxu0 0
      %7101 = vmatpush1.bf16.msra.mxu0 0
      %7102 = vmatprep.subr.bf16.mxu0 0
      %7103 = vmatpush1.bf16.msra.mxu0 0
      %7104 = vmatprep.subr.bf16.mxu0 0
      %7105 = vmatpush1.bf16.msra.mxu0 0
      %7106 = vmatprep.subr.bf16.mxu0 0
      %7107 = vmatpush1.bf16.msra.mxu0 0
      %7108 = vmatprep.subr.bf16.mxu0 0
      %7109 = vmatpush1.bf16.msra.mxu0 0
      %7110 = vmatprep.subr.bf16.mxu0 0
      %7111 = vmatpush1.bf16.msra.mxu0 0
      %7112 = vmatprep.subr.bf16.mxu0 0
      %7113 = vmatpush1.bf16.msra.mxu0 0
      %7114 = vmatprep.subr.bf16.mxu0 0
      %7115 = vmatpush1.bf16.msra.mxu0 0
      %7116 = vmatprep.subr.bf16.mxu0 0
      %7117 = vmatpush1.bf16.msra.mxu0 0
      %7118 = vmatprep.subr.bf16.mxu0 0
      %7119 = vmatpush1.bf16.msra.mxu0 0
      %7120 = vmatprep.mubr.bf16.mxu0 0
      %7121 = vmatmul.mubr.bf16.gmra.mrb[0].mxu0 %v7023
      %v7122 = vpop.f32.mrb[0].mxu0
      %v7123 = vadd.f32 0.0, %v7122
      %v7124 = vpop.f32.mrb[0].mxu0
      %v7125 = vpop.f32.mrb[0].mxu0
      %v7126 = vadd.f32 0.0, %v7125
      %v7127 = vpop.f32.mrb[0].mxu0
      %7128 = vmatprep.mubr.bf16.mxu0 0
      %7129 = vmatmul.mubr.bf16.gmra.mrb[0].mxu0 %v7026
      %v7130 = vpop.f32.mrb[0].mxu0
      %v7131 = vadd.f32 0.0, %v7130
      %v7132 = vpop.f32.mrb[0].mxu0
      %v7133 = vpop.f32.mrb[0].mxu0
      %v7134 = vadd.f32 0.0, %v7133
      %v7135 = vpop.f32.mrb[0].mxu0
      %7136 = vmatprep.mubr.bf16.mxu0 0
      %7137 = vmatmul.mubr.bf16.gmra.mrb[0].mxu0 %v7029
      %v7138 = vpop.f32.mrb[0].mxu0
      %v7139 = vadd.f32 0.0, %v7138
      %v7140 = vpop.f32.mrb[0].mxu0
      %v7141 = vpop.f32.mrb[0].mxu0
      %v7142 = vadd.f32 0.0, %v7141
      %v7143 = vpop.f32.mrb[0].mxu0
      %7144 = vmatprep.mubr.bf16.mxu0 0
      %7145 = vmatmul.mubr.bf16.gmra.mrb[0].mxu0 %v7032
      %v7146 = vpop.f32.mrb[0].mxu0
      %v7147 = vadd.f32 0.0, %v7146
      %v7148 = vpop.f32.mrb[0].mxu0
      %v7149 = vpop.f32.mrb[0].mxu0
      %v7150 = vadd.f32 0.0, %v7149
      %v7151 = vpop.f32.mrb[0].mxu0
      %7152 = vmatprep.mubr.bf16.mxu0 0
      %7153 = vmatmul.mubr.bf16.gmra.mrb[0].mxu0 %v7035
      %v7154 = vpop.f32.mrb[0].mxu0
      %v7155 = vadd.f32 0.0, %v7154
      %v7156 = vpop.f32.mrb[0].mxu0
      %v7157 = vpop.f32.mrb[0].mxu0
      %v7158 = vadd.f32 0.0, %v7157
      %v7159 = vpop.f32.mrb[0].mxu0
      %7160 = vmatprep.mubr.bf16.mxu0 0
      %7161 = vmatmul.mubr.bf16.gmra.mrb[0].mxu0 %v7038
      %v7162 = vpop.f32.mrb[0].mxu0
      %v7163 = vadd.f32 0.0, %v7162
      %v7164 = vpop.f32.mrb[0].mxu0
      %v7165 = vpop.f32.mrb[0].mxu0
      %v7166 = vadd.f32 0.0, %v7165
      %v7167 = vpop.f32.mrb[0].mxu0
      %7168 = vmatprep.mubr.bf16.mxu0 0
      %7169 = vmatmul.mubr.bf16.gmra.mrb[0].mxu0 %v7041
      %v7170 = vpop.f32.mrb[0].mxu0
      %v7171 = vadd.f32 0.0, %v7170
      %v7172 = vpop.f32.mrb[0].mxu0
      %v7173 = vpop.f32.mrb[0].mxu0
      %v7174 = vadd.f32 0.0, %v7173
      %v7175 = vpop.f32.mrb[0].mxu0
      %7176 = vmatprep.mubr.bf16.mxu0 0
      %7177 = vmatmul.mubr.bf16.gmra.mrb[0].mxu0 %v7044
      %v7178 = vpop.f32.mrb[0].mxu0
      %v7179 = vadd.f32 0.0, %v7178
      %v7180 = vpop.f32.mrb[0].mxu0
      %v7181 = vpop.f32.mrb[0].mxu0
      %v7182 = vadd.f32 0.0, %v7181
      %v7183 = vpop.f32.mrb[0].mxu0
      %7184 = vmatprep.mubr.bf16.mxu0 0
      %7185 = vmatmul.mubr.bf16.gmra.mrb[0].mxu0 %v7047
      %v7186 = vpop.f32.mrb[0].mxu0
      %v7187 = vadd.f32 0.0, %v7186
      %v7188 = vpop.f32.mrb[0].mxu0
      %v7189 = vpop.f32.mrb[0].mxu0
      %v7190 = vadd.f32 0.0, %v7189
      %v7191 = vpop.f32.mrb[0].mxu0
      %7192 = vmatprep.mubr.bf16.mxu0 0
      %7193 = vmatmul.mubr.bf16.gmra.mrb[0].mxu0 %v7050
      %v7194 = vpop.f32.mrb[0].mxu0
      %v7195 = vadd.f32 0.0, %v7194
      %v7196 = vpop.f32.mrb[0].mxu0
      %v7197 = vpop.f32.mrb[0].mxu0
      %v7198 = vadd.f32 0.0, %v7197
      %v7199 = vpop.f32.mrb[0].mxu0
      %7200 = vmatprep.mubr.bf16.mxu0 0
      %7201 = vmatmul.mubr.bf16.gmra.mrb[0].mxu0 %v7053
      %v7202 = vpop.f32.mrb[0].mxu0
      %v7203 = vadd.f32 0.0, %v7202
      %v7204 = vpop.f32.mrb[0].mxu0
      %v7205 = vpop.f32.mrb[0].mxu0
      %v7206 = vadd.f32 0.0, %v7205
      %v7207 = vpop.f32.mrb[0].mxu0
      %7208 = vmatprep.mubr.bf16.mxu0 0
      %7209 = vmatmul.mubr.bf16.gmra.mrb[0].mxu0 %v7056
      %v7210 = vpop.f32.mrb[0].mxu0
      %v7211 = vadd.f32 0.0, %v7210
      %v7212 = vpop.f32.mrb[0].mxu0
      %v7213 = vpop.f32.mrb[0].mxu0
      %v7214 = vadd.f32 0.0, %v7213
      %v7215 = vpop.f32.mrb[0].mxu0
      %7216 = vmatprep.mubr.bf16.mxu0 0
      %7217 = vmatmul.mubr.bf16.gmra.mrb[0].mxu0 %v7059
      %v7218 = vpop.f32.mrb[0].mxu0
      %v7219 = vadd.f32 0.0, %v7218
      %v7220 = vpop.f32.mrb[0].mxu0
      %v7221 = vpop.f32.mrb[0].mxu0
      %v7222 = vadd.f32 0.0, %v7221
      %v7223 = vpop.f32.mrb[0].mxu0
      %7224 = vmatprep.mubr.bf16.mxu0 0
      %7225 = vmatmul.mubr.bf16.gmra.mrb[0].mxu0 %v7062
      %v7226 = vpop.f32.mrb[0].mxu0
      %v7227 = vadd.f32 0.0, %v7226
      %v7228 = vpop.f32.mrb[0].mxu0
      %v7229 = vpop.f32.mrb[0].mxu0
      %v7230 = vadd.f32 0.0, %v7229
      %v7231 = vpop.f32.mrb[0].mxu0
      %7232 = vmatprep.mubr.bf16.mxu0 0
      %7233 = vmatmul.mubr.bf16.gmra.mrb[0].mxu0 %v7065
      %v7234 = vpop.f32.mrb[0].mxu0
      %v7235 = vadd.f32 0.0, %v7234
      %v7236 = vpop.f32.mrb[0].mxu0
      %v7237 = vpop.f32.mrb[0].mxu0
      %v7238 = vadd.f32 0.0, %v7237
      %v7239 = vpop.f32.mrb[0].mxu0
      %7240 = vmatprep.mubr.bf16.mxu0 0
      %7241 = vmatmul.mubr.bf16.gmra.mrb[0].mxu0 %v7068
      %v7242 = vpop.f32.mrb[0].mxu0
      %v7243 = vadd.f32 0.0, %v7242
      %v7244 = vpop.f32.mrb[0].mxu0
      %v7245 = vpop.f32.mrb[0].mxu0
      %v7246 = vadd.f32 0.0, %v7245
      %v7247 = vpop.f32.mrb[0].mxu0
      %7248 = vmatprep.mubr.bf16.mxu0 0
      %7249 = vmatmul.mubr.bf16.gmra.mrb[0].mxu0 %v7071
      %v7250 = vpop.f32.mrb[0].mxu0
      %v7251 = vadd.f32 0.0, %v7250
      %v7252 = vpop.f32.mrb[0].mxu0
      %v7253 = vpop.f32.mrb[0].mxu0
      %v7254 = vadd.f32 0.0, %v7253
      %v7255 = vpop.f32.mrb[0].mxu0
      %7256 = vmatprep.mubr.bf16.mxu0 0
      %7257 = vmatmul.mubr.bf16.gmra.mrb[0].mxu0 %v7074
      %v7258 = vpop.f32.mrb[0].mxu0
      %v7259 = vadd.f32 0.0, %v7258
      %v7260 = vpop.f32.mrb[0].mxu0
      %v7261 = vpop.f32.mrb[0].mxu0
      %v7262 = vadd.f32 0.0, %v7261
      %v7263 = vpop.f32.mrb[0].mxu0
      %7264 = vmatprep.mubr.bf16.mxu0 0
      %7265 = vmatmul.mubr.bf16.gmra.mrb[0].mxu0 %v7077
      %v7266 = vpop.f32.mrb[0].mxu0
      %v7267 = vadd.f32 0.0, %v7266
      %v7268 = vpop.f32.mrb[0].mxu0
      %v7269 = vpop.f32.mrb[0].mxu0
      %v7270 = vadd.f32 0.0, %v7269
      %v7271 = vpop.f32.mrb[0].mxu0
      %7272 = vmatprep.mubr.bf16.mxu0 0
      %7273 = vmatmul.mubr.bf16.gmra.mrb[0].mxu0 %v7080
      %v7274 = vpop.f32.mrb[0].mxu0
      %v7275 = vadd.f32 0.0, %v7274
      %v7276 = vpop.f32.mrb[0].mxu0
      %v7277 = vpop.f32.mrb[0].mxu0
      %v7278 = vadd.f32 0.0, %v7277
      %v7279 = vpop.f32.mrb[0].mxu0
      %7280 = vmatprep.mubr.bf16.mxu0 0
      %7281 = vmatmul.mubr.bf16.gmra.mrb[0].mxu0 %v7083
      %v7282 = vpop.f32.mrb[0].mxu0
      %v7283 = vadd.f32 0.0, %v7282
      %v7284 = vpop.f32.mrb[0].mxu0
      %v7285 = vpop.f32.mrb[0].mxu0
      %v7286 = vpop.f32.mrb[0].mxu0
      %7287 = vdwg.mxu0
      %v7288 = vadd.f32 %v6906, %v7123
      %v7289 = vadd.f32 %v6907, %v7126
      %v7290 = vadd.f32 %v6908, %v7131
      %v7291 = vadd.f32 %v6909, %v7134
      %v7292 = vadd.f32 %v6910, %v7139
      %v7293 = vadd.f32 %v6911, %v7142
      %v7294 = vadd.f32 %v6912, %v7147
      %v7295 = vadd.f32 %v6913, %v7150
      %v7296 = vadd.f32 %v6914, %v7155
      %v7297 = vadd.f32 %v6915, %v7158
      %v7298 = vadd.f32 %v6916, %v7163
      %v7299 = vadd.f32 %v6917, %v7166
      %v7300 = vadd.f32 %v6918, %v7171
      %v7301 = vadd.f32 %v6919, %v7174
      %v7302 = vadd.f32 %v6920, %v7179
      %v7303 = vadd.f32 %v6921, %v7182
      %v7304 = vadd.f32 %v6922, %v7187
      %v7305 = vadd.f32 %v6923, %v7190
      %v7306 = vadd.f32 %v6924, %v7195
      %v7307 = vadd.f32 %v6925, %v7198
      %v7308 = vadd.f32 %v6926, %v7203
      %v7309 = vadd.f32 %v6927, %v7206
      %v7310 = vadd.f32 %v6928, %v7211
      %v7311 = vadd.f32 %v6929, %v7214
      %v7312 = vadd.f32 %v6930, %v7219
      %v7313 = vadd.f32 %v6931, %v7222
      %v7314 = vadd.f32 %v6932, %v7227
      %v7315 = vadd.f32 %v6933, %v7230
      %v7316 = vadd.f32 %v6934, %v7235
      %v7317 = vadd.f32 %v6935, %v7238
      %v7318 = vadd.f32 %v6936, %v7243
      %v7319 = vadd.f32 %v6937, %v7246
      %v7320 = vadd.f32 %v6938, %v7251
      %v7321 = vadd.f32 %v6939, %v7254
      %v7322 = vadd.f32 %v6940, %v7259
      %v7323 = vadd.f32 %v6941, %v7262
      %v7324 = vadd.f32 %v6942, %v7267
      %v7325 = vadd.f32 %v6943, %v7270
      %v7326 = vadd.f32 %v6944, %v7275
      %v7327 = vadd.f32 %v6945, %v7278
      %v7328 = vadd.f32 %v6946, %v7283
      %v7329 = vld [vmem:[#allocation2 + $0x6] sm:$0xff]
      %v7330 = vld [vmem:[#allocation2 + $0xe] sm:$0xff]
      %v7331 = vld [vmem:[#allocation2 + $0x16] sm:$0xff]
      %v7332 = vld [vmem:[#allocation2 + $0x1e] sm:$0xff]
      %v7333 = vld [vmem:[#allocation2 + $0x26] sm:$0xff]
      %v7334 = vld [vmem:[#allocation2 + $0x2e] sm:$0xff]
      %v7335 = vld [vmem:[#allocation2 + $0x36] sm:$0xff]
      %v7336 = vld [vmem:[#allocation2 + $0x3e] sm:$0xff]
      %v7337 = vld [vmem:[#allocation2 + $0x46] sm:$0xff]
      %v7338 = vld [vmem:[#allocation2 + $0x4e] sm:$0xff]
      %v7339 = vld [vmem:[#allocation2 + $0x56] sm:$0xff]
      %v7340 = vld [vmem:[#allocation2 + $0x5e] sm:$0xff]
      %v7341 = vld [vmem:[#allocation2 + $0x66] sm:$0xff]
      %v7342 = vld [vmem:[#allocation2 + $0x6e] sm:$0xff]
      %v7343 = vld [vmem:[#allocation2 + $0x76] sm:$0xff]
      %v7344 = vld [vmem:[#allocation2 + $0x7e] sm:$0xff]
      %v7345 = vld [vmem:[#allocation2 + $0x86] sm:$0xff]
      %v7346 = vld [vmem:[#allocation2 + $0x8e] sm:$0xff]
      %v7347 = vld [vmem:[#allocation2 + $0x96] sm:$0xff]
      %v7348 = vld [vmem:[#allocation2 + $0x9e] sm:$0xff]
      %v7349 = vld [vmem:[#allocation2 + $0xa6] sm:$0xff]
      %v7350 = vld [vmem:[#allocation2 + $0xae] sm:$0xff]
      %v7351 = vld [vmem:[#allocation2 + $0xb6] sm:$0xff]
      %v7352 = vld [vmem:[#allocation2 + $0xbe] sm:$0xff]
      %v7353 = vld [vmem:[#allocation2 + $0xc6] sm:$0xff]
      %v7354 = vld [vmem:[#allocation2 + $0xce] sm:$0xff]
      %v7355 = vld [vmem:[#allocation2 + $0xd6] sm:$0xff]
      %v7356 = vld [vmem:[#allocation2 + $0xde] sm:$0xff]
      %v7357 = vld [vmem:[#allocation2 + $0xe6] sm:$0xff]
      %v7358 = vld [vmem:[#allocation2 + $0xee] sm:$0xff]
      %v7359 = vld [vmem:[#allocation2 + $0xf6] sm:$0xff]
      %v7360 = vld [vmem:[#allocation2 + $0xfe] sm:$0xff]
      %v7361 = vld [vmem:[#allocation2 + $0x106] sm:$0xff]
      %v7362 = vld [vmem:[#allocation2 + $0x10e] sm:$0xff]
      %v7363 = vld [vmem:[#allocation2 + $0x116] sm:$0xff]
      %v7364 = vld [vmem:[#allocation2 + $0x11e] sm:$0xff]
      %v7365 = vld [vmem:[#allocation2 + $0x126] sm:$0xff]
      %v7366 = vld [vmem:[#allocation2 + $0x12e] sm:$0xff]
      %v7367 = vld [vmem:[#allocation2 + $0x136] sm:$0xff]
      %v7368 = vld [vmem:[#allocation2 + $0x13e] sm:$0xff]
      %v7369 = vld [vmem:[#allocation2 + $0x146] sm:$0xff]
      %v7370 = vpack.c.bf16 %v7330, %v7329
      %v7371 = vpack.c.bf16 %v7332, %v7331
      %v7372 = vpack.c.bf16 %v7334, %v7333
      %v7373 = vpack.c.bf16 %v7336, %v7335
      %v7374 = vpack.c.bf16 %v7338, %v7337
      %v7375 = vpack.c.bf16 %v7340, %v7339
      %v7376 = vpack.c.bf16 %v7342, %v7341
      %v7377 = vpack.c.bf16 %v7344, %v7343
      %v7378 = vpack.c.bf16 %v7346, %v7345
      %v7379 = vpack.c.bf16 %v7348, %v7347
      %v7380 = vpack.c.bf16 %v7350, %v7349
      %v7381 = vpack.c.bf16 %v7352, %v7351
      %v7382 = vpack.c.bf16 %v7354, %v7353
      %v7383 = vpack.c.bf16 %v7356, %v7355
      %v7384 = vpack.c.bf16 %v7358, %v7357
      %v7385 = vpack.c.bf16 %v7360, %v7359
      %v7386 = vpack.c.bf16 %v7362, %v7361
      %v7387 = vpack.c.bf16 %v7364, %v7363
      %v7388 = vpack.c.bf16 %v7366, %v7365
      %v7389 = vpack.c.bf16 %v7368, %v7367
      %v7390 = vpack.c.bf16 %v7369, %v7369
      %s7391 = scalar_lea.vmem %s6, 36
      %v7392 = vld [vmem:[%s7391] sm:$0xf]
      %v7393 = vld [vmem:[%s7391 + $0x4] sm:$0xf]
      %v7394 = vld [vmem:[%s7391 + $0x8] sm:$0xf]
      %v7398 = vunpack.c.l.b16 %v7392
      %v7399 = vunpack.c.l.b16 %v7393
      %v7400 = vunpack.c.l.b16 %v7394
      %v7401 = vpack.c.b16 %v7399, %v7398
      %v7402 = vpack.c.b16 %v7400, %v7400
      %v7405 = vsel %vm835, %v7370, 0
      %v7408 = vsel %vm835, %v7371, 0
      %v7411 = vsel %vm835, %v7372, 0
      %v7414 = vsel %vm835, %v7373, 0
      %v7417 = vsel %vm835, %v7374, 0
      %v7420 = vsel %vm835, %v7375, 0
      %v7423 = vsel %vm835, %v7376, 0
      %v7426 = vsel %vm835, %v7377, 0
      %v7429 = vsel %vm835, %v7378, 0
      %v7432 = vsel %vm835, %v7379, 0
      %v7435 = vsel %vm835, %v7380, 0
      %v7438 = vsel %vm835, %v7381, 0
      %v7441 = vsel %vm835, %v7382, 0
      %v7444 = vsel %vm835, %v7383, 0
      %v7447 = vsel %vm835, %v7384, 0
      %v7450 = vsel %vm835, %v7385, 0
      %v7453 = vsel %vm835, %v7386, 0
      %v7456 = vsel %vm835, %v7387, 0
      %v7459 = vsel %vm835, %v7388, 0
      %v7462 = vsel %vm835, %v7389, 0
      %v7465 = vsel %vm835, %v7390, 0
      %v7468 = vsel %vm6320, %v7402, 0
      %7470 = vmatprep.subr.bf16.mxu0 0
      %7471 = vmatpush1.bf16.msra.mxu0 %v7401
      %7472 = vmatprep.subr.bf16.mxu0 0
      %7473 = vmatpush1.bf16.msra.mxu0 %v7468
      %7474 = vmatprep.subr.bf16.mxu0 0
      %7475 = vmatpush1.bf16.msra.mxu0 0
      %7476 = vmatprep.subr.bf16.mxu0 0
      %7477 = vmatpush1.bf16.msra.mxu0 0
      %7478 = vmatprep.subr.bf16.mxu0 0
      %7479 = vmatpush1.bf16.msra.mxu0 0
      %7480 = vmatprep.subr.bf16.mxu0 0
      %7481 = vmatpush1.bf16.msra.mxu0 0
      %7482 = vmatprep.subr.bf16.mxu0 0
      %7483 = vmatpush1.bf16.msra.mxu0 0
      %7484 = vmatprep.subr.bf16.mxu0 0
      %7485 = vmatpush1.bf16.msra.mxu0 0
      %7486 = vmatprep.subr.bf16.mxu0 0
      %7487 = vmatpush1.bf16.msra.mxu0 0
      %7488 = vmatprep.subr.bf16.mxu0 0
      %7489 = vmatpush1.bf16.msra.mxu0 0
      %7490 = vmatprep.subr.bf16.mxu0 0
      %7491 = vmatpush1.bf16.msra.mxu0 0
      %7492 = vmatprep.subr.bf16.mxu0 0
      %7493 = vmatpush1.bf16.msra.mxu0 0
      %7494 = vmatprep.subr.bf16.mxu0 0
      %7495 = vmatpush1.bf16.msra.mxu0 0
      %7496 = vmatprep.subr.bf16.mxu0 0
      %7497 = vmatpush1.bf16.msra.mxu0 0
      %7498 = vmatprep.subr.bf16.mxu0 0
      %7499 = vmatpush1.bf16.msra.mxu0 0
      %7500 = vmatprep.subr.bf16.mxu0 0
      %7501 = vmatpush1.bf16.msra.mxu0 0
      %7502 = vmatprep.mubr.bf16.mxu0 0
      %7503 = vmatmul.mubr.bf16.gmra.mrb[0].mxu0 %v7405
      %v7504 = vpop.f32.mrb[0].mxu0
      %v7505 = vadd.f32 0.0, %v7504
      %v7506 = vpop.f32.mrb[0].mxu0
      %v7507 = vpop.f32.mrb[0].mxu0
      %v7508 = vadd.f32 0.0, %v7507
      %v7509 = vpop.f32.mrb[0].mxu0
      %7510 = vmatprep.mubr.bf16.mxu0 0
      %7511 = vmatmul.mubr.bf16.gmra.mrb[0].mxu0 %v7408
      %v7512 = vpop.f32.mrb[0].mxu0
      %v7513 = vadd.f32 0.0, %v7512
      %v7514 = vpop.f32.mrb[0].mxu0
      %v7515 = vpop.f32.mrb[0].mxu0
      %v7516 = vadd.f32 0.0, %v7515
      %v7517 = vpop.f32.mrb[0].mxu0
      %7518 = vmatprep.mubr.bf16.mxu0 0
      %7519 = vmatmul.mubr.bf16.gmra.mrb[0].mxu0 %v7411
      %v7520 = vpop.f32.mrb[0].mxu0
      %v7521 = vadd.f32 0.0, %v7520
      %v7522 = vpop.f32.mrb[0].mxu0
      %v7523 = vpop.f32.mrb[0].mxu0
      %v7524 = vadd.f32 0.0, %v7523
      %v7525 = vpop.f32.mrb[0].mxu0
      %7526 = vmatprep.mubr.bf16.mxu0 0
      %7527 = vmatmul.mubr.bf16.gmra.mrb[0].mxu0 %v7414
      %v7528 = vpop.f32.mrb[0].mxu0
      %v7529 = vadd.f32 0.0, %v7528
      %v7530 = vpop.f32.mrb[0].mxu0
      %v7531 = vpop.f32.mrb[0].mxu0
      %v7532 = vadd.f32 0.0, %v7531
      %v7533 = vpop.f32.mrb[0].mxu0
      %7534 = vmatprep.mubr.bf16.mxu0 0
      %7535 = vmatmul.mubr.bf16.gmra.mrb[0].mxu0 %v7417
      %v7536 = vpop.f32.mrb[0].mxu0
      %v7537 = vadd.f32 0.0, %v7536
      %v7538 = vpop.f32.mrb[0].mxu0
      %v7539 = vpop.f32.mrb[0].mxu0
      %v7540 = vadd.f32 0.0, %v7539
      %v7541 = vpop.f32.mrb[0].mxu0
      %7542 = vmatprep.mubr.bf16.mxu0 0
      %7543 = vmatmul.mubr.bf16.gmra.mrb[0].mxu0 %v7420
      %v7544 = vpop.f32.mrb[0].mxu0
      %v7545 = vadd.f32 0.0, %v7544
      %v7546 = vpop.f32.mrb[0].mxu0
      %v7547 = vpop.f32.mrb[0].mxu0
      %v7548 = vadd.f32 0.0, %v7547
      %v7549 = vpop.f32.mrb[0].mxu0
      %7550 = vmatprep.mubr.bf16.mxu0 0
      %7551 = vmatmul.mubr.bf16.gmra.mrb[0].mxu0 %v7423
      %v7552 = vpop.f32.mrb[0].mxu0
      %v7553 = vadd.f32 0.0, %v7552
      %v7554 = vpop.f32.mrb[0].mxu0
      %v7555 = vpop.f32.mrb[0].mxu0
      %v7556 = vadd.f32 0.0, %v7555
      %v7557 = vpop.f32.mrb[0].mxu0
      %7558 = vmatprep.mubr.bf16.mxu0 0
      %7559 = vmatmul.mubr.bf16.gmra.mrb[0].mxu0 %v7426
      %v7560 = vpop.f32.mrb[0].mxu0
      %v7561 = vadd.f32 0.0, %v7560
      %v7562 = vpop.f32.mrb[0].mxu0
      %v7563 = vpop.f32.mrb[0].mxu0
      %v7564 = vadd.f32 0.0, %v7563
      %v7565 = vpop.f32.mrb[0].mxu0
      %7566 = vmatprep.mubr.bf16.mxu0 0
      %7567 = vmatmul.mubr.bf16.gmra.mrb[0].mxu0 %v7429
      %v7568 = vpop.f32.mrb[0].mxu0
      %v7569 = vadd.f32 0.0, %v7568
      %v7570 = vpop.f32.mrb[0].mxu0
      %v7571 = vpop.f32.mrb[0].mxu0
      %v7572 = vadd.f32 0.0, %v7571
      %v7573 = vpop.f32.mrb[0].mxu0
      %7574 = vmatprep.mubr.bf16.mxu0 0
      %7575 = vmatmul.mubr.bf16.gmra.mrb[0].mxu0 %v7432
      %v7576 = vpop.f32.mrb[0].mxu0
      %v7577 = vadd.f32 0.0, %v7576
      %v7578 = vpop.f32.mrb[0].mxu0
      %v7579 = vpop.f32.mrb[0].mxu0
      %v7580 = vadd.f32 0.0, %v7579
      %v7581 = vpop.f32.mrb[0].mxu0
      %7582 = vmatprep.mubr.bf16.mxu0 0
      %7583 = vmatmul.mubr.bf16.gmra.mrb[0].mxu0 %v7435
      %v7584 = vpop.f32.mrb[0].mxu0
      %v7585 = vadd.f32 0.0, %v7584
      %v7586 = vpop.f32.mrb[0].mxu0
      %v7587 = vpop.f32.mrb[0].mxu0
      %v7588 = vadd.f32 0.0, %v7587
      %v7589 = vpop.f32.mrb[0].mxu0
      %7590 = vmatprep.mubr.bf16.mxu0 0
      %7591 = vmatmul.mubr.bf16.gmra.mrb[0].mxu0 %v7438
      %v7592 = vpop.f32.mrb[0].mxu0
      %v7593 = vadd.f32 0.0, %v7592
      %v7594 = vpop.f32.mrb[0].mxu0
      %v7595 = vpop.f32.mrb[0].mxu0
      %v7596 = vadd.f32 0.0, %v7595
      %v7597 = vpop.f32.mrb[0].mxu0
      %7598 = vmatprep.mubr.bf16.mxu0 0
      %7599 = vmatmul.mubr.bf16.gmra.mrb[0].mxu0 %v7441
      %v7600 = vpop.f32.mrb[0].mxu0
      %v7601 = vadd.f32 0.0, %v7600
      %v7602 = vpop.f32.mrb[0].mxu0
      %v7603 = vpop.f32.mrb[0].mxu0
      %v7604 = vadd.f32 0.0, %v7603
      %v7605 = vpop.f32.mrb[0].mxu0
      %7606 = vmatprep.mubr.bf16.mxu0 0
      %7607 = vmatmul.mubr.bf16.gmra.mrb[0].mxu0 %v7444
      %v7608 = vpop.f32.mrb[0].mxu0
      %v7609 = vadd.f32 0.0, %v7608
      %v7610 = vpop.f32.mrb[0].mxu0
      %v7611 = vpop.f32.mrb[0].mxu0
      %v7612 = vadd.f32 0.0, %v7611
      %v7613 = vpop.f32.mrb[0].mxu0
      %7614 = vmatprep.mubr.bf16.mxu0 0
      %7615 = vmatmul.mubr.bf16.gmra.mrb[0].mxu0 %v7447
      %v7616 = vpop.f32.mrb[0].mxu0
      %v7617 = vadd.f32 0.0, %v7616
      %v7618 = vpop.f32.mrb[0].mxu0
      %v7619 = vpop.f32.mrb[0].mxu0
      %v7620 = vadd.f32 0.0, %v7619
      %v7621 = vpop.f32.mrb[0].mxu0
      %7622 = vmatprep.mubr.bf16.mxu0 0
      %7623 = vmatmul.mubr.bf16.gmra.mrb[0].mxu0 %v7450
      %v7624 = vpop.f32.mrb[0].mxu0
      %v7625 = vadd.f32 0.0, %v7624
      %v7626 = vpop.f32.mrb[0].mxu0
      %v7627 = vpop.f32.mrb[0].mxu0
      %v7628 = vadd.f32 0.0, %v7627
      %v7629 = vpop.f32.mrb[0].mxu0
      %7630 = vmatprep.mubr.bf16.mxu0 0
      %7631 = vmatmul.mubr.bf16.gmra.mrb[0].mxu0 %v7453
      %v7632 = vpop.f32.mrb[0].mxu0
      %v7633 = vadd.f32 0.0, %v7632
      %v7634 = vpop.f32.mrb[0].mxu0
      %v7635 = vpop.f32.mrb[0].mxu0
      %v7636 = vadd.f32 0.0, %v7635
      %v7637 = vpop.f32.mrb[0].mxu0
      %7638 = vmatprep.mubr.bf16.mxu0 0
      %7639 = vmatmul.mubr.bf16.gmra.mrb[0].mxu0 %v7456
      %v7640 = vpop.f32.mrb[0].mxu0
      %v7641 = vadd.f32 0.0, %v7640
      %v7642 = vpop.f32.mrb[0].mxu0
      %v7643 = vpop.f32.mrb[0].mxu0
      %v7644 = vadd.f32 0.0, %v7643
      %v7645 = vpop.f32.mrb[0].mxu0
      %7646 = vmatprep.mubr.bf16.mxu0 0
      %7647 = vmatmul.mubr.bf16.gmra.mrb[0].mxu0 %v7459
      %v7648 = vpop.f32.mrb[0].mxu0
      %v7649 = vadd.f32 0.0, %v7648
      %v7650 = vpop.f32.mrb[0].mxu0
      %v7651 = vpop.f32.mrb[0].mxu0
      %v7652 = vadd.f32 0.0, %v7651
      %v7653 = vpop.f32.mrb[0].mxu0
      %7654 = vmatprep.mubr.bf16.mxu0 0
      %7655 = vmatmul.mubr.bf16.gmra.mrb[0].mxu0 %v7462
      %v7656 = vpop.f32.mrb[0].mxu0
      %v7657 = vadd.f32 0.0, %v7656
      %v7658 = vpop.f32.mrb[0].mxu0
      %v7659 = vpop.f32.mrb[0].mxu0
      %v7660 = vadd.f32 0.0, %v7659
      %v7661 = vpop.f32.mrb[0].mxu0
      %7662 = vmatprep.mubr.bf16.mxu0 0
      %7663 = vmatmul.mubr.bf16.gmra.mrb[0].mxu0 %v7465
      %v7664 = vpop.f32.mrb[0].mxu0
      %v7665 = vadd.f32 0.0, %v7664
      %v7666 = vpop.f32.mrb[0].mxu0
      %v7667 = vpop.f32.mrb[0].mxu0
      %v7668 = vpop.f32.mrb[0].mxu0
      %7669 = vdwg.mxu0
      %v7670 = vadd.f32 %v7288, %v7505
      %v7671 = vadd.f32 %v7289, %v7508
      %v7672 = vadd.f32 %v7290, %v7513
      %v7673 = vadd.f32 %v7291, %v7516
      %v7674 = vadd.f32 %v7292, %v7521
      %v7675 = vadd.f32 %v7293, %v7524
      %v7676 = vadd.f32 %v7294, %v7529
      %v7677 = vadd.f32 %v7295, %v7532
      %v7678 = vadd.f32 %v7296, %v7537
      %v7679 = vadd.f32 %v7297, %v7540
      %v7680 = vadd.f32 %v7298, %v7545
      %v7681 = vadd.f32 %v7299, %v7548
      %v7682 = vadd.f32 %v7300, %v7553
      %v7683 = vadd.f32 %v7301, %v7556
      %v7684 = vadd.f32 %v7302, %v7561
      %v7685 = vadd.f32 %v7303, %v7564
      %v7686 = vadd.f32 %v7304, %v7569
      %v7687 = vadd.f32 %v7305, %v7572
      %v7688 = vadd.f32 %v7306, %v7577
      %v7689 = vadd.f32 %v7307, %v7580
      %v7690 = vadd.f32 %v7308, %v7585
      %v7691 = vadd.f32 %v7309, %v7588
      %v7692 = vadd.f32 %v7310, %v7593
      %v7693 = vadd.f32 %v7311, %v7596
      %v7694 = vadd.f32 %v7312, %v7601
      %v7695 = vadd.f32 %v7313, %v7604
      %v7696 = vadd.f32 %v7314, %v7609
      %v7697 = vadd.f32 %v7315, %v7612
      %v7698 = vadd.f32 %v7316, %v7617
      %v7699 = vadd.f32 %v7317, %v7620
      %v7700 = vadd.f32 %v7318, %v7625
      %v7701 = vadd.f32 %v7319, %v7628
      %v7702 = vadd.f32 %v7320, %v7633
      %v7703 = vadd.f32 %v7321, %v7636
      %v7704 = vadd.f32 %v7322, %v7641
      %v7705 = vadd.f32 %v7323, %v7644
      %v7706 = vadd.f32 %v7324, %v7649
      %v7707 = vadd.f32 %v7325, %v7652
      %v7708 = vadd.f32 %v7326, %v7657
      %v7709 = vadd.f32 %v7327, %v7660
      %v7710 = vadd.f32 %v7328, %v7665
      %s7711 = scalar_lea.vmem %s6, 48
      %v7712 = vld [vmem:[%s7711] sm:$0xf]
      %v7713 = vld [vmem:[%s7711 + $0x4] sm:$0xf]
      %v7714 = vld [vmem:[%s7711 + $0x8] sm:$0xf]
      %v7718 = vunpack.c.l.b16 %v7712
      %v7719 = vunpack.c.l.b16 %v7713
      %v7720 = vunpack.c.l.b16 %v7714
      %v7721 = vpack.c.b16 %v7719, %v7718
      %v7722 = vpack.c.b16 %v7720, %v7720
      %v7725 = vsel %vm6320, %v7722, 0
      %7727 = vmatprep.subr.bf16.mxu0 0
      %7728 = vmatpush1.bf16.msra.mxu0 %v7721
      %7729 = vmatprep.subr.bf16.mxu0 0
      %7730 = vmatpush1.bf16.msra.mxu0 %v7725
      %7731 = vmatprep.subr.bf16.mxu0 0
      %7732 = vmatpush1.bf16.msra.mxu0 0
      %7733 = vmatprep.subr.bf16.mxu0 0
      %7734 = vmatpush1.bf16.msra.mxu0 0
      %7735 = vmatprep.subr.bf16.mxu0 0
      %7736 = vmatpush1.bf16.msra.mxu0 0
      %7737 = vmatprep.subr.bf16.mxu0 0
      %7738 = vmatpush1.bf16.msra.mxu0 0
      %7739 = vmatprep.subr.bf16.mxu0 0
      %7740 = vmatpush1.bf16.msra.mxu0 0
      %7741 = vmatprep.subr.bf16.mxu0 0
      %7742 = vmatpush1.bf16.msra.mxu0 0
      %7743 = vmatprep.subr.bf16.mxu0 0
      %7744 = vmatpush1.bf16.msra.mxu0 0
      %7745 = vmatprep.subr.bf16.mxu0 0
      %7746 = vmatpush1.bf16.msra.mxu0 0
      %7747 = vmatprep.subr.bf16.mxu0 0
      %7748 = vmatpush1.bf16.msra.mxu0 0
      %7749 = vmatprep.subr.bf16.mxu0 0
      %7750 = vmatpush1.bf16.msra.mxu0 0
      %7751 = vmatprep.subr.bf16.mxu0 0
      %7752 = vmatpush1.bf16.msra.mxu0 0
      %7753 = vmatprep.subr.bf16.mxu0 0
      %7754 = vmatpush1.bf16.msra.mxu0 0
      %7755 = vmatprep.subr.bf16.mxu0 0
      %7756 = vmatpush1.bf16.msra.mxu0 0
      %7757 = vmatprep.subr.bf16.mxu0 0
      %7758 = vmatpush1.bf16.msra.mxu0 0
      %7759 = vmatprep.mubr.bf16.mxu0 0
      %7760 = vmatmul.mubr.bf16.gmra.mrb[0].mxu0 %v6641
      %v7761 = vpop.f32.mrb[0].mxu0
      %v7762 = vadd.f32 0.0, %v7761
      %v7763 = vpop.f32.mrb[0].mxu0
      %v7764 = vpop.f32.mrb[0].mxu0
      %v7765 = vadd.f32 0.0, %v7764
      %v7766 = vpop.f32.mrb[0].mxu0
      %7767 = vmatprep.mubr.bf16.mxu0 0
      %7768 = vmatmul.mubr.bf16.gmra.mrb[0].mxu0 %v6644
      %v7769 = vpop.f32.mrb[0].mxu0
      %v7770 = vadd.f32 0.0, %v7769
      %v7771 = vpop.f32.mrb[0].mxu0
      %v7772 = vpop.f32.mrb[0].mxu0
      %v7773 = vadd.f32 0.0, %v7772
      %v7774 = vpop.f32.mrb[0].mxu0
      %7775 = vmatprep.mubr.bf16.mxu0 0
      %7776 = vmatmul.mubr.bf16.gmra.mrb[0].mxu0 %v6647
      %v7777 = vpop.f32.mrb[0].mxu0
      %v7778 = vadd.f32 0.0, %v7777
      %v7779 = vpop.f32.mrb[0].mxu0
      %v7780 = vpop.f32.mrb[0].mxu0
      %v7781 = vadd.f32 0.0, %v7780
      %v7782 = vpop.f32.mrb[0].mxu0
      %7783 = vmatprep.mubr.bf16.mxu0 0
      %7784 = vmatmul.mubr.bf16.gmra.mrb[0].mxu0 %v6650
      %v7785 = vpop.f32.mrb[0].mxu0
      %v7786 = vadd.f32 0.0, %v7785
      %v7787 = vpop.f32.mrb[0].mxu0
      %v7788 = vpop.f32.mrb[0].mxu0
      %v7789 = vadd.f32 0.0, %v7788
      %v7790 = vpop.f32.mrb[0].mxu0
      %7791 = vmatprep.mubr.bf16.mxu0 0
      %7792 = vmatmul.mubr.bf16.gmra.mrb[0].mxu0 %v6653
      %v7793 = vpop.f32.mrb[0].mxu0
      %v7794 = vadd.f32 0.0, %v7793
      %v7795 = vpop.f32.mrb[0].mxu0
      %v7796 = vpop.f32.mrb[0].mxu0
      %v7797 = vadd.f32 0.0, %v7796
      %v7798 = vpop.f32.mrb[0].mxu0
      %7799 = vmatprep.mubr.bf16.mxu0 0
      %7800 = vmatmul.mubr.bf16.gmra.mrb[0].mxu0 %v6656
      %v7801 = vpop.f32.mrb[0].mxu0
      %v7802 = vadd.f32 0.0, %v7801
      %v7803 = vpop.f32.mrb[0].mxu0
      %v7804 = vpop.f32.mrb[0].mxu0
      %v7805 = vadd.f32 0.0, %v7804
      %v7806 = vpop.f32.mrb[0].mxu0
      %7807 = vmatprep.mubr.bf16.mxu0 0
      %7808 = vmatmul.mubr.bf16.gmra.mrb[0].mxu0 %v6659
      %v7809 = vpop.f32.mrb[0].mxu0
      %v7810 = vadd.f32 0.0, %v7809
      %v7811 = vpop.f32.mrb[0].mxu0
      %v7812 = vpop.f32.mrb[0].mxu0
      %v7813 = vadd.f32 0.0, %v7812
      %v7814 = vpop.f32.mrb[0].mxu0
      %7815 = vmatprep.mubr.bf16.mxu0 0
      %7816 = vmatmul.mubr.bf16.gmra.mrb[0].mxu0 %v6662
      %v7817 = vpop.f32.mrb[0].mxu0
      %v7818 = vadd.f32 0.0, %v7817
      %v7819 = vpop.f32.mrb[0].mxu0
      %v7820 = vpop.f32.mrb[0].mxu0
      %v7821 = vadd.f32 0.0, %v7820
      %v7822 = vpop.f32.mrb[0].mxu0
      %7823 = vmatprep.mubr.bf16.mxu0 0
      %7824 = vmatmul.mubr.bf16.gmra.mrb[0].mxu0 %v6665
      %v7825 = vpop.f32.mrb[0].mxu0
      %v7826 = vadd.f32 0.0, %v7825
      %v7827 = vpop.f32.mrb[0].mxu0
      %v7828 = vpop.f32.mrb[0].mxu0
      %v7829 = vadd.f32 0.0, %v7828
      %v7830 = vpop.f32.mrb[0].mxu0
      %7831 = vmatprep.mubr.bf16.mxu0 0
      %7832 = vmatmul.mubr.bf16.gmra.mrb[0].mxu0 %v6668
      %v7833 = vpop.f32.mrb[0].mxu0
      %v7834 = vadd.f32 0.0, %v7833
      %v7835 = vpop.f32.mrb[0].mxu0
      %v7836 = vpop.f32.mrb[0].mxu0
      %v7837 = vadd.f32 0.0, %v7836
      %v7838 = vpop.f32.mrb[0].mxu0
      %7839 = vmatprep.mubr.bf16.mxu0 0
      %7840 = vmatmul.mubr.bf16.gmra.mrb[0].mxu0 %v6671
      %v7841 = vpop.f32.mrb[0].mxu0
      %v7842 = vadd.f32 0.0, %v7841
      %v7843 = vpop.f32.mrb[0].mxu0
      %v7844 = vpop.f32.mrb[0].mxu0
      %v7845 = vadd.f32 0.0, %v7844
      %v7846 = vpop.f32.mrb[0].mxu0
      %7847 = vmatprep.mubr.bf16.mxu0 0
      %7848 = vmatmul.mubr.bf16.gmra.mrb[0].mxu0 %v6674
      %v7849 = vpop.f32.mrb[0].mxu0
      %v7850 = vadd.f32 0.0, %v7849
      %v7851 = vpop.f32.mrb[0].mxu0
      %v7852 = vpop.f32.mrb[0].mxu0
      %v7853 = vadd.f32 0.0, %v7852
      %v7854 = vpop.f32.mrb[0].mxu0
      %7855 = vmatprep.mubr.bf16.mxu0 0
      %7856 = vmatmul.mubr.bf16.gmra.mrb[0].mxu0 %v6677
      %v7857 = vpop.f32.mrb[0].mxu0
      %v7858 = vadd.f32 0.0, %v7857
      %v7859 = vpop.f32.mrb[0].mxu0
      %v7860 = vpop.f32.mrb[0].mxu0
      %v7861 = vadd.f32 0.0, %v7860
      %v7862 = vpop.f32.mrb[0].mxu0
      %7863 = vmatprep.mubr.bf16.mxu0 0
      %7864 = vmatmul.mubr.bf16.gmra.mrb[0].mxu0 %v6680
      %v7865 = vpop.f32.mrb[0].mxu0
      %v7866 = vadd.f32 0.0, %v7865
      %v7867 = vpop.f32.mrb[0].mxu0
      %v7868 = vpop.f32.mrb[0].mxu0
      %v7869 = vadd.f32 0.0, %v7868
      %v7870 = vpop.f32.mrb[0].mxu0
      %7871 = vmatprep.mubr.bf16.mxu0 0
      %7872 = vmatmul.mubr.bf16.gmra.mrb[0].mxu0 %v6683
      %v7873 = vpop.f32.mrb[0].mxu0
      %v7874 = vadd.f32 0.0, %v7873
      %v7875 = vpop.f32.mrb[0].mxu0
      %v7876 = vpop.f32.mrb[0].mxu0
      %v7877 = vadd.f32 0.0, %v7876
      %v7878 = vpop.f32.mrb[0].mxu0
      %7879 = vmatprep.mubr.bf16.mxu0 0
      %7880 = vmatmul.mubr.bf16.gmra.mrb[0].mxu0 %v6686
      %v7881 = vpop.f32.mrb[0].mxu0
      %v7882 = vadd.f32 0.0, %v7881
      %v7883 = vpop.f32.mrb[0].mxu0
      %v7884 = vpop.f32.mrb[0].mxu0
      %v7885 = vadd.f32 0.0, %v7884
      %v7886 = vpop.f32.mrb[0].mxu0
      %7887 = vmatprep.mubr.bf16.mxu0 0
      %7888 = vmatmul.mubr.bf16.gmra.mrb[0].mxu0 %v6689
      %v7889 = vpop.f32.mrb[0].mxu0
      %v7890 = vadd.f32 0.0, %v7889
      %v7891 = vpop.f32.mrb[0].mxu0
      %v7892 = vpop.f32.mrb[0].mxu0
      %v7893 = vadd.f32 0.0, %v7892
      %v7894 = vpop.f32.mrb[0].mxu0
      %7895 = vmatprep.mubr.bf16.mxu0 0
      %7896 = vmatmul.mubr.bf16.gmra.mrb[0].mxu0 %v6692
      %v7897 = vpop.f32.mrb[0].mxu0
      %v7898 = vadd.f32 0.0, %v7897
      %v7899 = vpop.f32.mrb[0].mxu0
      %v7900 = vpop.f32.mrb[0].mxu0
      %v7901 = vadd.f32 0.0, %v7900
      %v7902 = vpop.f32.mrb[0].mxu0
      %7903 = vmatprep.mubr.bf16.mxu0 0
      %7904 = vmatmul.mubr.bf16.gmra.mrb[0].mxu0 %v6695
      %v7905 = vpop.f32.mrb[0].mxu0
      %v7906 = vadd.f32 0.0, %v7905
      %v7907 = vpop.f32.mrb[0].mxu0
      %v7908 = vpop.f32.mrb[0].mxu0
      %v7909 = vadd.f32 0.0, %v7908
      %v7910 = vpop.f32.mrb[0].mxu0
      %7911 = vmatprep.mubr.bf16.mxu0 0
      %7912 = vmatmul.mubr.bf16.gmra.mrb[0].mxu0 %v6698
      %v7913 = vpop.f32.mrb[0].mxu0
      %v7914 = vadd.f32 0.0, %v7913
      %v7915 = vpop.f32.mrb[0].mxu0
      %v7916 = vpop.f32.mrb[0].mxu0
      %v7917 = vadd.f32 0.0, %v7916
      %v7918 = vpop.f32.mrb[0].mxu0
      %7919 = vmatprep.mubr.bf16.mxu0 0
      %7920 = vmatmul.mubr.bf16.gmra.mrb[0].mxu0 %v6701
      %v7921 = vpop.f32.mrb[0].mxu0
      %v7922 = vadd.f32 0.0, %v7921
      %v7923 = vpop.f32.mrb[0].mxu0
      %v7924 = vpop.f32.mrb[0].mxu0
      %v7925 = vpop.f32.mrb[0].mxu0
      %7926 = vdwg.mxu0
      %v7927 = vadd.f32 %v7670, %v7762
      %v7928 = vadd.f32 %v7671, %v7765
      %v7929 = vadd.f32 %v7672, %v7770
      %v7930 = vadd.f32 %v7673, %v7773
      %v7931 = vadd.f32 %v7674, %v7778
      %v7932 = vadd.f32 %v7675, %v7781
      %v7933 = vadd.f32 %v7676, %v7786
      %v7934 = vadd.f32 %v7677, %v7789
      %v7935 = vadd.f32 %v7678, %v7794
      %v7936 = vadd.f32 %v7679, %v7797
      %v7937 = vadd.f32 %v7680, %v7802
      %v7938 = vadd.f32 %v7681, %v7805
      %v7939 = vadd.f32 %v7682, %v7810
      %v7940 = vadd.f32 %v7683, %v7813
      %v7941 = vadd.f32 %v7684, %v7818
      %v7942 = vadd.f32 %v7685, %v7821
      %v7943 = vadd.f32 %v7686, %v7826
      %v7944 = vadd.f32 %v7687, %v7829
      %v7945 = vadd.f32 %v7688, %v7834
      %v7946 = vadd.f32 %v7689, %v7837
      %v7947 = vadd.f32 %v7690, %v7842
      %v7948 = vadd.f32 %v7691, %v7845
      %v7949 = vadd.f32 %v7692, %v7850
      %v7950 = vadd.f32 %v7693, %v7853
      %v7951 = vadd.f32 %v7694, %v7858
      %v7952 = vadd.f32 %v7695, %v7861
      %v7953 = vadd.f32 %v7696, %v7866
      %v7954 = vadd.f32 %v7697, %v7869
      %v7955 = vadd.f32 %v7698, %v7874
      %v7956 = vadd.f32 %v7699, %v7877
      %v7957 = vadd.f32 %v7700, %v7882
      %v7958 = vadd.f32 %v7701, %v7885
      %v7959 = vadd.f32 %v7702, %v7890
      %v7960 = vadd.f32 %v7703, %v7893
      %v7961 = vadd.f32 %v7704, %v7898
      %v7962 = vadd.f32 %v7705, %v7901
      %v7963 = vadd.f32 %v7706, %v7906
      %v7964 = vadd.f32 %v7707, %v7909
      %v7965 = vadd.f32 %v7708, %v7914
      %v7966 = vadd.f32 %v7709, %v7917
      %v7967 = vadd.f32 %v7710, %v7922
      %v7968 = vld [vmem:[#allocation2 + $0x2a] sm:$0xff]
      %v7969 = vld [vmem:[#allocation2 + $0x32] sm:$0xff]
      %v7970 = vld [vmem:[#allocation2 + $0x3a] sm:$0xff]
      %v7971 = vld [vmem:[#allocation2 + $0x42] sm:$0xff]
      %v7972 = vld [vmem:[#allocation2 + $0x4a] sm:$0xff]
      %v7973 = vld [vmem:[#allocation2 + $0x52] sm:$0xff]
      %v7974 = vld [vmem:[#allocation2 + $0x5a] sm:$0xff]
      %v7975 = vld [vmem:[#allocation2 + $0x62] sm:$0xff]
      %v7976 = vld [vmem:[#allocation2 + $0x6a] sm:$0xff]
      %v7977 = vld [vmem:[#allocation2 + $0x72] sm:$0xff]
      %v7978 = vld [vmem:[#allocation2 + $0x7a] sm:$0xff]
      %v7979 = vld [vmem:[#allocation2 + $0x82] sm:$0xff]
      %v7980 = vld [vmem:[#allocation2 + $0x8a] sm:$0xff]
      %v7981 = vld [vmem:[#allocation2 + $0x92] sm:$0xff]
      %v7982 = vld [vmem:[#allocation2 + $0x9a] sm:$0xff]
      %v7983 = vld [vmem:[#allocation2 + $0xa2] sm:$0xff]
      %v7984 = vld [vmem:[#allocation2 + $0xaa] sm:$0xff]
      %v7985 = vld [vmem:[#allocation2 + $0xb2] sm:$0xff]
      %v7986 = vld [vmem:[#allocation2 + $0xba] sm:$0xff]
      %v7987 = vld [vmem:[#allocation2 + $0xc2] sm:$0xff]
      %v7988 = vld [vmem:[#allocation2 + $0xca] sm:$0xff]
      %v7989 = vld [vmem:[#allocation2 + $0xd2] sm:$0xff]
      %v7990 = vld [vmem:[#allocation2 + $0xda] sm:$0xff]
      %v7991 = vld [vmem:[#allocation2 + $0xe2] sm:$0xff]
      %v7992 = vld [vmem:[#allocation2 + $0xea] sm:$0xff]
      %v7993 = vld [vmem:[#allocation2 + $0xf2] sm:$0xff]
      %v7994 = vld [vmem:[#allocation2 + $0xfa] sm:$0xff]
      %v7995 = vld [vmem:[#allocation2 + $0x102] sm:$0xff]
      %v7996 = vld [vmem:[#allocation2 + $0x10a] sm:$0xff]
      %v7997 = vld [vmem:[#allocation2 + $0x112] sm:$0xff]
      %v7998 = vld [vmem:[#allocation2 + $0x11a] sm:$0xff]
      %v7999 = vld [vmem:[#allocation2 + $0x122] sm:$0xff]
      %v8000 = vld [vmem:[#allocation2 + $0x12a] sm:$0xff]
      %v8001 = vld [vmem:[#allocation2 + $0x132] sm:$0xff]
      %v8002 = vld [vmem:[#allocation2 + $0x13a] sm:$0xff]
      %v8003 = vld [vmem:[#allocation2 + $0x142] sm:$0xff]
      %v8004 = vld [vmem:[#allocation2 + $0x14a] sm:$0xff]
      %v8005 = vld [vmem:[#allocation2 + $0x152] sm:$0xff]
      %v8006 = vld [vmem:[#allocation2 + $0x15a] sm:$0xff]
      %v8007 = vld [vmem:[#allocation2 + $0x162] sm:$0xff]
      %v8008 = vld [vmem:[#allocation2 + $0x16a] sm:$0xff]
      %v8009 = vpack.c.bf16 %v7969, %v7968
      %v8010 = vpack.c.bf16 %v7971, %v7970
      %v8011 = vpack.c.bf16 %v7973, %v7972
      %v8012 = vpack.c.bf16 %v7975, %v7974
      %v8013 = vpack.c.bf16 %v7977, %v7976
      %v8014 = vpack.c.bf16 %v7979, %v7978
      %v8015 = vpack.c.bf16 %v7981, %v7980
      %v8016 = vpack.c.bf16 %v7983, %v7982
      %v8017 = vpack.c.bf16 %v7985, %v7984
      %v8018 = vpack.c.bf16 %v7987, %v7986
      %v8019 = vpack.c.bf16 %v7989, %v7988
      %v8020 = vpack.c.bf16 %v7991, %v7990
      %v8021 = vpack.c.bf16 %v7993, %v7992
      %v8022 = vpack.c.bf16 %v7995, %v7994
      %v8023 = vpack.c.bf16 %v7997, %v7996
      %v8024 = vpack.c.bf16 %v7999, %v7998
      %v8025 = vpack.c.bf16 %v8001, %v8000
      %v8026 = vpack.c.bf16 %v8003, %v8002
      %v8027 = vpack.c.bf16 %v8005, %v8004
      %v8028 = vpack.c.bf16 %v8007, %v8006
      %v8029 = vpack.c.bf16 %v8008, %v8008
      %s8030 = scalar_lea.vmem %s6, 60
      %v8031 = vld [vmem:[%s8030] sm:$0xf]
      %v8032 = vld [vmem:[%s8030 + $0x4] sm:$0xf]
      %v8033 = vld [vmem:[%s8030 + $0x8] sm:$0xf]
      %v8037 = vunpack.c.l.b16 %v8031
      %v8038 = vunpack.c.l.b16 %v8032
      %v8039 = vunpack.c.l.b16 %v8033
      %v8040 = vpack.c.b16 %v8038, %v8037
      %v8041 = vpack.c.b16 %v8039, %v8039
      %v8044 = vsel %vm835, %v8009, 0
      %v8047 = vsel %vm835, %v8010, 0
      %v8050 = vsel %vm835, %v8011, 0
      %v8053 = vsel %vm835, %v8012, 0
      %v8056 = vsel %vm835, %v8013, 0
      %v8059 = vsel %vm835, %v8014, 0
      %v8062 = vsel %vm835, %v8015, 0
      %v8065 = vsel %vm835, %v8016, 0
      %v8068 = vsel %vm835, %v8017, 0
      %v8071 = vsel %vm835, %v8018, 0
      %v8074 = vsel %vm835, %v8019, 0
      %v8077 = vsel %vm835, %v8020, 0
      %v8080 = vsel %vm835, %v8021, 0
      %v8083 = vsel %vm835, %v8022, 0
      %v8086 = vsel %vm835, %v8023, 0
      %v8089 = vsel %vm835, %v8024, 0
      %v8092 = vsel %vm835, %v8025, 0
      %v8095 = vsel %vm835, %v8026, 0
      %v8098 = vsel %vm835, %v8027, 0
      %v8101 = vsel %vm835, %v8028, 0
      %v8104 = vsel %vm835, %v8029, 0
      %v8107 = vsel %vm6320, %v8041, 0
      %8109 = vmatprep.subr.bf16.mxu0 0
      %8110 = vmatpush1.bf16.msra.mxu0 %v8040
      %8111 = vmatprep.subr.bf16.mxu0 0
      %8112 = vmatpush1.bf16.msra.mxu0 %v8107
      %8113 = vmatprep.subr.bf16.mxu0 0
      %8114 = vmatpush1.bf16.msra.mxu0 0
      %8115 = vmatprep.subr.bf16.mxu0 0
      %8116 = vmatpush1.bf16.msra.mxu0 0
      %8117 = vmatprep.subr.bf16.mxu0 0
      %8118 = vmatpush1.bf16.msra.mxu0 0
      %8119 = vmatprep.subr.bf16.mxu0 0
      %8120 = vmatpush1.bf16.msra.mxu0 0
      %8121 = vmatprep.subr.bf16.mxu0 0
      %8122 = vmatpush1.bf16.msra.mxu0 0
      %8123 = vmatprep.subr.bf16.mxu0 0
      %8124 = vmatpush1.bf16.msra.mxu0 0
      %8125 = vmatprep.subr.bf16.mxu0 0
      %8126 = vmatpush1.bf16.msra.mxu0 0
      %8127 = vmatprep.subr.bf16.mxu0 0
      %8128 = vmatpush1.bf16.msra.mxu0 0
      %8129 = vmatprep.subr.bf16.mxu0 0
      %8130 = vmatpush1.bf16.msra.mxu0 0
      %8131 = vmatprep.subr.bf16.mxu0 0
      %8132 = vmatpush1.bf16.msra.mxu0 0
      %8133 = vmatprep.subr.bf16.mxu0 0
      %8134 = vmatpush1.bf16.msra.mxu0 0
      %8135 = vmatprep.subr.bf16.mxu0 0
      %8136 = vmatpush1.bf16.msra.mxu0 0
      %8137 = vmatprep.subr.bf16.mxu0 0
      %8138 = vmatpush1.bf16.msra.mxu0 0
      %8139 = vmatprep.subr.bf16.mxu0 0
      %8140 = vmatpush1.bf16.msra.mxu0 0
      %8141 = vmatprep.mubr.bf16.mxu0 0
      %8142 = vmatmul.mubr.bf16.gmra.mrb[0].mxu0 %v8044
      %v8143 = vpop.f32.mrb[0].mxu0
      %v8144 = vadd.f32 0.0, %v8143
      %v8145 = vpop.f32.mrb[0].mxu0
      %v8146 = vpop.f32.mrb[0].mxu0
      %v8147 = vadd.f32 0.0, %v8146
      %v8148 = vpop.f32.mrb[0].mxu0
      %8149 = vmatprep.mubr.bf16.mxu0 0
      %8150 = vmatmul.mubr.bf16.gmra.mrb[0].mxu0 %v8047
      %v8151 = vpop.f32.mrb[0].mxu0
      %v8152 = vadd.f32 0.0, %v8151
      %v8153 = vpop.f32.mrb[0].mxu0
      %v8154 = vpop.f32.mrb[0].mxu0
      %v8155 = vadd.f32 0.0, %v8154
      %v8156 = vpop.f32.mrb[0].mxu0
      %8157 = vmatprep.mubr.bf16.mxu0 0
      %8158 = vmatmul.mubr.bf16.gmra.mrb[0].mxu0 %v8050
      %v8159 = vpop.f32.mrb[0].mxu0
      %v8160 = vadd.f32 0.0, %v8159
      %v8161 = vpop.f32.mrb[0].mxu0
      %v8162 = vpop.f32.mrb[0].mxu0
      %v8163 = vadd.f32 0.0, %v8162
      %v8164 = vpop.f32.mrb[0].mxu0
      %8165 = vmatprep.mubr.bf16.mxu0 0
      %8166 = vmatmul.mubr.bf16.gmra.mrb[0].mxu0 %v8053
      %v8167 = vpop.f32.mrb[0].mxu0
      %v8168 = vadd.f32 0.0, %v8167
      %v8169 = vpop.f32.mrb[0].mxu0
      %v8170 = vpop.f32.mrb[0].mxu0
      %v8171 = vadd.f32 0.0, %v8170
      %v8172 = vpop.f32.mrb[0].mxu0
      %8173 = vmatprep.mubr.bf16.mxu0 0
      %8174 = vmatmul.mubr.bf16.gmra.mrb[0].mxu0 %v8056
      %v8175 = vpop.f32.mrb[0].mxu0
      %v8176 = vadd.f32 0.0, %v8175
      %v8177 = vpop.f32.mrb[0].mxu0
      %v8178 = vpop.f32.mrb[0].mxu0
      %v8179 = vadd.f32 0.0, %v8178
      %v8180 = vpop.f32.mrb[0].mxu0
      %8181 = vmatprep.mubr.bf16.mxu0 0
      %8182 = vmatmul.mubr.bf16.gmra.mrb[0].mxu0 %v8059
      %v8183 = vpop.f32.mrb[0].mxu0
      %v8184 = vadd.f32 0.0, %v8183
      %v8185 = vpop.f32.mrb[0].mxu0
      %v8186 = vpop.f32.mrb[0].mxu0
      %v8187 = vadd.f32 0.0, %v8186
      %v8188 = vpop.f32.mrb[0].mxu0
      %8189 = vmatprep.mubr.bf16.mxu0 0
      %8190 = vmatmul.mubr.bf16.gmra.mrb[0].mxu0 %v8062
      %v8191 = vpop.f32.mrb[0].mxu0
      %v8192 = vadd.f32 0.0, %v8191
      %v8193 = vpop.f32.mrb[0].mxu0
      %v8194 = vpop.f32.mrb[0].mxu0
      %v8195 = vadd.f32 0.0, %v8194
      %v8196 = vpop.f32.mrb[0].mxu0
      %8197 = vmatprep.mubr.bf16.mxu0 0
      %8198 = vmatmul.mubr.bf16.gmra.mrb[0].mxu0 %v8065
      %v8199 = vpop.f32.mrb[0].mxu0
      %v8200 = vadd.f32 0.0, %v8199
      %v8201 = vpop.f32.mrb[0].mxu0
      %v8202 = vpop.f32.mrb[0].mxu0
      %v8203 = vadd.f32 0.0, %v8202
      %v8204 = vpop.f32.mrb[0].mxu0
      %8205 = vmatprep.mubr.bf16.mxu0 0
      %8206 = vmatmul.mubr.bf16.gmra.mrb[0].mxu0 %v8068
      %v8207 = vpop.f32.mrb[0].mxu0
      %v8208 = vadd.f32 0.0, %v8207
      %v8209 = vpop.f32.mrb[0].mxu0
      %v8210 = vpop.f32.mrb[0].mxu0
      %v8211 = vadd.f32 0.0, %v8210
      %v8212 = vpop.f32.mrb[0].mxu0
      %8213 = vmatprep.mubr.bf16.mxu0 0
      %8214 = vmatmul.mubr.bf16.gmra.mrb[0].mxu0 %v8071
      %v8215 = vpop.f32.mrb[0].mxu0
      %v8216 = vadd.f32 0.0, %v8215
      %v8217 = vpop.f32.mrb[0].mxu0
      %v8218 = vpop.f32.mrb[0].mxu0
      %v8219 = vadd.f32 0.0, %v8218
      %v8220 = vpop.f32.mrb[0].mxu0
      %8221 = vmatprep.mubr.bf16.mxu0 0
      %8222 = vmatmul.mubr.bf16.gmra.mrb[0].mxu0 %v8074
      %v8223 = vpop.f32.mrb[0].mxu0
      %v8224 = vadd.f32 0.0, %v8223
      %v8225 = vpop.f32.mrb[0].mxu0
      %v8226 = vpop.f32.mrb[0].mxu0
      %v8227 = vadd.f32 0.0, %v8226
      %v8228 = vpop.f32.mrb[0].mxu0
      %8229 = vmatprep.mubr.bf16.mxu0 0
      %8230 = vmatmul.mubr.bf16.gmra.mrb[0].mxu0 %v8077
      %v8231 = vpop.f32.mrb[0].mxu0
      %v8232 = vadd.f32 0.0, %v8231
      %v8233 = vpop.f32.mrb[0].mxu0
      %v8234 = vpop.f32.mrb[0].mxu0
      %v8235 = vadd.f32 0.0, %v8234
      %v8236 = vpop.f32.mrb[0].mxu0
      %8237 = vmatprep.mubr.bf16.mxu0 0
      %8238 = vmatmul.mubr.bf16.gmra.mrb[0].mxu0 %v8080
      %v8239 = vpop.f32.mrb[0].mxu0
      %v8240 = vadd.f32 0.0, %v8239
      %v8241 = vpop.f32.mrb[0].mxu0
      %v8242 = vpop.f32.mrb[0].mxu0
      %v8243 = vadd.f32 0.0, %v8242
      %v8244 = vpop.f32.mrb[0].mxu0
      %8245 = vmatprep.mubr.bf16.mxu0 0
      %8246 = vmatmul.mubr.bf16.gmra.mrb[0].mxu0 %v8083
      %v8247 = vpop.f32.mrb[0].mxu0
      %v8248 = vadd.f32 0.0, %v8247
      %v8249 = vpop.f32.mrb[0].mxu0
      %v8250 = vpop.f32.mrb[0].mxu0
      %v8251 = vadd.f32 0.0, %v8250
      %v8252 = vpop.f32.mrb[0].mxu0
      %8253 = vmatprep.mubr.bf16.mxu0 0
      %8254 = vmatmul.mubr.bf16.gmra.mrb[0].mxu0 %v8086
      %v8255 = vpop.f32.mrb[0].mxu0
      %v8256 = vadd.f32 0.0, %v8255
      %v8257 = vpop.f32.mrb[0].mxu0
      %v8258 = vpop.f32.mrb[0].mxu0
      %v8259 = vadd.f32 0.0, %v8258
      %v8260 = vpop.f32.mrb[0].mxu0
      %8261 = vmatprep.mubr.bf16.mxu0 0
      %8262 = vmatmul.mubr.bf16.gmra.mrb[0].mxu0 %v8089
      %v8263 = vpop.f32.mrb[0].mxu0
      %v8264 = vadd.f32 0.0, %v8263
      %v8265 = vpop.f32.mrb[0].mxu0
      %v8266 = vpop.f32.mrb[0].mxu0
      %v8267 = vadd.f32 0.0, %v8266
      %v8268 = vpop.f32.mrb[0].mxu0
      %8269 = vmatprep.mubr.bf16.mxu0 0
      %8270 = vmatmul.mubr.bf16.gmra.mrb[0].mxu0 %v8092
      %v8271 = vpop.f32.mrb[0].mxu0
      %v8272 = vadd.f32 0.0, %v8271
      %v8273 = vpop.f32.mrb[0].mxu0
      %v8274 = vpop.f32.mrb[0].mxu0
      %v8275 = vadd.f32 0.0, %v8274
      %v8276 = vpop.f32.mrb[0].mxu0
      %8277 = vmatprep.mubr.bf16.mxu0 0
      %8278 = vmatmul.mubr.bf16.gmra.mrb[0].mxu0 %v8095
      %v8279 = vpop.f32.mrb[0].mxu0
      %v8280 = vadd.f32 0.0, %v8279
      %v8281 = vpop.f32.mrb[0].mxu0
      %v8282 = vpop.f32.mrb[0].mxu0
      %v8283 = vadd.f32 0.0, %v8282
      %v8284 = vpop.f32.mrb[0].mxu0
      %8285 = vmatprep.mubr.bf16.mxu0 0
      %8286 = vmatmul.mubr.bf16.gmra.mrb[0].mxu0 %v8098
      %v8287 = vpop.f32.mrb[0].mxu0
      %v8288 = vadd.f32 0.0, %v8287
      %v8289 = vpop.f32.mrb[0].mxu0
      %v8290 = vpop.f32.mrb[0].mxu0
      %v8291 = vadd.f32 0.0, %v8290
      %v8292 = vpop.f32.mrb[0].mxu0
      %8293 = vmatprep.mubr.bf16.mxu0 0
      %8294 = vmatmul.mubr.bf16.gmra.mrb[0].mxu0 %v8101
      %v8295 = vpop.f32.mrb[0].mxu0
      %v8296 = vadd.f32 0.0, %v8295
      %v8297 = vpop.f32.mrb[0].mxu0
      %v8298 = vpop.f32.mrb[0].mxu0
      %v8299 = vadd.f32 0.0, %v8298
      %v8300 = vpop.f32.mrb[0].mxu0
      %8301 = vmatprep.mubr.bf16.mxu0 0
      %8302 = vmatmul.mubr.bf16.gmra.mrb[0].mxu0 %v8104
      %v8303 = vpop.f32.mrb[0].mxu0
      %v8304 = vadd.f32 0.0, %v8303
      %v8305 = vpop.f32.mrb[0].mxu0
      %v8306 = vpop.f32.mrb[0].mxu0
      %v8307 = vpop.f32.mrb[0].mxu0
      %8308 = vdwg.mxu0
      %v8309 = vadd.f32 %v7927, %v8144
      %v8310 = vadd.f32 %v7928, %v8147
      %v8311 = vadd.f32 %v7929, %v8152
      %v8312 = vadd.f32 %v7930, %v8155
      %v8313 = vadd.f32 %v7931, %v8160
      %v8314 = vadd.f32 %v7932, %v8163
      %v8315 = vadd.f32 %v7933, %v8168
      %v8316 = vadd.f32 %v7934, %v8171
      %v8317 = vadd.f32 %v7935, %v8176
      %v8318 = vadd.f32 %v7936, %v8179
      %v8319 = vadd.f32 %v7937, %v8184
      %v8320 = vadd.f32 %v7938, %v8187
      %v8321 = vadd.f32 %v7939, %v8192
      %v8322 = vadd.f32 %v7940, %v8195
      %v8323 = vadd.f32 %v7941, %v8200
      %v8324 = vadd.f32 %v7942, %v8203
      %v8325 = vadd.f32 %v7943, %v8208
      %v8326 = vadd.f32 %v7944, %v8211
      %v8327 = vadd.f32 %v7945, %v8216
      %v8328 = vadd.f32 %v7946, %v8219
      %v8329 = vadd.f32 %v7947, %v8224
      %v8330 = vadd.f32 %v7948, %v8227
      %v8331 = vadd.f32 %v7949, %v8232
      %v8332 = vadd.f32 %v7950, %v8235
      %v8333 = vadd.f32 %v7951, %v8240
      %v8334 = vadd.f32 %v7952, %v8243
      %v8335 = vadd.f32 %v7953, %v8248
      %v8336 = vadd.f32 %v7954, %v8251
      %v8337 = vadd.f32 %v7955, %v8256
      %v8338 = vadd.f32 %v7956, %v8259
      %v8339 = vadd.f32 %v7957, %v8264
      %v8340 = vadd.f32 %v7958, %v8267
      %v8341 = vadd.f32 %v7959, %v8272
      %v8342 = vadd.f32 %v7960, %v8275
      %v8343 = vadd.f32 %v7961, %v8280
      %v8344 = vadd.f32 %v7962, %v8283
      %v8345 = vadd.f32 %v7963, %v8288
      %v8346 = vadd.f32 %v7964, %v8291
      %v8347 = vadd.f32 %v7965, %v8296
      %v8348 = vadd.f32 %v7966, %v8299
      %v8349 = vadd.f32 %v7967, %v8304
      %v8350 = vld [vmem:[#allocation4 + $0x17] sm:$0xff]
      %v8351 = vld [vmem:[#allocation4 + $0x1f] sm:$0xff]
      %v8352 = vld [vmem:[#allocation4 + $0x27] sm:$0xff]
      %v8353 = vld [vmem:[#allocation4 + $0x2f] sm:$0xff]
      %v8354 = vld [vmem:[#allocation4 + $0x37] sm:$0xff]
      %v8355 = vld [vmem:[#allocation4 + $0x3f] sm:$0xff]
      %v8356 = vld [vmem:[#allocation4 + $0x47] sm:$0xff]
      %v8357 = vld [vmem:[#allocation4 + $0x4f] sm:$0xff]
      %v8358 = vld [vmem:[#allocation4 + $0x57] sm:$0xff]
      %v8359 = vld [vmem:[#allocation4 + $0x5f] sm:$0xff]
      %v8360 = vld [vmem:[#allocation4 + $0x67] sm:$0xff]
      %v8361 = vld [vmem:[#allocation4 + $0x6f] sm:$0xff]
      %v8362 = vld [vmem:[#allocation4 + $0x77] sm:$0xff]
      %v8363 = vld [vmem:[#allocation4 + $0x7f] sm:$0xff]
      %v8364 = vld [vmem:[#allocation4 + $0x87] sm:$0xff]
      %v8365 = vld [vmem:[#allocation4 + $0x8f] sm:$0xff]
      %v8366 = vld [vmem:[#allocation4 + $0x97] sm:$0xff]
      %v8367 = vld [vmem:[#allocation4 + $0x9f] sm:$0xff]
      %v8368 = vld [vmem:[#allocation4 + $0xa7] sm:$0xff]
      %v8369 = vld [vmem:[#allocation4 + $0xaf] sm:$0xff]
      %v8370 = vld [vmem:[#allocation4 + $0xb7] sm:$0xff]
      %v8371 = vld [vmem:[#allocation4 + $0xbf] sm:$0xff]
      %v8372 = vld [vmem:[#allocation4 + $0xc7] sm:$0xff]
      %v8373 = vld [vmem:[#allocation4 + $0xcf] sm:$0xff]
      %v8374 = vld [vmem:[#allocation4 + $0xd7] sm:$0xff]
      %v8375 = vld [vmem:[#allocation4 + $0xdf] sm:$0xff]
      %v8376 = vld [vmem:[#allocation4 + $0xe7] sm:$0xff]
      %v8377 = vld [vmem:[#allocation4 + $0xef] sm:$0xff]
      %v8378 = vld [vmem:[#allocation4 + $0xf7] sm:$0xff]
      %v8379 = vld [vmem:[#allocation4 + $0xff] sm:$0xff]
      %v8380 = vld [vmem:[#allocation4 + $0x107] sm:$0xff]
      %v8381 = vld [vmem:[#allocation4 + $0x10f] sm:$0xff]
      %v8382 = vld [vmem:[#allocation4 + $0x117] sm:$0xff]
      %v8383 = vld [vmem:[#allocation4 + $0x11f] sm:$0xff]
      %v8384 = vld [vmem:[#allocation4 + $0x127] sm:$0xff]
      %v8385 = vld [vmem:[#allocation4 + $0x12f] sm:$0xff]
      %v8386 = vld [vmem:[#allocation4 + $0x137] sm:$0xff]
      %v8387 = vld [vmem:[#allocation4 + $0x13f] sm:$0xff]
      %v8388 = vld [vmem:[#allocation4 + $0x147] sm:$0xff]
      %v8389 = vld [vmem:[#allocation4 + $0x14f] sm:$0xff]
      %v8390 = vld [vmem:[#allocation4 + $0x157] sm:$0xff]
      %v8391 = vpack.c.bf16 %v8351, %v8350
      %v8392 = vpack.c.bf16 %v8353, %v8352
      %v8393 = vpack.c.bf16 %v8355, %v8354
      %v8394 = vpack.c.bf16 %v8357, %v8356
      %v8395 = vpack.c.bf16 %v8359, %v8358
      %v8396 = vpack.c.bf16 %v8361, %v8360
      %v8397 = vpack.c.bf16 %v8363, %v8362
      %v8398 = vpack.c.bf16 %v8365, %v8364
      %v8399 = vpack.c.bf16 %v8367, %v8366
      %v8400 = vpack.c.bf16 %v8369, %v8368
      %v8401 = vpack.c.bf16 %v8371, %v8370
      %v8402 = vpack.c.bf16 %v8373, %v8372
      %v8403 = vpack.c.bf16 %v8375, %v8374
      %v8404 = vpack.c.bf16 %v8377, %v8376
      %v8405 = vpack.c.bf16 %v8379, %v8378
      %v8406 = vpack.c.bf16 %v8381, %v8380
      %v8407 = vpack.c.bf16 %v8383, %v8382
      %v8408 = vpack.c.bf16 %v8385, %v8384
      %v8409 = vpack.c.bf16 %v8387, %v8386
      %v8410 = vpack.c.bf16 %v8389, %v8388
      %v8411 = vpack.c.bf16 %v8390, %v8390
      %v8412 = vld [vmem:[%s7] sm:$0xf]
      %v8413 = vld [vmem:[%s7 + $0x4] sm:$0xf]
      %v8414 = vld [vmem:[%s7 + $0x8] sm:$0xf]
      %v8418 = vunpack.c.l.b16 %v8412
      %v8419 = vunpack.c.l.b16 %v8413
      %v8420 = vunpack.c.l.b16 %v8414
      %v8421 = vpack.c.b16 %v8419, %v8418
      %v8422 = vpack.c.b16 %v8420, %v8420
      %v8425 = vsel %vm835, %v8391, 0
      %v8428 = vsel %vm835, %v8392, 0
      %v8431 = vsel %vm835, %v8393, 0
      %v8434 = vsel %vm835, %v8394, 0
      %v8437 = vsel %vm835, %v8395, 0
      %v8440 = vsel %vm835, %v8396, 0
      %v8443 = vsel %vm835, %v8397, 0
      %v8446 = vsel %vm835, %v8398, 0
      %v8449 = vsel %vm835, %v8399, 0
      %v8452 = vsel %vm835, %v8400, 0
      %v8455 = vsel %vm835, %v8401, 0
      %v8458 = vsel %vm835, %v8402, 0
      %v8461 = vsel %vm835, %v8403, 0
      %v8464 = vsel %vm835, %v8404, 0
      %v8467 = vsel %vm835, %v8405, 0
      %v8470 = vsel %vm835, %v8406, 0
      %v8473 = vsel %vm835, %v8407, 0
      %v8476 = vsel %vm835, %v8408, 0
      %v8479 = vsel %vm835, %v8409, 0
      %v8482 = vsel %vm835, %v8410, 0
      %v8485 = vsel %vm835, %v8411, 0
      %v8488 = vsel %vm6320, %v8422, 0
      %8490 = vmatprep.subr.bf16.mxu0 0
      %8491 = vmatpush1.bf16.msra.mxu0 %v8421
      %8492 = vmatprep.subr.bf16.mxu0 0
      %8493 = vmatpush1.bf16.msra.mxu0 %v8488
      %8494 = vmatprep.subr.bf16.mxu0 0
      %8495 = vmatpush1.bf16.msra.mxu0 0
      %8496 = vmatprep.subr.bf16.mxu0 0
      %8497 = vmatpush1.bf16.msra.mxu0 0
      %8498 = vmatprep.subr.bf16.mxu0 0
      %8499 = vmatpush1.bf16.msra.mxu0 0
      %8500 = vmatprep.subr.bf16.mxu0 0
      %8501 = vmatpush1.bf16.msra.mxu0 0
      %8502 = vmatprep.subr.bf16.mxu0 0
      %8503 = vmatpush1.bf16.msra.mxu0 0
      %8504 = vmatprep.subr.bf16.mxu0 0
      %8505 = vmatpush1.bf16.msra.mxu0 0
      %8506 = vmatprep.subr.bf16.mxu0 0
      %8507 = vmatpush1.bf16.msra.mxu0 0
      %8508 = vmatprep.subr.bf16.mxu0 0
      %8509 = vmatpush1.bf16.msra.mxu0 0
      %8510 = vmatprep.subr.bf16.mxu0 0
      %8511 = vmatpush1.bf16.msra.mxu0 0
      %8512 = vmatprep.subr.bf16.mxu0 0
      %8513 = vmatpush1.bf16.msra.mxu0 0
      %8514 = vmatprep.subr.bf16.mxu0 0
      %8515 = vmatpush1.bf16.msra.mxu0 0
      %8516 = vmatprep.subr.bf16.mxu0 0
      %8517 = vmatpush1.bf16.msra.mxu0 0
      %8518 = vmatprep.subr.bf16.mxu0 0
      %8519 = vmatpush1.bf16.msra.mxu0 0
      %8520 = vmatprep.subr.bf16.mxu0 0
      %8521 = vmatpush1.bf16.msra.mxu0 0
      %8522 = vmatprep.mubr.bf16.mxu0 0
      %8523 = vmatmul.mubr.bf16.gmra.mrb[0].mxu0 %v8425
      %v8524 = vpop.f32.mrb[0].mxu0
      %v8525 = vadd.f32 0.0, %v8524
      %v8526 = vpop.f32.mrb[0].mxu0
      %v8527 = vpop.f32.mrb[0].mxu0
      %v8528 = vadd.f32 0.0, %v8527
      %v8529 = vpop.f32.mrb[0].mxu0
      %8530 = vmatprep.mubr.bf16.mxu0 0
      %8531 = vmatmul.mubr.bf16.gmra.mrb[0].mxu0 %v8428
      %v8532 = vpop.f32.mrb[0].mxu0
      %v8533 = vadd.f32 0.0, %v8532
      %v8534 = vpop.f32.mrb[0].mxu0
      %v8535 = vpop.f32.mrb[0].mxu0
      %v8536 = vadd.f32 0.0, %v8535
      %v8537 = vpop.f32.mrb[0].mxu0
      %8538 = vmatprep.mubr.bf16.mxu0 0
      %8539 = vmatmul.mubr.bf16.gmra.mrb[0].mxu0 %v8431
      %v8540 = vpop.f32.mrb[0].mxu0
      %v8541 = vadd.f32 0.0, %v8540
      %v8542 = vpop.f32.mrb[0].mxu0
      %v8543 = vpop.f32.mrb[0].mxu0
      %v8544 = vadd.f32 0.0, %v8543
      %v8545 = vpop.f32.mrb[0].mxu0
      %8546 = vmatprep.mubr.bf16.mxu0 0
      %8547 = vmatmul.mubr.bf16.gmra.mrb[0].mxu0 %v8434
      %v8548 = vpop.f32.mrb[0].mxu0
      %v8549 = vadd.f32 0.0, %v8548
      %v8550 = vpop.f32.mrb[0].mxu0
      %v8551 = vpop.f32.mrb[0].mxu0
      %v8552 = vadd.f32 0.0, %v8551
      %v8553 = vpop.f32.mrb[0].mxu0
      %8554 = vmatprep.mubr.bf16.mxu0 0
      %8555 = vmatmul.mubr.bf16.gmra.mrb[0].mxu0 %v8437
      %v8556 = vpop.f32.mrb[0].mxu0
      %v8557 = vadd.f32 0.0, %v8556
      %v8558 = vpop.f32.mrb[0].mxu0
      %v8559 = vpop.f32.mrb[0].mxu0
      %v8560 = vadd.f32 0.0, %v8559
      %v8561 = vpop.f32.mrb[0].mxu0
      %8562 = vmatprep.mubr.bf16.mxu0 0
      %8563 = vmatmul.mubr.bf16.gmra.mrb[0].mxu0 %v8440
      %v8564 = vpop.f32.mrb[0].mxu0
      %v8565 = vadd.f32 0.0, %v8564
      %v8566 = vpop.f32.mrb[0].mxu0
      %v8567 = vpop.f32.mrb[0].mxu0
      %v8568 = vadd.f32 0.0, %v8567
      %v8569 = vpop.f32.mrb[0].mxu0
      %8570 = vmatprep.mubr.bf16.mxu0 0
      %8571 = vmatmul.mubr.bf16.gmra.mrb[0].mxu0 %v8443
      %v8572 = vpop.f32.mrb[0].mxu0
      %v8573 = vadd.f32 0.0, %v8572
      %v8574 = vpop.f32.mrb[0].mxu0
      %v8575 = vpop.f32.mrb[0].mxu0
      %v8576 = vadd.f32 0.0, %v8575
      %v8577 = vpop.f32.mrb[0].mxu0
      %8578 = vmatprep.mubr.bf16.mxu0 0
      %8579 = vmatmul.mubr.bf16.gmra.mrb[0].mxu0 %v8446
      %v8580 = vpop.f32.mrb[0].mxu0
      %v8581 = vadd.f32 0.0, %v8580
      %v8582 = vpop.f32.mrb[0].mxu0
      %v8583 = vpop.f32.mrb[0].mxu0
      %v8584 = vadd.f32 0.0, %v8583
      %v8585 = vpop.f32.mrb[0].mxu0
      %8586 = vmatprep.mubr.bf16.mxu0 0
      %8587 = vmatmul.mubr.bf16.gmra.mrb[0].mxu0 %v8449
      %v8588 = vpop.f32.mrb[0].mxu0
      %v8589 = vadd.f32 0.0, %v8588
      %v8590 = vpop.f32.mrb[0].mxu0
      %v8591 = vpop.f32.mrb[0].mxu0
      %v8592 = vadd.f32 0.0, %v8591
      %v8593 = vpop.f32.mrb[0].mxu0
      %8594 = vmatprep.mubr.bf16.mxu0 0
      %8595 = vmatmul.mubr.bf16.gmra.mrb[0].mxu0 %v8452
      %v8596 = vpop.f32.mrb[0].mxu0
      %v8597 = vadd.f32 0.0, %v8596
      %v8598 = vpop.f32.mrb[0].mxu0
      %v8599 = vpop.f32.mrb[0].mxu0
      %v8600 = vadd.f32 0.0, %v8599
      %v8601 = vpop.f32.mrb[0].mxu0
      %8602 = vmatprep.mubr.bf16.mxu0 0
      %8603 = vmatmul.mubr.bf16.gmra.mrb[0].mxu0 %v8455
      %v8604 = vpop.f32.mrb[0].mxu0
      %v8605 = vadd.f32 0.0, %v8604
      %v8606 = vpop.f32.mrb[0].mxu0
      %v8607 = vpop.f32.mrb[0].mxu0
      %v8608 = vadd.f32 0.0, %v8607
      %v8609 = vpop.f32.mrb[0].mxu0
      %8610 = vmatprep.mubr.bf16.mxu0 0
      %8611 = vmatmul.mubr.bf16.gmra.mrb[0].mxu0 %v8458
      %v8612 = vpop.f32.mrb[0].mxu0
      %v8613 = vadd.f32 0.0, %v8612
      %v8614 = vpop.f32.mrb[0].mxu0
      %v8615 = vpop.f32.mrb[0].mxu0
      %v8616 = vadd.f32 0.0, %v8615
      %v8617 = vpop.f32.mrb[0].mxu0
      %8618 = vmatprep.mubr.bf16.mxu0 0
      %8619 = vmatmul.mubr.bf16.gmra.mrb[0].mxu0 %v8461
      %v8620 = vpop.f32.mrb[0].mxu0
      %v8621 = vadd.f32 0.0, %v8620
      %v8622 = vpop.f32.mrb[0].mxu0
      %v8623 = vpop.f32.mrb[0].mxu0
      %v8624 = vadd.f32 0.0, %v8623
      %v8625 = vpop.f32.mrb[0].mxu0
      %8626 = vmatprep.mubr.bf16.mxu0 0
      %8627 = vmatmul.mubr.bf16.gmra.mrb[0].mxu0 %v8464
      %v8628 = vpop.f32.mrb[0].mxu0
      %v8629 = vadd.f32 0.0, %v8628
      %v8630 = vpop.f32.mrb[0].mxu0
      %v8631 = vpop.f32.mrb[0].mxu0
      %v8632 = vadd.f32 0.0, %v8631
      %v8633 = vpop.f32.mrb[0].mxu0
      %8634 = vmatprep.mubr.bf16.mxu0 0
      %8635 = vmatmul.mubr.bf16.gmra.mrb[0].mxu0 %v8467
      %v8636 = vpop.f32.mrb[0].mxu0
      %v8637 = vadd.f32 0.0, %v8636
      %v8638 = vpop.f32.mrb[0].mxu0
      %v8639 = vpop.f32.mrb[0].mxu0
      %v8640 = vadd.f32 0.0, %v8639
      %v8641 = vpop.f32.mrb[0].mxu0
      %8642 = vmatprep.mubr.bf16.mxu0 0
      %8643 = vmatmul.mubr.bf16.gmra.mrb[0].mxu0 %v8470
      %v8644 = vpop.f32.mrb[0].mxu0
      %v8645 = vadd.f32 0.0, %v8644
      %v8646 = vpop.f32.mrb[0].mxu0
      %v8647 = vpop.f32.mrb[0].mxu0
      %v8648 = vadd.f32 0.0, %v8647
      %v8649 = vpop.f32.mrb[0].mxu0
      %8650 = vmatprep.mubr.bf16.mxu0 0
      %8651 = vmatmul.mubr.bf16.gmra.mrb[0].mxu0 %v8473
      %v8652 = vpop.f32.mrb[0].mxu0
      %v8653 = vadd.f32 0.0, %v8652
      %v8654 = vpop.f32.mrb[0].mxu0
      %v8655 = vpop.f32.mrb[0].mxu0
      %v8656 = vadd.f32 0.0, %v8655
      %v8657 = vpop.f32.mrb[0].mxu0
      %8658 = vmatprep.mubr.bf16.mxu0 0
      %8659 = vmatmul.mubr.bf16.gmra.mrb[0].mxu0 %v8476
      %v8660 = vpop.f32.mrb[0].mxu0
      %v8661 = vadd.f32 0.0, %v8660
      %v8662 = vpop.f32.mrb[0].mxu0
      %v8663 = vpop.f32.mrb[0].mxu0
      %v8664 = vadd.f32 0.0, %v8663
      %v8665 = vpop.f32.mrb[0].mxu0
      %8666 = vmatprep.mubr.bf16.mxu0 0
      %8667 = vmatmul.mubr.bf16.gmra.mrb[0].mxu0 %v8479
      %v8668 = vpop.f32.mrb[0].mxu0
      %v8669 = vadd.f32 0.0, %v8668
      %v8670 = vpop.f32.mrb[0].mxu0
      %v8671 = vpop.f32.mrb[0].mxu0
      %v8672 = vadd.f32 0.0, %v8671
      %v8673 = vpop.f32.mrb[0].mxu0
      %8674 = vmatprep.mubr.bf16.mxu0 0
      %8675 = vmatmul.mubr.bf16.gmra.mrb[0].mxu0 %v8482
      %v8676 = vpop.f32.mrb[0].mxu0
      %v8677 = vadd.f32 0.0, %v8676
      %v8678 = vpop.f32.mrb[0].mxu0
      %v8679 = vpop.f32.mrb[0].mxu0
      %v8680 = vadd.f32 0.0, %v8679
      %v8681 = vpop.f32.mrb[0].mxu0
      %8682 = vmatprep.mubr.bf16.mxu0 0
      %8683 = vmatmul.mubr.bf16.gmra.mrb[0].mxu0 %v8485
      %v8684 = vpop.f32.mrb[0].mxu0
      %v8685 = vadd.f32 0.0, %v8684
      %v8686 = vpop.f32.mrb[0].mxu0
      %v8687 = vpop.f32.mrb[0].mxu0
      %v8688 = vpop.f32.mrb[0].mxu0
      %8689 = vdwg.mxu0
      %v8690 = vadd.f32 %v8309, %v8525
      %v8691 = vadd.f32 %v8310, %v8528
      %v8692 = vadd.f32 %v8311, %v8533
      %v8693 = vadd.f32 %v8312, %v8536
      %v8694 = vadd.f32 %v8313, %v8541
      %v8695 = vadd.f32 %v8314, %v8544
      %v8696 = vadd.f32 %v8315, %v8549
      %v8697 = vadd.f32 %v8316, %v8552
      %v8698 = vadd.f32 %v8317, %v8557
      %v8699 = vadd.f32 %v8318, %v8560
      %v8700 = vadd.f32 %v8319, %v8565
      %v8701 = vadd.f32 %v8320, %v8568
      %v8702 = vadd.f32 %v8321, %v8573
      %v8703 = vadd.f32 %v8322, %v8576
      %v8704 = vadd.f32 %v8323, %v8581
      %v8705 = vadd.f32 %v8324, %v8584
      %v8706 = vadd.f32 %v8325, %v8589
      %v8707 = vadd.f32 %v8326, %v8592
      %v8708 = vadd.f32 %v8327, %v8597
      %v8709 = vadd.f32 %v8328, %v8600
      %v8710 = vadd.f32 %v8329, %v8605
      %v8711 = vadd.f32 %v8330, %v8608
      %v8712 = vadd.f32 %v8331, %v8613
      %v8713 = vadd.f32 %v8332, %v8616
      %v8714 = vadd.f32 %v8333, %v8621
      %v8715 = vadd.f32 %v8334, %v8624
      %v8716 = vadd.f32 %v8335, %v8629
      %v8717 = vadd.f32 %v8336, %v8632
      %v8718 = vadd.f32 %v8337, %v8637
      %v8719 = vadd.f32 %v8338, %v8640
      %v8720 = vadd.f32 %v8339, %v8645
      %v8721 = vadd.f32 %v8340, %v8648
      %v8722 = vadd.f32 %v8341, %v8653
      %v8723 = vadd.f32 %v8342, %v8656
      %v8724 = vadd.f32 %v8343, %v8661
      %v8725 = vadd.f32 %v8344, %v8664
      %v8726 = vadd.f32 %v8345, %v8669
      %v8727 = vadd.f32 %v8346, %v8672
      %v8728 = vadd.f32 %v8347, %v8677
      %v8729 = vadd.f32 %v8348, %v8680
      %v8730 = vadd.f32 %v8349, %v8685
      %v8731 = vld [vmem:[#allocation4 + $0x18] sm:$0xff]
      %v8732 = vld [vmem:[#allocation4 + $0x20] sm:$0xff]
      %v8733 = vld [vmem:[#allocation4 + $0x28] sm:$0xff]
      %v8734 = vld [vmem:[#allocation4 + $0x30] sm:$0xff]
      %v8735 = vld [vmem:[#allocation4 + $0x38] sm:$0xff]
      %v8736 = vld [vmem:[#allocation4 + $0x40] sm:$0xff]
      %v8737 = vld [vmem:[#allocation4 + $0x48] sm:$0xff]
      %v8738 = vld [vmem:[#allocation4 + $0x50] sm:$0xff]
      %v8739 = vld [vmem:[#allocation4 + $0x58] sm:$0xff]
      %v8740 = vld [vmem:[#allocation4 + $0x60] sm:$0xff]
      %v8741 = vld [vmem:[#allocation4 + $0x68] sm:$0xff]
      %v8742 = vld [vmem:[#allocation4 + $0x70] sm:$0xff]
      %v8743 = vld [vmem:[#allocation4 + $0x78] sm:$0xff]
      %v8744 = vld [vmem:[#allocation4 + $0x80] sm:$0xff]
      %v8745 = vld [vmem:[#allocation4 + $0x88] sm:$0xff]
      %v8746 = vld [vmem:[#allocation4 + $0x90] sm:$0xff]
      %v8747 = vld [vmem:[#allocation4 + $0x98] sm:$0xff]
      %v8748 = vld [vmem:[#allocation4 + $0xa0] sm:$0xff]
      %v8749 = vld [vmem:[#allocation4 + $0xa8] sm:$0xff]
      %v8750 = vld [vmem:[#allocation4 + $0xb0] sm:$0xff]
      %v8751 = vld [vmem:[#allocation4 + $0xb8] sm:$0xff]
      %v8752 = vld [vmem:[#allocation4 + $0xc0] sm:$0xff]
      %v8753 = vld [vmem:[#allocation4 + $0xc8] sm:$0xff]
      %v8754 = vld [vmem:[#allocation4 + $0xd0] sm:$0xff]
      %v8755 = vld [vmem:[#allocation4 + $0xd8] sm:$0xff]
      %v8756 = vld [vmem:[#allocation4 + $0xe0] sm:$0xff]
      %v8757 = vld [vmem:[#allocation4 + $0xe8] sm:$0xff]
      %v8758 = vld [vmem:[#allocation4 + $0xf0] sm:$0xff]
      %v8759 = vld [vmem:[#allocation4 + $0xf8] sm:$0xff]
      %v8760 = vld [vmem:[#allocation4 + $0x100] sm:$0xff]
      %v8761 = vld [vmem:[#allocation4 + $0x108] sm:$0xff]
      %v8762 = vld [vmem:[#allocation4 + $0x110] sm:$0xff]
      %v8763 = vld [vmem:[#allocation4 + $0x118] sm:$0xff]
      %v8764 = vld [vmem:[#allocation4 + $0x120] sm:$0xff]
      %v8765 = vld [vmem:[#allocation4 + $0x128] sm:$0xff]
      %v8766 = vld [vmem:[#allocation4 + $0x130] sm:$0xff]
      %v8767 = vld [vmem:[#allocation4 + $0x138] sm:$0xff]
      %v8768 = vld [vmem:[#allocation4 + $0x140] sm:$0xff]
      %v8769 = vld [vmem:[#allocation4 + $0x148] sm:$0xff]
      %v8770 = vld [vmem:[#allocation4 + $0x150] sm:$0xff]
      %v8771 = vld [vmem:[#allocation4 + $0x158] sm:$0xff]
      %v8772 = vpack.c.bf16 %v8732, %v8731
      %v8773 = vpack.c.bf16 %v8734, %v8733
      %v8774 = vpack.c.bf16 %v8736, %v8735
      %v8775 = vpack.c.bf16 %v8738, %v8737
      %v8776 = vpack.c.bf16 %v8740, %v8739
      %v8777 = vpack.c.bf16 %v8742, %v8741
      %v8778 = vpack.c.bf16 %v8744, %v8743
      %v8779 = vpack.c.bf16 %v8746, %v8745
      %v8780 = vpack.c.bf16 %v8748, %v8747
      %v8781 = vpack.c.bf16 %v8750, %v8749
      %v8782 = vpack.c.bf16 %v8752, %v8751
      %v8783 = vpack.c.bf16 %v8754, %v8753
      %v8784 = vpack.c.bf16 %v8756, %v8755
      %v8785 = vpack.c.bf16 %v8758, %v8757
      %v8786 = vpack.c.bf16 %v8760, %v8759
      %v8787 = vpack.c.bf16 %v8762, %v8761
      %v8788 = vpack.c.bf16 %v8764, %v8763
      %v8789 = vpack.c.bf16 %v8766, %v8765
      %v8790 = vpack.c.bf16 %v8768, %v8767
      %v8791 = vpack.c.bf16 %v8770, %v8769
      %v8792 = vpack.c.bf16 %v8771, %v8771
      %s8793 = scalar_lea.vmem %s7, 12
      %v8794 = vld [vmem:[%s8793] sm:$0xf]
      %v8795 = vld [vmem:[%s8793 + $0x4] sm:$0xf]
      %v8796 = vld [vmem:[%s8793 + $0x8] sm:$0xf]
      %v8800 = vunpack.c.l.b16 %v8794
      %v8801 = vunpack.c.l.b16 %v8795
      %v8802 = vunpack.c.l.b16 %v8796
      %v8803 = vpack.c.b16 %v8801, %v8800
      %v8804 = vpack.c.b16 %v8802, %v8802
      %v8807 = vsel %vm835, %v8772, 0
      %v8810 = vsel %vm835, %v8773, 0
      %v8813 = vsel %vm835, %v8774, 0
      %v8816 = vsel %vm835, %v8775, 0
      %v8819 = vsel %vm835, %v8776, 0
      %v8822 = vsel %vm835, %v8777, 0
      %v8825 = vsel %vm835, %v8778, 0
      %v8828 = vsel %vm835, %v8779, 0
      %v8831 = vsel %vm835, %v8780, 0
      %v8834 = vsel %vm835, %v8781, 0
      %v8837 = vsel %vm835, %v8782, 0
      %v8840 = vsel %vm835, %v8783, 0
      %v8843 = vsel %vm835, %v8784, 0
      %v8846 = vsel %vm835, %v8785, 0
      %v8849 = vsel %vm835, %v8786, 0
      %v8852 = vsel %vm835, %v8787, 0
      %v8855 = vsel %vm835, %v8788, 0
      %v8858 = vsel %vm835, %v8789, 0
      %v8861 = vsel %vm835, %v8790, 0
      %v8864 = vsel %vm835, %v8791, 0
      %v8867 = vsel %vm835, %v8792, 0
      %v8870 = vsel %vm6320, %v8804, 0
      %8872 = vmatprep.subr.bf16.mxu0 0
      %8873 = vmatpush1.bf16.msra.mxu0 %v8803
      %8874 = vmatprep.subr.bf16.mxu0 0
      %8875 = vmatpush1.bf16.msra.mxu0 %v8870
      %8876 = vmatprep.subr.bf16.mxu0 0
      %8877 = vmatpush1.bf16.msra.mxu0 0
      %8878 = vmatprep.subr.bf16.mxu0 0
      %8879 = vmatpush1.bf16.msra.mxu0 0
      %8880 = vmatprep.subr.bf16.mxu0 0
      %8881 = vmatpush1.bf16.msra.mxu0 0
      %8882 = vmatprep.subr.bf16.mxu0 0
      %8883 = vmatpush1.bf16.msra.mxu0 0
      %8884 = vmatprep.subr.bf16.mxu0 0
      %8885 = vmatpush1.bf16.msra.mxu0 0
      %8886 = vmatprep.subr.bf16.mxu0 0
      %8887 = vmatpush1.bf16.msra.mxu0 0
      %8888 = vmatprep.subr.bf16.mxu0 0
      %8889 = vmatpush1.bf16.msra.mxu0 0
      %8890 = vmatprep.subr.bf16.mxu0 0
      %8891 = vmatpush1.bf16.msra.mxu0 0
      %8892 = vmatprep.subr.bf16.mxu0 0
      %8893 = vmatpush1.bf16.msra.mxu0 0
      %8894 = vmatprep.subr.bf16.mxu0 0
      %8895 = vmatpush1.bf16.msra.mxu0 0
      %8896 = vmatprep.subr.bf16.mxu0 0
      %8897 = vmatpush1.bf16.msra.mxu0 0
      %8898 = vmatprep.subr.bf16.mxu0 0
      %8899 = vmatpush1.bf16.msra.mxu0 0
      %8900 = vmatprep.subr.bf16.mxu0 0
      %8901 = vmatpush1.bf16.msra.mxu0 0
      %8902 = vmatprep.subr.bf16.mxu0 0
      %8903 = vmatpush1.bf16.msra.mxu0 0
      %8904 = vmatprep.mubr.bf16.mxu0 0
      %8905 = vmatmul.mubr.bf16.gmra.mrb[0].mxu0 %v8807
      %v8906 = vpop.f32.mrb[0].mxu0
      %v8907 = vadd.f32 0.0, %v8906
      %v8908 = vpop.f32.mrb[0].mxu0
      %v8909 = vpop.f32.mrb[0].mxu0
      %v8910 = vadd.f32 0.0, %v8909
      %v8911 = vpop.f32.mrb[0].mxu0
      %8912 = vmatprep.mubr.bf16.mxu0 0
      %8913 = vmatmul.mubr.bf16.gmra.mrb[0].mxu0 %v8810
      %v8914 = vpop.f32.mrb[0].mxu0
      %v8915 = vadd.f32 0.0, %v8914
      %v8916 = vpop.f32.mrb[0].mxu0
      %v8917 = vpop.f32.mrb[0].mxu0
      %v8918 = vadd.f32 0.0, %v8917
      %v8919 = vpop.f32.mrb[0].mxu0
      %8920 = vmatprep.mubr.bf16.mxu0 0
      %8921 = vmatmul.mubr.bf16.gmra.mrb[0].mxu0 %v8813
      %v8922 = vpop.f32.mrb[0].mxu0
      %v8923 = vadd.f32 0.0, %v8922
      %v8924 = vpop.f32.mrb[0].mxu0
      %v8925 = vpop.f32.mrb[0].mxu0
      %v8926 = vadd.f32 0.0, %v8925
      %v8927 = vpop.f32.mrb[0].mxu0
      %8928 = vmatprep.mubr.bf16.mxu0 0
      %8929 = vmatmul.mubr.bf16.gmra.mrb[0].mxu0 %v8816
      %v8930 = vpop.f32.mrb[0].mxu0
      %v8931 = vadd.f32 0.0, %v8930
      %v8932 = vpop.f32.mrb[0].mxu0
      %v8933 = vpop.f32.mrb[0].mxu0
      %v8934 = vadd.f32 0.0, %v8933
      %v8935 = vpop.f32.mrb[0].mxu0
      %8936 = vmatprep.mubr.bf16.mxu0 0
      %8937 = vmatmul.mubr.bf16.gmra.mrb[0].mxu0 %v8819
      %v8938 = vpop.f32.mrb[0].mxu0
      %v8939 = vadd.f32 0.0, %v8938
      %v8940 = vpop.f32.mrb[0].mxu0
      %v8941 = vpop.f32.mrb[0].mxu0
      %v8942 = vadd.f32 0.0, %v8941
      %v8943 = vpop.f32.mrb[0].mxu0
      %8944 = vmatprep.mubr.bf16.mxu0 0
      %8945 = vmatmul.mubr.bf16.gmra.mrb[0].mxu0 %v8822
      %v8946 = vpop.f32.mrb[0].mxu0
      %v8947 = vadd.f32 0.0, %v8946
      %v8948 = vpop.f32.mrb[0].mxu0
      %v8949 = vpop.f32.mrb[0].mxu0
      %v8950 = vadd.f32 0.0, %v8949
      %v8951 = vpop.f32.mrb[0].mxu0
      %8952 = vmatprep.mubr.bf16.mxu0 0
      %8953 = vmatmul.mubr.bf16.gmra.mrb[0].mxu0 %v8825
      %v8954 = vpop.f32.mrb[0].mxu0
      %v8955 = vadd.f32 0.0, %v8954
      %v8956 = vpop.f32.mrb[0].mxu0
      %v8957 = vpop.f32.mrb[0].mxu0
      %v8958 = vadd.f32 0.0, %v8957
      %v8959 = vpop.f32.mrb[0].mxu0
      %8960 = vmatprep.mubr.bf16.mxu0 0
      %8961 = vmatmul.mubr.bf16.gmra.mrb[0].mxu0 %v8828
      %v8962 = vpop.f32.mrb[0].mxu0
      %v8963 = vadd.f32 0.0, %v8962
      %v8964 = vpop.f32.mrb[0].mxu0
      %v8965 = vpop.f32.mrb[0].mxu0
      %v8966 = vadd.f32 0.0, %v8965
      %v8967 = vpop.f32.mrb[0].mxu0
      %8968 = vmatprep.mubr.bf16.mxu0 0
      %8969 = vmatmul.mubr.bf16.gmra.mrb[0].mxu0 %v8831
      %v8970 = vpop.f32.mrb[0].mxu0
      %v8971 = vadd.f32 0.0, %v8970
      %v8972 = vpop.f32.mrb[0].mxu0
      %v8973 = vpop.f32.mrb[0].mxu0
      %v8974 = vadd.f32 0.0, %v8973
      %v8975 = vpop.f32.mrb[0].mxu0
      %8976 = vmatprep.mubr.bf16.mxu0 0
      %8977 = vmatmul.mubr.bf16.gmra.mrb[0].mxu0 %v8834
      %v8978 = vpop.f32.mrb[0].mxu0
      %v8979 = vadd.f32 0.0, %v8978
      %v8980 = vpop.f32.mrb[0].mxu0
      %v8981 = vpop.f32.mrb[0].mxu0
      %v8982 = vadd.f32 0.0, %v8981
      %v8983 = vpop.f32.mrb[0].mxu0
      %8984 = vmatprep.mubr.bf16.mxu0 0
      %8985 = vmatmul.mubr.bf16.gmra.mrb[0].mxu0 %v8837
      %v8986 = vpop.f32.mrb[0].mxu0
      %v8987 = vadd.f32 0.0, %v8986
      %v8988 = vpop.f32.mrb[0].mxu0
      %v8989 = vpop.f32.mrb[0].mxu0
      %v8990 = vadd.f32 0.0, %v8989
      %v8991 = vpop.f32.mrb[0].mxu0
      %8992 = vmatprep.mubr.bf16.mxu0 0
      %8993 = vmatmul.mubr.bf16.gmra.mrb[0].mxu0 %v8840
      %v8994 = vpop.f32.mrb[0].mxu0
      %v8995 = vadd.f32 0.0, %v8994
      %v8996 = vpop.f32.mrb[0].mxu0
      %v8997 = vpop.f32.mrb[0].mxu0
      %v8998 = vadd.f32 0.0, %v8997
      %v8999 = vpop.f32.mrb[0].mxu0
      %9000 = vmatprep.mubr.bf16.mxu0 0
      %9001 = vmatmul.mubr.bf16.gmra.mrb[0].mxu0 %v8843
      %v9002 = vpop.f32.mrb[0].mxu0
      %v9003 = vadd.f32 0.0, %v9002
      %v9004 = vpop.f32.mrb[0].mxu0
      %v9005 = vpop.f32.mrb[0].mxu0
      %v9006 = vadd.f32 0.0, %v9005
      %v9007 = vpop.f32.mrb[0].mxu0
      %9008 = vmatprep.mubr.bf16.mxu0 0
      %9009 = vmatmul.mubr.bf16.gmra.mrb[0].mxu0 %v8846
      %v9010 = vpop.f32.mrb[0].mxu0
      %v9011 = vadd.f32 0.0, %v9010
      %v9012 = vpop.f32.mrb[0].mxu0
      %v9013 = vpop.f32.mrb[0].mxu0
      %v9014 = vadd.f32 0.0, %v9013
      %v9015 = vpop.f32.mrb[0].mxu0
      %9016 = vmatprep.mubr.bf16.mxu0 0
      %9017 = vmatmul.mubr.bf16.gmra.mrb[0].mxu0 %v8849
      %v9018 = vpop.f32.mrb[0].mxu0
      %v9019 = vadd.f32 0.0, %v9018
      %v9020 = vpop.f32.mrb[0].mxu0
      %v9021 = vpop.f32.mrb[0].mxu0
      %v9022 = vadd.f32 0.0, %v9021
      %v9023 = vpop.f32.mrb[0].mxu0
      %9024 = vmatprep.mubr.bf16.mxu0 0
      %9025 = vmatmul.mubr.bf16.gmra.mrb[0].mxu0 %v8852
      %v9026 = vpop.f32.mrb[0].mxu0
      %v9027 = vadd.f32 0.0, %v9026
      %v9028 = vpop.f32.mrb[0].mxu0
      %v9029 = vpop.f32.mrb[0].mxu0
      %v9030 = vadd.f32 0.0, %v9029
      %v9031 = vpop.f32.mrb[0].mxu0
      %9032 = vmatprep.mubr.bf16.mxu0 0
      %9033 = vmatmul.mubr.bf16.gmra.mrb[0].mxu0 %v8855
      %v9034 = vpop.f32.mrb[0].mxu0
      %v9035 = vadd.f32 0.0, %v9034
      %v9036 = vpop.f32.mrb[0].mxu0
      %v9037 = vpop.f32.mrb[0].mxu0
      %v9038 = vadd.f32 0.0, %v9037
      %v9039 = vpop.f32.mrb[0].mxu0
      %9040 = vmatprep.mubr.bf16.mxu0 0
      %9041 = vmatmul.mubr.bf16.gmra.mrb[0].mxu0 %v8858
      %v9042 = vpop.f32.mrb[0].mxu0
      %v9043 = vadd.f32 0.0, %v9042
      %v9044 = vpop.f32.mrb[0].mxu0
      %v9045 = vpop.f32.mrb[0].mxu0
      %v9046 = vadd.f32 0.0, %v9045
      %v9047 = vpop.f32.mrb[0].mxu0
      %9048 = vmatprep.mubr.bf16.mxu0 0
      %9049 = vmatmul.mubr.bf16.gmra.mrb[0].mxu0 %v8861
      %v9050 = vpop.f32.mrb[0].mxu0
      %v9051 = vadd.f32 0.0, %v9050
      %v9052 = vpop.f32.mrb[0].mxu0
      %v9053 = vpop.f32.mrb[0].mxu0
      %v9054 = vadd.f32 0.0, %v9053
      %v9055 = vpop.f32.mrb[0].mxu0
      %9056 = vmatprep.mubr.bf16.mxu0 0
      %9057 = vmatmul.mubr.bf16.gmra.mrb[0].mxu0 %v8864
      %v9058 = vpop.f32.mrb[0].mxu0
      %v9059 = vadd.f32 0.0, %v9058
      %v9060 = vpop.f32.mrb[0].mxu0
      %v9061 = vpop.f32.mrb[0].mxu0
      %v9062 = vadd.f32 0.0, %v9061
      %v9063 = vpop.f32.mrb[0].mxu0
      %9064 = vmatprep.mubr.bf16.mxu0 0
      %9065 = vmatmul.mubr.bf16.gmra.mrb[0].mxu0 %v8867
      %v9066 = vpop.f32.mrb[0].mxu0
      %v9067 = vadd.f32 0.0, %v9066
      %v9068 = vpop.f32.mrb[0].mxu0
      %v9069 = vpop.f32.mrb[0].mxu0
      %v9070 = vpop.f32.mrb[0].mxu0
      %9071 = vdwg.mxu0
      %v9072 = vadd.f32 %v8690, %v8907
      %v9073 = vadd.f32 %v8691, %v8910
      %v9074 = vadd.f32 %v8692, %v8915
      %v9075 = vadd.f32 %v8693, %v8918
      %v9076 = vadd.f32 %v8694, %v8923
      %v9077 = vadd.f32 %v8695, %v8926
      %v9078 = vadd.f32 %v8696, %v8931
      %v9079 = vadd.f32 %v8697, %v8934
      %v9080 = vadd.f32 %v8698, %v8939
      %v9081 = vadd.f32 %v8699, %v8942
      %v9082 = vadd.f32 %v8700, %v8947
      %v9083 = vadd.f32 %v8701, %v8950
      %v9084 = vadd.f32 %v8702, %v8955
      %v9085 = vadd.f32 %v8703, %v8958
      %v9086 = vadd.f32 %v8704, %v8963
      %v9087 = vadd.f32 %v8705, %v8966
      %v9088 = vadd.f32 %v8706, %v8971
      %v9089 = vadd.f32 %v8707, %v8974
      %v9090 = vadd.f32 %v8708, %v8979
      %v9091 = vadd.f32 %v8709, %v8982
      %v9092 = vadd.f32 %v8710, %v8987
      %v9093 = vadd.f32 %v8711, %v8990
      %v9094 = vadd.f32 %v8712, %v8995
      %v9095 = vadd.f32 %v8713, %v8998
      %v9096 = vadd.f32 %v8714, %v9003
      %v9097 = vadd.f32 %v8715, %v9006
      %v9098 = vadd.f32 %v8716, %v9011
      %v9099 = vadd.f32 %v8717, %v9014
      %v9100 = vadd.f32 %v8718, %v9019
      %v9101 = vadd.f32 %v8719, %v9022
      %v9102 = vadd.f32 %v8720, %v9027
      %v9103 = vadd.f32 %v8721, %v9030
      %v9104 = vadd.f32 %v8722, %v9035
      %v9105 = vadd.f32 %v8723, %v9038
      %v9106 = vadd.f32 %v8724, %v9043
      %v9107 = vadd.f32 %v8725, %v9046
      %v9108 = vadd.f32 %v8726, %v9051
      %v9109 = vadd.f32 %v8727, %v9054
      %v9110 = vadd.f32 %v8728, %v9059
      %v9111 = vadd.f32 %v8729, %v9062
      %v9112 = vadd.f32 %v8730, %v9067
      %v9113 = vld [vmem:[#allocation4 + $0x19] sm:$0xff]
      %v9114 = vld [vmem:[#allocation4 + $0x21] sm:$0xff]
      %v9115 = vld [vmem:[#allocation4 + $0x29] sm:$0xff]
      %v9116 = vld [vmem:[#allocation4 + $0x31] sm:$0xff]
      %v9117 = vld [vmem:[#allocation4 + $0x39] sm:$0xff]
      %v9118 = vld [vmem:[#allocation4 + $0x41] sm:$0xff]
      %v9119 = vld [vmem:[#allocation4 + $0x49] sm:$0xff]
      %v9120 = vld [vmem:[#allocation4 + $0x51] sm:$0xff]
      %v9121 = vld [vmem:[#allocation4 + $0x59] sm:$0xff]
      %v9122 = vld [vmem:[#allocation4 + $0x61] sm:$0xff]
      %v9123 = vld [vmem:[#allocation4 + $0x69] sm:$0xff]
      %v9124 = vld [vmem:[#allocation4 + $0x71] sm:$0xff]
      %v9125 = vld [vmem:[#allocation4 + $0x79] sm:$0xff]
      %v9126 = vld [vmem:[#allocation4 + $0x81] sm:$0xff]
      %v9127 = vld [vmem:[#allocation4 + $0x89] sm:$0xff]
      %v9128 = vld [vmem:[#allocation4 + $0x91] sm:$0xff]
      %v9129 = vld [vmem:[#allocation4 + $0x99] sm:$0xff]
      %v9130 = vld [vmem:[#allocation4 + $0xa1] sm:$0xff]
      %v9131 = vld [vmem:[#allocation4 + $0xa9] sm:$0xff]
      %v9132 = vld [vmem:[#allocation4 + $0xb1] sm:$0xff]
      %v9133 = vld [vmem:[#allocation4 + $0xb9] sm:$0xff]
      %v9134 = vld [vmem:[#allocation4 + $0xc1] sm:$0xff]
      %v9135 = vld [vmem:[#allocation4 + $0xc9] sm:$0xff]
      %v9136 = vld [vmem:[#allocation4 + $0xd1] sm:$0xff]
      %v9137 = vld [vmem:[#allocation4 + $0xd9] sm:$0xff]
      %v9138 = vld [vmem:[#allocation4 + $0xe1] sm:$0xff]
      %v9139 = vld [vmem:[#allocation4 + $0xe9] sm:$0xff]
      %v9140 = vld [vmem:[#allocation4 + $0xf1] sm:$0xff]
      %v9141 = vld [vmem:[#allocation4 + $0xf9] sm:$0xff]
      %v9142 = vld [vmem:[#allocation4 + $0x101] sm:$0xff]
      %v9143 = vld [vmem:[#allocation4 + $0x109] sm:$0xff]
      %v9144 = vld [vmem:[#allocation4 + $0x111] sm:$0xff]
      %v9145 = vld [vmem:[#allocation4 + $0x119] sm:$0xff]
      %v9146 = vld [vmem:[#allocation4 + $0x121] sm:$0xff]
      %v9147 = vld [vmem:[#allocation4 + $0x129] sm:$0xff]
      %v9148 = vld [vmem:[#allocation4 + $0x131] sm:$0xff]
      %v9149 = vld [vmem:[#allocation4 + $0x139] sm:$0xff]
      %v9150 = vld [vmem:[#allocation4 + $0x141] sm:$0xff]
      %v9151 = vld [vmem:[#allocation4 + $0x149] sm:$0xff]
      %v9152 = vld [vmem:[#allocation4 + $0x151] sm:$0xff]
      %v9153 = vld [vmem:[#allocation4 + $0x159] sm:$0xff]
      %v9154 = vpack.c.bf16 %v9114, %v9113
      %v9155 = vpack.c.bf16 %v9116, %v9115
      %v9156 = vpack.c.bf16 %v9118, %v9117
      %v9157 = vpack.c.bf16 %v9120, %v9119
      %v9158 = vpack.c.bf16 %v9122, %v9121
      %v9159 = vpack.c.bf16 %v9124, %v9123
      %v9160 = vpack.c.bf16 %v9126, %v9125
      %v9161 = vpack.c.bf16 %v9128, %v9127
      %v9162 = vpack.c.bf16 %v9130, %v9129
      %v9163 = vpack.c.bf16 %v9132, %v9131
      %v9164 = vpack.c.bf16 %v9134, %v9133
      %v9165 = vpack.c.bf16 %v9136, %v9135
      %v9166 = vpack.c.bf16 %v9138, %v9137
      %v9167 = vpack.c.bf16 %v9140, %v9139
      %v9168 = vpack.c.bf16 %v9142, %v9141
      %v9169 = vpack.c.bf16 %v9144, %v9143
      %v9170 = vpack.c.bf16 %v9146, %v9145
      %v9171 = vpack.c.bf16 %v9148, %v9147
      %v9172 = vpack.c.bf16 %v9150, %v9149
      %v9173 = vpack.c.bf16 %v9152, %v9151
      %v9174 = vpack.c.bf16 %v9153, %v9153
      %s9175 = scalar_lea.vmem %s7, 24
      %v9176 = vld [vmem:[%s9175] sm:$0xf]
      %v9177 = vld [vmem:[%s9175 + $0x4] sm:$0xf]
      %v9178 = vld [vmem:[%s9175 + $0x8] sm:$0xf]
      %v9182 = vunpack.c.l.b16 %v9176
      %v9183 = vunpack.c.l.b16 %v9177
      %v9184 = vunpack.c.l.b16 %v9178
      %v9185 = vpack.c.b16 %v9183, %v9182
      %v9186 = vpack.c.b16 %v9184, %v9184
      %v9189 = vsel %vm835, %v9154, 0
      %v9192 = vsel %vm835, %v9155, 0
      %v9195 = vsel %vm835, %v9156, 0
      %v9198 = vsel %vm835, %v9157, 0
      %v9201 = vsel %vm835, %v9158, 0
      %v9204 = vsel %vm835, %v9159, 0
      %v9207 = vsel %vm835, %v9160, 0
      %v9210 = vsel %vm835, %v9161, 0
      %v9213 = vsel %vm835, %v9162, 0
      %v9216 = vsel %vm835, %v9163, 0
      %v9219 = vsel %vm835, %v9164, 0
      %v9222 = vsel %vm835, %v9165, 0
      %v9225 = vsel %vm835, %v9166, 0
      %v9228 = vsel %vm835, %v9167, 0
      %v9231 = vsel %vm835, %v9168, 0
      %v9234 = vsel %vm835, %v9169, 0
      %v9237 = vsel %vm835, %v9170, 0
      %v9240 = vsel %vm835, %v9171, 0
      %v9243 = vsel %vm835, %v9172, 0
      %v9246 = vsel %vm835, %v9173, 0
      %v9249 = vsel %vm835, %v9174, 0
      %v9252 = vsel %vm6320, %v9186, 0
      %9254 = vmatprep.subr.bf16.mxu0 0
      %9255 = vmatpush1.bf16.msra.mxu0 %v9185
      %9256 = vmatprep.subr.bf16.mxu0 0
      %9257 = vmatpush1.bf16.msra.mxu0 %v9252
      %9258 = vmatprep.subr.bf16.mxu0 0
      %9259 = vmatpush1.bf16.msra.mxu0 0
      %9260 = vmatprep.subr.bf16.mxu0 0
      %9261 = vmatpush1.bf16.msra.mxu0 0
      %9262 = vmatprep.subr.bf16.mxu0 0
      %9263 = vmatpush1.bf16.msra.mxu0 0
      %9264 = vmatprep.subr.bf16.mxu0 0
      %9265 = vmatpush1.bf16.msra.mxu0 0
      %9266 = vmatprep.subr.bf16.mxu0 0
      %9267 = vmatpush1.bf16.msra.mxu0 0
      %9268 = vmatprep.subr.bf16.mxu0 0
      %9269 = vmatpush1.bf16.msra.mxu0 0
      %9270 = vmatprep.subr.bf16.mxu0 0
      %9271 = vmatpush1.bf16.msra.mxu0 0
      %9272 = vmatprep.subr.bf16.mxu0 0
      %9273 = vmatpush1.bf16.msra.mxu0 0
      %9274 = vmatprep.subr.bf16.mxu0 0
      %9275 = vmatpush1.bf16.msra.mxu0 0
      %9276 = vmatprep.subr.bf16.mxu0 0
      %9277 = vmatpush1.bf16.msra.mxu0 0
      %9278 = vmatprep.subr.bf16.mxu0 0
      %9279 = vmatpush1.bf16.msra.mxu0 0
      %9280 = vmatprep.subr.bf16.mxu0 0
      %9281 = vmatpush1.bf16.msra.mxu0 0
      %9282 = vmatprep.subr.bf16.mxu0 0
      %9283 = vmatpush1.bf16.msra.mxu0 0
      %9284 = vmatprep.subr.bf16.mxu0 0
      %9285 = vmatpush1.bf16.msra.mxu0 0
      %9286 = vmatprep.mubr.bf16.mxu0 0
      %9287 = vmatmul.mubr.bf16.gmra.mrb[0].mxu0 %v9189
      %v9288 = vpop.f32.mrb[0].mxu0
      %v9289 = vadd.f32 0.0, %v9288
      %v9290 = vpop.f32.mrb[0].mxu0
      %v9291 = vpop.f32.mrb[0].mxu0
      %v9292 = vadd.f32 0.0, %v9291
      %v9293 = vpop.f32.mrb[0].mxu0
      %9294 = vmatprep.mubr.bf16.mxu0 0
      %9295 = vmatmul.mubr.bf16.gmra.mrb[0].mxu0 %v9192
      %v9296 = vpop.f32.mrb[0].mxu0
      %v9297 = vadd.f32 0.0, %v9296
      %v9298 = vpop.f32.mrb[0].mxu0
      %v9299 = vpop.f32.mrb[0].mxu0
      %v9300 = vadd.f32 0.0, %v9299
      %v9301 = vpop.f32.mrb[0].mxu0
      %9302 = vmatprep.mubr.bf16.mxu0 0
      %9303 = vmatmul.mubr.bf16.gmra.mrb[0].mxu0 %v9195
      %v9304 = vpop.f32.mrb[0].mxu0
      %v9305 = vadd.f32 0.0, %v9304
      %v9306 = vpop.f32.mrb[0].mxu0
      %v9307 = vpop.f32.mrb[0].mxu0
      %v9308 = vadd.f32 0.0, %v9307
      %v9309 = vpop.f32.mrb[0].mxu0
      %9310 = vmatprep.mubr.bf16.mxu0 0
      %9311 = vmatmul.mubr.bf16.gmra.mrb[0].mxu0 %v9198
      %v9312 = vpop.f32.mrb[0].mxu0
      %v9313 = vadd.f32 0.0, %v9312
      %v9314 = vpop.f32.mrb[0].mxu0
      %v9315 = vpop.f32.mrb[0].mxu0
      %v9316 = vadd.f32 0.0, %v9315
      %v9317 = vpop.f32.mrb[0].mxu0
      %9318 = vmatprep.mubr.bf16.mxu0 0
      %9319 = vmatmul.mubr.bf16.gmra.mrb[0].mxu0 %v9201
      %v9320 = vpop.f32.mrb[0].mxu0
      %v9321 = vadd.f32 0.0, %v9320
      %v9322 = vpop.f32.mrb[0].mxu0
      %v9323 = vpop.f32.mrb[0].mxu0
      %v9324 = vadd.f32 0.0, %v9323
      %v9325 = vpop.f32.mrb[0].mxu0
      %9326 = vmatprep.mubr.bf16.mxu0 0
      %9327 = vmatmul.mubr.bf16.gmra.mrb[0].mxu0 %v9204
      %v9328 = vpop.f32.mrb[0].mxu0
      %v9329 = vadd.f32 0.0, %v9328
      %v9330 = vpop.f32.mrb[0].mxu0
      %v9331 = vpop.f32.mrb[0].mxu0
      %v9332 = vadd.f32 0.0, %v9331
      %v9333 = vpop.f32.mrb[0].mxu0
      %9334 = vmatprep.mubr.bf16.mxu0 0
      %9335 = vmatmul.mubr.bf16.gmra.mrb[0].mxu0 %v9207
      %v9336 = vpop.f32.mrb[0].mxu0
      %v9337 = vadd.f32 0.0, %v9336
      %v9338 = vpop.f32.mrb[0].mxu0
      %v9339 = vpop.f32.mrb[0].mxu0
      %v9340 = vadd.f32 0.0, %v9339
      %v9341 = vpop.f32.mrb[0].mxu0
      %9342 = vmatprep.mubr.bf16.mxu0 0
      %9343 = vmatmul.mubr.bf16.gmra.mrb[0].mxu0 %v9210
      %v9344 = vpop.f32.mrb[0].mxu0
      %v9345 = vadd.f32 0.0, %v9344
      %v9346 = vpop.f32.mrb[0].mxu0
      %v9347 = vpop.f32.mrb[0].mxu0
      %v9348 = vadd.f32 0.0, %v9347
      %v9349 = vpop.f32.mrb[0].mxu0
      %9350 = vmatprep.mubr.bf16.mxu0 0
      %9351 = vmatmul.mubr.bf16.gmra.mrb[0].mxu0 %v9213
      %v9352 = vpop.f32.mrb[0].mxu0
      %v9353 = vadd.f32 0.0, %v9352
      %v9354 = vpop.f32.mrb[0].mxu0
      %v9355 = vpop.f32.mrb[0].mxu0
      %v9356 = vadd.f32 0.0, %v9355
      %v9357 = vpop.f32.mrb[0].mxu0
      %9358 = vmatprep.mubr.bf16.mxu0 0
      %9359 = vmatmul.mubr.bf16.gmra.mrb[0].mxu0 %v9216
      %v9360 = vpop.f32.mrb[0].mxu0
      %v9361 = vadd.f32 0.0, %v9360
      %v9362 = vpop.f32.mrb[0].mxu0
      %v9363 = vpop.f32.mrb[0].mxu0
      %v9364 = vadd.f32 0.0, %v9363
      %v9365 = vpop.f32.mrb[0].mxu0
      %9366 = vmatprep.mubr.bf16.mxu0 0
      %9367 = vmatmul.mubr.bf16.gmra.mrb[0].mxu0 %v9219
      %v9368 = vpop.f32.mrb[0].mxu0
      %v9369 = vadd.f32 0.0, %v9368
      %v9370 = vpop.f32.mrb[0].mxu0
      %v9371 = vpop.f32.mrb[0].mxu0
      %v9372 = vadd.f32 0.0, %v9371
      %v9373 = vpop.f32.mrb[0].mxu0
      %9374 = vmatprep.mubr.bf16.mxu0 0
      %9375 = vmatmul.mubr.bf16.gmra.mrb[0].mxu0 %v9222
      %v9376 = vpop.f32.mrb[0].mxu0
      %v9377 = vadd.f32 0.0, %v9376
      %v9378 = vpop.f32.mrb[0].mxu0
      %v9379 = vpop.f32.mrb[0].mxu0
      %v9380 = vadd.f32 0.0, %v9379
      %v9381 = vpop.f32.mrb[0].mxu0
      %9382 = vmatprep.mubr.bf16.mxu0 0
      %9383 = vmatmul.mubr.bf16.gmra.mrb[0].mxu0 %v9225
      %v9384 = vpop.f32.mrb[0].mxu0
      %v9385 = vadd.f32 0.0, %v9384
      %v9386 = vpop.f32.mrb[0].mxu0
      %v9387 = vpop.f32.mrb[0].mxu0
      %v9388 = vadd.f32 0.0, %v9387
      %v9389 = vpop.f32.mrb[0].mxu0
      %9390 = vmatprep.mubr.bf16.mxu0 0
      %9391 = vmatmul.mubr.bf16.gmra.mrb[0].mxu0 %v9228
      %v9392 = vpop.f32.mrb[0].mxu0
      %v9393 = vadd.f32 0.0, %v9392
      %v9394 = vpop.f32.mrb[0].mxu0
      %v9395 = vpop.f32.mrb[0].mxu0
      %v9396 = vadd.f32 0.0, %v9395
      %v9397 = vpop.f32.mrb[0].mxu0
      %9398 = vmatprep.mubr.bf16.mxu0 0
      %9399 = vmatmul.mubr.bf16.gmra.mrb[0].mxu0 %v9231
      %v9400 = vpop.f32.mrb[0].mxu0
      %v9401 = vadd.f32 0.0, %v9400
      %v9402 = vpop.f32.mrb[0].mxu0
      %v9403 = vpop.f32.mrb[0].mxu0
      %v9404 = vadd.f32 0.0, %v9403
      %v9405 = vpop.f32.mrb[0].mxu0
      %9406 = vmatprep.mubr.bf16.mxu0 0
      %9407 = vmatmul.mubr.bf16.gmra.mrb[0].mxu0 %v9234
      %v9408 = vpop.f32.mrb[0].mxu0
      %v9409 = vadd.f32 0.0, %v9408
      %v9410 = vpop.f32.mrb[0].mxu0
      %v9411 = vpop.f32.mrb[0].mxu0
      %v9412 = vadd.f32 0.0, %v9411
      %v9413 = vpop.f32.mrb[0].mxu0
      %9414 = vmatprep.mubr.bf16.mxu0 0
      %9415 = vmatmul.mubr.bf16.gmra.mrb[0].mxu0 %v9237
      %v9416 = vpop.f32.mrb[0].mxu0
      %v9417 = vadd.f32 0.0, %v9416
      %v9418 = vpop.f32.mrb[0].mxu0
      %v9419 = vpop.f32.mrb[0].mxu0
      %v9420 = vadd.f32 0.0, %v9419
      %v9421 = vpop.f32.mrb[0].mxu0
      %9422 = vmatprep.mubr.bf16.mxu0 0
      %9423 = vmatmul.mubr.bf16.gmra.mrb[0].mxu0 %v9240
      %v9424 = vpop.f32.mrb[0].mxu0
      %v9425 = vadd.f32 0.0, %v9424
      %v9426 = vpop.f32.mrb[0].mxu0
      %v9427 = vpop.f32.mrb[0].mxu0
      %v9428 = vadd.f32 0.0, %v9427
      %v9429 = vpop.f32.mrb[0].mxu0
      %9430 = vmatprep.mubr.bf16.mxu0 0
      %9431 = vmatmul.mubr.bf16.gmra.mrb[0].mxu0 %v9243
      %v9432 = vpop.f32.mrb[0].mxu0
      %v9433 = vadd.f32 0.0, %v9432
      %v9434 = vpop.f32.mrb[0].mxu0
      %v9435 = vpop.f32.mrb[0].mxu0
      %v9436 = vadd.f32 0.0, %v9435
      %v9437 = vpop.f32.mrb[0].mxu0
      %9438 = vmatprep.mubr.bf16.mxu0 0
      %9439 = vmatmul.mubr.bf16.gmra.mrb[0].mxu0 %v9246
      %v9440 = vpop.f32.mrb[0].mxu0
      %v9441 = vadd.f32 0.0, %v9440
      %v9442 = vpop.f32.mrb[0].mxu0
      %v9443 = vpop.f32.mrb[0].mxu0
      %v9444 = vadd.f32 0.0, %v9443
      %v9445 = vpop.f32.mrb[0].mxu0
      %9446 = vmatprep.mubr.bf16.mxu0 0
      %9447 = vmatmul.mubr.bf16.gmra.mrb[0].mxu0 %v9249
      %v9448 = vpop.f32.mrb[0].mxu0
      %v9449 = vadd.f32 0.0, %v9448
      %v9450 = vpop.f32.mrb[0].mxu0
      %v9451 = vpop.f32.mrb[0].mxu0
      %v9452 = vpop.f32.mrb[0].mxu0
      %9453 = vdwg.mxu0
      %v9454 = vadd.f32 %v9072, %v9289
      %v9455 = vadd.f32 %v9073, %v9292
      %v9456 = vadd.f32 %v9074, %v9297
      %v9457 = vadd.f32 %v9075, %v9300
      %v9458 = vadd.f32 %v9076, %v9305
      %v9459 = vadd.f32 %v9077, %v9308
      %v9460 = vadd.f32 %v9078, %v9313
      %v9461 = vadd.f32 %v9079, %v9316
      %v9462 = vadd.f32 %v9080, %v9321
      %v9463 = vadd.f32 %v9081, %v9324
      %v9464 = vadd.f32 %v9082, %v9329
      %v9465 = vadd.f32 %v9083, %v9332
      %v9466 = vadd.f32 %v9084, %v9337
      %v9467 = vadd.f32 %v9085, %v9340
      %v9468 = vadd.f32 %v9086, %v9345
      %v9469 = vadd.f32 %v9087, %v9348
      %v9470 = vadd.f32 %v9088, %v9353
      %v9471 = vadd.f32 %v9089, %v9356
      %v9472 = vadd.f32 %v9090, %v9361
      %v9473 = vadd.f32 %v9091, %v9364
      %v9474 = vadd.f32 %v9092, %v9369
      %v9475 = vadd.f32 %v9093, %v9372
      %v9476 = vadd.f32 %v9094, %v9377
      %v9477 = vadd.f32 %v9095, %v9380
      %v9478 = vadd.f32 %v9096, %v9385
      %v9479 = vadd.f32 %v9097, %v9388
      %v9480 = vadd.f32 %v9098, %v9393
      %v9481 = vadd.f32 %v9099, %v9396
      %v9482 = vadd.f32 %v9100, %v9401
      %v9483 = vadd.f32 %v9101, %v9404
      %v9484 = vadd.f32 %v9102, %v9409
      %v9485 = vadd.f32 %v9103, %v9412
      %v9486 = vadd.f32 %v9104, %v9417
      %v9487 = vadd.f32 %v9105, %v9420
      %v9488 = vadd.f32 %v9106, %v9425
      %v9489 = vadd.f32 %v9107, %v9428
      %v9490 = vadd.f32 %v9108, %v9433
      %v9491 = vadd.f32 %v9109, %v9436
      %v9492 = vadd.f32 %v9110, %v9441
      %v9493 = vadd.f32 %v9111, %v9444
      %v9494 = vadd.f32 %v9112, %v9449
      %v9495 = vld [vmem:[#allocation4 + $0x6] sm:$0xff]
      %v9496 = vld [vmem:[#allocation4 + $0xe] sm:$0xff]
      %v9497 = vld [vmem:[#allocation4 + $0x16] sm:$0xff]
      %v9498 = vld [vmem:[#allocation4 + $0x1e] sm:$0xff]
      %v9499 = vld [vmem:[#allocation4 + $0x26] sm:$0xff]
      %v9500 = vld [vmem:[#allocation4 + $0x2e] sm:$0xff]
      %v9501 = vld [vmem:[#allocation4 + $0x36] sm:$0xff]
      %v9502 = vld [vmem:[#allocation4 + $0x3e] sm:$0xff]
      %v9503 = vld [vmem:[#allocation4 + $0x46] sm:$0xff]
      %v9504 = vld [vmem:[#allocation4 + $0x4e] sm:$0xff]
      %v9505 = vld [vmem:[#allocation4 + $0x56] sm:$0xff]
      %v9506 = vld [vmem:[#allocation4 + $0x5e] sm:$0xff]
      %v9507 = vld [vmem:[#allocation4 + $0x66] sm:$0xff]
      %v9508 = vld [vmem:[#allocation4 + $0x6e] sm:$0xff]
      %v9509 = vld [vmem:[#allocation4 + $0x76] sm:$0xff]
      %v9510 = vld [vmem:[#allocation4 + $0x7e] sm:$0xff]
      %v9511 = vld [vmem:[#allocation4 + $0x86] sm:$0xff]
      %v9512 = vld [vmem:[#allocation4 + $0x8e] sm:$0xff]
      %v9513 = vld [vmem:[#allocation4 + $0x96] sm:$0xff]
      %v9514 = vld [vmem:[#allocation4 + $0x9e] sm:$0xff]
      %v9515 = vld [vmem:[#allocation4 + $0xa6] sm:$0xff]
      %v9516 = vld [vmem:[#allocation4 + $0xae] sm:$0xff]
      %v9517 = vld [vmem:[#allocation4 + $0xb6] sm:$0xff]
      %v9518 = vld [vmem:[#allocation4 + $0xbe] sm:$0xff]
      %v9519 = vld [vmem:[#allocation4 + $0xc6] sm:$0xff]
      %v9520 = vld [vmem:[#allocation4 + $0xce] sm:$0xff]
      %v9521 = vld [vmem:[#allocation4 + $0xd6] sm:$0xff]
      %v9522 = vld [vmem:[#allocation4 + $0xde] sm:$0xff]
      %v9523 = vld [vmem:[#allocation4 + $0xe6] sm:$0xff]
      %v9524 = vld [vmem:[#allocation4 + $0xee] sm:$0xff]
      %v9525 = vld [vmem:[#allocation4 + $0xf6] sm:$0xff]
      %v9526 = vld [vmem:[#allocation4 + $0xfe] sm:$0xff]
      %v9527 = vld [vmem:[#allocation4 + $0x106] sm:$0xff]
      %v9528 = vld [vmem:[#allocation4 + $0x10e] sm:$0xff]
      %v9529 = vld [vmem:[#allocation4 + $0x116] sm:$0xff]
      %v9530 = vld [vmem:[#allocation4 + $0x11e] sm:$0xff]
      %v9531 = vld [vmem:[#allocation4 + $0x126] sm:$0xff]
      %v9532 = vld [vmem:[#allocation4 + $0x12e] sm:$0xff]
      %v9533 = vld [vmem:[#allocation4 + $0x136] sm:$0xff]
      %v9534 = vld [vmem:[#allocation4 + $0x13e] sm:$0xff]
      %v9535 = vld [vmem:[#allocation4 + $0x146] sm:$0xff]
      %v9536 = vpack.c.bf16 %v9496, %v9495
      %v9537 = vpack.c.bf16 %v9498, %v9497
      %v9538 = vpack.c.bf16 %v9500, %v9499
      %v9539 = vpack.c.bf16 %v9502, %v9501
      %v9540 = vpack.c.bf16 %v9504, %v9503
      %v9541 = vpack.c.bf16 %v9506, %v9505
      %v9542 = vpack.c.bf16 %v9508, %v9507
      %v9543 = vpack.c.bf16 %v9510, %v9509
      %v9544 = vpack.c.bf16 %v9512, %v9511
      %v9545 = vpack.c.bf16 %v9514, %v9513
      %v9546 = vpack.c.bf16 %v9516, %v9515
      %v9547 = vpack.c.bf16 %v9518, %v9517
      %v9548 = vpack.c.bf16 %v9520, %v9519
      %v9549 = vpack.c.bf16 %v9522, %v9521
      %v9550 = vpack.c.bf16 %v9524, %v9523
      %v9551 = vpack.c.bf16 %v9526, %v9525
      %v9552 = vpack.c.bf16 %v9528, %v9527
      %v9553 = vpack.c.bf16 %v9530, %v9529
      %v9554 = vpack.c.bf16 %v9532, %v9531
      %v9555 = vpack.c.bf16 %v9534, %v9533
      %v9556 = vpack.c.bf16 %v9535, %v9535
      %s9557 = scalar_lea.vmem %s7, 36
      %v9558 = vld [vmem:[%s9557] sm:$0xf]
      %v9559 = vld [vmem:[%s9557 + $0x4] sm:$0xf]
      %v9560 = vld [vmem:[%s9557 + $0x8] sm:$0xf]
      %v9564 = vunpack.c.l.b16 %v9558
      %v9565 = vunpack.c.l.b16 %v9559
      %v9566 = vunpack.c.l.b16 %v9560
      %v9567 = vpack.c.b16 %v9565, %v9564
      %v9568 = vpack.c.b16 %v9566, %v9566
      %v9571 = vsel %vm835, %v9536, 0
      %v9574 = vsel %vm835, %v9537, 0
      %v9577 = vsel %vm835, %v9538, 0
      %v9580 = vsel %vm835, %v9539, 0
      %v9583 = vsel %vm835, %v9540, 0
      %v9586 = vsel %vm835, %v9541, 0
      %v9589 = vsel %vm835, %v9542, 0
      %v9592 = vsel %vm835, %v9543, 0
      %v9595 = vsel %vm835, %v9544, 0
      %v9598 = vsel %vm835, %v9545, 0
      %v9601 = vsel %vm835, %v9546, 0
      %v9604 = vsel %vm835, %v9547, 0
      %v9607 = vsel %vm835, %v9548, 0
      %v9610 = vsel %vm835, %v9549, 0
      %v9613 = vsel %vm835, %v9550, 0
      %v9616 = vsel %vm835, %v9551, 0
      %v9619 = vsel %vm835, %v9552, 0
      %v9622 = vsel %vm835, %v9553, 0
      %v9625 = vsel %vm835, %v9554, 0
      %v9628 = vsel %vm835, %v9555, 0
      %v9631 = vsel %vm835, %v9556, 0
      %v9634 = vsel %vm6320, %v9568, 0
      %9636 = vmatprep.subr.bf16.mxu0 0
      %9637 = vmatpush1.bf16.msra.mxu0 %v9567
      %9638 = vmatprep.subr.bf16.mxu0 0
      %9639 = vmatpush1.bf16.msra.mxu0 %v9634
      %9640 = vmatprep.subr.bf16.mxu0 0
      %9641 = vmatpush1.bf16.msra.mxu0 0
      %9642 = vmatprep.subr.bf16.mxu0 0
      %9643 = vmatpush1.bf16.msra.mxu0 0
      %9644 = vmatprep.subr.bf16.mxu0 0
      %9645 = vmatpush1.bf16.msra.mxu0 0
      %9646 = vmatprep.subr.bf16.mxu0 0
      %9647 = vmatpush1.bf16.msra.mxu0 0
      %9648 = vmatprep.subr.bf16.mxu0 0
      %9649 = vmatpush1.bf16.msra.mxu0 0
      %9650 = vmatprep.subr.bf16.mxu0 0
      %9651 = vmatpush1.bf16.msra.mxu0 0
      %9652 = vmatprep.subr.bf16.mxu0 0
      %9653 = vmatpush1.bf16.msra.mxu0 0
      %9654 = vmatprep.subr.bf16.mxu0 0
      %9655 = vmatpush1.bf16.msra.mxu0 0
      %9656 = vmatprep.subr.bf16.mxu0 0
      %9657 = vmatpush1.bf16.msra.mxu0 0
      %9658 = vmatprep.subr.bf16.mxu0 0
      %9659 = vmatpush1.bf16.msra.mxu0 0
      %9660 = vmatprep.subr.bf16.mxu0 0
      %9661 = vmatpush1.bf16.msra.mxu0 0
      %9662 = vmatprep.subr.bf16.mxu0 0
      %9663 = vmatpush1.bf16.msra.mxu0 0
      %9664 = vmatprep.subr.bf16.mxu0 0
      %9665 = vmatpush1.bf16.msra.mxu0 0
      %9666 = vmatprep.subr.bf16.mxu0 0
      %9667 = vmatpush1.bf16.msra.mxu0 0
      %9668 = vmatprep.mubr.bf16.mxu0 0
      %9669 = vmatmul.mubr.bf16.gmra.mrb[0].mxu0 %v9571
      %v9670 = vpop.f32.mrb[0].mxu0
      %v9671 = vadd.f32 0.0, %v9670
      %v9672 = vpop.f32.mrb[0].mxu0
      %v9673 = vpop.f32.mrb[0].mxu0
      %v9674 = vadd.f32 0.0, %v9673
      %v9675 = vpop.f32.mrb[0].mxu0
      %9676 = vmatprep.mubr.bf16.mxu0 0
      %9677 = vmatmul.mubr.bf16.gmra.mrb[0].mxu0 %v9574
      %v9678 = vpop.f32.mrb[0].mxu0
      %v9679 = vadd.f32 0.0, %v9678
      %v9680 = vpop.f32.mrb[0].mxu0
      %v9681 = vpop.f32.mrb[0].mxu0
      %v9682 = vadd.f32 0.0, %v9681
      %v9683 = vpop.f32.mrb[0].mxu0
      %9684 = vmatprep.mubr.bf16.mxu0 0
      %9685 = vmatmul.mubr.bf16.gmra.mrb[0].mxu0 %v9577
      %v9686 = vpop.f32.mrb[0].mxu0
      %v9687 = vadd.f32 0.0, %v9686
      %v9688 = vpop.f32.mrb[0].mxu0
      %v9689 = vpop.f32.mrb[0].mxu0
      %v9690 = vadd.f32 0.0, %v9689
      %v9691 = vpop.f32.mrb[0].mxu0
      %9692 = vmatprep.mubr.bf16.mxu0 0
      %9693 = vmatmul.mubr.bf16.gmra.mrb[0].mxu0 %v9580
      %v9694 = vpop.f32.mrb[0].mxu0
      %v9695 = vadd.f32 0.0, %v9694
      %v9696 = vpop.f32.mrb[0].mxu0
      %v9697 = vpop.f32.mrb[0].mxu0
      %v9698 = vadd.f32 0.0, %v9697
      %v9699 = vpop.f32.mrb[0].mxu0
      %9700 = vmatprep.mubr.bf16.mxu0 0
      %9701 = vmatmul.mubr.bf16.gmra.mrb[0].mxu0 %v9583
      %v9702 = vpop.f32.mrb[0].mxu0
      %v9703 = vadd.f32 0.0, %v9702
      %v9704 = vpop.f32.mrb[0].mxu0
      %v9705 = vpop.f32.mrb[0].mxu0
      %v9706 = vadd.f32 0.0, %v9705
      %v9707 = vpop.f32.mrb[0].mxu0
      %9708 = vmatprep.mubr.bf16.mxu0 0
      %9709 = vmatmul.mubr.bf16.gmra.mrb[0].mxu0 %v9586
      %v9710 = vpop.f32.mrb[0].mxu0
      %v9711 = vadd.f32 0.0, %v9710
      %v9712 = vpop.f32.mrb[0].mxu0
      %v9713 = vpop.f32.mrb[0].mxu0
      %v9714 = vadd.f32 0.0, %v9713
      %v9715 = vpop.f32.mrb[0].mxu0
      %9716 = vmatprep.mubr.bf16.mxu0 0
      %9717 = vmatmul.mubr.bf16.gmra.mrb[0].mxu0 %v9589
      %v9718 = vpop.f32.mrb[0].mxu0
      %v9719 = vadd.f32 0.0, %v9718
      %v9720 = vpop.f32.mrb[0].mxu0
      %v9721 = vpop.f32.mrb[0].mxu0
      %v9722 = vadd.f32 0.0, %v9721
      %v9723 = vpop.f32.mrb[0].mxu0
      %9724 = vmatprep.mubr.bf16.mxu0 0
      %9725 = vmatmul.mubr.bf16.gmra.mrb[0].mxu0 %v9592
      %v9726 = vpop.f32.mrb[0].mxu0
      %v9727 = vadd.f32 0.0, %v9726
      %v9728 = vpop.f32.mrb[0].mxu0
      %v9729 = vpop.f32.mrb[0].mxu0
      %v9730 = vadd.f32 0.0, %v9729
      %v9731 = vpop.f32.mrb[0].mxu0
      %9732 = vmatprep.mubr.bf16.mxu0 0
      %9733 = vmatmul.mubr.bf16.gmra.mrb[0].mxu0 %v9595
      %v9734 = vpop.f32.mrb[0].mxu0
      %v9735 = vadd.f32 0.0, %v9734
      %v9736 = vpop.f32.mrb[0].mxu0
      %v9737 = vpop.f32.mrb[0].mxu0
      %v9738 = vadd.f32 0.0, %v9737
      %v9739 = vpop.f32.mrb[0].mxu0
      %9740 = vmatprep.mubr.bf16.mxu0 0
      %9741 = vmatmul.mubr.bf16.gmra.mrb[0].mxu0 %v9598
      %v9742 = vpop.f32.mrb[0].mxu0
      %v9743 = vadd.f32 0.0, %v9742
      %v9744 = vpop.f32.mrb[0].mxu0
      %v9745 = vpop.f32.mrb[0].mxu0
      %v9746 = vadd.f32 0.0, %v9745
      %v9747 = vpop.f32.mrb[0].mxu0
      %9748 = vmatprep.mubr.bf16.mxu0 0
      %9749 = vmatmul.mubr.bf16.gmra.mrb[0].mxu0 %v9601
      %v9750 = vpop.f32.mrb[0].mxu0
      %v9751 = vadd.f32 0.0, %v9750
      %v9752 = vpop.f32.mrb[0].mxu0
      %v9753 = vpop.f32.mrb[0].mxu0
      %v9754 = vadd.f32 0.0, %v9753
      %v9755 = vpop.f32.mrb[0].mxu0
      %9756 = vmatprep.mubr.bf16.mxu0 0
      %9757 = vmatmul.mubr.bf16.gmra.mrb[0].mxu0 %v9604
      %v9758 = vpop.f32.mrb[0].mxu0
      %v9759 = vadd.f32 0.0, %v9758
      %v9760 = vpop.f32.mrb[0].mxu0
      %v9761 = vpop.f32.mrb[0].mxu0
      %v9762 = vadd.f32 0.0, %v9761
      %v9763 = vpop.f32.mrb[0].mxu0
      %9764 = vmatprep.mubr.bf16.mxu0 0
      %9765 = vmatmul.mubr.bf16.gmra.mrb[0].mxu0 %v9607
      %v9766 = vpop.f32.mrb[0].mxu0
      %v9767 = vadd.f32 0.0, %v9766
      %v9768 = vpop.f32.mrb[0].mxu0
      %v9769 = vpop.f32.mrb[0].mxu0
      %v9770 = vadd.f32 0.0, %v9769
      %v9771 = vpop.f32.mrb[0].mxu0
      %9772 = vmatprep.mubr.bf16.mxu0 0
      %9773 = vmatmul.mubr.bf16.gmra.mrb[0].mxu0 %v9610
      %v9774 = vpop.f32.mrb[0].mxu0
      %v9775 = vadd.f32 0.0, %v9774
      %v9776 = vpop.f32.mrb[0].mxu0
      %v9777 = vpop.f32.mrb[0].mxu0
      %v9778 = vadd.f32 0.0, %v9777
      %v9779 = vpop.f32.mrb[0].mxu0
      %9780 = vmatprep.mubr.bf16.mxu0 0
      %9781 = vmatmul.mubr.bf16.gmra.mrb[0].mxu0 %v9613
      %v9782 = vpop.f32.mrb[0].mxu0
      %v9783 = vadd.f32 0.0, %v9782
      %v9784 = vpop.f32.mrb[0].mxu0
      %v9785 = vpop.f32.mrb[0].mxu0
      %v9786 = vadd.f32 0.0, %v9785
      %v9787 = vpop.f32.mrb[0].mxu0
      %9788 = vmatprep.mubr.bf16.mxu0 0
      %9789 = vmatmul.mubr.bf16.gmra.mrb[0].mxu0 %v9616
      %v9790 = vpop.f32.mrb[0].mxu0
      %v9791 = vadd.f32 0.0, %v9790
      %v9792 = vpop.f32.mrb[0].mxu0
      %v9793 = vpop.f32.mrb[0].mxu0
      %v9794 = vadd.f32 0.0, %v9793
      %v9795 = vpop.f32.mrb[0].mxu0
      %9796 = vmatprep.mubr.bf16.mxu0 0
      %9797 = vmatmul.mubr.bf16.gmra.mrb[0].mxu0 %v9619
      %v9798 = vpop.f32.mrb[0].mxu0
      %v9799 = vadd.f32 0.0, %v9798
      %v9800 = vpop.f32.mrb[0].mxu0
      %v9801 = vpop.f32.mrb[0].mxu0
      %v9802 = vadd.f32 0.0, %v9801
      %v9803 = vpop.f32.mrb[0].mxu0
      %9804 = vmatprep.mubr.bf16.mxu0 0
      %9805 = vmatmul.mubr.bf16.gmra.mrb[0].mxu0 %v9622
      %v9806 = vpop.f32.mrb[0].mxu0
      %v9807 = vadd.f32 0.0, %v9806
      %v9808 = vpop.f32.mrb[0].mxu0
      %v9809 = vpop.f32.mrb[0].mxu0
      %v9810 = vadd.f32 0.0, %v9809
      %v9811 = vpop.f32.mrb[0].mxu0
      %9812 = vmatprep.mubr.bf16.mxu0 0
      %9813 = vmatmul.mubr.bf16.gmra.mrb[0].mxu0 %v9625
      %v9814 = vpop.f32.mrb[0].mxu0
      %v9815 = vadd.f32 0.0, %v9814
      %v9816 = vpop.f32.mrb[0].mxu0
      %v9817 = vpop.f32.mrb[0].mxu0
      %v9818 = vadd.f32 0.0, %v9817
      %v9819 = vpop.f32.mrb[0].mxu0
      %9820 = vmatprep.mubr.bf16.mxu0 0
      %9821 = vmatmul.mubr.bf16.gmra.mrb[0].mxu0 %v9628
      %v9822 = vpop.f32.mrb[0].mxu0
      %v9823 = vadd.f32 0.0, %v9822
      %v9824 = vpop.f32.mrb[0].mxu0
      %v9825 = vpop.f32.mrb[0].mxu0
      %v9826 = vadd.f32 0.0, %v9825
      %v9827 = vpop.f32.mrb[0].mxu0
      %9828 = vmatprep.mubr.bf16.mxu0 0
      %9829 = vmatmul.mubr.bf16.gmra.mrb[0].mxu0 %v9631
      %v9830 = vpop.f32.mrb[0].mxu0
      %v9831 = vadd.f32 0.0, %v9830
      %v9832 = vpop.f32.mrb[0].mxu0
      %v9833 = vpop.f32.mrb[0].mxu0
      %v9834 = vpop.f32.mrb[0].mxu0
      %9835 = vdwg.mxu0
      %v9836 = vadd.f32 %v9454, %v9671
      %v9837 = vadd.f32 %v9455, %v9674
      %v9838 = vadd.f32 %v9456, %v9679
      %v9839 = vadd.f32 %v9457, %v9682
      %v9840 = vadd.f32 %v9458, %v9687
      %v9841 = vadd.f32 %v9459, %v9690
      %v9842 = vadd.f32 %v9460, %v9695
      %v9843 = vadd.f32 %v9461, %v9698
      %v9844 = vadd.f32 %v9462, %v9703
      %v9845 = vadd.f32 %v9463, %v9706
      %v9846 = vadd.f32 %v9464, %v9711
      %v9847 = vadd.f32 %v9465, %v9714
      %v9848 = vadd.f32 %v9466, %v9719
      %v9849 = vadd.f32 %v9467, %v9722
      %v9850 = vadd.f32 %v9468, %v9727
      %v9851 = vadd.f32 %v9469, %v9730
      %v9852 = vadd.f32 %v9470, %v9735
      %v9853 = vadd.f32 %v9471, %v9738
      %v9854 = vadd.f32 %v9472, %v9743
      %v9855 = vadd.f32 %v9473, %v9746
      %v9856 = vadd.f32 %v9474, %v9751
      %v9857 = vadd.f32 %v9475, %v9754
      %v9858 = vadd.f32 %v9476, %v9759
      %v9859 = vadd.f32 %v9477, %v9762
      %v9860 = vadd.f32 %v9478, %v9767
      %v9861 = vadd.f32 %v9479, %v9770
      %v9862 = vadd.f32 %v9480, %v9775
      %v9863 = vadd.f32 %v9481, %v9778
      %v9864 = vadd.f32 %v9482, %v9783
      %v9865 = vadd.f32 %v9483, %v9786
      %v9866 = vadd.f32 %v9484, %v9791
      %v9867 = vadd.f32 %v9485, %v9794
      %v9868 = vadd.f32 %v9486, %v9799
      %v9869 = vadd.f32 %v9487, %v9802
      %v9870 = vadd.f32 %v9488, %v9807
      %v9871 = vadd.f32 %v9489, %v9810
      %v9872 = vadd.f32 %v9490, %v9815
      %v9873 = vadd.f32 %v9491, %v9818
      %v9874 = vadd.f32 %v9492, %v9823
      %v9875 = vadd.f32 %v9493, %v9826
      %v9876 = vadd.f32 %v9494, %v9831
      %s9877 = scalar_lea.vmem %s7, 48
      %v9878 = vld [vmem:[%s9877] sm:$0xf]
      %v9879 = vld [vmem:[%s9877 + $0x4] sm:$0xf]
      %v9880 = vld [vmem:[%s9877 + $0x8] sm:$0xf]
      %v9884 = vunpack.c.l.b16 %v9878
      %v9885 = vunpack.c.l.b16 %v9879
      %v9886 = vunpack.c.l.b16 %v9880
      %v9887 = vpack.c.b16 %v9885, %v9884
      %v9888 = vpack.c.b16 %v9886, %v9886
      %v9891 = vsel %vm6320, %v9888, 0
      %9893 = vmatprep.subr.bf16.mxu0 0
      %9894 = vmatpush1.bf16.msra.mxu0 %v9887
      %9895 = vmatprep.subr.bf16.mxu0 0
      %9896 = vmatpush1.bf16.msra.mxu0 %v9891
      %9897 = vmatprep.subr.bf16.mxu0 0
      %9898 = vmatpush1.bf16.msra.mxu0 0
      %9899 = vmatprep.subr.bf16.mxu0 0
      %9900 = vmatpush1.bf16.msra.mxu0 0
      %9901 = vmatprep.subr.bf16.mxu0 0
      %9902 = vmatpush1.bf16.msra.mxu0 0
      %9903 = vmatprep.subr.bf16.mxu0 0
      %9904 = vmatpush1.bf16.msra.mxu0 0
      %9905 = vmatprep.subr.bf16.mxu0 0
      %9906 = vmatpush1.bf16.msra.mxu0 0
      %9907 = vmatprep.subr.bf16.mxu0 0
      %9908 = vmatpush1.bf16.msra.mxu0 0
      %9909 = vmatprep.subr.bf16.mxu0 0
      %9910 = vmatpush1.bf16.msra.mxu0 0
      %9911 = vmatprep.subr.bf16.mxu0 0
      %9912 = vmatpush1.bf16.msra.mxu0 0
      %9913 = vmatprep.subr.bf16.mxu0 0
      %9914 = vmatpush1.bf16.msra.mxu0 0
      %9915 = vmatprep.subr.bf16.mxu0 0
      %9916 = vmatpush1.bf16.msra.mxu0 0
      %9917 = vmatprep.subr.bf16.mxu0 0
      %9918 = vmatpush1.bf16.msra.mxu0 0
      %9919 = vmatprep.subr.bf16.mxu0 0
      %9920 = vmatpush1.bf16.msra.mxu0 0
      %9921 = vmatprep.subr.bf16.mxu0 0
      %9922 = vmatpush1.bf16.msra.mxu0 0
      %9923 = vmatprep.subr.bf16.mxu0 0
      %9924 = vmatpush1.bf16.msra.mxu0 0
      %9925 = vmatprep.mubr.bf16.mxu0 0
      %9926 = vmatmul.mubr.bf16.gmra.mrb[0].mxu0 %v8807
      %v9927 = vpop.f32.mrb[0].mxu0
      %v9928 = vadd.f32 0.0, %v9927
      %v9929 = vpop.f32.mrb[0].mxu0
      %v9930 = vpop.f32.mrb[0].mxu0
      %v9931 = vadd.f32 0.0, %v9930
      %v9932 = vpop.f32.mrb[0].mxu0
      %9933 = vmatprep.mubr.bf16.mxu0 0
      %9934 = vmatmul.mubr.bf16.gmra.mrb[0].mxu0 %v8810
      %v9935 = vpop.f32.mrb[0].mxu0
      %v9936 = vadd.f32 0.0, %v9935
      %v9937 = vpop.f32.mrb[0].mxu0
      %v9938 = vpop.f32.mrb[0].mxu0
      %v9939 = vadd.f32 0.0, %v9938
      %v9940 = vpop.f32.mrb[0].mxu0
      %9941 = vmatprep.mubr.bf16.mxu0 0
      %9942 = vmatmul.mubr.bf16.gmra.mrb[0].mxu0 %v8813
      %v9943 = vpop.f32.mrb[0].mxu0
      %v9944 = vadd.f32 0.0, %v9943
      %v9945 = vpop.f32.mrb[0].mxu0
      %v9946 = vpop.f32.mrb[0].mxu0
      %v9947 = vadd.f32 0.0, %v9946
      %v9948 = vpop.f32.mrb[0].mxu0
      %9949 = vmatprep.mubr.bf16.mxu0 0
      %9950 = vmatmul.mubr.bf16.gmra.mrb[0].mxu0 %v8816
      %v9951 = vpop.f32.mrb[0].mxu0
      %v9952 = vadd.f32 0.0, %v9951
      %v9953 = vpop.f32.mrb[0].mxu0
      %v9954 = vpop.f32.mrb[0].mxu0
      %v9955 = vadd.f32 0.0, %v9954
      %v9956 = vpop.f32.mrb[0].mxu0
      %9957 = vmatprep.mubr.bf16.mxu0 0
      %9958 = vmatmul.mubr.bf16.gmra.mrb[0].mxu0 %v8819
      %v9959 = vpop.f32.mrb[0].mxu0
      %v9960 = vadd.f32 0.0, %v9959
      %v9961 = vpop.f32.mrb[0].mxu0
      %v9962 = vpop.f32.mrb[0].mxu0
      %v9963 = vadd.f32 0.0, %v9962
      %v9964 = vpop.f32.mrb[0].mxu0
      %9965 = vmatprep.mubr.bf16.mxu0 0
      %9966 = vmatmul.mubr.bf16.gmra.mrb[0].mxu0 %v8822
      %v9967 = vpop.f32.mrb[0].mxu0
      %v9968 = vadd.f32 0.0, %v9967
      %v9969 = vpop.f32.mrb[0].mxu0
      %v9970 = vpop.f32.mrb[0].mxu0
      %v9971 = vadd.f32 0.0, %v9970
      %v9972 = vpop.f32.mrb[0].mxu0
      %9973 = vmatprep.mubr.bf16.mxu0 0
      %9974 = vmatmul.mubr.bf16.gmra.mrb[0].mxu0 %v8825
      %v9975 = vpop.f32.mrb[0].mxu0
      %v9976 = vadd.f32 0.0, %v9975
      %v9977 = vpop.f32.mrb[0].mxu0
      %v9978 = vpop.f32.mrb[0].mxu0
      %v9979 = vadd.f32 0.0, %v9978
      %v9980 = vpop.f32.mrb[0].mxu0
      %9981 = vmatprep.mubr.bf16.mxu0 0
      %9982 = vmatmul.mubr.bf16.gmra.mrb[0].mxu0 %v8828
      %v9983 = vpop.f32.mrb[0].mxu0
      %v9984 = vadd.f32 0.0, %v9983
      %v9985 = vpop.f32.mrb[0].mxu0
      %v9986 = vpop.f32.mrb[0].mxu0
      %v9987 = vadd.f32 0.0, %v9986
      %v9988 = vpop.f32.mrb[0].mxu0
      %9989 = vmatprep.mubr.bf16.mxu0 0
      %9990 = vmatmul.mubr.bf16.gmra.mrb[0].mxu0 %v8831
      %v9991 = vpop.f32.mrb[0].mxu0
      %v9992 = vadd.f32 0.0, %v9991
      %v9993 = vpop.f32.mrb[0].mxu0
      %v9994 = vpop.f32.mrb[0].mxu0
      %v9995 = vadd.f32 0.0, %v9994
      %v9996 = vpop.f32.mrb[0].mxu0
      %9997 = vmatprep.mubr.bf16.mxu0 0
      %9998 = vmatmul.mubr.bf16.gmra.mrb[0].mxu0 %v8834
      %v9999 = vpop.f32.mrb[0].mxu0
      %v10000 = vadd.f32 0.0, %v9999
      %v10001 = vpop.f32.mrb[0].mxu0
      %v10002 = vpop.f32.mrb[0].mxu0
      %v10003 = vadd.f32 0.0, %v10002
      %v10004 = vpop.f32.mrb[0].mxu0
      %10005 = vmatprep.mubr.bf16.mxu0 0
      %10006 = vmatmul.mubr.bf16.gmra.mrb[0].mxu0 %v8837
      %v10007 = vpop.f32.mrb[0].mxu0
      %v10008 = vadd.f32 0.0, %v10007
      %v10009 = vpop.f32.mrb[0].mxu0
      %v10010 = vpop.f32.mrb[0].mxu0
      %v10011 = vadd.f32 0.0, %v10010
      %v10012 = vpop.f32.mrb[0].mxu0
      %10013 = vmatprep.mubr.bf16.mxu0 0
      %10014 = vmatmul.mubr.bf16.gmra.mrb[0].mxu0 %v8840
      %v10015 = vpop.f32.mrb[0].mxu0
      %v10016 = vadd.f32 0.0, %v10015
      %v10017 = vpop.f32.mrb[0].mxu0
      %v10018 = vpop.f32.mrb[0].mxu0
      %v10019 = vadd.f32 0.0, %v10018
      %v10020 = vpop.f32.mrb[0].mxu0
      %10021 = vmatprep.mubr.bf16.mxu0 0
      %10022 = vmatmul.mubr.bf16.gmra.mrb[0].mxu0 %v8843
      %v10023 = vpop.f32.mrb[0].mxu0
      %v10024 = vadd.f32 0.0, %v10023
      %v10025 = vpop.f32.mrb[0].mxu0
      %v10026 = vpop.f32.mrb[0].mxu0
      %v10027 = vadd.f32 0.0, %v10026
      %v10028 = vpop.f32.mrb[0].mxu0
      %10029 = vmatprep.mubr.bf16.mxu0 0
      %10030 = vmatmul.mubr.bf16.gmra.mrb[0].mxu0 %v8846
      %v10031 = vpop.f32.mrb[0].mxu0
      %v10032 = vadd.f32 0.0, %v10031
      %v10033 = vpop.f32.mrb[0].mxu0
      %v10034 = vpop.f32.mrb[0].mxu0
      %v10035 = vadd.f32 0.0, %v10034
      %v10036 = vpop.f32.mrb[0].mxu0
      %10037 = vmatprep.mubr.bf16.mxu0 0
      %10038 = vmatmul.mubr.bf16.gmra.mrb[0].mxu0 %v8849
      %v10039 = vpop.f32.mrb[0].mxu0
      %v10040 = vadd.f32 0.0, %v10039
      %v10041 = vpop.f32.mrb[0].mxu0
      %v10042 = vpop.f32.mrb[0].mxu0
      %v10043 = vadd.f32 0.0, %v10042
      %v10044 = vpop.f32.mrb[0].mxu0
      %10045 = vmatprep.mubr.bf16.mxu0 0
      %10046 = vmatmul.mubr.bf16.gmra.mrb[0].mxu0 %v8852
      %v10047 = vpop.f32.mrb[0].mxu0
      %v10048 = vadd.f32 0.0, %v10047
      %v10049 = vpop.f32.mrb[0].mxu0
      %v10050 = vpop.f32.mrb[0].mxu0
      %v10051 = vadd.f32 0.0, %v10050
      %v10052 = vpop.f32.mrb[0].mxu0
      %10053 = vmatprep.mubr.bf16.mxu0 0
      %10054 = vmatmul.mubr.bf16.gmra.mrb[0].mxu0 %v8855
      %v10055 = vpop.f32.mrb[0].mxu0
      %v10056 = vadd.f32 0.0, %v10055
      %v10057 = vpop.f32.mrb[0].mxu0
      %v10058 = vpop.f32.mrb[0].mxu0
      %v10059 = vadd.f32 0.0, %v10058
      %v10060 = vpop.f32.mrb[0].mxu0
      %10061 = vmatprep.mubr.bf16.mxu0 0
      %10062 = vmatmul.mubr.bf16.gmra.mrb[0].mxu0 %v8858
      %v10063 = vpop.f32.mrb[0].mxu0
      %v10064 = vadd.f32 0.0, %v10063
      %v10065 = vpop.f32.mrb[0].mxu0
      %v10066 = vpop.f32.mrb[0].mxu0
      %v10067 = vadd.f32 0.0, %v10066
      %v10068 = vpop.f32.mrb[0].mxu0
      %10069 = vmatprep.mubr.bf16.mxu0 0
      %10070 = vmatmul.mubr.bf16.gmra.mrb[0].mxu0 %v8861
      %v10071 = vpop.f32.mrb[0].mxu0
      %v10072 = vadd.f32 0.0, %v10071
      %v10073 = vpop.f32.mrb[0].mxu0
      %v10074 = vpop.f32.mrb[0].mxu0
      %v10075 = vadd.f32 0.0, %v10074
      %v10076 = vpop.f32.mrb[0].mxu0
      %10077 = vmatprep.mubr.bf16.mxu0 0
      %10078 = vmatmul.mubr.bf16.gmra.mrb[0].mxu0 %v8864
      %v10079 = vpop.f32.mrb[0].mxu0
      %v10080 = vadd.f32 0.0, %v10079
      %v10081 = vpop.f32.mrb[0].mxu0
      %v10082 = vpop.f32.mrb[0].mxu0
      %v10083 = vadd.f32 0.0, %v10082
      %v10084 = vpop.f32.mrb[0].mxu0
      %10085 = vmatprep.mubr.bf16.mxu0 0
      %10086 = vmatmul.mubr.bf16.gmra.mrb[0].mxu0 %v8867
      %v10087 = vpop.f32.mrb[0].mxu0
      %v10088 = vadd.f32 0.0, %v10087
      %v10089 = vpop.f32.mrb[0].mxu0
      %v10090 = vpop.f32.mrb[0].mxu0
      %v10091 = vpop.f32.mrb[0].mxu0
      %10092 = vdwg.mxu0
      %v10093 = vadd.f32 %v9836, %v9928
      %v10094 = vadd.f32 %v9837, %v9931
      %v10095 = vadd.f32 %v9838, %v9936
      %v10096 = vadd.f32 %v9839, %v9939
      %v10097 = vadd.f32 %v9840, %v9944
      %v10098 = vadd.f32 %v9841, %v9947
      %v10099 = vadd.f32 %v9842, %v9952
      %v10100 = vadd.f32 %v9843, %v9955
      %v10101 = vadd.f32 %v9844, %v9960
      %v10102 = vadd.f32 %v9845, %v9963
      %v10103 = vadd.f32 %v9846, %v9968
      %v10104 = vadd.f32 %v9847, %v9971
      %v10105 = vadd.f32 %v9848, %v9976
      %v10106 = vadd.f32 %v9849, %v9979
      %v10107 = vadd.f32 %v9850, %v9984
      %v10108 = vadd.f32 %v9851, %v9987
      %v10109 = vadd.f32 %v9852, %v9992
      %v10110 = vadd.f32 %v9853, %v9995
      %v10111 = vadd.f32 %v9854, %v10000
      %v10112 = vadd.f32 %v9855, %v10003
      %v10113 = vadd.f32 %v9856, %v10008
      %v10114 = vadd.f32 %v9857, %v10011
      %v10115 = vadd.f32 %v9858, %v10016
      %v10116 = vadd.f32 %v9859, %v10019
      %v10117 = vadd.f32 %v9860, %v10024
      %v10118 = vadd.f32 %v9861, %v10027
      %v10119 = vadd.f32 %v9862, %v10032
      %v10120 = vadd.f32 %v9863, %v10035
      %v10121 = vadd.f32 %v9864, %v10040
      %v10122 = vadd.f32 %v9865, %v10043
      %v10123 = vadd.f32 %v9866, %v10048
      %v10124 = vadd.f32 %v9867, %v10051
      %v10125 = vadd.f32 %v9868, %v10056
      %v10126 = vadd.f32 %v9869, %v10059
      %v10127 = vadd.f32 %v9870, %v10064
      %v10128 = vadd.f32 %v9871, %v10067
      %v10129 = vadd.f32 %v9872, %v10072
      %v10130 = vadd.f32 %v9873, %v10075
      %v10131 = vadd.f32 %v9874, %v10080
      %v10132 = vadd.f32 %v9875, %v10083
      %v10133 = vadd.f32 %v9876, %v10088
      %v10134 = vld [vmem:[#allocation4 + $0x2a] sm:$0xff]
      %v10135 = vld [vmem:[#allocation4 + $0x32] sm:$0xff]
      %v10136 = vld [vmem:[#allocation4 + $0x3a] sm:$0xff]
      %v10137 = vld [vmem:[#allocation4 + $0x42] sm:$0xff]
      %v10138 = vld [vmem:[#allocation4 + $0x4a] sm:$0xff]
      %v10139 = vld [vmem:[#allocation4 + $0x52] sm:$0xff]
      %v10140 = vld [vmem:[#allocation4 + $0x5a] sm:$0xff]
      %v10141 = vld [vmem:[#allocation4 + $0x62] sm:$0xff]
      %v10142 = vld [vmem:[#allocation4 + $0x6a] sm:$0xff]
      %v10143 = vld [vmem:[#allocation4 + $0x72] sm:$0xff]
      %v10144 = vld [vmem:[#allocation4 + $0x7a] sm:$0xff]
      %v10145 = vld [vmem:[#allocation4 + $0x82] sm:$0xff]
      %v10146 = vld [vmem:[#allocation4 + $0x8a] sm:$0xff]
      %v10147 = vld [vmem:[#allocation4 + $0x92] sm:$0xff]
      %v10148 = vld [vmem:[#allocation4 + $0x9a] sm:$0xff]
      %v10149 = vld [vmem:[#allocation4 + $0xa2] sm:$0xff]
      %v10150 = vld [vmem:[#allocation4 + $0xaa] sm:$0xff]
      %v10151 = vld [vmem:[#allocation4 + $0xb2] sm:$0xff]
      %v10152 = vld [vmem:[#allocation4 + $0xba] sm:$0xff]
      %v10153 = vld [vmem:[#allocation4 + $0xc2] sm:$0xff]
      %v10154 = vld [vmem:[#allocation4 + $0xca] sm:$0xff]
      %v10155 = vld [vmem:[#allocation4 + $0xd2] sm:$0xff]
      %v10156 = vld [vmem:[#allocation4 + $0xda] sm:$0xff]
      %v10157 = vld [vmem:[#allocation4 + $0xe2] sm:$0xff]
      %v10158 = vld [vmem:[#allocation4 + $0xea] sm:$0xff]
      %v10159 = vld [vmem:[#allocation4 + $0xf2] sm:$0xff]
      %v10160 = vld [vmem:[#allocation4 + $0xfa] sm:$0xff]
      %v10161 = vld [vmem:[#allocation4 + $0x102] sm:$0xff]
      %v10162 = vld [vmem:[#allocation4 + $0x10a] sm:$0xff]
      %v10163 = vld [vmem:[#allocation4 + $0x112] sm:$0xff]
      %v10164 = vld [vmem:[#allocation4 + $0x11a] sm:$0xff]
      %v10165 = vld [vmem:[#allocation4 + $0x122] sm:$0xff]
      %v10166 = vld [vmem:[#allocation4 + $0x12a] sm:$0xff]
      %v10167 = vld [vmem:[#allocation4 + $0x132] sm:$0xff]
      %v10168 = vld [vmem:[#allocation4 + $0x13a] sm:$0xff]
      %v10169 = vld [vmem:[#allocation4 + $0x142] sm:$0xff]
      %v10170 = vld [vmem:[#allocation4 + $0x14a] sm:$0xff]
      %v10171 = vld [vmem:[#allocation4 + $0x152] sm:$0xff]
      %v10172 = vld [vmem:[#allocation4 + $0x15a] sm:$0xff]
      %v10173 = vld [vmem:[#allocation4 + $0x162] sm:$0xff]
      %v10174 = vld [vmem:[#allocation4 + $0x16a] sm:$0xff]
      %v10175 = vpack.c.bf16 %v10135, %v10134
      %v10176 = vpack.c.bf16 %v10137, %v10136
      %v10177 = vpack.c.bf16 %v10139, %v10138
      %v10178 = vpack.c.bf16 %v10141, %v10140
      %v10179 = vpack.c.bf16 %v10143, %v10142
      %v10180 = vpack.c.bf16 %v10145, %v10144
      %v10181 = vpack.c.bf16 %v10147, %v10146
      %v10182 = vpack.c.bf16 %v10149, %v10148
      %v10183 = vpack.c.bf16 %v10151, %v10150
      %v10184 = vpack.c.bf16 %v10153, %v10152
      %v10185 = vpack.c.bf16 %v10155, %v10154
      %v10186 = vpack.c.bf16 %v10157, %v10156
      %v10187 = vpack.c.bf16 %v10159, %v10158
      %v10188 = vpack.c.bf16 %v10161, %v10160
      %v10189 = vpack.c.bf16 %v10163, %v10162
      %v10190 = vpack.c.bf16 %v10165, %v10164
      %v10191 = vpack.c.bf16 %v10167, %v10166
      %v10192 = vpack.c.bf16 %v10169, %v10168
      %v10193 = vpack.c.bf16 %v10171, %v10170
      %v10194 = vpack.c.bf16 %v10173, %v10172
      %v10195 = vpack.c.bf16 %v10174, %v10174
      %s10196 = scalar_lea.vmem %s7, 60
      %v10197 = vld [vmem:[%s10196] sm:$0xf]
      %v10198 = vld [vmem:[%s10196 + $0x4] sm:$0xf]
      %v10199 = vld [vmem:[%s10196 + $0x8] sm:$0xf]
      %v10203 = vunpack.c.l.b16 %v10197
      %v10204 = vunpack.c.l.b16 %v10198
      %v10205 = vunpack.c.l.b16 %v10199
      %v10206 = vpack.c.b16 %v10204, %v10203
      %v10207 = vpack.c.b16 %v10205, %v10205
      %v10210 = vsel %vm835, %v10175, 0
      %v10213 = vsel %vm835, %v10176, 0
      %v10216 = vsel %vm835, %v10177, 0
      %v10219 = vsel %vm835, %v10178, 0
      %v10222 = vsel %vm835, %v10179, 0
      %v10225 = vsel %vm835, %v10180, 0
      %v10228 = vsel %vm835, %v10181, 0
      %v10231 = vsel %vm835, %v10182, 0
      %v10234 = vsel %vm835, %v10183, 0
      %v10237 = vsel %vm835, %v10184, 0
      %v10240 = vsel %vm835, %v10185, 0
      %v10243 = vsel %vm835, %v10186, 0
      %v10246 = vsel %vm835, %v10187, 0
      %v10249 = vsel %vm835, %v10188, 0
      %v10252 = vsel %vm835, %v10189, 0
      %v10255 = vsel %vm835, %v10190, 0
      %v10258 = vsel %vm835, %v10191, 0
      %v10261 = vsel %vm835, %v10192, 0
      %v10264 = vsel %vm835, %v10193, 0
      %v10267 = vsel %vm835, %v10194, 0
      %v10270 = vsel %vm835, %v10195, 0
      %v10273 = vsel %vm6320, %v10207, 0
      %10275 = vmatprep.subr.bf16.mxu0 0
      %10276 = vmatpush1.bf16.msra.mxu0 %v10206
      %10277 = vmatprep.subr.bf16.mxu0 0
      %10278 = vmatpush1.bf16.msra.mxu0 %v10273
      %10279 = vmatprep.subr.bf16.mxu0 0
      %10280 = vmatpush1.bf16.msra.mxu0 0
      %10281 = vmatprep.subr.bf16.mxu0 0
      %10282 = vmatpush1.bf16.msra.mxu0 0
      %10283 = vmatprep.subr.bf16.mxu0 0
      %10284 = vmatpush1.bf16.msra.mxu0 0
      %10285 = vmatprep.subr.bf16.mxu0 0
      %10286 = vmatpush1.bf16.msra.mxu0 0
      %10287 = vmatprep.subr.bf16.mxu0 0
      %10288 = vmatpush1.bf16.msra.mxu0 0
      %10289 = vmatprep.subr.bf16.mxu0 0
      %10290 = vmatpush1.bf16.msra.mxu0 0
      %10291 = vmatprep.subr.bf16.mxu0 0
      %10292 = vmatpush1.bf16.msra.mxu0 0
      %10293 = vmatprep.subr.bf16.mxu0 0
      %10294 = vmatpush1.bf16.msra.mxu0 0
      %10295 = vmatprep.subr.bf16.mxu0 0
      %10296 = vmatpush1.bf16.msra.mxu0 0
      %10297 = vmatprep.subr.bf16.mxu0 0
      %10298 = vmatpush1.bf16.msra.mxu0 0
      %10299 = vmatprep.subr.bf16.mxu0 0
      %10300 = vmatpush1.bf16.msra.mxu0 0
      %10301 = vmatprep.subr.bf16.mxu0 0
      %10302 = vmatpush1.bf16.msra.mxu0 0
      %10303 = vmatprep.subr.bf16.mxu0 0
      %10304 = vmatpush1.bf16.msra.mxu0 0
      %10305 = vmatprep.subr.bf16.mxu0 0
      %10306 = vmatpush1.bf16.msra.mxu0 0
      %10307 = vmatprep.mubr.bf16.mxu0 0
      %10308 = vmatmul.mubr.bf16.gmra.mrb[0].mxu0 %v10210
      %v10309 = vpop.f32.mrb[0].mxu0
      %v10310 = vadd.f32 0.0, %v10309
      %v10311 = vpop.f32.mrb[0].mxu0
      %v10312 = vpop.f32.mrb[0].mxu0
      %v10313 = vadd.f32 0.0, %v10312
      %v10314 = vpop.f32.mrb[0].mxu0
      %10315 = vmatprep.mubr.bf16.mxu0 0
      %10316 = vmatmul.mubr.bf16.gmra.mrb[0].mxu0 %v10213
      %v10317 = vpop.f32.mrb[0].mxu0
      %v10318 = vadd.f32 0.0, %v10317
      %v10319 = vpop.f32.mrb[0].mxu0
      %v10320 = vpop.f32.mrb[0].mxu0
      %v10321 = vadd.f32 0.0, %v10320
      %v10322 = vpop.f32.mrb[0].mxu0
      %10323 = vmatprep.mubr.bf16.mxu0 0
      %10324 = vmatmul.mubr.bf16.gmra.mrb[0].mxu0 %v10216
      %v10325 = vpop.f32.mrb[0].mxu0
      %v10326 = vadd.f32 0.0, %v10325
      %v10327 = vpop.f32.mrb[0].mxu0
      %v10328 = vpop.f32.mrb[0].mxu0
      %v10329 = vadd.f32 0.0, %v10328
      %v10330 = vpop.f32.mrb[0].mxu0
      %10331 = vmatprep.mubr.bf16.mxu0 0
      %10332 = vmatmul.mubr.bf16.gmra.mrb[0].mxu0 %v10219
      %v10333 = vpop.f32.mrb[0].mxu0
      %v10334 = vadd.f32 0.0, %v10333
      %v10335 = vpop.f32.mrb[0].mxu0
      %v10336 = vpop.f32.mrb[0].mxu0
      %v10337 = vadd.f32 0.0, %v10336
      %v10338 = vpop.f32.mrb[0].mxu0
      %10339 = vmatprep.mubr.bf16.mxu0 0
      %10340 = vmatmul.mubr.bf16.gmra.mrb[0].mxu0 %v10222
      %v10341 = vpop.f32.mrb[0].mxu0
      %v10342 = vadd.f32 0.0, %v10341
      %v10343 = vpop.f32.mrb[0].mxu0
      %v10344 = vpop.f32.mrb[0].mxu0
      %v10345 = vadd.f32 0.0, %v10344
      %v10346 = vpop.f32.mrb[0].mxu0
      %10347 = vmatprep.mubr.bf16.mxu0 0
      %10348 = vmatmul.mubr.bf16.gmra.mrb[0].mxu0 %v10225
      %v10349 = vpop.f32.mrb[0].mxu0
      %v10350 = vadd.f32 0.0, %v10349
      %v10351 = vpop.f32.mrb[0].mxu0
      %v10352 = vpop.f32.mrb[0].mxu0
      %v10353 = vadd.f32 0.0, %v10352
      %v10354 = vpop.f32.mrb[0].mxu0
      %10355 = vmatprep.mubr.bf16.mxu0 0
      %10356 = vmatmul.mubr.bf16.gmra.mrb[0].mxu0 %v10228
      %v10357 = vpop.f32.mrb[0].mxu0
      %v10358 = vadd.f32 0.0, %v10357
      %v10359 = vpop.f32.mrb[0].mxu0
      %v10360 = vpop.f32.mrb[0].mxu0
      %v10361 = vadd.f32 0.0, %v10360
      %v10362 = vpop.f32.mrb[0].mxu0
      %10363 = vmatprep.mubr.bf16.mxu0 0
      %10364 = vmatmul.mubr.bf16.gmra.mrb[0].mxu0 %v10231
      %v10365 = vpop.f32.mrb[0].mxu0
      %v10366 = vadd.f32 0.0, %v10365
      %v10367 = vpop.f32.mrb[0].mxu0
      %v10368 = vpop.f32.mrb[0].mxu0
      %v10369 = vadd.f32 0.0, %v10368
      %v10370 = vpop.f32.mrb[0].mxu0
      %10371 = vmatprep.mubr.bf16.mxu0 0
      %10372 = vmatmul.mubr.bf16.gmra.mrb[0].mxu0 %v10234
      %v10373 = vpop.f32.mrb[0].mxu0
      %v10374 = vadd.f32 0.0, %v10373
      %v10375 = vpop.f32.mrb[0].mxu0
      %v10376 = vpop.f32.mrb[0].mxu0
      %v10377 = vadd.f32 0.0, %v10376
      %v10378 = vpop.f32.mrb[0].mxu0
      %10379 = vmatprep.mubr.bf16.mxu0 0
      %10380 = vmatmul.mubr.bf16.gmra.mrb[0].mxu0 %v10237
      %v10381 = vpop.f32.mrb[0].mxu0
      %v10382 = vadd.f32 0.0, %v10381
      %v10383 = vpop.f32.mrb[0].mxu0
      %v10384 = vpop.f32.mrb[0].mxu0
      %v10385 = vadd.f32 0.0, %v10384
      %v10386 = vpop.f32.mrb[0].mxu0
      %10387 = vmatprep.mubr.bf16.mxu0 0
      %10388 = vmatmul.mubr.bf16.gmra.mrb[0].mxu0 %v10240
      %v10389 = vpop.f32.mrb[0].mxu0
      %v10390 = vadd.f32 0.0, %v10389
      %v10391 = vpop.f32.mrb[0].mxu0
      %v10392 = vpop.f32.mrb[0].mxu0
      %v10393 = vadd.f32 0.0, %v10392
      %v10394 = vpop.f32.mrb[0].mxu0
      %10395 = vmatprep.mubr.bf16.mxu0 0
      %10396 = vmatmul.mubr.bf16.gmra.mrb[0].mxu0 %v10243
      %v10397 = vpop.f32.mrb[0].mxu0
      %v10398 = vadd.f32 0.0, %v10397
      %v10399 = vpop.f32.mrb[0].mxu0
      %v10400 = vpop.f32.mrb[0].mxu0
      %v10401 = vadd.f32 0.0, %v10400
      %v10402 = vpop.f32.mrb[0].mxu0
      %10403 = vmatprep.mubr.bf16.mxu0 0
      %10404 = vmatmul.mubr.bf16.gmra.mrb[0].mxu0 %v10246
      %v10405 = vpop.f32.mrb[0].mxu0
      %v10406 = vadd.f32 0.0, %v10405
      %v10407 = vpop.f32.mrb[0].mxu0
      %v10408 = vpop.f32.mrb[0].mxu0
      %v10409 = vadd.f32 0.0, %v10408
      %v10410 = vpop.f32.mrb[0].mxu0
      %10411 = vmatprep.mubr.bf16.mxu0 0
      %10412 = vmatmul.mubr.bf16.gmra.mrb[0].mxu0 %v10249
      %v10413 = vpop.f32.mrb[0].mxu0
      %v10414 = vadd.f32 0.0, %v10413
      %v10415 = vpop.f32.mrb[0].mxu0
      %v10416 = vpop.f32.mrb[0].mxu0
      %v10417 = vadd.f32 0.0, %v10416
      %v10418 = vpop.f32.mrb[0].mxu0
      %10419 = vmatprep.mubr.bf16.mxu0 0
      %10420 = vmatmul.mubr.bf16.gmra.mrb[0].mxu0 %v10252
      %v10421 = vpop.f32.mrb[0].mxu0
      %v10422 = vadd.f32 0.0, %v10421
      %v10423 = vpop.f32.mrb[0].mxu0
      %v10424 = vpop.f32.mrb[0].mxu0
      %v10425 = vadd.f32 0.0, %v10424
      %v10426 = vpop.f32.mrb[0].mxu0
      %10427 = vmatprep.mubr.bf16.mxu0 0
      %10428 = vmatmul.mubr.bf16.gmra.mrb[0].mxu0 %v10255
      %v10429 = vpop.f32.mrb[0].mxu0
      %v10430 = vadd.f32 0.0, %v10429
      %v10431 = vpop.f32.mrb[0].mxu0
      %v10432 = vpop.f32.mrb[0].mxu0
      %v10433 = vadd.f32 0.0, %v10432
      %v10434 = vpop.f32.mrb[0].mxu0
      %10435 = vmatprep.mubr.bf16.mxu0 0
      %10436 = vmatmul.mubr.bf16.gmra.mrb[0].mxu0 %v10258
      %v10437 = vpop.f32.mrb[0].mxu0
      %v10438 = vadd.f32 0.0, %v10437
      %v10439 = vpop.f32.mrb[0].mxu0
      %v10440 = vpop.f32.mrb[0].mxu0
      %v10441 = vadd.f32 0.0, %v10440
      %v10442 = vpop.f32.mrb[0].mxu0
      %10443 = vmatprep.mubr.bf16.mxu0 0
      %10444 = vmatmul.mubr.bf16.gmra.mrb[0].mxu0 %v10261
      %v10445 = vpop.f32.mrb[0].mxu0
      %v10446 = vadd.f32 0.0, %v10445
      %v10447 = vpop.f32.mrb[0].mxu0
      %v10448 = vpop.f32.mrb[0].mxu0
      %v10449 = vadd.f32 0.0, %v10448
      %v10450 = vpop.f32.mrb[0].mxu0
      %10451 = vmatprep.mubr.bf16.mxu0 0
      %10452 = vmatmul.mubr.bf16.gmra.mrb[0].mxu0 %v10264
      %v10453 = vpop.f32.mrb[0].mxu0
      %v10454 = vadd.f32 0.0, %v10453
      %v10455 = vpop.f32.mrb[0].mxu0
      %v10456 = vpop.f32.mrb[0].mxu0
      %v10457 = vadd.f32 0.0, %v10456
      %v10458 = vpop.f32.mrb[0].mxu0
      %10459 = vmatprep.mubr.bf16.mxu0 0
      %10460 = vmatmul.mubr.bf16.gmra.mrb[0].mxu0 %v10267
      %v10461 = vpop.f32.mrb[0].mxu0
      %v10462 = vadd.f32 0.0, %v10461
      %v10463 = vpop.f32.mrb[0].mxu0
      %v10464 = vpop.f32.mrb[0].mxu0
      %v10465 = vadd.f32 0.0, %v10464
      %v10466 = vpop.f32.mrb[0].mxu0
      %10467 = vmatprep.mubr.bf16.mxu0 0
      %10468 = vmatmul.mubr.bf16.gmra.mrb[0].mxu0 %v10270
      %v10469 = vpop.f32.mrb[0].mxu0
      %v10470 = vadd.f32 0.0, %v10469
      %v10471 = vpop.f32.mrb[0].mxu0
      %v10472 = vpop.f32.mrb[0].mxu0
      %v10473 = vpop.f32.mrb[0].mxu0
      %10474 = vdwg.mxu0
      %v10475 = vadd.f32 %v10093, %v10310
      %v10476 = vadd.f32 %v10094, %v10313
      %v10477 = vadd.f32 %v10095, %v10318
      %v10478 = vadd.f32 %v10096, %v10321
      %v10479 = vadd.f32 %v10097, %v10326
      %v10480 = vadd.f32 %v10098, %v10329
      %v10481 = vadd.f32 %v10099, %v10334
      %v10482 = vadd.f32 %v10100, %v10337
      %v10483 = vadd.f32 %v10101, %v10342
      %v10484 = vadd.f32 %v10102, %v10345
      %v10485 = vadd.f32 %v10103, %v10350
      %v10486 = vadd.f32 %v10104, %v10353
      %v10487 = vadd.f32 %v10105, %v10358
      %v10488 = vadd.f32 %v10106, %v10361
      %v10489 = vadd.f32 %v10107, %v10366
      %v10490 = vadd.f32 %v10108, %v10369
      %v10491 = vadd.f32 %v10109, %v10374
      %v10492 = vadd.f32 %v10110, %v10377
      %v10493 = vadd.f32 %v10111, %v10382
      %v10494 = vadd.f32 %v10112, %v10385
      %v10495 = vadd.f32 %v10113, %v10390
      %v10496 = vadd.f32 %v10114, %v10393
      %v10497 = vadd.f32 %v10115, %v10398
      %v10498 = vadd.f32 %v10116, %v10401
      %v10499 = vadd.f32 %v10117, %v10406
      %v10500 = vadd.f32 %v10118, %v10409
      %v10501 = vadd.f32 %v10119, %v10414
      %v10502 = vadd.f32 %v10120, %v10417
      %v10503 = vadd.f32 %v10121, %v10422
      %v10504 = vadd.f32 %v10122, %v10425
      %v10505 = vadd.f32 %v10123, %v10430
      %v10506 = vadd.f32 %v10124, %v10433
      %v10507 = vadd.f32 %v10125, %v10438
      %v10508 = vadd.f32 %v10126, %v10441
      %v10509 = vadd.f32 %v10127, %v10446
      %v10510 = vadd.f32 %v10128, %v10449
      %v10511 = vadd.f32 %v10129, %v10454
      %v10512 = vadd.f32 %v10130, %v10457
      %v10513 = vadd.f32 %v10131, %v10462
      %v10514 = vadd.f32 %v10132, %v10465
      %v10515 = vadd.f32 %v10133, %v10470
      %v10516 = vld [vmem:[%s11] sm:$0x1]
      %v10518 = vlaneseq
      %v10519 = vshrl.u32 %v10518, 7
      %v10520 = vsub.s32 0, %v10519
      %v10521 = vrot.slane %v10516, %v10520
      %v10523 = vadd.f32 %v10475, %v10521
      %v10524 = vadd.f32 %v10476, %v10521
      %v10525 = vadd.f32 %v10477, %v10521
      %v10526 = vadd.f32 %v10478, %v10521
      %v10527 = vadd.f32 %v10479, %v10521
      %v10528 = vadd.f32 %v10480, %v10521
      %v10529 = vadd.f32 %v10481, %v10521
      %v10530 = vadd.f32 %v10482, %v10521
      %v10531 = vadd.f32 %v10483, %v10521
      %v10532 = vadd.f32 %v10484, %v10521
      %v10533 = vadd.f32 %v10485, %v10521
      %v10534 = vadd.f32 %v10486, %v10521
      %v10535 = vadd.f32 %v10487, %v10521
      %v10536 = vadd.f32 %v10488, %v10521
      %v10537 = vadd.f32 %v10489, %v10521
      %v10538 = vadd.f32 %v10490, %v10521
      %v10539 = vadd.f32 %v10491, %v10521
      %v10540 = vadd.f32 %v10492, %v10521
      %v10541 = vadd.f32 %v10493, %v10521
      %v10542 = vadd.f32 %v10494, %v10521
      %v10543 = vadd.f32 %v10495, %v10521
      %v10544 = vadd.f32 %v10496, %v10521
      %v10545 = vadd.f32 %v10497, %v10521
      %v10546 = vadd.f32 %v10498, %v10521
      %v10547 = vadd.f32 %v10499, %v10521
      %v10548 = vadd.f32 %v10500, %v10521
      %v10549 = vadd.f32 %v10501, %v10521
      %v10550 = vadd.f32 %v10502, %v10521
      %v10551 = vadd.f32 %v10503, %v10521
      %v10552 = vadd.f32 %v10504, %v10521
      %v10553 = vadd.f32 %v10505, %v10521
      %v10554 = vadd.f32 %v10506, %v10521
      %v10555 = vadd.f32 %v10507, %v10521
      %v10556 = vadd.f32 %v10508, %v10521
      %v10557 = vadd.f32 %v10509, %v10521
      %v10558 = vadd.f32 %v10510, %v10521
      %v10559 = vadd.f32 %v10511, %v10521
      %v10560 = vadd.f32 %v10512, %v10521
      %v10561 = vadd.f32 %v10513, %v10521
      %v10562 = vadd.f32 %v10514, %v10521
      %v10563 = vadd.f32 %v10515, %v10521
      %v10564 = vmax.f32 %v10523, 0.0
      %v10565 = vmax.f32 %v10524, 0.0
      %v10566 = vmax.f32 %v10525, 0.0
      %v10567 = vmax.f32 %v10526, 0.0
      %v10568 = vmax.f32 %v10527, 0.0
      %v10569 = vmax.f32 %v10528, 0.0
      %v10570 = vmax.f32 %v10529, 0.0
      %v10571 = vmax.f32 %v10530, 0.0
      %v10572 = vmax.f32 %v10531, 0.0
      %v10573 = vmax.f32 %v10532, 0.0
      %v10574 = vmax.f32 %v10533, 0.0
      %v10575 = vmax.f32 %v10534, 0.0
      %v10576 = vmax.f32 %v10535, 0.0
      %v10577 = vmax.f32 %v10536, 0.0
      %v10578 = vmax.f32 %v10537, 0.0
      %v10579 = vmax.f32 %v10538, 0.0
      %v10580 = vmax.f32 %v10539, 0.0
      %v10581 = vmax.f32 %v10540, 0.0
      %v10582 = vmax.f32 %v10541, 0.0
      %v10583 = vmax.f32 %v10542, 0.0
      %v10584 = vmax.f32 %v10543, 0.0
      %v10585 = vmax.f32 %v10544, 0.0
      %v10586 = vmax.f32 %v10545, 0.0
      %v10587 = vmax.f32 %v10546, 0.0
      %v10588 = vmax.f32 %v10547, 0.0
      %v10589 = vmax.f32 %v10548, 0.0
      %v10590 = vmax.f32 %v10549, 0.0
      %v10591 = vmax.f32 %v10550, 0.0
      %v10592 = vmax.f32 %v10551, 0.0
      %v10593 = vmax.f32 %v10552, 0.0
      %v10594 = vmax.f32 %v10553, 0.0
      %v10595 = vmax.f32 %v10554, 0.0
      %v10596 = vmax.f32 %v10555, 0.0
      %v10597 = vmax.f32 %v10556, 0.0
      %v10598 = vmax.f32 %v10557, 0.0
      %v10599 = vmax.f32 %v10558, 0.0
      %v10600 = vmax.f32 %v10559, 0.0
      %v10601 = vmax.f32 %v10560, 0.0
      %v10602 = vmax.f32 %v10561, 0.0
      %v10603 = vmax.f32 %v10562, 0.0
      %v10604 = vmax.f32 %v10563, 0.0
      %10605 = vst [vmem:[%s413] sm:$0xff] %v10564
      %10606 = vst [vmem:[%s413 + $0x8] sm:$0xff] %v10565
      %10607 = vst [vmem:[%s413 + $0x10] sm:$0xff] %v10566
      %10608 = vst [vmem:[%s413 + $0x18] sm:$0xff] %v10567
      %10609 = vst [vmem:[%s413 + $0x20] sm:$0xff] %v10568
      %10610 = vst [vmem:[%s413 + $0x28] sm:$0xff] %v10569
      %10611 = vst [vmem:[%s413 + $0x30] sm:$0xff] %v10570
      %10612 = vst [vmem:[%s413 + $0x38] sm:$0xff] %v10571
      %10613 = vst [vmem:[%s413 + $0x40] sm:$0xff] %v10572
      %10614 = vst [vmem:[%s413 + $0x48] sm:$0xff] %v10573
      %10615 = vst [vmem:[%s413 + $0x50] sm:$0xff] %v10574
      %10616 = vst [vmem:[%s413 + $0x58] sm:$0xff] %v10575
      %10617 = vst [vmem:[%s413 + $0x60] sm:$0xff] %v10576
      %10618 = vst [vmem:[%s413 + $0x68] sm:$0xff] %v10577
      %10619 = vst [vmem:[%s413 + $0x70] sm:$0xff] %v10578
      %10620 = vst [vmem:[%s413 + $0x78] sm:$0xff] %v10579
      %10621 = vst [vmem:[%s413 + $0x80] sm:$0xff] %v10580
      %10622 = vst [vmem:[%s413 + $0x88] sm:$0xff] %v10581
      %10623 = vst [vmem:[%s413 + $0x90] sm:$0xff] %v10582
      %10624 = vst [vmem:[%s413 + $0x98] sm:$0xff] %v10583
      %10625 = vst [vmem:[%s413 + $0xa0] sm:$0xff] %v10584
      %10626 = vst [vmem:[%s413 + $0xa8] sm:$0xff] %v10585
      %10627 = vst [vmem:[%s413 + $0xb0] sm:$0xff] %v10586
      %10628 = vst [vmem:[%s413 + $0xb8] sm:$0xff] %v10587
      %10629 = vst [vmem:[%s413 + $0xc0] sm:$0xff] %v10588
      %10630 = vst [vmem:[%s413 + $0xc8] sm:$0xff] %v10589
      %10631 = vst [vmem:[%s413 + $0xd0] sm:$0xff] %v10590
      %10632 = vst [vmem:[%s413 + $0xd8] sm:$0xff] %v10591
      %10633 = vst [vmem:[%s413 + $0xe0] sm:$0xff] %v10592
      %10634 = vst [vmem:[%s413 + $0xe8] sm:$0xff] %v10593
      %10635 = vst [vmem:[%s413 + $0xf0] sm:$0xff] %v10594
      %10636 = vst [vmem:[%s413 + $0xf8] sm:$0xff] %v10595
      %10637 = vst [vmem:[%s413 + $0x100] sm:$0xff] %v10596
      %10638 = vst [vmem:[%s413 + $0x108] sm:$0xff] %v10597
      %10639 = vst [vmem:[%s413 + $0x110] sm:$0xff] %v10598
      %10640 = vst [vmem:[%s413 + $0x118] sm:$0xff] %v10599
      %10641 = vst [vmem:[%s413 + $0x120] sm:$0xff] %v10600
      %10642 = vst [vmem:[%s413 + $0x128] sm:$0xff] %v10601
      %10643 = vst [vmem:[%s413 + $0x130] sm:$0xff] %v10602
      %10644 = vst [vmem:[%s413 + $0x138] sm:$0xff] %v10603
      %10645 = vst [vmem:[%s413 + $0x140] sm:$0xff] %v10604
      %p10646 = scmp.lt.s32.totalorder %s23, 1
      %s10647 = scalar_select %p10646, %s23, 1
      %s10648 = smul.addr %s10647, 41
      %s10649 = smul.addr %s10648, 8
      %s10650 = scalar_lea.vmem %s12, %s10649
      // Predicated region
      $region69: #{inception_e_forward.1} parent=67 // pred_check
        %p10651 = pneg %p298
      $region70: #{inception_e_forward.1} parent=67 // pred_check_branch
        %10653 = sbr.rel (%p10651) target = $region72
      $region71: #{inception_e_forward.1} parent=67 // pred_region
        _
      $region72: #{inception_e_forward.1} parent=67 // pred_fallthru
        _
    $region68: #{inception_e_forward.1} parent=5 // pred_fallthru
      _
    %p10654 = scmp.le.s32.totalorder 2, %s18
    // Predicated region
    $region73: #{inception_e_forward.1} parent=5 // pred_check
      %p10655 = pneg %p10654
    $region74: #{inception_e_forward.1} parent=5 // pred_check_branch
      %10657 = sbr.rel (%p10655) target = $region76
    $region75: #{inception_e_forward.1} parent=5 // pred_region
      %s10658 = ssub.s32 %s18, 2
      // Predicated region
      $region77: #{inception_e_forward.1} parent=75 // pred_check
        %p10659 = pneg %p304
      $region78: #{inception_e_forward.1} parent=75 // pred_check_branch
        %10661 = sbr.rel (%p10659) target = $region80
      $region79: #{inception_e_forward.1} parent=75 // pred_region
        %p10662 = scmp.lt.s32.totalorder %s24, 1
        %s10663 = scalar_select %p10662, %s24, 1
        %s10664 = smul.addr %s10663, 41
        %s10665 = smul.addr %s10664, 8
        %s10666 = scalar_lea.vmem %s12, %s10665
      $region80: #{inception_e_forward.1} parent=75 // pred_fallthru
        _
    $region76: #{inception_e_forward.1} parent=5 // pred_fallthru
      _
  $region6: #{inception_e_forward.1} parent=0 // loop_footer
    %s22 = sadd.s32 1, %s18
  $region7: #{inception_e_forward.1} parent=0 // loop_footer_branch
    %17 = sbr.rel target = $region3
  $region8: #{inception_e_forward.1} parent=0 // loop_exit
    _

</llo_original>
